<compile_context>
chip_gen: v7x
topology: tpu7x:2x2x1
jax: 0.10.0
libtpu: 0.0.40
codegen_flags: <defaults>
</compile_context>

<pallas_src>
import jax
import jax.numpy as jnp
from jax.experimental import pallas as pl
from jax.experimental.pallas import tpu as pltpu

POOL_SIZES = (3, 7, 14)
P_COMP = 4
STEM_OUT = 64
COMP_OUT = STEM_OUT // P_COMP        # 16
HIDDEN = 1024
MLP_OUT = 128


# ----------------------------- in-kernel math ------------------------------
def _erf(x):
    # Abramowitz & Stegun 7.1.26 rational approximation.
    a1, a2, a3, a4, a5 = 0.254829592, -0.284496736, 1.421413741, -1.453152027, 1.061405429
    p = 0.3275911
    ax = jnp.abs(x)
    t = pl.reciprocal(1.0 + p * ax, approx=True)   # EUP slot; keeps VALU free
    poly = ((((a5 * t + a4) * t + a3) * t + a2) * t + a1) * t
    y = 1.0 - poly * jnp.exp(-ax * ax)
    return jnp.where(x < 0.0, -y, y)


def _gelu_exact(x):
    # matches torch.nn.GELU() (approximate='none'): 0.5*x*(1+erf(x/sqrt(2)))
    return 0.5 * x * (1.0 + _erf(x * 0.7071067811865476))


# ------------------------------ Pallas kernels ------------------------------
def _stem_kernel(p_ref, w_ref, b_ref, o_ref):
    # p: (147, S) im2col patches (spatial on lanes)
    # w: (16, 147) folded stem+compression weights, b: (16, 1) compression bias
    # o: (16, S) lane-dense, channel-major (NCHW-ready) output.
    o_ref[...] = (
        jnp.dot(w_ref[...], p_ref[...], preferred_element_type=jnp.float32) + b_ref[...]
    )


def pallas_folded_stem(patches, w_folded, b_folded):
    B, K, S = patches.shape
    N = w_folded.shape[0]
    return pl.pallas_call(
        _stem_kernel,
        out_shape=jax.ShapeDtypeStruct((B, N, S), jnp.float32),
        grid=(B,),
        in_specs=[
            pl.BlockSpec((None, K, S), lambda b: (b, 0, 0)),   # per-batch patch tile
            pl.BlockSpec((N, K), lambda b: (0, 0)),            # folded weights (resident)
            pl.BlockSpec((N, 1), lambda b: (0, 0)),            # bias
        ],
        out_specs=pl.BlockSpec((None, N, S), lambda b: (b, 0, 0)),
        compiler_params=pltpu.CompilerParams(dimension_semantics=("parallel",)),
    )(patches, w_folded, b_folded)


def _mlp3_kernel(x1, w11, b11, w12, b12,
                 x2, w21, b21, w22, b22,
                 x3, w31, b31, w32, b32,
                 o1, o2, o3, e1, e2, e3):
    def branch(x_ref, w1_ref, b1_ref, w2_ref, b2_ref, out_ref, xout_ref):
        h = jnp.dot(x_ref[...], w1_ref[...], preferred_element_type=jnp.float32) + b1_ref[...]
        xout_ref[...] = h                      # pre-activation "energy" branch (x.clone())
        g = _gelu_exact(h)
        out_ref[...] = (
            jnp.dot(g, w2_ref[...], preferred_element_type=jnp.float32) + b2_ref[...]
        )
    branch(x1, w11, b11, w12, b12, o1, e1)
    branch(x2, w21, b21, w22, b22, o2, e2)
    branch(x3, w31, b31, w32, b32, o3, e3)


def _vmem_spec():
    return pl.BlockSpec(memory_space=pltpu.MemorySpace.VMEM)


def pallas_mlp3(pooled_list, mlp_params):
    m = pooled_list[0].shape[0]
    args = []
    for x, mp in zip(pooled_list, mlp_params):
        args += [x, mp["w1"].T, mp["b1"].reshape(1, -1), mp["w2"].T, mp["b2"].reshape(1, -1)]
    out_shape = tuple(
        [jax.ShapeDtypeStruct((m, MLP_OUT), jnp.float32)] * 3
        + [jax.ShapeDtypeStruct((m, HIDDEN), jnp.float32)] * 3
    )
    return pl.pallas_call(
        _mlp3_kernel,
        out_shape=out_shape,
        in_specs=[_vmem_spec()] * len(args),
        out_specs=tuple([_vmem_spec()] * 6),
    )(*args)


# ------------------------------ parameter init ------------------------------
def init_params(in_img_size):
    key = jax.random.PRNGKey(0)
    ks = jax.random.split(key, 3 + 4 * len(POOL_SIZES))
    params = {
        "conv_w": jax.random.normal(ks[0], (STEM_OUT, 3, 7, 7), jnp.float32) * 0.05,
        "comp_w": jax.random.normal(ks[1], (COMP_OUT, STEM_OUT, 1, 1), jnp.float32) * 0.1,
        "comp_b": jax.random.normal(ks[2], (COMP_OUT,), jnp.float32) * 0.01,
        "mlps": [],
    }
    for i, ps in enumerate(POOL_SIZES):
        d = (in_img_size // ps) ** 2
        k1, k2, k3, k4 = ks[3 + 4 * i: 3 + 4 * i + 4]
        params["mlps"].append({
            "w1": jax.random.normal(k1, (HIDDEN, d), jnp.float32) * (float(d) ** -0.5),
            "b1": jax.random.normal(k2, (HIDDEN,), jnp.float32) * 0.01,
            "w2": jax.random.normal(k3, (MLP_OUT, HIDDEN), jnp.float32) * (float(HIDDEN) ** -0.5),
            "b2": jax.random.normal(k4, (MLP_OUT,), jnp.float32) * 0.01,
        })
    return params


# ------------------------------ model forward -------------------------------
def test_model_forward(x, params):
    B, C, H, W = x.shape
    Ho = (H + 2 * 3 - 7) // 2 + 1
    Wo = (W + 2 * 3 - 7) // 2 + 1

    # --- im2col for Conv2d(3,64,k=7,s=2,p=3): (B, C*49, Ho*Wo), k-index = c*49 + kh*7 + kw.
    xp = jnp.pad(x, ((0, 0), (0, 0), (3, 3), (3, 3)))
    cols = []
    for kh in range(7):
        for kw in range(7):
            cols.append(xp[:, :, kh:kh + 2 * Ho:2, kw:kw + 2 * Wo:2])       # (B,C,Ho,Wo)
    patches = jnp.stack(cols, axis=2).reshape(B, C * 49, Ho * Wo)            # contiguous reshape

    # --- fold the 1x1 compression conv (64->16, bias) into the stem conv weights.
    # TODO(synk): Dropout2d(p=0.3) is stochastic in train mode; implemented as eval-mode
    # identity (the weight fold is only valid under that assumption).
    w_stem = params["conv_w"].reshape(STEM_OUT, C * 49)                      # (64, 147)
    w_comp = params["comp_w"].reshape(COMP_OUT, STEM_OUT)                    # (16, 64)
    w_folded = jnp.dot(w_comp, w_stem)                                       # (16, 147)
    b_folded = params["comp_b"].reshape(COMP_OUT, 1)

    comp = pallas_folded_stem(patches, w_folded, b_folded)                   # (B, 16, Ho*Wo)
    comp = comp.reshape(B, COMP_OUT, Ho, Wo)                                 # NCHW, no transpose

    # --- per-scale max-pool + ReLU in plain jnp (KB-scale; a dedicated kernel here
    # would be launch- and lane-mask-bound), then one fused Pallas call for all MLPs.
    pooled_list = []
    for ps in POOL_SIZES:
        hp, wp = Ho // ps, Wo // ps
        win = comp[:, :, :hp * ps, :wp * ps].reshape(B, COMP_OUT, hp, ps, wp, ps)
        pooled = jnp.maximum(jnp.max(win, axis=(3, 5)), 0.0)                 # (B,16,hp,wp)
        pooled_list.append(pooled.reshape(B * COMP_OUT, hp * wp))

    o1, o2, o3, e1, e2, e3 = pallas_mlp3(pooled_list, params["mlps"])

    outs = [o.reshape(B, COMP_OUT * MLP_OUT) for o in (o1, o2, o3)]          # (B, 2048) each
    energies = [e.reshape(B, COMP_OUT * HIDDEN) for e in (e1, e2, e3)]       # (B, 16384) each
    out_cat = jnp.concatenate(outs, axis=1)                                  # (B, 6144)
    # TODO(synk): torch.cat(out, 1) on the (tensor, list) tuple is ill-typed in the source;
    # interpreted as concatenating the MLP outputs with all energy tensors along dim 1.
    hc = jnp.concatenate([out_cat] + energies, axis=1)                       # (B, 55296)
    return hc


if __name__ == "__main__":
    B, C, H, W = 2, 3, 56, 56
    key = jax.random.PRNGKey(0)
    x = jax.random.normal(key, (B, C, H, W), jnp.float32)

    in_img_size = (H + 2 * 3 - 7) // 2 + 1  # spatial size after the stem conv (=28)
    params = init_params(in_img_size)

    fwd = jax.jit(test_model_forward)
    hc = fwd(x, params)
    jax.block_until_ready(hc)

    expected_dim = len(POOL_SIZES) * COMP_OUT * MLP_OUT + len(POOL_SIZES) * COMP_OUT * HIDDEN
    assert hc.shape == (B, expected_dim), hc.shape
    assert hc.dtype == jnp.float32
    print("KERNEL_OK")
</pallas_src>

<mosaic_0001>
module attributes {stable_mosaic.version = 11 : i64} {
  func.func @_stem_kernel(%arg0: i32, %arg1: memref<1x147x784xf32, #tpu.memory_space<vmem>>, %arg2: memref<16x147xf32, #tpu.memory_space<vmem>>, %arg3: memref<16x1xf32, #tpu.memory_space<vmem>>, %arg4: memref<1x16x784xf32, #tpu.memory_space<vmem>>) attributes {dimension_semantics = [#tpu.dimension_semantics<parallel>], iteration_bounds = array<i64: 2>, scalar_prefetch = 0 : i64, scratch_operands = 0 : i64, tpu.core_type = #tpu.core_type<tc>, window_params = [{transform_indices = @transform_0, window_bounds = array<i64: 1, 147, 784>}, {pipeline_mode = #tpu.pipeline_mode<synchronous>, transform_indices = @transform_1, window_bounds = array<i64: 16, 147>}, {pipeline_mode = #tpu.pipeline_mode<synchronous>, transform_indices = @transform_2, window_bounds = array<i64: 16, 1>}, {transform_indices = @transform_3, window_bounds = array<i64: 1, 16, 784>}]} {
    %c0 = arith.constant 0 : index
    %c0_0 = arith.constant 0 : index
    %0 = vector.load %arg2[%c0, %c0_0] : memref<16x147xf32, #tpu.memory_space<vmem>>, vector<16x147xf32>
    %c0_1 = arith.constant 0 : index
    %c0_2 = arith.constant 0 : index
    %c0_3 = arith.constant 0 : index
    %1 = vector.load %arg1[%c0_1, %c0_2, %c0_3] : memref<1x147x784xf32, #tpu.memory_space<vmem>>, vector<1x147x784xf32>
    %2 = vector.shape_cast %1 : vector<1x147x784xf32> to vector<147x784xf32>
    %cst = arith.constant dense<0.000000e+00> : vector<16x784xf32>
    %3 = tpu.matmul %0, %2, %cst {dimension_numbers = #tpu.dot_dimension_numbers<[1], [0], [0], [1], [0, 0, 1, 1], [], []>} : vector<16x147xf32>, vector<147x784xf32>, vector<16x784xf32> -> vector<16x784xf32>
    %c0_4 = arith.constant 0 : index
    %c0_5 = arith.constant 0 : index
    %4 = vector.load %arg3[%c0_4, %c0_5] : memref<16x1xf32, #tpu.memory_space<vmem>>, vector<16x1xf32>
    %5 = vector.broadcast %4 : vector<16x1xf32> to vector<16x784xf32>
    %6 = arith.addf %3, %5 : vector<16x784xf32>
    %c0_6 = arith.constant 0 : index
    %c0_7 = arith.constant 0 : index
    %c0_8 = arith.constant 0 : index
    %7 = vector.load %arg4[%c0_6, %c0_7, %c0_8] : memref<1x16x784xf32, #tpu.memory_space<vmem>>, vector<1x16x784xf32>
    %8 = vector.shape_cast %7 : vector<1x16x784xf32> to vector<16x784xf32>
    %9 = vector.shape_cast %6 : vector<16x784xf32> to vector<1x16x784xf32>
    tpu.vector_store %arg4[%c0_6, %c0_7, %c0_8], %9 {strides = array<i32>} : memref<1x16x784xf32, #tpu.memory_space<vmem>>, vector<1x16x784xf32>,
    return
  }
  func.func @transform_0(%arg0: i32) -> (i32, i32, i32) {
    %c0_i32 = arith.constant 0 : i32
    %c0_i32_0 = arith.constant 0 : i32
    %c0_i32_1 = arith.constant 0 : i32
    return %arg0, %c0_i32, %c0_i32_0 : i32, i32, i32
  }
  func.func @transform_1(%arg0: i32) -> (i32, i32) {
    %c0_i32 = arith.constant 0 : i32
    %c0_i32_0 = arith.constant 0 : i32
    %c0_i32_1 = arith.constant 0 : i32
    return %c0_i32, %c0_i32_0 : i32, i32
  }
  func.func @transform_2(%arg0: i32) -> (i32, i32) {
    %c0_i32 = arith.constant 0 : i32
    %c0_i32_0 = arith.constant 0 : i32
    %c0_i32_1 = arith.constant 0 : i32
    return %c0_i32, %c0_i32_0 : i32, i32
  }
  func.func @transform_3(%arg0: i32) -> (i32, i32, i32) {
    %c0_i32 = arith.constant 0 : i32
    %c0_i32_0 = arith.constant 0 : i32
    %c0_i32_1 = arith.constant 0 : i32
    return %arg0, %c0_i32, %c0_i32_0 : i32, i32, i32
  }
}

module attributes {stable_mosaic.version = 11 : i64} {
  func.func @_mlp3_kernel(%arg0: memref<32x81xf32, #tpu.memory_space<vmem>>, %arg1: memref<81x1024xf32, #tpu.memory_space<vmem>>, %arg2: memref<1x1024xf32, #tpu.memory_space<vmem>>, %arg3: memref<1024x128xf32, #tpu.memory_space<vmem>>, %arg4: memref<1x128xf32, #tpu.memory_space<vmem>>, %arg5: memref<32x16xf32, #tpu.memory_space<vmem>>, %arg6: memref<16x1024xf32, #tpu.memory_space<vmem>>, %arg7: memref<1x1024xf32, #tpu.memory_space<vmem>>, %arg8: memref<1024x128xf32, #tpu.memory_space<vmem>>, %arg9: memref<1x128xf32, #tpu.memory_space<vmem>>, %arg10: memref<32x4xf32, #tpu.memory_space<vmem>>, %arg11: memref<4x1024xf32, #tpu.memory_space<vmem>>, %arg12: memref<1x1024xf32, #tpu.memory_space<vmem>>, %arg13: memref<1024x128xf32, #tpu.memory_space<vmem>>, %arg14: memref<1x128xf32, #tpu.memory_space<vmem>>, %arg15: memref<32x128xf32, #tpu.memory_space<vmem>>, %arg16: memref<32x128xf32, #tpu.memory_space<vmem>>, %arg17: memref<32x128xf32, #tpu.memory_space<vmem>>, %arg18: memref<32x1024xf32, #tpu.memory_space<vmem>>, %arg19: memref<32x1024xf32, #tpu.memory_space<vmem>>, %arg20: memref<32x1024xf32, #tpu.memory_space<vmem>>) attributes {dimension_semantics = [], scalar_prefetch = 0 : i64, scratch_operands = 0 : i64, tpu.core_type = #tpu.core_type<tc>} {
    %c0 = arith.constant 0 : index
    %c0_0 = arith.constant 0 : index
    %0 = vector.load %arg0[%c0, %c0_0] : memref<32x81xf32, #tpu.memory_space<vmem>>, vector<32x81xf32>
    %c0_1 = arith.constant 0 : index
    %c0_2 = arith.constant 0 : index
    %1 = vector.load %arg1[%c0_1, %c0_2] : memref<81x1024xf32, #tpu.memory_space<vmem>>, vector<81x1024xf32>
    %cst = arith.constant dense<0.000000e+00> : vector<32x1024xf32>
    %2 = tpu.matmul %0, %1, %cst {dimension_numbers = #tpu.dot_dimension_numbers<[1], [0], [0], [1], [0, 0, 1, 1], [], []>} : vector<32x81xf32>, vector<81x1024xf32>, vector<32x1024xf32> -> vector<32x1024xf32>
    %c0_3 = arith.constant 0 : index
    %c0_4 = arith.constant 0 : index
    %3 = vector.load %arg2[%c0_3, %c0_4] : memref<1x1024xf32, #tpu.memory_space<vmem>>, vector<1x1024xf32>
    %4 = vector.broadcast %3 : vector<1x1024xf32> to vector<32x1024xf32>
    %5 = arith.addf %2, %4 : vector<32x1024xf32>
    %c0_5 = arith.constant 0 : index
    %c0_6 = arith.constant 0 : index
    %6 = vector.load %arg18[%c0_5, %c0_6] : memref<32x1024xf32, #tpu.memory_space<vmem>>, vector<32x1024xf32>
    tpu.vector_store %arg18[%c0_5, %c0_6], %5 {strides = array<i32>} : memref<32x1024xf32, #tpu.memory_space<vmem>>, vector<32x1024xf32>,
    %cst_7 = arith.constant 5.000000e-01 : f32
    %7 = vector.broadcast %cst_7 : f32 to vector<32x1024xf32>
    %8 = arith.mulf %7, %5 : vector<32x1024xf32>
    %cst_8 = arith.constant 0.707106769 : f32
    %9 = vector.broadcast %cst_8 : f32 to vector<32x1024xf32>
    %10 = arith.mulf %5, %9 : vector<32x1024xf32>
    %11 = math.absf %10 : vector<32x1024xf32>
    %cst_9 = arith.constant 0.327591091 : f32
    %12 = vector.broadcast %cst_9 : f32 to vector<32x1024xf32>
    %13 = arith.mulf %12, %11 : vector<32x1024xf32>
    %cst_10 = arith.constant 1.000000e+00 : f32
    %14 = vector.broadcast %cst_10 : f32 to vector<32x1024xf32>
    %15 = arith.addf %14, %13 : vector<32x1024xf32>
    %16 = tpu.reciprocal %15 {approx = true} : vector<32x1024xf32> -> vector<32x1024xf32>
    %cst_11 = arith.constant 1.06140542 : f32
    %17 = vector.broadcast %cst_11 : f32 to vector<32x1024xf32>
    %18 = arith.mulf %17, %16 : vector<32x1024xf32>
    %cst_12 = arith.constant -1.45315206 : f32
    %19 = vector.broadcast %cst_12 : f32 to vector<32x1024xf32>
    %20 = arith.addf %18, %19 : vector<32x1024xf32>
    %21 = arith.mulf %20, %16 : vector<32x1024xf32>
    %cst_13 = arith.constant 1.42141378 : f32
    %22 = vector.broadcast %cst_13 : f32 to vector<32x1024xf32>
    %23 = arith.addf %21, %22 : vector<32x1024xf32>
    %24 = arith.mulf %23, %16 : vector<32x1024xf32>
    %cst_14 = arith.constant -0.284496725 : f32
    %25 = vector.broadcast %cst_14 : f32 to vector<32x1024xf32>
    %26 = arith.addf %24, %25 : vector<32x1024xf32>
    %27 = arith.mulf %26, %16 : vector<32x1024xf32>
    %cst_15 = arith.constant 0.254829586 : f32
    %28 = vector.broadcast %cst_15 : f32 to vector<32x1024xf32>
    %29 = arith.addf %27, %28 : vector<32x1024xf32>
    %30 = arith.mulf %29, %16 : vector<32x1024xf32>
    %cst_16 = arith.constant 0.000000e+00 : f32
    %31 = vector.broadcast %cst_16 : f32 to vector<32x1024xf32>
    %32 = arith.subf %31, %11 : vector<32x1024xf32>
    %33 = arith.mulf %32, %11 : vector<32x1024xf32>
    %34 = math.exp %33 : vector<32x1024xf32>
    %35 = arith.mulf %30, %34 : vector<32x1024xf32>
    %cst_17 = arith.constant 1.000000e+00 : f32
    %36 = vector.broadcast %cst_17 : f32 to vector<32x1024xf32>
    %37 = arith.subf %36, %35 : vector<32x1024xf32>
    %cst_18 = arith.constant 0.000000e+00 : f32
    %38 = vector.broadcast %cst_18 : f32 to vector<32x1024xf32>
    %39 = arith.cmpf olt, %10, %38 : vector<32x1024xf32>
    %cst_19 = arith.constant 0.000000e+00 : f32
    %40 = vector.broadcast %cst_19 : f32 to vector<32x1024xf32>
    %41 = arith.subf %40, %37 : vector<32x1024xf32>
    %42 = arith.select %39, %41, %37 : vector<32x1024xi1>, vector<32x1024xf32>
    %cst_20 = arith.constant 1.000000e+00 : f32
    %43 = vector.broadcast %cst_20 : f32 to vector<32x1024xf32>
    %44 = arith.addf %43, %42 : vector<32x1024xf32>
    %45 = arith.mulf %8, %44 : vector<32x1024xf32>
    %c0_21 = arith.constant 0 : index
    %c0_22 = arith.constant 0 : index
    %46 = vector.load %arg3[%c0_21, %c0_22] : memref<1024x128xf32, #tpu.memory_space<vmem>>, vector<1024x128xf32>
    %cst_23 = arith.constant dense<0.000000e+00> : vector<32x128xf32>
    %47 = tpu.matmul %45, %46, %cst_23 {dimension_numbers = #tpu.dot_dimension_numbers<[1], [0], [0], [1], [0, 0, 1, 1], [], []>} : vector<32x1024xf32>, vector<1024x128xf32>, vector<32x128xf32> -> vector<32x128xf32>
    %c0_24 = arith.constant 0 : index
    %c0_25 = arith.constant 0 : index
    %48 = vector.load %arg4[%c0_24, %c0_25] : memref<1x128xf32, #tpu.memory_space<vmem>>, vector<1x128xf32>
    %49 = vector.broadcast %48 : vector<1x128xf32> to vector<32x128xf32>
    %50 = arith.addf %47, %49 : vector<32x128xf32>
    %c0_26 = arith.constant 0 : index
    %c0_27 = arith.constant 0 : index
    %51 = vector.load %arg15[%c0_26, %c0_27] : memref<32x128xf32, #tpu.memory_space<vmem>>, vector<32x128xf32>
    tpu.vector_store %arg15[%c0_26, %c0_27], %50 {strides = array<i32>} : memref<32x128xf32, #tpu.memory_space<vmem>>, vector<32x128xf32>,
    %c0_28 = arith.constant 0 : index
    %c0_29 = arith.constant 0 : index
    %52 = vector.load %arg5[%c0_28, %c0_29] : memref<32x16xf32, #tpu.memory_space<vmem>>, vector<32x16xf32>
    %c0_30 = arith.constant 0 : index
    %c0_31 = arith.constant 0 : index
    %53 = vector.load %arg6[%c0_30, %c0_31] : memref<16x1024xf32, #tpu.memory_space<vmem>>, vector<16x1024xf32>
    %cst_32 = arith.constant dense<0.000000e+00> : vector<32x1024xf32>
    %54 = tpu.matmul %52, %53, %cst_32 {dimension_numbers = #tpu.dot_dimension_numbers<[1], [0], [0], [1], [0, 0, 1, 1], [], []>} : vector<32x16xf32>, vector<16x1024xf32>, vector<32x1024xf32> -> vector<32x1024xf32>
    %c0_33 = arith.constant 0 : index
    %c0_34 = arith.constant 0 : index
    %55 = vector.load %arg7[%c0_33, %c0_34] : memref<1x1024xf32, #tpu.memory_space<vmem>>, vector<1x1024xf32>
    %56 = vector.broadcast %55 : vector<1x1024xf32> to vector<32x1024xf32>
    %57 = arith.addf %54, %56 : vector<32x1024xf32>
    %c0_35 = arith.constant 0 : index
    %c0_36 = arith.constant 0 : index
    %58 = vector.load %arg19[%c0_35, %c0_36] : memref<32x1024xf32, #tpu.memory_space<vmem>>, vector<32x1024xf32>
    tpu.vector_store %arg19[%c0_35, %c0_36], %57 {strides = array<i32>} : memref<32x1024xf32, #tpu.memory_space<vmem>>, vector<32x1024xf32>,
    %cst_37 = arith.constant 5.000000e-01 : f32
    %59 = vector.broadcast %cst_37 : f32 to vector<32x1024xf32>
    %60 = arith.mulf %59, %57 : vector<32x1024xf32>
    %cst_38 = arith.constant 0.707106769 : f32
    %61 = vector.broadcast %cst_38 : f32 to vector<32x1024xf32>
    %62 = arith.mulf %57, %61 : vector<32x1024xf32>
    %63 = math.absf %62 : vector<32x1024xf32>
    %cst_39 = arith.constant 0.327591091 : f32
    %64 = vector.broadcast %cst_39 : f32 to vector<32x1024xf32>
    %65 = arith.mulf %64, %63 : vector<32x1024xf32>
    %cst_40 = arith.constant 1.000000e+00 : f32
    %66 = vector.broadcast %cst_40 : f32 to vector<32x1024xf32>
    %67 = arith.addf %66, %65 : vector<32x1024xf32>
    %68 = tpu.reciprocal %67 {approx = true} : vector<32x1024xf32> -> vector<32x1024xf32>
    %cst_41 = arith.constant 1.06140542 : f32
    %69 = vector.broadcast %cst_41 : f32 to vector<32x1024xf32>
    %70 = arith.mulf %69, %68 : vector<32x1024xf32>
    %cst_42 = arith.constant -1.45315206 : f32
    %71 = vector.broadcast %cst_42 : f32 to vector<32x1024xf32>
    %72 = arith.addf %70, %71 : vector<32x1024xf32>
    %73 = arith.mulf %72, %68 : vector<32x1024xf32>
    %cst_43 = arith.constant 1.42141378 : f32
    %74 = vector.broadcast %cst_43 : f32 to vector<32x1024xf32>
    %75 = arith.addf %73, %74 : vector<32x1024xf32>
    %76 = arith.mulf %75, %68 : vector<32x1024xf32>
    %cst_44 = arith.constant -0.284496725 : f32
    %77 = vector.broadcast %cst_44 : f32 to vector<32x1024xf32>
    %78 = arith.addf %76, %77 : vector<32x1024xf32>
    %79 = arith.mulf %78, %68 : vector<32x1024xf32>
    %cst_45 = arith.constant 0.254829586 : f32
    %80 = vector.broadcast %cst_45 : f32 to vector<32x1024xf32>
    %81 = arith.addf %79, %80 : vector<32x1024xf32>
    %82 = arith.mulf %81, %68 : vector<32x1024xf32>
    %cst_46 = arith.constant 0.000000e+00 : f32
    %83 = vector.broadcast %cst_46 : f32 to vector<32x1024xf32>
    %84 = arith.subf %83, %63 : vector<32x1024xf32>
    %85 = arith.mulf %84, %63 : vector<32x1024xf32>
    %86 = math.exp %85 : vector<32x1024xf32>
    %87 = arith.mulf %82, %86 : vector<32x1024xf32>
    %cst_47 = arith.constant 1.000000e+00 : f32
    %88 = vector.broadcast %cst_47 : f32 to vector<32x1024xf32>
    %89 = arith.subf %88, %87 : vector<32x1024xf32>
    %cst_48 = arith.constant 0.000000e+00 : f32
    %90 = vector.broadcast %cst_48 : f32 to vector<32x1024xf32>
    %91 = arith.cmpf olt, %62, %90 : vector<32x1024xf32>
    %cst_49 = arith.constant 0.000000e+00 : f32
    %92 = vector.broadcast %cst_49 : f32 to vector<32x1024xf32>
    %93 = arith.subf %92, %89 : vector<32x1024xf32>
    %94 = arith.select %91, %93, %89 : vector<32x1024xi1>, vector<32x1024xf32>
    %cst_50 = arith.constant 1.000000e+00 : f32
    %95 = vector.broadcast %cst_50 : f32 to vector<32x1024xf32>
    %96 = arith.addf %95, %94 : vector<32x1024xf32>
    %97 = arith.mulf %60, %96 : vector<32x1024xf32>
    %c0_51 = arith.constant 0 : index
    %c0_52 = arith.constant 0 : index
    %98 = vector.load %arg8[%c0_51, %c0_52] : memref<1024x128xf32, #tpu.memory_space<vmem>>, vector<1024x128xf32>
    %cst_53 = arith.constant dense<0.000000e+00> : vector<32x128xf32>
    %99 = tpu.matmul %97, %98, %cst_53 {dimension_numbers = #tpu.dot_dimension_numbers<[1], [0], [0], [1], [0, 0, 1, 1], [], []>} : vector<32x1024xf32>, vector<1024x128xf32>, vector<32x128xf32> -> vector<32x128xf32>
    %c0_54 = arith.constant 0 : index
    %c0_55 = arith.constant 0 : index
    %100 = vector.load %arg9[%c0_54, %c0_55] : memref<1x128xf32, #tpu.memory_space<vmem>>, vector<1x128xf32>
    %101 = vector.broadcast %100 : vector<1x128xf32> to vector<32x128xf32>
    %102 = arith.addf %99, %101 : vector<32x128xf32>
    %c0_56 = arith.constant 0 : index
    %c0_57 = arith.constant 0 : index
    %103 = vector.load %arg16[%c0_56, %c0_57] : memref<32x128xf32, #tpu.memory_space<vmem>>, vector<32x128xf32>
    tpu.vector_store %arg16[%c0_56, %c0_57], %102 {strides = array<i32>} : memref<32x128xf32, #tpu.memory_space<vmem>>, vector<32x128xf32>,
    %c0_58 = arith.constant 0 : index
    %c0_59 = arith.constant 0 : index
    %104 = vector.load %arg10[%c0_58, %c0_59] : memref<32x4xf32, #tpu.memory_space<vmem>>, vector<32x4xf32>
    %c0_60 = arith.constant 0 : index
    %c0_61 = arith.constant 0 : index
    %105 = vector.load %arg11[%c0_60, %c0_61] : memref<4x1024xf32, #tpu.memory_space<vmem>>, vector<4x1024xf32>
    %cst_62 = arith.constant dense<0.000000e+00> : vector<32x1024xf32>
    %106 = tpu.matmul %104, %105, %cst_62 {dimension_numbers = #tpu.dot_dimension_numbers<[1], [0], [0], [1], [0, 0, 1, 1], [], []>} : vector<32x4xf32>, vector<4x1024xf32>, vector<32x1024xf32> -> vector<32x1024xf32>
    %c0_63 = arith.constant 0 : index
    %c0_64 = arith.constant 0 : index
    %107 = vector.load %arg12[%c0_63, %c0_64] : memref<1x1024xf32, #tpu.memory_space<vmem>>, vector<1x1024xf32>
    %108 = vector.broadcast %107 : vector<1x1024xf32> to vector<32x1024xf32>
    %109 = arith.addf %106, %108 : vector<32x1024xf32>
    %c0_65 = arith.constant 0 : index
    %c0_66 = arith.constant 0 : index
    %110 = vector.load %arg20[%c0_65, %c0_66] : memref<32x1024xf32, #tpu.memory_space<vmem>>, vector<32x1024xf32>
    tpu.vector_store %arg20[%c0_65, %c0_66], %109 {strides = array<i32>} : memref<32x1024xf32, #tpu.memory_space<vmem>>, vector<32x1024xf32>,
    %cst_67 = arith.constant 5.000000e-01 : f32
    %111 = vector.broadcast %cst_67 : f32 to vector<32x1024xf32>
    %112 = arith.mulf %111, %109 : vector<32x1024xf32>
    %cst_68 = arith.constant 0.707106769 : f32
    %113 = vector.broadcast %cst_68 : f32 to vector<32x1024xf32>
    %114 = arith.mulf %109, %113 : vector<32x1024xf32>
    %115 = math.absf %114 : vector<32x1024xf32>
    %cst_69 = arith.constant 0.327591091 : f32
    %116 = vector.broadcast %cst_69 : f32 to vector<32x1024xf32>
    %117 = arith.mulf %116, %115 : vector<32x1024xf32>
    %cst_70 = arith.constant 1.000000e+00 : f32
    %118 = vector.broadcast %cst_70 : f32 to vector<32x1024xf32>
    %119 = arith.addf %118, %117 : vector<32x1024xf32>
    %120 = tpu.reciprocal %119 {approx = true} : vector<32x1024xf32> -> vector<32x1024xf32>
    %cst_71 = arith.constant 1.06140542 : f32
    %121 = vector.broadcast %cst_71 : f32 to vector<32x1024xf32>
    %122 = arith.mulf %121, %120 : vector<32x1024xf32>
    %cst_72 = arith.constant -1.45315206 : f32
    %123 = vector.broadcast %cst_72 : f32 to vector<32x1024xf32>
    %124 = arith.addf %122, %123 : vector<32x1024xf32>
    %125 = arith.mulf %124, %120 : vector<32x1024xf32>
    %cst_73 = arith.constant 1.42141378 : f32
    %126 = vector.broadcast %cst_73 : f32 to vector<32x1024xf32>
    %127 = arith.addf %125, %126 : vector<32x1024xf32>
    %128 = arith.mulf %127, %120 : vector<32x1024xf32>
    %cst_74 = arith.constant -0.284496725 : f32
    %129 = vector.broadcast %cst_74 : f32 to vector<32x1024xf32>
    %130 = arith.addf %128, %129 : vector<32x1024xf32>
    %131 = arith.mulf %130, %120 : vector<32x1024xf32>
    %cst_75 = arith.constant 0.254829586 : f32
    %132 = vector.broadcast %cst_75 : f32 to vector<32x1024xf32>
    %133 = arith.addf %131, %132 : vector<32x1024xf32>
    %134 = arith.mulf %133, %120 : vector<32x1024xf32>
    %cst_76 = arith.constant 0.000000e+00 : f32
    %135 = vector.broadcast %cst_76 : f32 to vector<32x1024xf32>
    %136 = arith.subf %135, %115 : vector<32x1024xf32>
    %137 = arith.mulf %136, %115 : vector<32x1024xf32>
    %138 = math.exp %137 : vector<32x1024xf32>
    %139 = arith.mulf %134, %138 : vector<32x1024xf32>
    %cst_77 = arith.constant 1.000000e+00 : f32
    %140 = vector.broadcast %cst_77 : f32 to vector<32x1024xf32>
    %141 = arith.subf %140, %139 : vector<32x1024xf32>
    %cst_78 = arith.constant 0.000000e+00 : f32
    %142 = vector.broadcast %cst_78 : f32 to vector<32x1024xf32>
    %143 = arith.cmpf olt, %114, %142 : vector<32x1024xf32>
    %cst_79 = arith.constant 0.000000e+00 : f32
    %144 = vector.broadcast %cst_79 : f32 to vector<32x1024xf32>
    %145 = arith.subf %144, %141 : vector<32x1024xf32>
    %146 = arith.select %143, %145, %141 : vector<32x1024xi1>, vector<32x1024xf32>
    %cst_80 = arith.constant 1.000000e+00 : f32
    %147 = vector.broadcast %cst_80 : f32 to vector<32x1024xf32>
    %148 = arith.addf %147, %146 : vector<32x1024xf32>
    %149 = arith.mulf %112, %148 : vector<32x1024xf32>
    %c0_81 = arith.constant 0 : index
    %c0_82 = arith.constant 0 : index
    %150 = vector.load %arg13[%c0_81, %c0_82] : memref<1024x128xf32, #tpu.memory_space<vmem>>, vector<1024x128xf32>
    %cst_83 = arith.constant dense<0.000000e+00> : vector<32x128xf32>
    %151 = tpu.matmul %149, %150, %cst_83 {dimension_numbers = #tpu.dot_dimension_numbers<[1], [0], [0], [1], [0, 0, 1, 1], [], []>} : vector<32x1024xf32>, vector<1024x128xf32>, vector<32x128xf32> -> vector<32x128xf32>
    %c0_84 = arith.constant 0 : index
    %c0_85 = arith.constant 0 : index
    %152 = vector.load %arg14[%c0_84, %c0_85] : memref<1x128xf32, #tpu.memory_space<vmem>>, vector<1x128xf32>
    %153 = vector.broadcast %152 : vector<1x128xf32> to vector<32x128xf32>
    %154 = arith.addf %151, %153 : vector<32x128xf32>
    %c0_86 = arith.constant 0 : index
    %c0_87 = arith.constant 0 : index
    %155 = vector.load %arg17[%c0_86, %c0_87] : memref<32x128xf32, #tpu.memory_space<vmem>>, vector<32x128xf32>
    tpu.vector_store %arg17[%c0_86, %c0_87], %154 {strides = array<i32>} : memref<32x128xf32, #tpu.memory_space<vmem>>, vector<32x128xf32>,
    return
  }
}

</mosaic_0001>

<llo_original>
// kernel: test_model_forward.2
$region0: #{test_model_forward.2}
  #allocation0 [shape = 'u32[]', space=smem, size = 0x4, offset = 0x4, fixed_abs, tag = 'smem constant byte address 0x4 - core index']
  #allocation1 [shape = 'u32[144,128]{1,0:T(1,128)}', space=vmem, size = 0x12000, scoped, tag = 'internal scratch']
  %s0 = inlined_call_operand.vmem [shape: f32[2,147,784], index: 0, kind: input, shape index: {}]
  %s1 = inlined_call_operand.vmem [shape: f32[16,147], index: 1, kind: input, shape index: {}]
  %s2 = inlined_call_operand.vmem [shape: f32[16,1], index: 2, kind: input, shape index: {}]
  %s3 = inlined_call_operand.vmem [shape: f32[2,16,784], index: 3, kind: output, shape index: {}]
  %s4 = sld [smem:[#allocation0]]
  $region45: #{test_model_forward.2} parent=0
    _
  %s6 = ssub.s32 1, %s4
  %s7 = scalar_select 0, %s6, %s4
  loop: start=0, step=1, limit=4
  $region2: #{test_model_forward.2} parent=0 // loop_pre_header
    _
  $region3: #{test_model_forward.2} parent=0 // loop_header
    %s9 = sphi 0, %s13
    %p10 = scmp.ge.s32.totalorder %s9, 4
    %s19 = sphi 0, %s21
    %s22 = sphi 0, %s19
    %s23 = sphi 0, %s22
    %s39 = sphi 0, %s23
    %s43 = sphi 0, %s43
    %s45 = sphi 0, %s43
    %s46 = sphi 0, %s45
    %s60 = sphi 0, %s46
    %s64 = sphi 0, %s64
    %s66 = sphi 0, %s64
    %s67 = sphi 0, %s66
    %s81 = sphi 0, %s67
    %s87 = sphi 0, %s89
    %s90 = sphi 0, %s87
    %s91 = sphi 0, %s90
    %s107 = sphi 0, %s91
  $region4: #{test_model_forward.2} parent=0 // loop_header_branch
    %12 = sbr.rel (%p10) target = $region8
  $region5: #{test_model_forward.2} parent=0 // loop_body
    %s14 = ssub.s32 %s9, 1
    %s15 = ssub.s32 %s9, 2
    %s16 = sadd.s32 %s9, 1
    %s17 = ssub.s32 %s9, %s16
    %p18 = scmp.eq.s32.totalorder %s17, 0
    %s20 = sadd.s32 %s19, 1
    %s21 = scalar_select %p18, %s19, %s20
    %p24 = pneg %p18
    %p25 = scmp.eq.s32.totalorder %s9, 1
    %p26 = por %p24, %p25
    %p27 = scmp.ne.s32.totalorder %s19, %s22
    %p28 = scmp.eq.s32.totalorder %s9, 0
    %p29 = por %p27, %p28
    %p30 = scmp.ne.s32.totalorder %s19, %s22
    %p31 = scmp.eq.s32.totalorder %s14, 1
    %p32 = por %p30, %p31
    %p33 = scmp.ne.s32.totalorder %s22, %s23
    %p34 = scmp.eq.s32.totalorder %s14, 0
    %p35 = por %p33, %p34
    %p36 = scmp.ne.s32.totalorder %s22, %s23
    %p37 = scmp.eq.s32.totalorder %s15, 1
    %p38 = por %p36, %p37
    %p40 = scmp.ne.s32.totalorder %s23, %s39
    %p41 = scmp.eq.s32.totalorder %s15, 0
    %p42 = por %p40, %p41
    %s44 = sadd.s32 %s43, 1
    %p47 = scmp.eq.s32.totalorder %s9, 1
    %p48 = scmp.ne.s32.totalorder %s43, %s45
    %p49 = scmp.eq.s32.totalorder %s9, 0
    %p50 = por %p48, %p49
    %p51 = scmp.ne.s32.totalorder %s43, %s45
    %p52 = scmp.eq.s32.totalorder %s14, 1
    %p53 = por %p51, %p52
    %p54 = scmp.ne.s32.totalorder %s45, %s46
    %p55 = scmp.eq.s32.totalorder %s14, 0
    %p56 = por %p54, %p55
    %p57 = scmp.ne.s32.totalorder %s45, %s46
    %p58 = scmp.eq.s32.totalorder %s15, 1
    %p59 = por %p57, %p58
    %p61 = scmp.ne.s32.totalorder %s46, %s60
    %p62 = scmp.eq.s32.totalorder %s15, 0
    %p63 = por %p61, %p62
    %s65 = sadd.s32 %s64, 1
    %p68 = scmp.eq.s32.totalorder %s9, 1
    %p69 = scmp.ne.s32.totalorder %s64, %s66
    %p70 = scmp.eq.s32.totalorder %s9, 0
    %p71 = por %p69, %p70
    %p72 = scmp.ne.s32.totalorder %s64, %s66
    %p73 = scmp.eq.s32.totalorder %s14, 1
    %p74 = por %p72, %p73
    %p75 = scmp.ne.s32.totalorder %s66, %s67
    %p76 = scmp.eq.s32.totalorder %s14, 0
    %p77 = por %p75, %p76
    %p78 = scmp.ne.s32.totalorder %s66, %s67
    %p79 = scmp.eq.s32.totalorder %s15, 1
    %p80 = por %p78, %p79
    %p82 = scmp.ne.s32.totalorder %s67, %s81
    %p83 = scmp.eq.s32.totalorder %s15, 0
    %p84 = por %p82, %p83
    %s85 = ssub.s32 %s9, %s16
    %p86 = scmp.eq.s32.totalorder %s85, 0
    %s88 = sadd.s32 %s87, 1
    %s89 = scalar_select %p86, %s87, %s88
    %p92 = pneg %p86
    %p93 = scmp.eq.s32.totalorder %s9, 1
    %p94 = por %p92, %p93
    %p95 = scmp.ne.s32.totalorder %s87, %s90
    %p96 = scmp.eq.s32.totalorder %s9, 0
    %p97 = por %p95, %p96
    %p98 = scmp.ne.s32.totalorder %s87, %s90
    %p99 = scmp.eq.s32.totalorder %s14, 1
    %p100 = por %p98, %p99
    %p101 = scmp.ne.s32.totalorder %s90, %s91
    %p102 = scmp.eq.s32.totalorder %s14, 0
    %p103 = por %p101, %p102
    %p104 = scmp.ne.s32.totalorder %s90, %s91
    %p105 = scmp.eq.s32.totalorder %s15, 1
    %p106 = por %p104, %p105
    %p108 = scmp.ne.s32.totalorder %s91, %s107
    %p109 = scmp.eq.s32.totalorder %s15, 0
    %p110 = por %p108, %p109
    %p111 = scmp.le.s32.totalorder 1, %s9
    %p112 = scmp.lt.s32.totalorder %s9, 3
    %p113 = pnand %p111, %p112
    %p114 = pneg %p113
    // Predicated region
    $region9: #{test_model_forward.2} parent=5 // pred_check
      _
    $region10: #{test_model_forward.2} parent=5 // pred_check_branch
      %116 = sbr.rel (%p113) target = $region12
    $region11: #{test_model_forward.2} parent=5 // pred_region
      %s117 = ssub.s32 %s9, 1
      // Predicated region
      $region13: #{test_model_forward.2} parent=11 // pred_check
        %p118 = pneg %p56
      $region14: #{test_model_forward.2} parent=11 // pred_check_branch
        %120 = sbr.rel (%p118) target = $region16
      $region15: #{test_model_forward.2} parent=11 // pred_region
        _
      $region16: #{test_model_forward.2} parent=11 // pred_fallthru
        _
      // Predicated region
      $region17: #{test_model_forward.2} parent=11 // pred_check
        %p121 = pneg %p77
      $region18: #{test_model_forward.2} parent=11 // pred_check_branch
        %123 = sbr.rel (%p121) target = $region20
      $region19: #{test_model_forward.2} parent=11 // pred_region
        _
      $region20: #{test_model_forward.2} parent=11 // pred_fallthru
        _
    $region12: #{test_model_forward.2} parent=5 // pred_fallthru
      _
    %p124 = scmp.lt.s32.totalorder %s9, 2
    // Predicated region
    $region21: #{test_model_forward.2} parent=5 // pred_check
      %p125 = pneg %p124
    $region22: #{test_model_forward.2} parent=5 // pred_check_branch
      %127 = sbr.rel (%p125) target = $region24
    $region23: #{test_model_forward.2} parent=5 // pred_region
      // Predicated region
      $region25: #{test_model_forward.2} parent=23 // pred_check
        %p128 = pneg %p29
      $region26: #{test_model_forward.2} parent=23 // pred_check_branch
        %130 = sbr.rel (%p128) target = $region28
      $region27: #{test_model_forward.2} parent=23 // pred_region
        %p131 = scmp.lt.s32.totalorder %s9, 1
        %s132 = scalar_select %p131, %s9, 1
        %s133 = smul.addr %s132, 133
        %s134 = smul.addr %s133, 8
        %s135 = scalar_lea.vmem %s0, %s134
      $region28: #{test_model_forward.2} parent=23 // pred_fallthru
        _
    $region24: #{test_model_forward.2} parent=5 // pred_fallthru
      _
    %p136 = scmp.le.s32.totalorder 1, %s9
    %p137 = scmp.lt.s32.totalorder %s9, 3
    %p138 = pnand %p136, %p137
    %p139 = pneg %p138
    // Predicated region
    $region29: #{test_model_forward.2} parent=5 // pred_check
      _
    $region30: #{test_model_forward.2} parent=5 // pred_check_branch
      %141 = sbr.rel (%p138) target = $region32
    $region31: #{test_model_forward.2} parent=5 // pred_region
      %s142 = ssub.s32 %s9, 1
      %p143 = scmp.lt.s32.totalorder %s14, 1
      %s144 = scalar_select %p143, %s14, 1
      %s145 = smul.addr %s144, 133
      %s146 = smul.addr %s145, 8
      %s147 = scalar_lea.vmem %s0, %s146
      %p148 = pneg %p35
      %p149 = pneg %p32
      %p150 = pneg %p56
      %p151 = pneg %p53
      %p152 = pneg %p77
      %p153 = pneg %p74
      %p154 = pneg %p103
      %p155 = pneg %p100
      %p156 = scmp.lt.s32.totalorder %s14, 1
      %s157 = scalar_select %p156, %s14, 1
      %s158 = smul.addr %s157, 14
      %s159 = smul.addr %s158, 8
      %s160 = scalar_lea.vmem %s3, %s159
      %p161 = scmp.lt.s32.totalorder %s14, 1
      %s162 = scalar_select %p161, %s14, 1
      %s163 = smul.addr %s162, 133
      %s164 = smul.addr %s163, 8
      %s165 = scalar_lea.vmem %s0, %s164
      %p166 = scmp.lt.s32.totalorder %s14, 1
      %s167 = scalar_select %p166, %s14, 1
      %s168 = smul.addr %s167, 14
      %s169 = smul.addr %s168, 8
      %s170 = scalar_lea.vmem %s3, %s169
      %v171 = vld [vmem:[%s1] sm:$0xff]
      %v172 = vld [vmem:[%s1 + $0x8] sm:$0xff]
      %v173 = vld [vmem:[%s1 + $0x10] sm:$0xff]
      %v174 = vld [vmem:[%s1 + $0x18] sm:$0xff]
      %v175 = vld [vmem:[%s165] sm:$0xff]
      %v176 = vld [vmem:[%s165 + $0x8] sm:$0xff]
      %v177 = vld [vmem:[%s165 + $0x10] sm:$0xff]
      %v178 = vld [vmem:[%s165 + $0x18] sm:$0xff]
      %v179 = vld [vmem:[%s165 + $0x20] sm:$0xff]
      %v180 = vld [vmem:[%s165 + $0x28] sm:$0xff]
      %v181 = vld [vmem:[%s165 + $0x30] sm:$0xff]
      %v182 = vld [vmem:[%s165 + $0x38] sm:$0xff]
      %v183 = vld [vmem:[%s165 + $0x40] sm:$0xff]
      %v184 = vld [vmem:[%s165 + $0x48] sm:$0xff]
      %v185 = vld [vmem:[%s165 + $0x50] sm:$0xff]
      %v186 = vld [vmem:[%s165 + $0x58] sm:$0xff]
      %v187 = vld [vmem:[%s165 + $0x60] sm:$0xff]
      %v188 = vld [vmem:[%s165 + $0x68] sm:$0xff]
      %v189 = vld [vmem:[%s165 + $0x70] sm:$0xff]
      %v190 = vld [vmem:[%s165 + $0x78] sm:$0xff]
      %v191 = vld [vmem:[%s165 + $0x80] sm:$0xff]
      %v192 = vld [vmem:[%s165 + $0x88] sm:$0xff]
      %v193 = vld [vmem:[%s165 + $0x90] sm:$0xff]
      %v194 = vld [vmem:[%s165 + $0x98] sm:$0xff]
      %v195 = vld [vmem:[%s165 + $0xa0] sm:$0xff]
      %v196 = vld [vmem:[%s165 + $0xa8] sm:$0xff]
      %v197 = vld [vmem:[%s165 + $0xb0] sm:$0xff]
      %v198 = vld [vmem:[%s165 + $0xb8] sm:$0xff]
      %v199 = vld [vmem:[%s165 + $0xc0] sm:$0xff]
      %v200 = vld [vmem:[%s165 + $0xc8] sm:$0xff]
      %v201 = vld [vmem:[%s165 + $0xd0] sm:$0xff]
      %v202 = vld [vmem:[%s165 + $0xd8] sm:$0xff]
      %v203 = vld [vmem:[%s165 + $0xe0] sm:$0xff]
      %v204 = vld [vmem:[%s165 + $0xe8] sm:$0xff]
      %v205 = vld [vmem:[%s165 + $0xf0] sm:$0xff]
      %v206 = vld [vmem:[%s165 + $0xf8] sm:$0xff]
      %v207 = vld [vmem:[%s165 + $0x100] sm:$0xff]
      %v208 = vld [vmem:[%s165 + $0x108] sm:$0xff]
      %v209 = vld [vmem:[%s165 + $0x110] sm:$0xff]
      %v210 = vld [vmem:[%s165 + $0x118] sm:$0xff]
      %v211 = vld [vmem:[%s165 + $0x120] sm:$0xff]
      %v212 = vld [vmem:[%s165 + $0x128] sm:$0xff]
      %v213 = vld [vmem:[%s165 + $0x130] sm:$0xff]
      %v214 = vld [vmem:[%s165 + $0x138] sm:$0xff]
      %v215 = vld [vmem:[%s165 + $0x140] sm:$0xff]
      %v216 = vld [vmem:[%s165 + $0x148] sm:$0xff]
      %v217 = vld [vmem:[%s165 + $0x150] sm:$0xff]
      %v218 = vld [vmem:[%s165 + $0x158] sm:$0xff]
      %v219 = vld [vmem:[%s165 + $0x160] sm:$0xff]
      %v220 = vld [vmem:[%s165 + $0x168] sm:$0xff]
      %v221 = vld [vmem:[%s165 + $0x170] sm:$0xff]
      %v222 = vld [vmem:[%s165 + $0x178] sm:$0xff]
      %v223 = vld [vmem:[%s165 + $0x180] sm:$0xff]
      %v224 = vld [vmem:[%s165 + $0x188] sm:$0xff]
      %v225 = vld [vmem:[%s165 + $0x190] sm:$0xff]
      %v226 = vld [vmem:[%s165 + $0x198] sm:$0xff]
      %v227 = vld [vmem:[%s165 + $0x1a0] sm:$0xff]
      %v228 = vld [vmem:[%s165 + $0x1a8] sm:$0xff]
      %v229 = vld [vmem:[%s165 + $0x1b0] sm:$0xff]
      %v230 = vld [vmem:[%s165 + $0x1b8] sm:$0xff]
      %v231 = vld [vmem:[%s165 + $0x1c0] sm:$0xff]
      %v232 = vld [vmem:[%s165 + $0x1c8] sm:$0xff]
      %v233 = vld [vmem:[%s165 + $0x1d0] sm:$0xff]
      %v234 = vld [vmem:[%s165 + $0x1d8] sm:$0xff]
      %v235 = vld [vmem:[%s165 + $0x1e0] sm:$0xff]
      %v236 = vld [vmem:[%s165 + $0x1e8] sm:$0xff]
      %v237 = vld [vmem:[%s165 + $0x1f0] sm:$0xff]
      %v238 = vld [vmem:[%s165 + $0x1f8] sm:$0xff]
      %v239 = vld [vmem:[%s165 + $0x200] sm:$0xff]
      %v240 = vld [vmem:[%s165 + $0x208] sm:$0xff]
      %v241 = vld [vmem:[%s165 + $0x210] sm:$0xff]
      %v242 = vld [vmem:[%s165 + $0x218] sm:$0xff]
      %v243 = vld [vmem:[%s165 + $0x220] sm:$0xff]
      %v244 = vld [vmem:[%s165 + $0x228] sm:$0xff]
      %v245 = vld [vmem:[%s165 + $0x230] sm:$0xff]
      %v246 = vld [vmem:[%s165 + $0x238] sm:$0xff]
      %v247 = vld [vmem:[%s165 + $0x240] sm:$0xff]
      %v248 = vld [vmem:[%s165 + $0x248] sm:$0xff]
      %v249 = vld [vmem:[%s165 + $0x250] sm:$0xff]
      %v250 = vld [vmem:[%s165 + $0x258] sm:$0xff]
      %v251 = vld [vmem:[%s165 + $0x260] sm:$0xff]
      %v252 = vld [vmem:[%s165 + $0x268] sm:$0xff]
      %v253 = vld [vmem:[%s165 + $0x270] sm:$0xff]
      %v254 = vld [vmem:[%s165 + $0x278] sm:$0xff]
      %v255 = vld [vmem:[%s165 + $0x280] sm:$0xff]
      %v256 = vld [vmem:[%s165 + $0x288] sm:$0xff]
      %v257 = vld [vmem:[%s165 + $0x290] sm:$0xff]
      %v258 = vld [vmem:[%s165 + $0x298] sm:$0xff]
      %v259 = vld [vmem:[%s165 + $0x2a0] sm:$0xff]
      %v260 = vld [vmem:[%s165 + $0x2a8] sm:$0xff]
      %v261 = vld [vmem:[%s165 + $0x2b0] sm:$0xff]
      %v262 = vld [vmem:[%s165 + $0x2b8] sm:$0xff]
      %v263 = vld [vmem:[%s165 + $0x2c0] sm:$0xff]
      %v264 = vld [vmem:[%s165 + $0x2c8] sm:$0xff]
      %v265 = vld [vmem:[%s165 + $0x2d0] sm:$0xff]
      %v266 = vld [vmem:[%s165 + $0x2d8] sm:$0xff]
      %v267 = vld [vmem:[%s165 + $0x2e0] sm:$0xff]
      %v268 = vld [vmem:[%s165 + $0x2e8] sm:$0xff]
      %v269 = vld [vmem:[%s165 + $0x2f0] sm:$0xff]
      %v270 = vld [vmem:[%s165 + $0x2f8] sm:$0xff]
      %v271 = vld [vmem:[%s165 + $0x300] sm:$0xff]
      %v272 = vld [vmem:[%s165 + $0x308] sm:$0xff]
      %v273 = vld [vmem:[%s165 + $0x310] sm:$0xff]
      %v274 = vld [vmem:[%s165 + $0x318] sm:$0xff]
      %v275 = vld [vmem:[%s165 + $0x320] sm:$0xff]
      %v276 = vld [vmem:[%s165 + $0x328] sm:$0xff]
      %v277 = vld [vmem:[%s165 + $0x330] sm:$0xff]
      %v278 = vld [vmem:[%s165 + $0x338] sm:$0xff]
      %v279 = vld [vmem:[%s165 + $0x340] sm:$0xff]
      %v280 = vld [vmem:[%s165 + $0x348] sm:$0xff]
      %v281 = vld [vmem:[%s165 + $0x350] sm:$0xff]
      %v282 = vld [vmem:[%s165 + $0x358] sm:$0xff]
      %v283 = vld [vmem:[%s165 + $0x360] sm:$0xff]
      %v284 = vld [vmem:[%s165 + $0x368] sm:$0xff]
      %v285 = vld [vmem:[%s165 + $0x370] sm:$0xff]
      %v286 = vld [vmem:[%s165 + $0x378] sm:$0xff]
      %v287 = vld [vmem:[%s165 + $0x380] sm:$0xff]
      %v288 = vld [vmem:[%s165 + $0x388] sm:$0xff]
      %v289 = vld [vmem:[%s165 + $0x390] sm:$0xff]
      %v290 = vld [vmem:[%s165 + $0x398] sm:$0xff]
      %v291 = vld [vmem:[%s165 + $0x3a0] sm:$0xff]
      %v292 = vld [vmem:[%s165 + $0x3a8] sm:$0xff]
      %v293 = vld [vmem:[%s165 + $0x3b0] sm:$0xff]
      %v294 = vld [vmem:[%s165 + $0x3b8] sm:$0xff]
      %v295 = vld [vmem:[%s165 + $0x3c0] sm:$0xff]
      %v296 = vld [vmem:[%s165 + $0x3c8] sm:$0xff]
      %v297 = vld [vmem:[%s165 + $0x3d0] sm:$0xff]
      %v298 = vld [vmem:[%s165 + $0x3d8] sm:$0xff]
      %v299 = vld [vmem:[%s165 + $0x3e0] sm:$0xff]
      %v300 = vld [vmem:[%s165 + $0x3e8] sm:$0xff]
      %v301 = vld [vmem:[%s165 + $0x3f0] sm:$0x7]
      %v302 = vld [vmem:[%s165 + $0x3f8] sm:$0x7]
      %v303 = vld [vmem:[%s165 + $0x400] sm:$0x7]
      %v304 = vld [vmem:[%s165 + $0x408] sm:$0x7]
      %v305 = vld [vmem:[%s165 + $0x410] sm:$0x7]
      %v306 = vld [vmem:[%s165 + $0x418] sm:$0x7]
      %v307 = vld [vmem:[%s165 + $0x420] sm:$0x7]
      %v308 = vld [vmem:[%s2] sm:$0xff]
      %v309 = vld [vmem:[%s2 + $0x8] sm:$0xff]
      %311 = vset.pattern.permute.xlu0 0
      %312 = vperm.xlu0 %311, %v308
      %v313 = vpop.permute.xlu0 %312
      %316 = vset.pattern.permute.xlu0 0
      %317 = vperm.xlu0 %316, %v309
      %v318 = vpop.permute.xlu0 %317
      %vm320 = vcmask 154624
      %v322 = vsel %vm320, %v172, 0
      %v325 = vsel %vm320, %v174, 0
      %vm327 = vcmask 1042432
      %v329 = vsel %vm327, %v301, 0
      %v332 = vsel %vm327, %v302, 0
      %v335 = vsel %vm327, %v303, 0
      %v338 = vsel %vm327, %v304, 0
      %v341 = vsel %vm327, %v305, 0
      %v344 = vsel %vm327, %v306, 0
      %v347 = vsel %vm327, %v307, 0
      %349 = vmatprep.subr.mxu0 %v176
      %350 = vmatpush1.msra.mxu0 %v175
      %351 = vmatprep.subr.mxu0 %v183
      %352 = vmatpush1.msra.mxu0 %v182
      %353 = vmatprep.subr.mxu0 %v190
      %354 = vmatpush1.msra.mxu0 %v189
      %355 = vmatprep.subr.mxu0 %v197
      %356 = vmatpush1.msra.mxu0 %v196
      %357 = vmatprep.subr.mxu0 %v204
      %358 = vmatpush1.msra.mxu0 %v203
      %359 = vmatprep.subr.mxu0 %v211
      %360 = vmatpush1.msra.mxu0 %v210
      %361 = vmatprep.subr.mxu0 %v218
      %362 = vmatpush1.msra.mxu0 %v217
      %363 = vmatprep.subr.mxu0 %v225
      %364 = vmatpush1.msra.mxu0 %v224
      %365 = vmatprep.subr.mxu0 %v232
      %366 = vmatpush1.msra.mxu0 %v231
      %367 = vmatprep.subr.mxu0 %v239
      %368 = vmatpush1.msra.mxu0 %v238
      %369 = vmatprep.subr.mxu0 %v246
      %370 = vmatpush1.msra.mxu0 %v245
      %371 = vmatprep.subr.mxu0 %v253
      %372 = vmatpush1.msra.mxu0 %v252
      %373 = vmatprep.subr.mxu0 %v260
      %374 = vmatpush1.msra.mxu0 %v259
      %375 = vmatprep.subr.mxu0 %v267
      %376 = vmatpush1.msra.mxu0 %v266
      %377 = vmatprep.subr.mxu0 %v274
      %378 = vmatpush1.msra.mxu0 %v273
      %379 = vmatprep.subr.mxu0 %v281
      %380 = vmatpush1.msra.mxu0 %v280
      %381 = vmatprep.subr.mxu0 %v288
      %382 = vmatpush1.msra.mxu0 %v287
      %383 = vmatprep.subr.mxu0 %v295
      %384 = vmatpush1.msra.mxu0 %v294
      %385 = vmatprep.subr.mxu0 %v332
      %386 = vmatpush1.msra.mxu0 %v329
      %387 = vmatprep.subr.mxu0 0.0
      %388 = vmatpush1.msra.mxu0 0.0
      %389 = vmatprep.subr.mxu0 0.0
      %390 = vmatpush1.msra.mxu0 0.0
      %391 = vmatprep.subr.mxu0 0.0
      %392 = vmatpush1.msra.mxu0 0.0
      %393 = vmatprep.subr.mxu0 0.0
      %394 = vmatpush1.msra.mxu0 0.0
      %395 = vmatprep.subr.mxu0 0.0
      %396 = vmatpush1.msra.mxu0 0.0
      %397 = vmatprep.subr.mxu0 0.0
      %398 = vmatpush1.msra.mxu0 0.0
      %399 = vmatprep.subr.mxu0 0.0
      %400 = vmatpush1.msra.mxu0 0.0
      %401 = vmatprep.subr.mxu0 0.0
      %402 = vmatpush1.msra.mxu0 0.0
      %403 = vmatprep.subr.mxu0 0.0
      %404 = vmatpush1.msra.mxu0 0.0
      %405 = vmatprep.subr.mxu0 0.0
      %406 = vmatpush1.msra.mxu0 0.0
      %407 = vmatprep.subr.mxu0 0.0
      %408 = vmatpush1.msra.mxu0 0.0
      %409 = vmatprep.subr.mxu0 0.0
      %410 = vmatpush1.msra.mxu0 0.0
      %411 = vmatprep.subr.mxu0 0.0
      %412 = vmatpush1.msra.mxu0 0.0
      %413 = vmatprep.mubr.f32.mxu0 %v322
      %414 = vmatmul.mubr.f32.gmra.mrb[0].mxu0 %v171
      %v415 = vpop.f32.mrb[0].mxu0
      %v416 = vadd.f32 %v313, %v415
      %v417 = vpop.f32.mrb[0].mxu0
      %v418 = vadd.f32 %v313, %v417
      %419 = vmatprep.mubr.f32.mxu0 %v325
      %420 = vmatmul.mubr.f32.gmra.mrb[0].mxu0 %v173
      %v421 = vpop.f32.mrb[0].mxu0
      %v422 = vadd.f32 %v318, %v421
      %v423 = vpop.f32.mrb[0].mxu0
      %v424 = vadd.f32 %v318, %v423
      %425 = vdwg.mxu0
      %426 = vmatprep.subr.mxu0 %v178
      %427 = vmatpush1.msra.mxu0 %v177
      %428 = vmatprep.subr.mxu0 %v185
      %429 = vmatpush1.msra.mxu0 %v184
      %430 = vmatprep.subr.mxu0 %v192
      %431 = vmatpush1.msra.mxu0 %v191
      %432 = vmatprep.subr.mxu0 %v199
      %433 = vmatpush1.msra.mxu0 %v198
      %434 = vmatprep.subr.mxu0 %v206
      %435 = vmatpush1.msra.mxu0 %v205
      %436 = vmatprep.subr.mxu0 %v213
      %437 = vmatpush1.msra.mxu0 %v212
      %438 = vmatprep.subr.mxu0 %v220
      %439 = vmatpush1.msra.mxu0 %v219
      %440 = vmatprep.subr.mxu0 %v227
      %441 = vmatpush1.msra.mxu0 %v226
      %442 = vmatprep.subr.mxu0 %v234
      %443 = vmatpush1.msra.mxu0 %v233
      %444 = vmatprep.subr.mxu0 %v241
      %445 = vmatpush1.msra.mxu0 %v240
      %446 = vmatprep.subr.mxu0 %v248
      %447 = vmatpush1.msra.mxu0 %v247
      %448 = vmatprep.subr.mxu0 %v255
      %449 = vmatpush1.msra.mxu0 %v254
      %450 = vmatprep.subr.mxu0 %v262
      %451 = vmatpush1.msra.mxu0 %v261
      %452 = vmatprep.subr.mxu0 %v269
      %453 = vmatpush1.msra.mxu0 %v268
      %454 = vmatprep.subr.mxu0 %v276
      %455 = vmatpush1.msra.mxu0 %v275
      %456 = vmatprep.subr.mxu0 %v283
      %457 = vmatpush1.msra.mxu0 %v282
      %458 = vmatprep.subr.mxu0 %v290
      %459 = vmatpush1.msra.mxu0 %v289
      %460 = vmatprep.subr.mxu0 %v297
      %461 = vmatpush1.msra.mxu0 %v296
      %462 = vmatprep.subr.mxu0 %v338
      %463 = vmatpush1.msra.mxu0 %v335
      %464 = vmatprep.subr.mxu0 0.0
      %465 = vmatpush1.msra.mxu0 0.0
      %466 = vmatprep.subr.mxu0 0.0
      %467 = vmatpush1.msra.mxu0 0.0
      %468 = vmatprep.subr.mxu0 0.0
      %469 = vmatpush1.msra.mxu0 0.0
      %470 = vmatprep.subr.mxu0 0.0
      %471 = vmatpush1.msra.mxu0 0.0
      %472 = vmatprep.subr.mxu0 0.0
      %473 = vmatpush1.msra.mxu0 0.0
      %474 = vmatprep.subr.mxu0 0.0
      %475 = vmatpush1.msra.mxu0 0.0
      %476 = vmatprep.subr.mxu0 0.0
      %477 = vmatpush1.msra.mxu0 0.0
      %478 = vmatprep.subr.mxu0 0.0
      %479 = vmatpush1.msra.mxu0 0.0
      %480 = vmatprep.subr.mxu0 0.0
      %481 = vmatpush1.msra.mxu0 0.0
      %482 = vmatprep.subr.mxu0 0.0
      %483 = vmatpush1.msra.mxu0 0.0
      %484 = vmatprep.subr.mxu0 0.0
      %485 = vmatpush1.msra.mxu0 0.0
      %486 = vmatprep.subr.mxu0 0.0
      %487 = vmatpush1.msra.mxu0 0.0
      %488 = vmatprep.subr.mxu0 0.0
      %489 = vmatpush1.msra.mxu0 0.0
      %490 = vmatprep.mubr.f32.mxu0 %v322
      %491 = vmatmul.mubr.f32.gmra.mrb[0].mxu0 %v171
      %v492 = vpop.f32.mrb[0].mxu0
      %v493 = vadd.f32 %v313, %v492
      %v494 = vpop.f32.mrb[0].mxu0
      %v495 = vadd.f32 %v313, %v494
      %496 = vmatprep.mubr.f32.mxu0 %v325
      %497 = vmatmul.mubr.f32.gmra.mrb[0].mxu0 %v173
      %v498 = vpop.f32.mrb[0].mxu0
      %v499 = vadd.f32 %v318, %v498
      %v500 = vpop.f32.mrb[0].mxu0
      %v501 = vadd.f32 %v318, %v500
      %502 = vdwg.mxu0
      %503 = vmatprep.subr.mxu0 %v180
      %504 = vmatpush1.msra.mxu0 %v179
      %505 = vmatprep.subr.mxu0 %v187
      %506 = vmatpush1.msra.mxu0 %v186
      %507 = vmatprep.subr.mxu0 %v194
      %508 = vmatpush1.msra.mxu0 %v193
      %509 = vmatprep.subr.mxu0 %v201
      %510 = vmatpush1.msra.mxu0 %v200
      %511 = vmatprep.subr.mxu0 %v208
      %512 = vmatpush1.msra.mxu0 %v207
      %513 = vmatprep.subr.mxu0 %v215
      %514 = vmatpush1.msra.mxu0 %v214
      %515 = vmatprep.subr.mxu0 %v222
      %516 = vmatpush1.msra.mxu0 %v221
      %517 = vmatprep.subr.mxu0 %v229
      %518 = vmatpush1.msra.mxu0 %v228
      %519 = vmatprep.subr.mxu0 %v236
      %520 = vmatpush1.msra.mxu0 %v235
      %521 = vmatprep.subr.mxu0 %v243
      %522 = vmatpush1.msra.mxu0 %v242
      %523 = vmatprep.subr.mxu0 %v250
      %524 = vmatpush1.msra.mxu0 %v249
      %525 = vmatprep.subr.mxu0 %v257
      %526 = vmatpush1.msra.mxu0 %v256
      %527 = vmatprep.subr.mxu0 %v264
      %528 = vmatpush1.msra.mxu0 %v263
      %529 = vmatprep.subr.mxu0 %v271
      %530 = vmatpush1.msra.mxu0 %v270
      %531 = vmatprep.subr.mxu0 %v278
      %532 = vmatpush1.msra.mxu0 %v277
      %533 = vmatprep.subr.mxu0 %v285
      %534 = vmatpush1.msra.mxu0 %v284
      %535 = vmatprep.subr.mxu0 %v292
      %536 = vmatpush1.msra.mxu0 %v291
      %537 = vmatprep.subr.mxu0 %v299
      %538 = vmatpush1.msra.mxu0 %v298
      %539 = vmatprep.subr.mxu0 %v344
      %540 = vmatpush1.msra.mxu0 %v341
      %541 = vmatprep.subr.mxu0 0.0
      %542 = vmatpush1.msra.mxu0 0.0
      %543 = vmatprep.subr.mxu0 0.0
      %544 = vmatpush1.msra.mxu0 0.0
      %545 = vmatprep.subr.mxu0 0.0
      %546 = vmatpush1.msra.mxu0 0.0
      %547 = vmatprep.subr.mxu0 0.0
      %548 = vmatpush1.msra.mxu0 0.0
      %549 = vmatprep.subr.mxu0 0.0
      %550 = vmatpush1.msra.mxu0 0.0
      %551 = vmatprep.subr.mxu0 0.0
      %552 = vmatpush1.msra.mxu0 0.0
      %553 = vmatprep.subr.mxu0 0.0
      %554 = vmatpush1.msra.mxu0 0.0
      %555 = vmatprep.subr.mxu0 0.0
      %556 = vmatpush1.msra.mxu0 0.0
      %557 = vmatprep.subr.mxu0 0.0
      %558 = vmatpush1.msra.mxu0 0.0
      %559 = vmatprep.subr.mxu0 0.0
      %560 = vmatpush1.msra.mxu0 0.0
      %561 = vmatprep.subr.mxu0 0.0
      %562 = vmatpush1.msra.mxu0 0.0
      %563 = vmatprep.subr.mxu0 0.0
      %564 = vmatpush1.msra.mxu0 0.0
      %565 = vmatprep.subr.mxu0 0.0
      %566 = vmatpush1.msra.mxu0 0.0
      %567 = vmatprep.mubr.f32.mxu0 %v322
      %568 = vmatmul.mubr.f32.gmra.mrb[0].mxu0 %v171
      %v569 = vpop.f32.mrb[0].mxu0
      %v570 = vadd.f32 %v313, %v569
      %v571 = vpop.f32.mrb[0].mxu0
      %v572 = vadd.f32 %v313, %v571
      %573 = vmatprep.mubr.f32.mxu0 %v325
      %574 = vmatmul.mubr.f32.gmra.mrb[0].mxu0 %v173
      %v575 = vpop.f32.mrb[0].mxu0
      %v576 = vadd.f32 %v318, %v575
      %v577 = vpop.f32.mrb[0].mxu0
      %v578 = vadd.f32 %v318, %v577
      %579 = vdwg.mxu0
      %580 = vmatprep.subr.mxu0 0.0
      %581 = vmatpush1.msra.mxu0 %v181
      %582 = vmatprep.subr.mxu0 0.0
      %583 = vmatpush1.msra.mxu0 %v188
      %584 = vmatprep.subr.mxu0 0.0
      %585 = vmatpush1.msra.mxu0 %v195
      %586 = vmatprep.subr.mxu0 0.0
      %587 = vmatpush1.msra.mxu0 %v202
      %588 = vmatprep.subr.mxu0 0.0
      %589 = vmatpush1.msra.mxu0 %v209
      %590 = vmatprep.subr.mxu0 0.0
      %591 = vmatpush1.msra.mxu0 %v216
      %592 = vmatprep.subr.mxu0 0.0
      %593 = vmatpush1.msra.mxu0 %v223
      %594 = vmatprep.subr.mxu0 0.0
      %595 = vmatpush1.msra.mxu0 %v230
      %596 = vmatprep.subr.mxu0 0.0
      %597 = vmatpush1.msra.mxu0 %v237
      %598 = vmatprep.subr.mxu0 0.0
      %599 = vmatpush1.msra.mxu0 %v244
      %600 = vmatprep.subr.mxu0 0.0
      %601 = vmatpush1.msra.mxu0 %v251
      %602 = vmatprep.subr.mxu0 0.0
      %603 = vmatpush1.msra.mxu0 %v258
      %604 = vmatprep.subr.mxu0 0.0
      %605 = vmatpush1.msra.mxu0 %v265
      %606 = vmatprep.subr.mxu0 0.0
      %607 = vmatpush1.msra.mxu0 %v272
      %608 = vmatprep.subr.mxu0 0.0
      %609 = vmatpush1.msra.mxu0 %v279
      %610 = vmatprep.subr.mxu0 0.0
      %611 = vmatpush1.msra.mxu0 %v286
      %612 = vmatprep.subr.mxu0 0.0
      %613 = vmatpush1.msra.mxu0 %v293
      %614 = vmatprep.subr.mxu0 0.0
      %615 = vmatpush1.msra.mxu0 %v300
      %616 = vmatprep.subr.mxu0 0.0
      %617 = vmatpush1.msra.mxu0 %v347
      %618 = vmatprep.subr.mxu0 0.0
      %619 = vmatpush1.msra.mxu0 0.0
      %620 = vmatprep.subr.mxu0 0.0
      %621 = vmatpush1.msra.mxu0 0.0
      %622 = vmatprep.subr.mxu0 0.0
      %623 = vmatpush1.msra.mxu0 0.0
      %624 = vmatprep.subr.mxu0 0.0
      %625 = vmatpush1.msra.mxu0 0.0
      %626 = vmatprep.subr.mxu0 0.0
      %627 = vmatpush1.msra.mxu0 0.0
      %628 = vmatprep.subr.mxu0 0.0
      %629 = vmatpush1.msra.mxu0 0.0
      %630 = vmatprep.subr.mxu0 0.0
      %631 = vmatpush1.msra.mxu0 0.0
      %632 = vmatprep.subr.mxu0 0.0
      %633 = vmatpush1.msra.mxu0 0.0
      %634 = vmatprep.subr.mxu0 0.0
      %635 = vmatpush1.msra.mxu0 0.0
      %636 = vmatprep.subr.mxu0 0.0
      %637 = vmatpush1.msra.mxu0 0.0
      %638 = vmatprep.subr.mxu0 0.0
      %639 = vmatpush1.msra.mxu0 0.0
      %640 = vmatprep.subr.mxu0 0.0
      %641 = vmatpush1.msra.mxu0 0.0
      %642 = vmatprep.subr.mxu0 0.0
      %643 = vmatpush1.msra.mxu0 0.0
      %644 = vmatprep.mubr.f32.mxu0 %v322
      %645 = vmatmul.mubr.f32.gmra.mrb[0].mxu0 %v171
      %v646 = vpop.f32.mrb[0].mxu0
      %v647 = vadd.f32 %v313, %v646
      %v648 = vpop.f32.mrb[0].mxu0
      %649 = vmatprep.mubr.f32.mxu0 %v325
      %650 = vmatmul.mubr.f32.gmra.mrb[0].mxu0 %v173
      %v651 = vpop.f32.mrb[0].mxu0
      %v652 = vadd.f32 %v318, %v651
      %v653 = vpop.f32.mrb[0].mxu0
      %654 = vdwg.mxu0
      %655 = vst [vmem:[%s170] sm:$0xff] %v416
      %656 = vst [vmem:[%s170 + $0x8] sm:$0xff] %v418
      %657 = vst [vmem:[%s170 + $0x10] sm:$0xff] %v493
      %658 = vst [vmem:[%s170 + $0x18] sm:$0xff] %v495
      %659 = vst [vmem:[%s170 + $0x20] sm:$0xff] %v570
      %660 = vst [vmem:[%s170 + $0x28] sm:$0xff] %v572
      %vm661 = vcmask 130048
      %662 = vst.msk [vmem:[%s170 + $0x30] sm:$0xff] %vm661, %v647
      %663 = vst [vmem:[%s170 + $0x38] sm:$0xff] %v422
      %664 = vst [vmem:[%s170 + $0x40] sm:$0xff] %v424
      %665 = vst [vmem:[%s170 + $0x48] sm:$0xff] %v499
      %666 = vst [vmem:[%s170 + $0x50] sm:$0xff] %v501
      %667 = vst [vmem:[%s170 + $0x58] sm:$0xff] %v576
      %668 = vst [vmem:[%s170 + $0x60] sm:$0xff] %v578
      %669 = vst.msk [vmem:[%s170 + $0x68] sm:$0xff] %vm661, %v652
      %p670 = scmp.lt.s32.totalorder %s14, 1
      %s671 = scalar_select %p670, %s14, 1
      %s672 = smul.addr %s671, 14
      %s673 = smul.addr %s672, 8
      %s674 = scalar_lea.vmem %s3, %s673
      // Predicated region
      $region33: #{test_model_forward.2} parent=31 // pred_check
        %p675 = pneg %p100
      $region34: #{test_model_forward.2} parent=31 // pred_check_branch
        %677 = sbr.rel (%p675) target = $region36
      $region35: #{test_model_forward.2} parent=31 // pred_region
        _
      $region36: #{test_model_forward.2} parent=31 // pred_fallthru
        _
    $region32: #{test_model_forward.2} parent=5 // pred_fallthru
      _
    %p678 = scmp.le.s32.totalorder 2, %s9
    // Predicated region
    $region37: #{test_model_forward.2} parent=5 // pred_check
      %p679 = pneg %p678
    $region38: #{test_model_forward.2} parent=5 // pred_check_branch
      %681 = sbr.rel (%p679) target = $region40
    $region39: #{test_model_forward.2} parent=5 // pred_region
      %s682 = ssub.s32 %s9, 2
      // Predicated region
      $region41: #{test_model_forward.2} parent=39 // pred_check
        %p683 = pneg %p106
      $region42: #{test_model_forward.2} parent=39 // pred_check_branch
        %685 = sbr.rel (%p683) target = $region44
      $region43: #{test_model_forward.2} parent=39 // pred_region
        %p686 = scmp.lt.s32.totalorder %s15, 1
        %s687 = scalar_select %p686, %s15, 1
        %s688 = smul.addr %s687, 14
        %s689 = smul.addr %s688, 8
        %s690 = scalar_lea.vmem %s3, %s689
      $region44: #{test_model_forward.2} parent=39 // pred_fallthru
        _
    $region40: #{test_model_forward.2} parent=5 // pred_fallthru
      _
  $region6: #{test_model_forward.2} parent=0 // loop_footer
    %s13 = sadd.s32 1, %s9
  $region7: #{test_model_forward.2} parent=0 // loop_footer_branch
    %8 = sbr.rel target = $region3
  $region8: #{test_model_forward.2} parent=0 // loop_exit
    _

// kernel: test_model_forward.3
$region0: #{test_model_forward.3}
  #allocation0 [shape = 'u32[]', space=smem, size = 0x4, offset = 0x4, fixed_abs, tag = 'smem constant byte address 0x4 - core index']
  #allocation1 [shape = 'u32[144,128]{1,0:T(1,128)}', space=vmem, size = 0x12000, scoped, tag = 'internal scratch']
  %s0 = inlined_call_operand.vmem [shape: f32[32,81], index: 0, kind: input, shape index: {}]
  %s1 = inlined_call_operand.vmem [shape: f32[81,1024], index: 1, kind: input, shape index: {}]
  %s2 = inlined_call_operand.vmem [shape: f32[1,1024], index: 2, kind: input, shape index: {}]
  %s3 = inlined_call_operand.vmem [shape: f32[1024,128], index: 3, kind: input, shape index: {}]
  %s4 = inlined_call_operand.vmem [shape: f32[1,128], index: 4, kind: input, shape index: {}]
  %s5 = inlined_call_operand.vmem [shape: f32[32,16], index: 5, kind: input, shape index: {}]
  %s6 = inlined_call_operand.vmem [shape: f32[16,1024], index: 6, kind: input, shape index: {}]
  %s7 = inlined_call_operand.vmem [shape: f32[1,1024], index: 7, kind: input, shape index: {}]
  %s8 = inlined_call_operand.vmem [shape: f32[1024,128], index: 8, kind: input, shape index: {}]
  %s9 = inlined_call_operand.vmem [shape: f32[1,128], index: 9, kind: input, shape index: {}]
  %s10 = inlined_call_operand.vmem [shape: f32[32,4], index: 10, kind: input, shape index: {}]
  %s11 = inlined_call_operand.vmem [shape: f32[4,1024], index: 11, kind: input, shape index: {}]
  %s12 = inlined_call_operand.vmem [shape: f32[1,1024], index: 12, kind: input, shape index: {}]
  %s13 = inlined_call_operand.vmem [shape: f32[1024,128], index: 13, kind: input, shape index: {}]
  %s14 = inlined_call_operand.vmem [shape: f32[1,128], index: 14, kind: input, shape index: {}]
  %s15 = inlined_call_operand.vmem [shape: f32[32,128], index: 15, kind: output, shape index: {0}]
  %s16 = inlined_call_operand.vmem [shape: f32[32,128], index: 16, kind: output, shape index: {1}]
  %s17 = inlined_call_operand.vmem [shape: f32[32,128], index: 17, kind: output, shape index: {2}]
  %s18 = inlined_call_operand.vmem [shape: f32[32,1024], index: 18, kind: output, shape index: {3}]
  %s19 = inlined_call_operand.vmem [shape: f32[32,1024], index: 19, kind: output, shape index: {4}]
  %s20 = inlined_call_operand.vmem [shape: f32[32,1024], index: 20, kind: output, shape index: {5}]
  %21 = xla_tuple %s15, %s16, %s17, %s18, %s19, %s20
  %s22 = sld [smem:[#allocation0]]
  $region110: #{test_model_forward.3} parent=0
    _
  %s24 = ssub.s32 1, %s22
  %s25 = scalar_select 0, %s24, %s22
  // Predicated region
  $region2: #{test_model_forward.3} parent=0 // pred_check
    _
  $region3: #{test_model_forward.3} parent=0 // pred_check_branch
    %27 = sbr.rel (0) target = $region5
  $region4: #{test_model_forward.3} parent=0 // pred_region
    _
  $region5: #{test_model_forward.3} parent=0 // pred_fallthru
    _
  // Predicated region
  $region6: #{test_model_forward.3} parent=0 // pred_check
    _
  $region7: #{test_model_forward.3} parent=0 // pred_check_branch
    %29 = sbr.rel (0) target = $region9
  $region8: #{test_model_forward.3} parent=0 // pred_region
    _
  $region9: #{test_model_forward.3} parent=0 // pred_fallthru
    _
  // Predicated region
  $region10: #{test_model_forward.3} parent=0 // pred_check
    _
  $region11: #{test_model_forward.3} parent=0 // pred_check_branch
    %31 = sbr.rel (0) target = $region13
  $region12: #{test_model_forward.3} parent=0 // pred_region
    _
  $region13: #{test_model_forward.3} parent=0 // pred_fallthru
    _
  // Predicated region
  $region14: #{test_model_forward.3} parent=0 // pred_check
    _
  $region15: #{test_model_forward.3} parent=0 // pred_check_branch
    %33 = sbr.rel (0) target = $region17
  $region16: #{test_model_forward.3} parent=0 // pred_region
    _
  $region17: #{test_model_forward.3} parent=0 // pred_fallthru
    _
  // Predicated region
  $region18: #{test_model_forward.3} parent=0 // pred_check
    _
  $region19: #{test_model_forward.3} parent=0 // pred_check_branch
    %35 = sbr.rel (0) target = $region21
  $region20: #{test_model_forward.3} parent=0 // pred_region
    _
  $region21: #{test_model_forward.3} parent=0 // pred_fallthru
    _
  // Predicated region
  $region22: #{test_model_forward.3} parent=0 // pred_check
    _
  $region23: #{test_model_forward.3} parent=0 // pred_check_branch
    %37 = sbr.rel (0) target = $region25
  $region24: #{test_model_forward.3} parent=0 // pred_region
    _
  $region25: #{test_model_forward.3} parent=0 // pred_fallthru
    _
  // Predicated region
  $region26: #{test_model_forward.3} parent=0 // pred_check
    _
  $region27: #{test_model_forward.3} parent=0 // pred_check_branch
    %39 = sbr.rel (0) target = $region29
  $region28: #{test_model_forward.3} parent=0 // pred_region
    _
  $region29: #{test_model_forward.3} parent=0 // pred_fallthru
    _
  // Predicated region
  $region30: #{test_model_forward.3} parent=0 // pred_check
    _
  $region31: #{test_model_forward.3} parent=0 // pred_check_branch
    %41 = sbr.rel (0) target = $region33
  $region32: #{test_model_forward.3} parent=0 // pred_region
    _
  $region33: #{test_model_forward.3} parent=0 // pred_fallthru
    _
  // Predicated region
  $region34: #{test_model_forward.3} parent=0 // pred_check
    _
  $region35: #{test_model_forward.3} parent=0 // pred_check_branch
    %43 = sbr.rel (0) target = $region37
  $region36: #{test_model_forward.3} parent=0 // pred_region
    _
  $region37: #{test_model_forward.3} parent=0 // pred_fallthru
    _
  // Predicated region
  $region38: #{test_model_forward.3} parent=0 // pred_check
    _
  $region39: #{test_model_forward.3} parent=0 // pred_check_branch
    %45 = sbr.rel (0) target = $region41
  $region40: #{test_model_forward.3} parent=0 // pred_region
    _
  $region41: #{test_model_forward.3} parent=0 // pred_fallthru
    _
  // Predicated region
  $region42: #{test_model_forward.3} parent=0 // pred_check
    _
  $region43: #{test_model_forward.3} parent=0 // pred_check_branch
    %47 = sbr.rel (0) target = $region45
  $region44: #{test_model_forward.3} parent=0 // pred_region
    _
  $region45: #{test_model_forward.3} parent=0 // pred_fallthru
    _
  // Predicated region
  $region46: #{test_model_forward.3} parent=0 // pred_check
    _
  $region47: #{test_model_forward.3} parent=0 // pred_check_branch
    %49 = sbr.rel (0) target = $region49
  $region48: #{test_model_forward.3} parent=0 // pred_region
    _
  $region49: #{test_model_forward.3} parent=0 // pred_fallthru
    _
  // Predicated region
  $region50: #{test_model_forward.3} parent=0 // pred_check
    _
  $region51: #{test_model_forward.3} parent=0 // pred_check_branch
    %51 = sbr.rel (0) target = $region53
  $region52: #{test_model_forward.3} parent=0 // pred_region
    _
  $region53: #{test_model_forward.3} parent=0 // pred_fallthru
    _
  // Predicated region
  $region54: #{test_model_forward.3} parent=0 // pred_check
    _
  $region55: #{test_model_forward.3} parent=0 // pred_check_branch
    %53 = sbr.rel (0) target = $region57
  $region56: #{test_model_forward.3} parent=0 // pred_region
    _
  $region57: #{test_model_forward.3} parent=0 // pred_fallthru
    _
  // Predicated region
  $region58: #{test_model_forward.3} parent=0 // pred_check
    _
  $region59: #{test_model_forward.3} parent=0 // pred_check_branch
    %55 = sbr.rel (0) target = $region61
  $region60: #{test_model_forward.3} parent=0 // pred_region
    _
  $region61: #{test_model_forward.3} parent=0 // pred_fallthru
    _
  %v56 = vld [vmem:[%s0] sm:$0xff]
  %v57 = vld [vmem:[%s0 + $0x8] sm:$0xff]
  %v58 = vld [vmem:[%s0 + $0x10] sm:$0xff]
  %v59 = vld [vmem:[%s0 + $0x18] sm:$0xff]
  %v60 = vld [vmem:[%s1] sm:$0xff]
  %v61 = vld [vmem:[%s1 + $0x8] sm:$0xff]
  %v62 = vld [vmem:[%s1 + $0x10] sm:$0xff]
  %v63 = vld [vmem:[%s1 + $0x18] sm:$0xff]
  %v64 = vld [vmem:[%s1 + $0x20] sm:$0xff]
  %v65 = vld [vmem:[%s1 + $0x28] sm:$0xff]
  %v66 = vld [vmem:[%s1 + $0x30] sm:$0xff]
  %v67 = vld [vmem:[%s1 + $0x38] sm:$0xff]
  %v68 = vld [vmem:[%s1 + $0x40] sm:$0xff]
  %v69 = vld [vmem:[%s1 + $0x48] sm:$0xff]
  %v70 = vld [vmem:[%s1 + $0x50] sm:$0xff]
  %v71 = vld [vmem:[%s1 + $0x58] sm:$0xff]
  %v72 = vld [vmem:[%s1 + $0x60] sm:$0xff]
  %v73 = vld [vmem:[%s1 + $0x68] sm:$0xff]
  %v74 = vld [vmem:[%s1 + $0x70] sm:$0xff]
  %v75 = vld [vmem:[%s1 + $0x78] sm:$0xff]
  %v76 = vld [vmem:[%s1 + $0x80] sm:$0xff]
  %v77 = vld [vmem:[%s1 + $0x88] sm:$0xff]
  %v78 = vld [vmem:[%s1 + $0x90] sm:$0xff]
  %v79 = vld [vmem:[%s1 + $0x98] sm:$0xff]
  %v80 = vld [vmem:[%s1 + $0xa0] sm:$0xff]
  %v81 = vld [vmem:[%s1 + $0xa8] sm:$0xff]
  %v82 = vld [vmem:[%s1 + $0xb0] sm:$0xff]
  %v83 = vld [vmem:[%s1 + $0xb8] sm:$0xff]
  %v84 = vld [vmem:[%s1 + $0xc0] sm:$0xff]
  %v85 = vld [vmem:[%s1 + $0xc8] sm:$0xff]
  %v86 = vld [vmem:[%s1 + $0xd0] sm:$0xff]
  %v87 = vld [vmem:[%s1 + $0xd8] sm:$0xff]
  %v88 = vld [vmem:[%s1 + $0xe0] sm:$0xff]
  %v89 = vld [vmem:[%s1 + $0xe8] sm:$0xff]
  %v90 = vld [vmem:[%s1 + $0xf0] sm:$0xff]
  %v91 = vld [vmem:[%s1 + $0xf8] sm:$0xff]
  %v92 = vld [vmem:[%s1 + $0x100] sm:$0xff]
  %v93 = vld [vmem:[%s1 + $0x108] sm:$0xff]
  %v94 = vld [vmem:[%s1 + $0x110] sm:$0xff]
  %v95 = vld [vmem:[%s1 + $0x118] sm:$0xff]
  %v96 = vld [vmem:[%s1 + $0x120] sm:$0xff]
  %v97 = vld [vmem:[%s1 + $0x128] sm:$0xff]
  %v98 = vld [vmem:[%s1 + $0x130] sm:$0xff]
  %v99 = vld [vmem:[%s1 + $0x138] sm:$0xff]
  %v100 = vld [vmem:[%s1 + $0x140] sm:$0xff]
  %v101 = vld [vmem:[%s1 + $0x148] sm:$0xff]
  %v102 = vld [vmem:[%s1 + $0x150] sm:$0xff]
  %v103 = vld [vmem:[%s1 + $0x158] sm:$0xff]
  %v104 = vld [vmem:[%s1 + $0x160] sm:$0xff]
  %v105 = vld [vmem:[%s1 + $0x168] sm:$0xff]
  %v106 = vld [vmem:[%s1 + $0x170] sm:$0xff]
  %v107 = vld [vmem:[%s1 + $0x178] sm:$0xff]
  %v108 = vld [vmem:[%s1 + $0x180] sm:$0xff]
  %v109 = vld [vmem:[%s1 + $0x188] sm:$0xff]
  %v110 = vld [vmem:[%s1 + $0x190] sm:$0xff]
  %v111 = vld [vmem:[%s1 + $0x198] sm:$0xff]
  %v112 = vld [vmem:[%s1 + $0x1a0] sm:$0xff]
  %v113 = vld [vmem:[%s1 + $0x1a8] sm:$0xff]
  %v114 = vld [vmem:[%s1 + $0x1b0] sm:$0xff]
  %v115 = vld [vmem:[%s1 + $0x1b8] sm:$0xff]
  %v116 = vld [vmem:[%s1 + $0x1c0] sm:$0xff]
  %v117 = vld [vmem:[%s1 + $0x1c8] sm:$0xff]
  %v118 = vld [vmem:[%s1 + $0x1d0] sm:$0xff]
  %v119 = vld [vmem:[%s1 + $0x1d8] sm:$0xff]
  %v120 = vld [vmem:[%s1 + $0x1e0] sm:$0xff]
  %v121 = vld [vmem:[%s1 + $0x1e8] sm:$0xff]
  %v122 = vld [vmem:[%s1 + $0x1f0] sm:$0xff]
  %v123 = vld [vmem:[%s1 + $0x1f8] sm:$0xff]
  %v124 = vld [vmem:[%s1 + $0x200] sm:$0xff]
  %v125 = vld [vmem:[%s1 + $0x208] sm:$0xff]
  %v126 = vld [vmem:[%s1 + $0x210] sm:$0xff]
  %v127 = vld [vmem:[%s1 + $0x218] sm:$0xff]
  %v128 = vld [vmem:[%s1 + $0x220] sm:$0xff]
  %v129 = vld [vmem:[%s1 + $0x228] sm:$0xff]
  %v130 = vld [vmem:[%s1 + $0x230] sm:$0xff]
  %v131 = vld [vmem:[%s1 + $0x238] sm:$0xff]
  %v132 = vld [vmem:[%s1 + $0x240] sm:$0xff]
  %v133 = vld [vmem:[%s1 + $0x248] sm:$0xff]
  %v134 = vld [vmem:[%s1 + $0x250] sm:$0xff]
  %v135 = vld [vmem:[%s1 + $0x258] sm:$0xff]
  %v136 = vld [vmem:[%s1 + $0x260] sm:$0xff]
  %v137 = vld [vmem:[%s1 + $0x268] sm:$0xff]
  %v138 = vld [vmem:[%s1 + $0x270] sm:$0xff]
  %v139 = vld [vmem:[%s1 + $0x278] sm:$0xff]
  %v140 = vld [vmem:[%s1 + $0x280] sm:$0x1]
  %v141 = vld [vmem:[%s1 + $0x288] sm:$0x1]
  %v142 = vld [vmem:[%s1 + $0x290] sm:$0x1]
  %v143 = vld [vmem:[%s1 + $0x298] sm:$0x1]
  %v144 = vld [vmem:[%s1 + $0x2a0] sm:$0x1]
  %v145 = vld [vmem:[%s1 + $0x2a8] sm:$0x1]
  %v146 = vld [vmem:[%s1 + $0x2b0] sm:$0x1]
  %v147 = vld [vmem:[%s1 + $0x2b8] sm:$0x1]
  %v148 = vld [vmem:[%s2] sm:$0xff]
  %v150 = vlaneseq
  %v151 = vshrl.u32 %v150, 7
  %v152 = vsub.s32 0, %v151
  %v153 = vrot.slane %v148, %v152
  %v154 = vlaneseq
  %v155 = vshrl.u32 %v154, 7
  %v156 = vsub.s32 1, %v155
  %v157 = vrot.slane %v148, %v156
  %v158 = vlaneseq
  %v159 = vshrl.u32 %v158, 7
  %v160 = vsub.s32 2, %v159
  %v161 = vrot.slane %v148, %v160
  %v162 = vlaneseq
  %v163 = vshrl.u32 %v162, 7
  %v164 = vsub.s32 3, %v163
  %v165 = vrot.slane %v148, %v164
  %v166 = vlaneseq
  %v167 = vshrl.u32 %v166, 7
  %v168 = vsub.s32 4, %v167
  %v169 = vrot.slane %v148, %v168
  %v170 = vlaneseq
  %v171 = vshrl.u32 %v170, 7
  %v172 = vsub.s32 5, %v171
  %v173 = vrot.slane %v148, %v172
  %v174 = vlaneseq
  %v175 = vshrl.u32 %v174, 7
  %v176 = vsub.s32 6, %v175
  %v177 = vrot.slane %v148, %v176
  %v178 = vlaneseq
  %v179 = vshrl.u32 %v178, 7
  %v180 = vsub.s32 7, %v179
  %v181 = vrot.slane %v148, %v180
  %vm190 = vcmask 662528
  %v192 = vsel %vm190, %v56, 0
  %v195 = vsel %vm190, %v57, 0
  %v198 = vsel %vm190, %v58, 0
  %v201 = vsel %vm190, %v59, 0
  %vm203 = vcmask 1040384
  %v205 = vsel %vm203, %v140, 0
  %v208 = vsel %vm203, %v141, 0
  %v211 = vsel %vm203, %v142, 0
  %v214 = vsel %vm203, %v143, 0
  %v217 = vsel %vm203, %v144, 0
  %v220 = vsel %vm203, %v145, 0
  %v223 = vsel %vm203, %v146, 0
  %v226 = vsel %vm203, %v147, 0
  %228 = vmatprep.subr.mxu0 %v61
  %229 = vmatpush1.msra.mxu0 %v60
  %230 = vmatprep.subr.mxu0 %v69
  %231 = vmatpush1.msra.mxu0 %v68
  %232 = vmatprep.subr.mxu0 %v77
  %233 = vmatpush1.msra.mxu0 %v76
  %234 = vmatprep.subr.mxu0 %v85
  %235 = vmatpush1.msra.mxu0 %v84
  %236 = vmatprep.subr.mxu0 %v93
  %237 = vmatpush1.msra.mxu0 %v92
  %238 = vmatprep.subr.mxu0 %v101
  %239 = vmatpush1.msra.mxu0 %v100
  %240 = vmatprep.subr.mxu0 %v109
  %241 = vmatpush1.msra.mxu0 %v108
  %242 = vmatprep.subr.mxu0 %v117
  %243 = vmatpush1.msra.mxu0 %v116
  %244 = vmatprep.subr.mxu0 %v125
  %245 = vmatpush1.msra.mxu0 %v124
  %246 = vmatprep.subr.mxu0 %v133
  %247 = vmatpush1.msra.mxu0 %v132
  %248 = vmatprep.subr.mxu0 %v208
  %249 = vmatpush1.msra.mxu0 %v205
  %250 = vmatprep.subr.mxu0 0.0
  %251 = vmatpush1.msra.mxu0 0.0
  %252 = vmatprep.subr.mxu0 0.0
  %253 = vmatpush1.msra.mxu0 0.0
  %254 = vmatprep.subr.mxu0 0.0
  %255 = vmatpush1.msra.mxu0 0.0
  %256 = vmatprep.subr.mxu0 0.0
  %257 = vmatpush1.msra.mxu0 0.0
  %258 = vmatprep.subr.mxu0 0.0
  %259 = vmatpush1.msra.mxu0 0.0
  %260 = vmatprep.subr.mxu0 0.0
  %261 = vmatpush1.msra.mxu0 0.0
  %262 = vmatprep.subr.mxu0 0.0
  %263 = vmatpush1.msra.mxu0 0.0
  %264 = vmatprep.subr.mxu0 0.0
  %265 = vmatpush1.msra.mxu0 0.0
  %266 = vmatprep.subr.mxu0 0.0
  %267 = vmatpush1.msra.mxu0 0.0
  %268 = vmatprep.subr.mxu0 0.0
  %269 = vmatpush1.msra.mxu0 0.0
  %270 = vmatprep.subr.mxu0 0.0
  %271 = vmatpush1.msra.mxu0 0.0
  %272 = vmatprep.subr.mxu0 0.0
  %273 = vmatpush1.msra.mxu0 0.0
  %274 = vmatprep.subr.mxu0 0.0
  %275 = vmatpush1.msra.mxu0 0.0
  %276 = vmatprep.subr.mxu0 0.0
  %277 = vmatpush1.msra.mxu0 0.0
  %278 = vmatprep.subr.mxu0 0.0
  %279 = vmatpush1.msra.mxu0 0.0
  %280 = vmatprep.subr.mxu0 0.0
  %281 = vmatpush1.msra.mxu0 0.0
  %282 = vmatprep.subr.mxu0 0.0
  %283 = vmatpush1.msra.mxu0 0.0
  %284 = vmatprep.subr.mxu0 0.0
  %285 = vmatpush1.msra.mxu0 0.0
  %286 = vmatprep.subr.mxu0 0.0
  %287 = vmatpush1.msra.mxu0 0.0
  %288 = vmatprep.subr.mxu0 0.0
  %289 = vmatpush1.msra.mxu0 0.0
  %290 = vmatprep.subr.mxu0 0.0
  %291 = vmatpush1.msra.mxu0 0.0
  %292 = vmatprep.mubr.f32.mxu0 0.0
  %293 = vmatmul.mubr.f32.gmra.mrb[0].mxu0 %v192
  %v294 = vpop.f32.mrb[0].mxu0
  %v295 = vadd.f32 %v153, %v294
  %v296 = vpop.f32.mrb[0].mxu0
  %v297 = vadd.f32 %v157, %v296
  %298 = vmatprep.mubr.f32.mxu0 0.0
  %299 = vmatmul.mubr.f32.gmra.mrb[0].mxu0 %v195
  %v300 = vpop.f32.mrb[0].mxu0
  %v301 = vadd.f32 %v153, %v300
  %v302 = vpop.f32.mrb[0].mxu0
  %v303 = vadd.f32 %v157, %v302
  %304 = vmatprep.mubr.f32.mxu0 0.0
  %305 = vmatmul.mubr.f32.gmra.mrb[0].mxu0 %v198
  %v306 = vpop.f32.mrb[0].mxu0
  %v307 = vadd.f32 %v153, %v306
  %v308 = vpop.f32.mrb[0].mxu0
  %v309 = vadd.f32 %v157, %v308
  %310 = vmatprep.mubr.f32.mxu0 0.0
  %311 = vmatmul.mubr.f32.gmra.mrb[0].mxu0 %v201
  %v312 = vpop.f32.mrb[0].mxu0
  %v313 = vadd.f32 %v153, %v312
  %v314 = vpop.f32.mrb[0].mxu0
  %v315 = vadd.f32 %v157, %v314
  %316 = vdwg.mxu0
  %317 = vmatprep.subr.mxu0 %v63
  %318 = vmatpush1.msra.mxu0 %v62
  %319 = vmatprep.subr.mxu0 %v71
  %320 = vmatpush1.msra.mxu0 %v70
  %321 = vmatprep.subr.mxu0 %v79
  %322 = vmatpush1.msra.mxu0 %v78
  %323 = vmatprep.subr.mxu0 %v87
  %324 = vmatpush1.msra.mxu0 %v86
  %325 = vmatprep.subr.mxu0 %v95
  %326 = vmatpush1.msra.mxu0 %v94
  %327 = vmatprep.subr.mxu0 %v103
  %328 = vmatpush1.msra.mxu0 %v102
  %329 = vmatprep.subr.mxu0 %v111
  %330 = vmatpush1.msra.mxu0 %v110
  %331 = vmatprep.subr.mxu0 %v119
  %332 = vmatpush1.msra.mxu0 %v118
  %333 = vmatprep.subr.mxu0 %v127
  %334 = vmatpush1.msra.mxu0 %v126
  %335 = vmatprep.subr.mxu0 %v135
  %336 = vmatpush1.msra.mxu0 %v134
  %337 = vmatprep.subr.mxu0 %v214
  %338 = vmatpush1.msra.mxu0 %v211
  %339 = vmatprep.subr.mxu0 0.0
  %340 = vmatpush1.msra.mxu0 0.0
  %341 = vmatprep.subr.mxu0 0.0
  %342 = vmatpush1.msra.mxu0 0.0
  %343 = vmatprep.subr.mxu0 0.0
  %344 = vmatpush1.msra.mxu0 0.0
  %345 = vmatprep.subr.mxu0 0.0
  %346 = vmatpush1.msra.mxu0 0.0
  %347 = vmatprep.subr.mxu0 0.0
  %348 = vmatpush1.msra.mxu0 0.0
  %349 = vmatprep.subr.mxu0 0.0
  %350 = vmatpush1.msra.mxu0 0.0
  %351 = vmatprep.subr.mxu0 0.0
  %352 = vmatpush1.msra.mxu0 0.0
  %353 = vmatprep.subr.mxu0 0.0
  %354 = vmatpush1.msra.mxu0 0.0
  %355 = vmatprep.subr.mxu0 0.0
  %356 = vmatpush1.msra.mxu0 0.0
  %357 = vmatprep.subr.mxu0 0.0
  %358 = vmatpush1.msra.mxu0 0.0
  %359 = vmatprep.subr.mxu0 0.0
  %360 = vmatpush1.msra.mxu0 0.0
  %361 = vmatprep.subr.mxu0 0.0
  %362 = vmatpush1.msra.mxu0 0.0
  %363 = vmatprep.subr.mxu0 0.0
  %364 = vmatpush1.msra.mxu0 0.0
  %365 = vmatprep.subr.mxu0 0.0
  %366 = vmatpush1.msra.mxu0 0.0
  %367 = vmatprep.subr.mxu0 0.0
  %368 = vmatpush1.msra.mxu0 0.0
  %369 = vmatprep.subr.mxu0 0.0
  %370 = vmatpush1.msra.mxu0 0.0
  %371 = vmatprep.subr.mxu0 0.0
  %372 = vmatpush1.msra.mxu0 0.0
  %373 = vmatprep.subr.mxu0 0.0
  %374 = vmatpush1.msra.mxu0 0.0
  %375 = vmatprep.subr.mxu0 0.0
  %376 = vmatpush1.msra.mxu0 0.0
  %377 = vmatprep.subr.mxu0 0.0
  %378 = vmatpush1.msra.mxu0 0.0
  %379 = vmatprep.subr.mxu0 0.0
  %380 = vmatpush1.msra.mxu0 0.0
  %381 = vmatprep.mubr.f32.mxu0 0.0
  %382 = vmatmul.mubr.f32.gmra.mrb[0].mxu0 %v192
  %v383 = vpop.f32.mrb[0].mxu0
  %v384 = vadd.f32 %v161, %v383
  %v385 = vpop.f32.mrb[0].mxu0
  %v386 = vadd.f32 %v165, %v385
  %387 = vmatprep.mubr.f32.mxu0 0.0
  %388 = vmatmul.mubr.f32.gmra.mrb[0].mxu0 %v195
  %v389 = vpop.f32.mrb[0].mxu0
  %v390 = vadd.f32 %v161, %v389
  %v391 = vpop.f32.mrb[0].mxu0
  %v392 = vadd.f32 %v165, %v391
  %393 = vmatprep.mubr.f32.mxu0 0.0
  %394 = vmatmul.mubr.f32.gmra.mrb[0].mxu0 %v198
  %v395 = vpop.f32.mrb[0].mxu0
  %v396 = vadd.f32 %v161, %v395
  %v397 = vpop.f32.mrb[0].mxu0
  %v398 = vadd.f32 %v165, %v397
  %399 = vmatprep.mubr.f32.mxu0 0.0
  %400 = vmatmul.mubr.f32.gmra.mrb[0].mxu0 %v201
  %v401 = vpop.f32.mrb[0].mxu0
  %v402 = vadd.f32 %v161, %v401
  %v403 = vpop.f32.mrb[0].mxu0
  %v404 = vadd.f32 %v165, %v403
  %405 = vdwg.mxu0
  %406 = vmatprep.subr.mxu0 %v65
  %407 = vmatpush1.msra.mxu0 %v64
  %408 = vmatprep.subr.mxu0 %v73
  %409 = vmatpush1.msra.mxu0 %v72
  %410 = vmatprep.subr.mxu0 %v81
  %411 = vmatpush1.msra.mxu0 %v80
  %412 = vmatprep.subr.mxu0 %v89
  %413 = vmatpush1.msra.mxu0 %v88
  %414 = vmatprep.subr.mxu0 %v97
  %415 = vmatpush1.msra.mxu0 %v96
  %416 = vmatprep.subr.mxu0 %v105
  %417 = vmatpush1.msra.mxu0 %v104
  %418 = vmatprep.subr.mxu0 %v113
  %419 = vmatpush1.msra.mxu0 %v112
  %420 = vmatprep.subr.mxu0 %v121
  %421 = vmatpush1.msra.mxu0 %v120
  %422 = vmatprep.subr.mxu0 %v129
  %423 = vmatpush1.msra.mxu0 %v128
  %424 = vmatprep.subr.mxu0 %v137
  %425 = vmatpush1.msra.mxu0 %v136
  %426 = vmatprep.subr.mxu0 %v220
  %427 = vmatpush1.msra.mxu0 %v217
  %428 = vmatprep.subr.mxu0 0.0
  %429 = vmatpush1.msra.mxu0 0.0
  %430 = vmatprep.subr.mxu0 0.0
  %431 = vmatpush1.msra.mxu0 0.0
  %432 = vmatprep.subr.mxu0 0.0
  %433 = vmatpush1.msra.mxu0 0.0
  %434 = vmatprep.subr.mxu0 0.0
  %435 = vmatpush1.msra.mxu0 0.0
  %436 = vmatprep.subr.mxu0 0.0
  %437 = vmatpush1.msra.mxu0 0.0
  %438 = vmatprep.subr.mxu0 0.0
  %439 = vmatpush1.msra.mxu0 0.0
  %440 = vmatprep.subr.mxu0 0.0
  %441 = vmatpush1.msra.mxu0 0.0
  %442 = vmatprep.subr.mxu0 0.0
  %443 = vmatpush1.msra.mxu0 0.0
  %444 = vmatprep.subr.mxu0 0.0
  %445 = vmatpush1.msra.mxu0 0.0
  %446 = vmatprep.subr.mxu0 0.0
  %447 = vmatpush1.msra.mxu0 0.0
  %448 = vmatprep.subr.mxu0 0.0
  %449 = vmatpush1.msra.mxu0 0.0
  %450 = vmatprep.subr.mxu0 0.0
  %451 = vmatpush1.msra.mxu0 0.0
  %452 = vmatprep.subr.mxu0 0.0
  %453 = vmatpush1.msra.mxu0 0.0
  %454 = vmatprep.subr.mxu0 0.0
  %455 = vmatpush1.msra.mxu0 0.0
  %456 = vmatprep.subr.mxu0 0.0
  %457 = vmatpush1.msra.mxu0 0.0
  %458 = vmatprep.subr.mxu0 0.0
  %459 = vmatpush1.msra.mxu0 0.0
  %460 = vmatprep.subr.mxu0 0.0
  %461 = vmatpush1.msra.mxu0 0.0
  %462 = vmatprep.subr.mxu0 0.0
  %463 = vmatpush1.msra.mxu0 0.0
  %464 = vmatprep.subr.mxu0 0.0
  %465 = vmatpush1.msra.mxu0 0.0
  %466 = vmatprep.subr.mxu0 0.0
  %467 = vmatpush1.msra.mxu0 0.0
  %468 = vmatprep.subr.mxu0 0.0
  %469 = vmatpush1.msra.mxu0 0.0
  %470 = vmatprep.mubr.f32.mxu0 0.0
  %471 = vmatmul.mubr.f32.gmra.mrb[0].mxu0 %v192
  %v472 = vpop.f32.mrb[0].mxu0
  %v473 = vadd.f32 %v169, %v472
  %v474 = vpop.f32.mrb[0].mxu0
  %v475 = vadd.f32 %v173, %v474
  %476 = vmatprep.mubr.f32.mxu0 0.0
  %477 = vmatmul.mubr.f32.gmra.mrb[0].mxu0 %v195
  %v478 = vpop.f32.mrb[0].mxu0
  %v479 = vadd.f32 %v169, %v478
  %v480 = vpop.f32.mrb[0].mxu0
  %v481 = vadd.f32 %v173, %v480
  %482 = vmatprep.mubr.f32.mxu0 0.0
  %483 = vmatmul.mubr.f32.gmra.mrb[0].mxu0 %v198
  %v484 = vpop.f32.mrb[0].mxu0
  %v485 = vadd.f32 %v169, %v484
  %v486 = vpop.f32.mrb[0].mxu0
  %v487 = vadd.f32 %v173, %v486
  %488 = vmatprep.mubr.f32.mxu0 0.0
  %489 = vmatmul.mubr.f32.gmra.mrb[0].mxu0 %v201
  %v490 = vpop.f32.mrb[0].mxu0
  %v491 = vadd.f32 %v169, %v490
  %v492 = vpop.f32.mrb[0].mxu0
  %v493 = vadd.f32 %v173, %v492
  %494 = vdwg.mxu0
  %495 = vmatprep.subr.mxu0 %v67
  %496 = vmatpush1.msra.mxu0 %v66
  %497 = vmatprep.subr.mxu0 %v75
  %498 = vmatpush1.msra.mxu0 %v74
  %499 = vmatprep.subr.mxu0 %v83
  %500 = vmatpush1.msra.mxu0 %v82
  %501 = vmatprep.subr.mxu0 %v91
  %502 = vmatpush1.msra.mxu0 %v90
  %503 = vmatprep.subr.mxu0 %v99
  %504 = vmatpush1.msra.mxu0 %v98
  %505 = vmatprep.subr.mxu0 %v107
  %506 = vmatpush1.msra.mxu0 %v106
  %507 = vmatprep.subr.mxu0 %v115
  %508 = vmatpush1.msra.mxu0 %v114
  %509 = vmatprep.subr.mxu0 %v123
  %510 = vmatpush1.msra.mxu0 %v122
  %511 = vmatprep.subr.mxu0 %v131
  %512 = vmatpush1.msra.mxu0 %v130
  %513 = vmatprep.subr.mxu0 %v139
  %514 = vmatpush1.msra.mxu0 %v138
  %515 = vmatprep.subr.mxu0 %v226
  %516 = vmatpush1.msra.mxu0 %v223
  %517 = vmatprep.subr.mxu0 0.0
  %518 = vmatpush1.msra.mxu0 0.0
  %519 = vmatprep.subr.mxu0 0.0
  %520 = vmatpush1.msra.mxu0 0.0
  %521 = vmatprep.subr.mxu0 0.0
  %522 = vmatpush1.msra.mxu0 0.0
  %523 = vmatprep.subr.mxu0 0.0
  %524 = vmatpush1.msra.mxu0 0.0
  %525 = vmatprep.subr.mxu0 0.0
  %526 = vmatpush1.msra.mxu0 0.0
  %527 = vmatprep.subr.mxu0 0.0
  %528 = vmatpush1.msra.mxu0 0.0
  %529 = vmatprep.subr.mxu0 0.0
  %530 = vmatpush1.msra.mxu0 0.0
  %531 = vmatprep.subr.mxu0 0.0
  %532 = vmatpush1.msra.mxu0 0.0
  %533 = vmatprep.subr.mxu0 0.0
  %534 = vmatpush1.msra.mxu0 0.0
  %535 = vmatprep.subr.mxu0 0.0
  %536 = vmatpush1.msra.mxu0 0.0
  %537 = vmatprep.subr.mxu0 0.0
  %538 = vmatpush1.msra.mxu0 0.0
  %539 = vmatprep.subr.mxu0 0.0
  %540 = vmatpush1.msra.mxu0 0.0
  %541 = vmatprep.subr.mxu0 0.0
  %542 = vmatpush1.msra.mxu0 0.0
  %543 = vmatprep.subr.mxu0 0.0
  %544 = vmatpush1.msra.mxu0 0.0
  %545 = vmatprep.subr.mxu0 0.0
  %546 = vmatpush1.msra.mxu0 0.0
  %547 = vmatprep.subr.mxu0 0.0
  %548 = vmatpush1.msra.mxu0 0.0
  %549 = vmatprep.subr.mxu0 0.0
  %550 = vmatpush1.msra.mxu0 0.0
  %551 = vmatprep.subr.mxu0 0.0
  %552 = vmatpush1.msra.mxu0 0.0
  %553 = vmatprep.subr.mxu0 0.0
  %554 = vmatpush1.msra.mxu0 0.0
  %555 = vmatprep.subr.mxu0 0.0
  %556 = vmatpush1.msra.mxu0 0.0
  %557 = vmatprep.subr.mxu0 0.0
  %558 = vmatpush1.msra.mxu0 0.0
  %559 = vmatprep.mubr.f32.mxu0 0.0
  %560 = vmatmul.mubr.f32.gmra.mrb[0].mxu0 %v192
  %v561 = vpop.f32.mrb[0].mxu0
  %v562 = vadd.f32 %v177, %v561
  %v563 = vpop.f32.mrb[0].mxu0
  %v564 = vadd.f32 %v181, %v563
  %565 = vmatprep.mubr.f32.mxu0 0.0
  %566 = vmatmul.mubr.f32.gmra.mrb[0].mxu0 %v195
  %v567 = vpop.f32.mrb[0].mxu0
  %v568 = vadd.f32 %v177, %v567
  %v569 = vpop.f32.mrb[0].mxu0
  %v570 = vadd.f32 %v181, %v569
  %571 = vmatprep.mubr.f32.mxu0 0.0
  %572 = vmatmul.mubr.f32.gmra.mrb[0].mxu0 %v198
  %v573 = vpop.f32.mrb[0].mxu0
  %v574 = vadd.f32 %v177, %v573
  %v575 = vpop.f32.mrb[0].mxu0
  %v576 = vadd.f32 %v181, %v575
  %577 = vmatprep.mubr.f32.mxu0 0.0
  %578 = vmatmul.mubr.f32.gmra.mrb[0].mxu0 %v201
  %v579 = vpop.f32.mrb[0].mxu0
  %v580 = vadd.f32 %v177, %v579
  %v581 = vpop.f32.mrb[0].mxu0
  %v582 = vadd.f32 %v181, %v581
  %583 = vdwg.mxu0
  %584 = vst [vmem:[%s18] sm:$0xff] %v295
  %585 = vst [vmem:[%s18 + $0x8] sm:$0xff] %v297
  %586 = vst [vmem:[%s18 + $0x10] sm:$0xff] %v384
  %587 = vst [vmem:[%s18 + $0x18] sm:$0xff] %v386
  %588 = vst [vmem:[%s18 + $0x20] sm:$0xff] %v473
  %589 = vst [vmem:[%s18 + $0x28] sm:$0xff] %v475
  %590 = vst [vmem:[%s18 + $0x30] sm:$0xff] %v562
  %591 = vst [vmem:[%s18 + $0x38] sm:$0xff] %v564
  %592 = vst [vmem:[%s18 + $0x40] sm:$0xff] %v301
  %593 = vst [vmem:[%s18 + $0x48] sm:$0xff] %v303
  %594 = vst [vmem:[%s18 + $0x50] sm:$0xff] %v390
  %595 = vst [vmem:[%s18 + $0x58] sm:$0xff] %v392
  %596 = vst [vmem:[%s18 + $0x60] sm:$0xff] %v479
  %597 = vst [vmem:[%s18 + $0x68] sm:$0xff] %v481
  %598 = vst [vmem:[%s18 + $0x70] sm:$0xff] %v568
  %599 = vst [vmem:[%s18 + $0x78] sm:$0xff] %v570
  %600 = vst [vmem:[%s18 + $0x80] sm:$0xff] %v307
  %601 = vst [vmem:[%s18 + $0x88] sm:$0xff] %v309
  %602 = vst [vmem:[%s18 + $0x90] sm:$0xff] %v396
  %603 = vst [vmem:[%s18 + $0x98] sm:$0xff] %v398
  %604 = vst [vmem:[%s18 + $0xa0] sm:$0xff] %v485
  %605 = vst [vmem:[%s18 + $0xa8] sm:$0xff] %v487
  %606 = vst [vmem:[%s18 + $0xb0] sm:$0xff] %v574
  %607 = vst [vmem:[%s18 + $0xb8] sm:$0xff] %v576
  %608 = vst [vmem:[%s18 + $0xc0] sm:$0xff] %v313
  %609 = vst [vmem:[%s18 + $0xc8] sm:$0xff] %v315
  %610 = vst [vmem:[%s18 + $0xd0] sm:$0xff] %v402
  %611 = vst [vmem:[%s18 + $0xd8] sm:$0xff] %v404
  %612 = vst [vmem:[%s18 + $0xe0] sm:$0xff] %v491
  %613 = vst [vmem:[%s18 + $0xe8] sm:$0xff] %v493
  %614 = vst [vmem:[%s18 + $0xf0] sm:$0xff] %v580
  %615 = vst [vmem:[%s18 + $0xf8] sm:$0xff] %v582
  %v616 = vmul.f32 %v295, 0.5
  %v617 = vmul.f32 %v297, 0.5
  %v618 = vmul.f32 %v384, 0.5
  %v619 = vmul.f32 %v386, 0.5
  %v620 = vmul.f32 %v473, 0.5
  %v621 = vmul.f32 %v475, 0.5
  %v622 = vmul.f32 %v562, 0.5
  %v623 = vmul.f32 %v564, 0.5
  %v624 = vmul.f32 %v301, 0.5
  %v625 = vmul.f32 %v303, 0.5
  %v626 = vmul.f32 %v390, 0.5
  %v627 = vmul.f32 %v392, 0.5
  %v628 = vmul.f32 %v479, 0.5
  %v629 = vmul.f32 %v481, 0.5
  %v630 = vmul.f32 %v568, 0.5
  %v631 = vmul.f32 %v570, 0.5
  %v632 = vmul.f32 %v307, 0.5
  %v633 = vmul.f32 %v309, 0.5
  %v634 = vmul.f32 %v396, 0.5
  %v635 = vmul.f32 %v398, 0.5
  %v636 = vmul.f32 %v485, 0.5
  %v637 = vmul.f32 %v487, 0.5
  %v638 = vmul.f32 %v574, 0.5
  %v639 = vmul.f32 %v576, 0.5
  %v640 = vmul.f32 %v313, 0.5
  %v641 = vmul.f32 %v315, 0.5
  %v642 = vmul.f32 %v402, 0.5
  %v643 = vmul.f32 %v404, 0.5
  %v644 = vmul.f32 %v491, 0.5
  %v645 = vmul.f32 %v493, 0.5
  %v646 = vmul.f32 %v580, 0.5
  %v647 = vmul.f32 %v582, 0.5
  %v648 = vmul.f32 %v295, 0.70710677
  %v649 = vmul.f32 %v297, 0.70710677
  %v650 = vmul.f32 %v384, 0.70710677
  %v651 = vmul.f32 %v386, 0.70710677
  %v652 = vmul.f32 %v473, 0.70710677
  %v653 = vmul.f32 %v475, 0.70710677
  %v654 = vmul.f32 %v562, 0.70710677
  %v655 = vmul.f32 %v564, 0.70710677
  %v656 = vmul.f32 %v301, 0.70710677
  %v657 = vmul.f32 %v303, 0.70710677
  %v658 = vmul.f32 %v390, 0.70710677
  %v659 = vmul.f32 %v392, 0.70710677
  %v660 = vmul.f32 %v479, 0.70710677
  %v661 = vmul.f32 %v481, 0.70710677
  %v662 = vmul.f32 %v568, 0.70710677
  %v663 = vmul.f32 %v570, 0.70710677
  %v664 = vmul.f32 %v307, 0.70710677
  %v665 = vmul.f32 %v309, 0.70710677
  %v666 = vmul.f32 %v396, 0.70710677
  %v667 = vmul.f32 %v398, 0.70710677
  %v668 = vmul.f32 %v485, 0.70710677
  %v669 = vmul.f32 %v487, 0.70710677
  %v670 = vmul.f32 %v574, 0.70710677
  %v671 = vmul.f32 %v576, 0.70710677
  %v672 = vmul.f32 %v313, 0.70710677
  %v673 = vmul.f32 %v315, 0.70710677
  %v674 = vmul.f32 %v402, 0.70710677
  %v675 = vmul.f32 %v404, 0.70710677
  %v676 = vmul.f32 %v491, 0.70710677
  %v677 = vmul.f32 %v493, 0.70710677
  %v678 = vmul.f32 %v580, 0.70710677
  %v679 = vmul.f32 %v582, 0.70710677
  %v680 = vand.u32 2147483647, %v648
  %v681 = vand.u32 2147483647, %v649
  %v682 = vand.u32 2147483647, %v650
  %v683 = vand.u32 2147483647, %v651
  %v684 = vand.u32 2147483647, %v652
  %v685 = vand.u32 2147483647, %v653
  %v686 = vand.u32 2147483647, %v654
  %v687 = vand.u32 2147483647, %v655
  %v688 = vand.u32 2147483647, %v656
  %v689 = vand.u32 2147483647, %v657
  %v690 = vand.u32 2147483647, %v658
  %v691 = vand.u32 2147483647, %v659
  %v692 = vand.u32 2147483647, %v660
  %v693 = vand.u32 2147483647, %v661
  %v694 = vand.u32 2147483647, %v662
  %v695 = vand.u32 2147483647, %v663
  %v696 = vand.u32 2147483647, %v664
  %v697 = vand.u32 2147483647, %v665
  %v698 = vand.u32 2147483647, %v666
  %v699 = vand.u32 2147483647, %v667
  %v700 = vand.u32 2147483647, %v668
  %v701 = vand.u32 2147483647, %v669
  %v702 = vand.u32 2147483647, %v670
  %v703 = vand.u32 2147483647, %v671
  %v704 = vand.u32 2147483647, %v672
  %v705 = vand.u32 2147483647, %v673
  %v706 = vand.u32 2147483647, %v674
  %v707 = vand.u32 2147483647, %v675
  %v708 = vand.u32 2147483647, %v676
  %v709 = vand.u32 2147483647, %v677
  %v710 = vand.u32 2147483647, %v678
  %v711 = vand.u32 2147483647, %v679
  %v712 = vmul.f32 %v680, 0.3275911
  %v713 = vmul.f32 %v681, 0.3275911
  %v714 = vmul.f32 %v682, 0.3275911
  %v715 = vmul.f32 %v683, 0.3275911
  %v716 = vmul.f32 %v684, 0.3275911
  %v717 = vmul.f32 %v685, 0.3275911
  %v718 = vmul.f32 %v686, 0.3275911
  %v719 = vmul.f32 %v687, 0.3275911
  %v720 = vmul.f32 %v688, 0.3275911
  %v721 = vmul.f32 %v689, 0.3275911
  %v722 = vmul.f32 %v690, 0.3275911
  %v723 = vmul.f32 %v691, 0.3275911
  %v724 = vmul.f32 %v692, 0.3275911
  %v725 = vmul.f32 %v693, 0.3275911
  %v726 = vmul.f32 %v694, 0.3275911
  %v727 = vmul.f32 %v695, 0.3275911
  %v728 = vmul.f32 %v696, 0.3275911
  %v729 = vmul.f32 %v697, 0.3275911
  %v730 = vmul.f32 %v698, 0.3275911
  %v731 = vmul.f32 %v699, 0.3275911
  %v732 = vmul.f32 %v700, 0.3275911
  %v733 = vmul.f32 %v701, 0.3275911
  %v734 = vmul.f32 %v702, 0.3275911
  %v735 = vmul.f32 %v703, 0.3275911
  %v736 = vmul.f32 %v704, 0.3275911
  %v737 = vmul.f32 %v705, 0.3275911
  %v738 = vmul.f32 %v706, 0.3275911
  %v739 = vmul.f32 %v707, 0.3275911
  %v740 = vmul.f32 %v708, 0.3275911
  %v741 = vmul.f32 %v709, 0.3275911
  %v742 = vmul.f32 %v710, 0.3275911
  %v743 = vmul.f32 %v711, 0.3275911
  %v744 = vadd.f32 %v712, 1.0
  %v745 = vadd.f32 %v713, 1.0
  %v746 = vadd.f32 %v714, 1.0
  %v747 = vadd.f32 %v715, 1.0
  %v748 = vadd.f32 %v716, 1.0
  %v749 = vadd.f32 %v717, 1.0
  %v750 = vadd.f32 %v718, 1.0
  %v751 = vadd.f32 %v719, 1.0
  %v752 = vadd.f32 %v720, 1.0
  %v753 = vadd.f32 %v721, 1.0
  %v754 = vadd.f32 %v722, 1.0
  %v755 = vadd.f32 %v723, 1.0
  %v756 = vadd.f32 %v724, 1.0
  %v757 = vadd.f32 %v725, 1.0
  %v758 = vadd.f32 %v726, 1.0
  %v759 = vadd.f32 %v727, 1.0
  %v760 = vadd.f32 %v728, 1.0
  %v761 = vadd.f32 %v729, 1.0
  %v762 = vadd.f32 %v730, 1.0
  %v763 = vadd.f32 %v731, 1.0
  %v764 = vadd.f32 %v732, 1.0
  %v765 = vadd.f32 %v733, 1.0
  %v766 = vadd.f32 %v734, 1.0
  %v767 = vadd.f32 %v735, 1.0
  %v768 = vadd.f32 %v736, 1.0
  %v769 = vadd.f32 %v737, 1.0
  %v770 = vadd.f32 %v738, 1.0
  %v771 = vadd.f32 %v739, 1.0
  %v772 = vadd.f32 %v740, 1.0
  %v773 = vadd.f32 %v741, 1.0
  %v774 = vadd.f32 %v742, 1.0
  %v775 = vadd.f32 %v743, 1.0
  %v776 = vrcp.pop %v744
  %v777 = vrcp.pop %v745
  %v778 = vrcp.pop %v746
  %v779 = vrcp.pop %v747
  %v780 = vrcp.pop %v748
  %v781 = vrcp.pop %v749
  %v782 = vrcp.pop %v750
  %v783 = vrcp.pop %v751
  %v784 = vrcp.pop %v752
  %v785 = vrcp.pop %v753
  %v786 = vrcp.pop %v754
  %v787 = vrcp.pop %v755
  %v788 = vrcp.pop %v756
  %v789 = vrcp.pop %v757
  %v790 = vrcp.pop %v758
  %v791 = vrcp.pop %v759
  %v792 = vrcp.pop %v760
  %v793 = vrcp.pop %v761
  %v794 = vrcp.pop %v762
  %v795 = vrcp.pop %v763
  %v796 = vrcp.pop %v764
  %v797 = vrcp.pop %v765
  %v798 = vrcp.pop %v766
  %v799 = vrcp.pop %v767
  %v800 = vrcp.pop %v768
  %v801 = vrcp.pop %v769
  %v802 = vrcp.pop %v770
  %v803 = vrcp.pop %v771
  %v804 = vrcp.pop %v772
  %v805 = vrcp.pop %v773
  %v806 = vrcp.pop %v774
  %v807 = vrcp.pop %v775
  %v808 = vmul.f32 %v776, 1.0614054
  %v809 = vmul.f32 %v777, 1.0614054
  %v810 = vmul.f32 %v778, 1.0614054
  %v811 = vmul.f32 %v779, 1.0614054
  %v812 = vmul.f32 %v780, 1.0614054
  %v813 = vmul.f32 %v781, 1.0614054
  %v814 = vmul.f32 %v782, 1.0614054
  %v815 = vmul.f32 %v783, 1.0614054
  %v816 = vmul.f32 %v784, 1.0614054
  %v817 = vmul.f32 %v785, 1.0614054
  %v818 = vmul.f32 %v786, 1.0614054
  %v819 = vmul.f32 %v787, 1.0614054
  %v820 = vmul.f32 %v788, 1.0614054
  %v821 = vmul.f32 %v789, 1.0614054
  %v822 = vmul.f32 %v790, 1.0614054
  %v823 = vmul.f32 %v791, 1.0614054
  %v824 = vmul.f32 %v792, 1.0614054
  %v825 = vmul.f32 %v793, 1.0614054
  %v826 = vmul.f32 %v794, 1.0614054
  %v827 = vmul.f32 %v795, 1.0614054
  %v828 = vmul.f32 %v796, 1.0614054
  %v829 = vmul.f32 %v797, 1.0614054
  %v830 = vmul.f32 %v798, 1.0614054
  %v831 = vmul.f32 %v799, 1.0614054
  %v832 = vmul.f32 %v800, 1.0614054
  %v833 = vmul.f32 %v801, 1.0614054
  %v834 = vmul.f32 %v802, 1.0614054
  %v835 = vmul.f32 %v803, 1.0614054
  %v836 = vmul.f32 %v804, 1.0614054
  %v837 = vmul.f32 %v805, 1.0614054
  %v838 = vmul.f32 %v806, 1.0614054
  %v839 = vmul.f32 %v807, 1.0614054
  %v840 = vadd.f32 %v808, -1.4531521
  %v841 = vadd.f32 %v809, -1.4531521
  %v842 = vadd.f32 %v810, -1.4531521
  %v843 = vadd.f32 %v811, -1.4531521
  %v844 = vadd.f32 %v812, -1.4531521
  %v845 = vadd.f32 %v813, -1.4531521
  %v846 = vadd.f32 %v814, -1.4531521
  %v847 = vadd.f32 %v815, -1.4531521
  %v848 = vadd.f32 %v816, -1.4531521
  %v849 = vadd.f32 %v817, -1.4531521
  %v850 = vadd.f32 %v818, -1.4531521
  %v851 = vadd.f32 %v819, -1.4531521
  %v852 = vadd.f32 %v820, -1.4531521
  %v853 = vadd.f32 %v821, -1.4531521
  %v854 = vadd.f32 %v822, -1.4531521
  %v855 = vadd.f32 %v823, -1.4531521
  %v856 = vadd.f32 %v824, -1.4531521
  %v857 = vadd.f32 %v825, -1.4531521
  %v858 = vadd.f32 %v826, -1.4531521
  %v859 = vadd.f32 %v827, -1.4531521
  %v860 = vadd.f32 %v828, -1.4531521
  %v861 = vadd.f32 %v829, -1.4531521
  %v862 = vadd.f32 %v830, -1.4531521
  %v863 = vadd.f32 %v831, -1.4531521
  %v864 = vadd.f32 %v832, -1.4531521
  %v865 = vadd.f32 %v833, -1.4531521
  %v866 = vadd.f32 %v834, -1.4531521
  %v867 = vadd.f32 %v835, -1.4531521
  %v868 = vadd.f32 %v836, -1.4531521
  %v869 = vadd.f32 %v837, -1.4531521
  %v870 = vadd.f32 %v838, -1.4531521
  %v871 = vadd.f32 %v839, -1.4531521
  %v872 = vmul.f32 %v840, %v776
  %v873 = vmul.f32 %v841, %v777
  %v874 = vmul.f32 %v842, %v778
  %v875 = vmul.f32 %v843, %v779
  %v876 = vmul.f32 %v844, %v780
  %v877 = vmul.f32 %v845, %v781
  %v878 = vmul.f32 %v846, %v782
  %v879 = vmul.f32 %v847, %v783
  %v880 = vmul.f32 %v848, %v784
  %v881 = vmul.f32 %v849, %v785
  %v882 = vmul.f32 %v850, %v786
  %v883 = vmul.f32 %v851, %v787
  %v884 = vmul.f32 %v852, %v788
  %v885 = vmul.f32 %v853, %v789
  %v886 = vmul.f32 %v854, %v790
  %v887 = vmul.f32 %v855, %v791
  %v888 = vmul.f32 %v856, %v792
  %v889 = vmul.f32 %v857, %v793
  %v890 = vmul.f32 %v858, %v794
  %v891 = vmul.f32 %v859, %v795
  %v892 = vmul.f32 %v860, %v796
  %v893 = vmul.f32 %v861, %v797
  %v894 = vmul.f32 %v862, %v798
  %v895 = vmul.f32 %v863, %v799
  %v896 = vmul.f32 %v864, %v800
  %v897 = vmul.f32 %v865, %v801
  %v898 = vmul.f32 %v866, %v802
  %v899 = vmul.f32 %v867, %v803
  %v900 = vmul.f32 %v868, %v804
  %v901 = vmul.f32 %v869, %v805
  %v902 = vmul.f32 %v870, %v806
  %v903 = vmul.f32 %v871, %v807
  %v904 = vadd.f32 %v872, 1.4214138
  %v905 = vadd.f32 %v873, 1.4214138
  %v906 = vadd.f32 %v874, 1.4214138
  %v907 = vadd.f32 %v875, 1.4214138
  %v908 = vadd.f32 %v876, 1.4214138
  %v909 = vadd.f32 %v877, 1.4214138
  %v910 = vadd.f32 %v878, 1.4214138
  %v911 = vadd.f32 %v879, 1.4214138
  %v912 = vadd.f32 %v880, 1.4214138
  %v913 = vadd.f32 %v881, 1.4214138
  %v914 = vadd.f32 %v882, 1.4214138
  %v915 = vadd.f32 %v883, 1.4214138
  %v916 = vadd.f32 %v884, 1.4214138
  %v917 = vadd.f32 %v885, 1.4214138
  %v918 = vadd.f32 %v886, 1.4214138
  %v919 = vadd.f32 %v887, 1.4214138
  %v920 = vadd.f32 %v888, 1.4214138
  %v921 = vadd.f32 %v889, 1.4214138
  %v922 = vadd.f32 %v890, 1.4214138
  %v923 = vadd.f32 %v891, 1.4214138
  %v924 = vadd.f32 %v892, 1.4214138
  %v925 = vadd.f32 %v893, 1.4214138
  %v926 = vadd.f32 %v894, 1.4214138
  %v927 = vadd.f32 %v895, 1.4214138
  %v928 = vadd.f32 %v896, 1.4214138
  %v929 = vadd.f32 %v897, 1.4214138
  %v930 = vadd.f32 %v898, 1.4214138
  %v931 = vadd.f32 %v899, 1.4214138
  %v932 = vadd.f32 %v900, 1.4214138
  %v933 = vadd.f32 %v901, 1.4214138
  %v934 = vadd.f32 %v902, 1.4214138
  %v935 = vadd.f32 %v903, 1.4214138
  %v936 = vmul.f32 %v904, %v776
  %v937 = vmul.f32 %v905, %v777
  %v938 = vmul.f32 %v906, %v778
  %v939 = vmul.f32 %v907, %v779
  %v940 = vmul.f32 %v908, %v780
  %v941 = vmul.f32 %v909, %v781
  %v942 = vmul.f32 %v910, %v782
  %v943 = vmul.f32 %v911, %v783
  %v944 = vmul.f32 %v912, %v784
  %v945 = vmul.f32 %v913, %v785
  %v946 = vmul.f32 %v914, %v786
  %v947 = vmul.f32 %v915, %v787
  %v948 = vmul.f32 %v916, %v788
  %v949 = vmul.f32 %v917, %v789
  %v950 = vmul.f32 %v918, %v790
  %v951 = vmul.f32 %v919, %v791
  %v952 = vmul.f32 %v920, %v792
  %v953 = vmul.f32 %v921, %v793
  %v954 = vmul.f32 %v922, %v794
  %v955 = vmul.f32 %v923, %v795
  %v956 = vmul.f32 %v924, %v796
  %v957 = vmul.f32 %v925, %v797
  %v958 = vmul.f32 %v926, %v798
  %v959 = vmul.f32 %v927, %v799
  %v960 = vmul.f32 %v928, %v800
  %v961 = vmul.f32 %v929, %v801
  %v962 = vmul.f32 %v930, %v802
  %v963 = vmul.f32 %v931, %v803
  %v964 = vmul.f32 %v932, %v804
  %v965 = vmul.f32 %v933, %v805
  %v966 = vmul.f32 %v934, %v806
  %v967 = vmul.f32 %v935, %v807
  %v968 = vadd.f32 %v936, -0.28449672
  %v969 = vadd.f32 %v937, -0.28449672
  %v970 = vadd.f32 %v938, -0.28449672
  %v971 = vadd.f32 %v939, -0.28449672
  %v972 = vadd.f32 %v940, -0.28449672
  %v973 = vadd.f32 %v941, -0.28449672
  %v974 = vadd.f32 %v942, -0.28449672
  %v975 = vadd.f32 %v943, -0.28449672
  %v976 = vadd.f32 %v944, -0.28449672
  %v977 = vadd.f32 %v945, -0.28449672
  %v978 = vadd.f32 %v946, -0.28449672
  %v979 = vadd.f32 %v947, -0.28449672
  %v980 = vadd.f32 %v948, -0.28449672
  %v981 = vadd.f32 %v949, -0.28449672
  %v982 = vadd.f32 %v950, -0.28449672
  %v983 = vadd.f32 %v951, -0.28449672
  %v984 = vadd.f32 %v952, -0.28449672
  %v985 = vadd.f32 %v953, -0.28449672
  %v986 = vadd.f32 %v954, -0.28449672
  %v987 = vadd.f32 %v955, -0.28449672
  %v988 = vadd.f32 %v956, -0.28449672
  %v989 = vadd.f32 %v957, -0.28449672
  %v990 = vadd.f32 %v958, -0.28449672
  %v991 = vadd.f32 %v959, -0.28449672
  %v992 = vadd.f32 %v960, -0.28449672
  %v993 = vadd.f32 %v961, -0.28449672
  %v994 = vadd.f32 %v962, -0.28449672
  %v995 = vadd.f32 %v963, -0.28449672
  %v996 = vadd.f32 %v964, -0.28449672
  %v997 = vadd.f32 %v965, -0.28449672
  %v998 = vadd.f32 %v966, -0.28449672
  %v999 = vadd.f32 %v967, -0.28449672
  %v1000 = vmul.f32 %v968, %v776
  %v1001 = vmul.f32 %v969, %v777
  %v1002 = vmul.f32 %v970, %v778
  %v1003 = vmul.f32 %v971, %v779
  %v1004 = vmul.f32 %v972, %v780
  %v1005 = vmul.f32 %v973, %v781
  %v1006 = vmul.f32 %v974, %v782
  %v1007 = vmul.f32 %v975, %v783
  %v1008 = vmul.f32 %v976, %v784
  %v1009 = vmul.f32 %v977, %v785
  %v1010 = vmul.f32 %v978, %v786
  %v1011 = vmul.f32 %v979, %v787
  %v1012 = vmul.f32 %v980, %v788
  %v1013 = vmul.f32 %v981, %v789
  %v1014 = vmul.f32 %v982, %v790
  %v1015 = vmul.f32 %v983, %v791
  %v1016 = vmul.f32 %v984, %v792
  %v1017 = vmul.f32 %v985, %v793
  %v1018 = vmul.f32 %v986, %v794
  %v1019 = vmul.f32 %v987, %v795
  %v1020 = vmul.f32 %v988, %v796
  %v1021 = vmul.f32 %v989, %v797
  %v1022 = vmul.f32 %v990, %v798
  %v1023 = vmul.f32 %v991, %v799
  %v1024 = vmul.f32 %v992, %v800
  %v1025 = vmul.f32 %v993, %v801
  %v1026 = vmul.f32 %v994, %v802
  %v1027 = vmul.f32 %v995, %v803
  %v1028 = vmul.f32 %v996, %v804
  %v1029 = vmul.f32 %v997, %v805
  %v1030 = vmul.f32 %v998, %v806
  %v1031 = vmul.f32 %v999, %v807
  %v1032 = vadd.f32 %v1000, 0.2548296
  %v1033 = vadd.f32 %v1001, 0.2548296
  %v1034 = vadd.f32 %v1002, 0.2548296
  %v1035 = vadd.f32 %v1003, 0.2548296
  %v1036 = vadd.f32 %v1004, 0.2548296
  %v1037 = vadd.f32 %v1005, 0.2548296
  %v1038 = vadd.f32 %v1006, 0.2548296
  %v1039 = vadd.f32 %v1007, 0.2548296
  %v1040 = vadd.f32 %v1008, 0.2548296
  %v1041 = vadd.f32 %v1009, 0.2548296
  %v1042 = vadd.f32 %v1010, 0.2548296
  %v1043 = vadd.f32 %v1011, 0.2548296
  %v1044 = vadd.f32 %v1012, 0.2548296
  %v1045 = vadd.f32 %v1013, 0.2548296
  %v1046 = vadd.f32 %v1014, 0.2548296
  %v1047 = vadd.f32 %v1015, 0.2548296
  %v1048 = vadd.f32 %v1016, 0.2548296
  %v1049 = vadd.f32 %v1017, 0.2548296
  %v1050 = vadd.f32 %v1018, 0.2548296
  %v1051 = vadd.f32 %v1019, 0.2548296
  %v1052 = vadd.f32 %v1020, 0.2548296
  %v1053 = vadd.f32 %v1021, 0.2548296
  %v1054 = vadd.f32 %v1022, 0.2548296
  %v1055 = vadd.f32 %v1023, 0.2548296
  %v1056 = vadd.f32 %v1024, 0.2548296
  %v1057 = vadd.f32 %v1025, 0.2548296
  %v1058 = vadd.f32 %v1026, 0.2548296
  %v1059 = vadd.f32 %v1027, 0.2548296
  %v1060 = vadd.f32 %v1028, 0.2548296
  %v1061 = vadd.f32 %v1029, 0.2548296
  %v1062 = vadd.f32 %v1030, 0.2548296
  %v1063 = vadd.f32 %v1031, 0.2548296
  %v1064 = vmul.f32 %v1032, %v776
  %v1065 = vmul.f32 %v1033, %v777
  %v1066 = vmul.f32 %v1034, %v778
  %v1067 = vmul.f32 %v1035, %v779
  %v1068 = vmul.f32 %v1036, %v780
  %v1069 = vmul.f32 %v1037, %v781
  %v1070 = vmul.f32 %v1038, %v782
  %v1071 = vmul.f32 %v1039, %v783
  %v1072 = vmul.f32 %v1040, %v784
  %v1073 = vmul.f32 %v1041, %v785
  %v1074 = vmul.f32 %v1042, %v786
  %v1075 = vmul.f32 %v1043, %v787
  %v1076 = vmul.f32 %v1044, %v788
  %v1077 = vmul.f32 %v1045, %v789
  %v1078 = vmul.f32 %v1046, %v790
  %v1079 = vmul.f32 %v1047, %v791
  %v1080 = vmul.f32 %v1048, %v792
  %v1081 = vmul.f32 %v1049, %v793
  %v1082 = vmul.f32 %v1050, %v794
  %v1083 = vmul.f32 %v1051, %v795
  %v1084 = vmul.f32 %v1052, %v796
  %v1085 = vmul.f32 %v1053, %v797
  %v1086 = vmul.f32 %v1054, %v798
  %v1087 = vmul.f32 %v1055, %v799
  %v1088 = vmul.f32 %v1056, %v800
  %v1089 = vmul.f32 %v1057, %v801
  %v1090 = vmul.f32 %v1058, %v802
  %v1091 = vmul.f32 %v1059, %v803
  %v1092 = vmul.f32 %v1060, %v804
  %v1093 = vmul.f32 %v1061, %v805
  %v1094 = vmul.f32 %v1062, %v806
  %v1095 = vmul.f32 %v1063, %v807
  %v1096 = vsub.f32 0.0, %v680
  %v1097 = vsub.f32 0.0, %v681
  %v1098 = vsub.f32 0.0, %v682
  %v1099 = vsub.f32 0.0, %v683
  %v1100 = vsub.f32 0.0, %v684
  %v1101 = vsub.f32 0.0, %v685
  %v1102 = vsub.f32 0.0, %v686
  %v1103 = vsub.f32 0.0, %v687
  %v1104 = vsub.f32 0.0, %v688
  %v1105 = vsub.f32 0.0, %v689
  %v1106 = vsub.f32 0.0, %v690
  %v1107 = vsub.f32 0.0, %v691
  %v1108 = vsub.f32 0.0, %v692
  %v1109 = vsub.f32 0.0, %v693
  %v1110 = vsub.f32 0.0, %v694
  %v1111 = vsub.f32 0.0, %v695
  %v1112 = vsub.f32 0.0, %v696
  %v1113 = vsub.f32 0.0, %v697
  %v1114 = vsub.f32 0.0, %v698
  %v1115 = vsub.f32 0.0, %v699
  %v1116 = vsub.f32 0.0, %v700
  %v1117 = vsub.f32 0.0, %v701
  %v1118 = vsub.f32 0.0, %v702
  %v1119 = vsub.f32 0.0, %v703
  %v1120 = vsub.f32 0.0, %v704
  %v1121 = vsub.f32 0.0, %v705
  %v1122 = vsub.f32 0.0, %v706
  %v1123 = vsub.f32 0.0, %v707
  %v1124 = vsub.f32 0.0, %v708
  %v1125 = vsub.f32 0.0, %v709
  %v1126 = vsub.f32 0.0, %v710
  %v1127 = vsub.f32 0.0, %v711
  %v1128 = vmul.f32 %v1096, %v680
  %v1129 = vmul.f32 %v1097, %v681
  %v1130 = vmul.f32 %v1098, %v682
  %v1131 = vmul.f32 %v1099, %v683
  %v1132 = vmul.f32 %v1100, %v684
  %v1133 = vmul.f32 %v1101, %v685
  %v1134 = vmul.f32 %v1102, %v686
  %v1135 = vmul.f32 %v1103, %v687
  %v1136 = vmul.f32 %v1104, %v688
  %v1137 = vmul.f32 %v1105, %v689
  %v1138 = vmul.f32 %v1106, %v690
  %v1139 = vmul.f32 %v1107, %v691
  %v1140 = vmul.f32 %v1108, %v692
  %v1141 = vmul.f32 %v1109, %v693
  %v1142 = vmul.f32 %v1110, %v694
  %v1143 = vmul.f32 %v1111, %v695
  %v1144 = vmul.f32 %v1112, %v696
  %v1145 = vmul.f32 %v1113, %v697
  %v1146 = vmul.f32 %v1114, %v698
  %v1147 = vmul.f32 %v1115, %v699
  %v1148 = vmul.f32 %v1116, %v700
  %v1149 = vmul.f32 %v1117, %v701
  %v1150 = vmul.f32 %v1118, %v702
  %v1151 = vmul.f32 %v1119, %v703
  %v1152 = vmul.f32 %v1120, %v704
  %v1153 = vmul.f32 %v1121, %v705
  %v1154 = vmul.f32 %v1122, %v706
  %v1155 = vmul.f32 %v1123, %v707
  %v1156 = vmul.f32 %v1124, %v708
  %v1157 = vmul.f32 %v1125, %v709
  %v1158 = vmul.f32 %v1126, %v710
  %v1159 = vmul.f32 %v1127, %v711
  %v1160 = vmul.f32 %v1128, 1.442695
  %v1161 = vpow.pop %v1160
  %v1162 = vmul.f32 %v1129, 1.442695
  %v1163 = vpow.pop %v1162
  %v1164 = vmul.f32 %v1130, 1.442695
  %v1165 = vpow.pop %v1164
  %v1166 = vmul.f32 %v1131, 1.442695
  %v1167 = vpow.pop %v1166
  %v1168 = vmul.f32 %v1132, 1.442695
  %v1169 = vpow.pop %v1168
  %v1170 = vmul.f32 %v1133, 1.442695
  %v1171 = vpow.pop %v1170
  %v1172 = vmul.f32 %v1134, 1.442695
  %v1173 = vpow.pop %v1172
  %v1174 = vmul.f32 %v1135, 1.442695
  %v1175 = vpow.pop %v1174
  %v1176 = vmul.f32 %v1136, 1.442695
  %v1177 = vpow.pop %v1176
  %v1178 = vmul.f32 %v1137, 1.442695
  %v1179 = vpow.pop %v1178
  %v1180 = vmul.f32 %v1138, 1.442695
  %v1181 = vpow.pop %v1180
  %v1182 = vmul.f32 %v1139, 1.442695
  %v1183 = vpow.pop %v1182
  %v1184 = vmul.f32 %v1140, 1.442695
  %v1185 = vpow.pop %v1184
  %v1186 = vmul.f32 %v1141, 1.442695
  %v1187 = vpow.pop %v1186
  %v1188 = vmul.f32 %v1142, 1.442695
  %v1189 = vpow.pop %v1188
  %v1190 = vmul.f32 %v1143, 1.442695
  %v1191 = vpow.pop %v1190
  %v1192 = vmul.f32 %v1144, 1.442695
  %v1193 = vpow.pop %v1192
  %v1194 = vmul.f32 %v1145, 1.442695
  %v1195 = vpow.pop %v1194
  %v1196 = vmul.f32 %v1146, 1.442695
  %v1197 = vpow.pop %v1196
  %v1198 = vmul.f32 %v1147, 1.442695
  %v1199 = vpow.pop %v1198
  %v1200 = vmul.f32 %v1148, 1.442695
  %v1201 = vpow.pop %v1200
  %v1202 = vmul.f32 %v1149, 1.442695
  %v1203 = vpow.pop %v1202
  %v1204 = vmul.f32 %v1150, 1.442695
  %v1205 = vpow.pop %v1204
  %v1206 = vmul.f32 %v1151, 1.442695
  %v1207 = vpow.pop %v1206
  %v1208 = vmul.f32 %v1152, 1.442695
  %v1209 = vpow.pop %v1208
  %v1210 = vmul.f32 %v1153, 1.442695
  %v1211 = vpow.pop %v1210
  %v1212 = vmul.f32 %v1154, 1.442695
  %v1213 = vpow.pop %v1212
  %v1214 = vmul.f32 %v1155, 1.442695
  %v1215 = vpow.pop %v1214
  %v1216 = vmul.f32 %v1156, 1.442695
  %v1217 = vpow.pop %v1216
  %v1218 = vmul.f32 %v1157, 1.442695
  %v1219 = vpow.pop %v1218
  %v1220 = vmul.f32 %v1158, 1.442695
  %v1221 = vpow.pop %v1220
  %v1222 = vmul.f32 %v1159, 1.442695
  %v1223 = vpow.pop %v1222
  %v1224 = vmul.f32 %v1064, %v1161
  %v1225 = vmul.f32 %v1065, %v1163
  %v1226 = vmul.f32 %v1066, %v1165
  %v1227 = vmul.f32 %v1067, %v1167
  %v1228 = vmul.f32 %v1068, %v1169
  %v1229 = vmul.f32 %v1069, %v1171
  %v1230 = vmul.f32 %v1070, %v1173
  %v1231 = vmul.f32 %v1071, %v1175
  %v1232 = vmul.f32 %v1072, %v1177
  %v1233 = vmul.f32 %v1073, %v1179
  %v1234 = vmul.f32 %v1074, %v1181
  %v1235 = vmul.f32 %v1075, %v1183
  %v1236 = vmul.f32 %v1076, %v1185
  %v1237 = vmul.f32 %v1077, %v1187
  %v1238 = vmul.f32 %v1078, %v1189
  %v1239 = vmul.f32 %v1079, %v1191
  %v1240 = vmul.f32 %v1080, %v1193
  %v1241 = vmul.f32 %v1081, %v1195
  %v1242 = vmul.f32 %v1082, %v1197
  %v1243 = vmul.f32 %v1083, %v1199
  %v1244 = vmul.f32 %v1084, %v1201
  %v1245 = vmul.f32 %v1085, %v1203
  %v1246 = vmul.f32 %v1086, %v1205
  %v1247 = vmul.f32 %v1087, %v1207
  %v1248 = vmul.f32 %v1088, %v1209
  %v1249 = vmul.f32 %v1089, %v1211
  %v1250 = vmul.f32 %v1090, %v1213
  %v1251 = vmul.f32 %v1091, %v1215
  %v1252 = vmul.f32 %v1092, %v1217
  %v1253 = vmul.f32 %v1093, %v1219
  %v1254 = vmul.f32 %v1094, %v1221
  %v1255 = vmul.f32 %v1095, %v1223
  %v1256 = vsub.f32 1.0, %v1224
  %v1257 = vsub.f32 1.0, %v1225
  %v1258 = vsub.f32 1.0, %v1226
  %v1259 = vsub.f32 1.0, %v1227
  %v1260 = vsub.f32 1.0, %v1228
  %v1261 = vsub.f32 1.0, %v1229
  %v1262 = vsub.f32 1.0, %v1230
  %v1263 = vsub.f32 1.0, %v1231
  %v1264 = vsub.f32 1.0, %v1232
  %v1265 = vsub.f32 1.0, %v1233
  %v1266 = vsub.f32 1.0, %v1234
  %v1267 = vsub.f32 1.0, %v1235
  %v1268 = vsub.f32 1.0, %v1236
  %v1269 = vsub.f32 1.0, %v1237
  %v1270 = vsub.f32 1.0, %v1238
  %v1271 = vsub.f32 1.0, %v1239
  %v1272 = vsub.f32 1.0, %v1240
  %v1273 = vsub.f32 1.0, %v1241
  %v1274 = vsub.f32 1.0, %v1242
  %v1275 = vsub.f32 1.0, %v1243
  %v1276 = vsub.f32 1.0, %v1244
  %v1277 = vsub.f32 1.0, %v1245
  %v1278 = vsub.f32 1.0, %v1246
  %v1279 = vsub.f32 1.0, %v1247
  %v1280 = vsub.f32 1.0, %v1248
  %v1281 = vsub.f32 1.0, %v1249
  %v1282 = vsub.f32 1.0, %v1250
  %v1283 = vsub.f32 1.0, %v1251
  %v1284 = vsub.f32 1.0, %v1252
  %v1285 = vsub.f32 1.0, %v1253
  %v1286 = vsub.f32 1.0, %v1254
  %v1287 = vsub.f32 1.0, %v1255
  %vm1288 = vcmp.lt.f32.partialorder %v648, 0.0
  %vm1289 = vcmp.lt.f32.partialorder %v649, 0.0
  %vm1290 = vcmp.lt.f32.partialorder %v650, 0.0
  %vm1291 = vcmp.lt.f32.partialorder %v651, 0.0
  %vm1292 = vcmp.lt.f32.partialorder %v652, 0.0
  %vm1293 = vcmp.lt.f32.partialorder %v653, 0.0
  %vm1294 = vcmp.lt.f32.partialorder %v654, 0.0
  %vm1295 = vcmp.lt.f32.partialorder %v655, 0.0
  %vm1296 = vcmp.lt.f32.partialorder %v656, 0.0
  %vm1297 = vcmp.lt.f32.partialorder %v657, 0.0
  %vm1298 = vcmp.lt.f32.partialorder %v658, 0.0
  %vm1299 = vcmp.lt.f32.partialorder %v659, 0.0
  %vm1300 = vcmp.lt.f32.partialorder %v660, 0.0
  %vm1301 = vcmp.lt.f32.partialorder %v661, 0.0
  %vm1302 = vcmp.lt.f32.partialorder %v662, 0.0
  %vm1303 = vcmp.lt.f32.partialorder %v663, 0.0
  %vm1304 = vcmp.lt.f32.partialorder %v664, 0.0
  %vm1305 = vcmp.lt.f32.partialorder %v665, 0.0
  %vm1306 = vcmp.lt.f32.partialorder %v666, 0.0
  %vm1307 = vcmp.lt.f32.partialorder %v667, 0.0
  %vm1308 = vcmp.lt.f32.partialorder %v668, 0.0
  %vm1309 = vcmp.lt.f32.partialorder %v669, 0.0
  %vm1310 = vcmp.lt.f32.partialorder %v670, 0.0
  %vm1311 = vcmp.lt.f32.partialorder %v671, 0.0
  %vm1312 = vcmp.lt.f32.partialorder %v672, 0.0
  %vm1313 = vcmp.lt.f32.partialorder %v673, 0.0
  %vm1314 = vcmp.lt.f32.partialorder %v674, 0.0
  %vm1315 = vcmp.lt.f32.partialorder %v675, 0.0
  %vm1316 = vcmp.lt.f32.partialorder %v676, 0.0
  %vm1317 = vcmp.lt.f32.partialorder %v677, 0.0
  %vm1318 = vcmp.lt.f32.partialorder %v678, 0.0
  %vm1319 = vcmp.lt.f32.partialorder %v679, 0.0
  %v1320 = vsub.f32 0.0, %v1256
  %v1321 = vsub.f32 0.0, %v1257
  %v1322 = vsub.f32 0.0, %v1258
  %v1323 = vsub.f32 0.0, %v1259
  %v1324 = vsub.f32 0.0, %v1260
  %v1325 = vsub.f32 0.0, %v1261
  %v1326 = vsub.f32 0.0, %v1262
  %v1327 = vsub.f32 0.0, %v1263
  %v1328 = vsub.f32 0.0, %v1264
  %v1329 = vsub.f32 0.0, %v1265
  %v1330 = vsub.f32 0.0, %v1266
  %v1331 = vsub.f32 0.0, %v1267
  %v1332 = vsub.f32 0.0, %v1268
  %v1333 = vsub.f32 0.0, %v1269
  %v1334 = vsub.f32 0.0, %v1270
  %v1335 = vsub.f32 0.0, %v1271
  %v1336 = vsub.f32 0.0, %v1272
  %v1337 = vsub.f32 0.0, %v1273
  %v1338 = vsub.f32 0.0, %v1274
  %v1339 = vsub.f32 0.0, %v1275
  %v1340 = vsub.f32 0.0, %v1276
  %v1341 = vsub.f32 0.0, %v1277
  %v1342 = vsub.f32 0.0, %v1278
  %v1343 = vsub.f32 0.0, %v1279
  %v1344 = vsub.f32 0.0, %v1280
  %v1345 = vsub.f32 0.0, %v1281
  %v1346 = vsub.f32 0.0, %v1282
  %v1347 = vsub.f32 0.0, %v1283
  %v1348 = vsub.f32 0.0, %v1284
  %v1349 = vsub.f32 0.0, %v1285
  %v1350 = vsub.f32 0.0, %v1286
  %v1351 = vsub.f32 0.0, %v1287
  %v1352 = vsel %vm1288, %v1320, %v1256
  %v1353 = vsel %vm1289, %v1321, %v1257
  %v1354 = vsel %vm1290, %v1322, %v1258
  %v1355 = vsel %vm1291, %v1323, %v1259
  %v1356 = vsel %vm1292, %v1324, %v1260
  %v1357 = vsel %vm1293, %v1325, %v1261
  %v1358 = vsel %vm1294, %v1326, %v1262
  %v1359 = vsel %vm1295, %v1327, %v1263
  %v1360 = vsel %vm1296, %v1328, %v1264
  %v1361 = vsel %vm1297, %v1329, %v1265
  %v1362 = vsel %vm1298, %v1330, %v1266
  %v1363 = vsel %vm1299, %v1331, %v1267
  %v1364 = vsel %vm1300, %v1332, %v1268
  %v1365 = vsel %vm1301, %v1333, %v1269
  %v1366 = vsel %vm1302, %v1334, %v1270
  %v1367 = vsel %vm1303, %v1335, %v1271
  %v1368 = vsel %vm1304, %v1336, %v1272
  %v1369 = vsel %vm1305, %v1337, %v1273
  %v1370 = vsel %vm1306, %v1338, %v1274
  %v1371 = vsel %vm1307, %v1339, %v1275
  %v1372 = vsel %vm1308, %v1340, %v1276
  %v1373 = vsel %vm1309, %v1341, %v1277
  %v1374 = vsel %vm1310, %v1342, %v1278
  %v1375 = vsel %vm1311, %v1343, %v1279
  %v1376 = vsel %vm1312, %v1344, %v1280
  %v1377 = vsel %vm1313, %v1345, %v1281
  %v1378 = vsel %vm1314, %v1346, %v1282
  %v1379 = vsel %vm1315, %v1347, %v1283
  %v1380 = vsel %vm1316, %v1348, %v1284
  %v1381 = vsel %vm1317, %v1349, %v1285
  %v1382 = vsel %vm1318, %v1350, %v1286
  %v1383 = vsel %vm1319, %v1351, %v1287
  %v1384 = vadd.f32 %v1352, 1.0
  %v1385 = vadd.f32 %v1353, 1.0
  %v1386 = vadd.f32 %v1354, 1.0
  %v1387 = vadd.f32 %v1355, 1.0
  %v1388 = vadd.f32 %v1356, 1.0
  %v1389 = vadd.f32 %v1357, 1.0
  %v1390 = vadd.f32 %v1358, 1.0
  %v1391 = vadd.f32 %v1359, 1.0
  %v1392 = vadd.f32 %v1360, 1.0
  %v1393 = vadd.f32 %v1361, 1.0
  %v1394 = vadd.f32 %v1362, 1.0
  %v1395 = vadd.f32 %v1363, 1.0
  %v1396 = vadd.f32 %v1364, 1.0
  %v1397 = vadd.f32 %v1365, 1.0
  %v1398 = vadd.f32 %v1366, 1.0
  %v1399 = vadd.f32 %v1367, 1.0
  %v1400 = vadd.f32 %v1368, 1.0
  %v1401 = vadd.f32 %v1369, 1.0
  %v1402 = vadd.f32 %v1370, 1.0
  %v1403 = vadd.f32 %v1371, 1.0
  %v1404 = vadd.f32 %v1372, 1.0
  %v1405 = vadd.f32 %v1373, 1.0
  %v1406 = vadd.f32 %v1374, 1.0
  %v1407 = vadd.f32 %v1375, 1.0
  %v1408 = vadd.f32 %v1376, 1.0
  %v1409 = vadd.f32 %v1377, 1.0
  %v1410 = vadd.f32 %v1378, 1.0
  %v1411 = vadd.f32 %v1379, 1.0
  %v1412 = vadd.f32 %v1380, 1.0
  %v1413 = vadd.f32 %v1381, 1.0
  %v1414 = vadd.f32 %v1382, 1.0
  %v1415 = vadd.f32 %v1383, 1.0
  %v1416 = vmul.f32 %v616, %v1384
  %v1417 = vmul.f32 %v617, %v1385
  %v1418 = vmul.f32 %v618, %v1386
  %v1419 = vmul.f32 %v619, %v1387
  %v1420 = vmul.f32 %v620, %v1388
  %v1421 = vmul.f32 %v621, %v1389
  %v1422 = vmul.f32 %v622, %v1390
  %v1423 = vmul.f32 %v623, %v1391
  %v1424 = vmul.f32 %v624, %v1392
  %v1425 = vmul.f32 %v625, %v1393
  %v1426 = vmul.f32 %v626, %v1394
  %v1427 = vmul.f32 %v627, %v1395
  %v1428 = vmul.f32 %v628, %v1396
  %v1429 = vmul.f32 %v629, %v1397
  %v1430 = vmul.f32 %v630, %v1398
  %v1431 = vmul.f32 %v631, %v1399
  %v1432 = vmul.f32 %v632, %v1400
  %v1433 = vmul.f32 %v633, %v1401
  %v1434 = vmul.f32 %v634, %v1402
  %v1435 = vmul.f32 %v635, %v1403
  %v1436 = vmul.f32 %v636, %v1404
  %v1437 = vmul.f32 %v637, %v1405
  %v1438 = vmul.f32 %v638, %v1406
  %v1439 = vmul.f32 %v639, %v1407
  %v1440 = vmul.f32 %v640, %v1408
  %v1441 = vmul.f32 %v641, %v1409
  %v1442 = vmul.f32 %v642, %v1410
  %v1443 = vmul.f32 %v643, %v1411
  %v1444 = vmul.f32 %v644, %v1412
  %v1445 = vmul.f32 %v645, %v1413
  %v1446 = vmul.f32 %v646, %v1414
  %v1447 = vmul.f32 %v647, %v1415
  %v1448 = vld [vmem:[%s3] sm:$0xff]
  %v1449 = vld [vmem:[%s3 + $0x8] sm:$0xff]
  %v1450 = vld [vmem:[%s3 + $0x10] sm:$0xff]
  %v1451 = vld [vmem:[%s3 + $0x18] sm:$0xff]
  %v1452 = vld [vmem:[%s3 + $0x20] sm:$0xff]
  %v1453 = vld [vmem:[%s3 + $0x28] sm:$0xff]
  %v1454 = vld [vmem:[%s3 + $0x30] sm:$0xff]
  %v1455 = vld [vmem:[%s3 + $0x38] sm:$0xff]
  %v1456 = vld [vmem:[%s3 + $0x40] sm:$0xff]
  %v1457 = vld [vmem:[%s3 + $0x48] sm:$0xff]
  %v1458 = vld [vmem:[%s3 + $0x50] sm:$0xff]
  %v1459 = vld [vmem:[%s3 + $0x58] sm:$0xff]
  %v1460 = vld [vmem:[%s3 + $0x60] sm:$0xff]
  %v1461 = vld [vmem:[%s3 + $0x68] sm:$0xff]
  %v1462 = vld [vmem:[%s3 + $0x70] sm:$0xff]
  %v1463 = vld [vmem:[%s3 + $0x78] sm:$0xff]
  %v1464 = vld [vmem:[%s3 + $0x80] sm:$0xff]
  %v1465 = vld [vmem:[%s3 + $0x88] sm:$0xff]
  %v1466 = vld [vmem:[%s3 + $0x90] sm:$0xff]
  %v1467 = vld [vmem:[%s3 + $0x98] sm:$0xff]
  %v1468 = vld [vmem:[%s3 + $0xa0] sm:$0xff]
  %v1469 = vld [vmem:[%s3 + $0xa8] sm:$0xff]
  %v1470 = vld [vmem:[%s3 + $0xb0] sm:$0xff]
  %v1471 = vld [vmem:[%s3 + $0xb8] sm:$0xff]
  %v1472 = vld [vmem:[%s3 + $0xc0] sm:$0xff]
  %v1473 = vld [vmem:[%s3 + $0xc8] sm:$0xff]
  %v1474 = vld [vmem:[%s3 + $0xd0] sm:$0xff]
  %v1475 = vld [vmem:[%s3 + $0xd8] sm:$0xff]
  %v1476 = vld [vmem:[%s3 + $0xe0] sm:$0xff]
  %v1477 = vld [vmem:[%s3 + $0xe8] sm:$0xff]
  %v1478 = vld [vmem:[%s3 + $0xf0] sm:$0xff]
  %v1479 = vld [vmem:[%s3 + $0xf8] sm:$0xff]
  %v1480 = vld [vmem:[%s3 + $0x100] sm:$0xff]
  %v1481 = vld [vmem:[%s3 + $0x108] sm:$0xff]
  %v1482 = vld [vmem:[%s3 + $0x110] sm:$0xff]
  %v1483 = vld [vmem:[%s3 + $0x118] sm:$0xff]
  %v1484 = vld [vmem:[%s3 + $0x120] sm:$0xff]
  %v1485 = vld [vmem:[%s3 + $0x128] sm:$0xff]
  %v1486 = vld [vmem:[%s3 + $0x130] sm:$0xff]
  %v1487 = vld [vmem:[%s3 + $0x138] sm:$0xff]
  %v1488 = vld [vmem:[%s3 + $0x140] sm:$0xff]
  %v1489 = vld [vmem:[%s3 + $0x148] sm:$0xff]
  %v1490 = vld [vmem:[%s3 + $0x150] sm:$0xff]
  %v1491 = vld [vmem:[%s3 + $0x158] sm:$0xff]
  %v1492 = vld [vmem:[%s3 + $0x160] sm:$0xff]
  %v1493 = vld [vmem:[%s3 + $0x168] sm:$0xff]
  %v1494 = vld [vmem:[%s3 + $0x170] sm:$0xff]
  %v1495 = vld [vmem:[%s3 + $0x178] sm:$0xff]
  %v1496 = vld [vmem:[%s3 + $0x180] sm:$0xff]
  %v1497 = vld [vmem:[%s3 + $0x188] sm:$0xff]
  %v1498 = vld [vmem:[%s3 + $0x190] sm:$0xff]
  %v1499 = vld [vmem:[%s3 + $0x198] sm:$0xff]
  %v1500 = vld [vmem:[%s3 + $0x1a0] sm:$0xff]
  %v1501 = vld [vmem:[%s3 + $0x1a8] sm:$0xff]
  %v1502 = vld [vmem:[%s3 + $0x1b0] sm:$0xff]
  %v1503 = vld [vmem:[%s3 + $0x1b8] sm:$0xff]
  %v1504 = vld [vmem:[%s3 + $0x1c0] sm:$0xff]
  %v1505 = vld [vmem:[%s3 + $0x1c8] sm:$0xff]
  %v1506 = vld [vmem:[%s3 + $0x1d0] sm:$0xff]
  %v1507 = vld [vmem:[%s3 + $0x1d8] sm:$0xff]
  %v1508 = vld [vmem:[%s3 + $0x1e0] sm:$0xff]
  %v1509 = vld [vmem:[%s3 + $0x1e8] sm:$0xff]
  %v1510 = vld [vmem:[%s3 + $0x1f0] sm:$0xff]
  %v1511 = vld [vmem:[%s3 + $0x1f8] sm:$0xff]
  %v1512 = vld [vmem:[%s3 + $0x200] sm:$0xff]
  %v1513 = vld [vmem:[%s3 + $0x208] sm:$0xff]
  %v1514 = vld [vmem:[%s3 + $0x210] sm:$0xff]
  %v1515 = vld [vmem:[%s3 + $0x218] sm:$0xff]
  %v1516 = vld [vmem:[%s3 + $0x220] sm:$0xff]
  %v1517 = vld [vmem:[%s3 + $0x228] sm:$0xff]
  %v1518 = vld [vmem:[%s3 + $0x230] sm:$0xff]
  %v1519 = vld [vmem:[%s3 + $0x238] sm:$0xff]
  %v1520 = vld [vmem:[%s3 + $0x240] sm:$0xff]
  %v1521 = vld [vmem:[%s3 + $0x248] sm:$0xff]
  %v1522 = vld [vmem:[%s3 + $0x250] sm:$0xff]
  %v1523 = vld [vmem:[%s3 + $0x258] sm:$0xff]
  %v1524 = vld [vmem:[%s3 + $0x260] sm:$0xff]
  %v1525 = vld [vmem:[%s3 + $0x268] sm:$0xff]
  %v1526 = vld [vmem:[%s3 + $0x270] sm:$0xff]
  %v1527 = vld [vmem:[%s3 + $0x278] sm:$0xff]
  %v1528 = vld [vmem:[%s3 + $0x280] sm:$0xff]
  %v1529 = vld [vmem:[%s3 + $0x288] sm:$0xff]
  %v1530 = vld [vmem:[%s3 + $0x290] sm:$0xff]
  %v1531 = vld [vmem:[%s3 + $0x298] sm:$0xff]
  %v1532 = vld [vmem:[%s3 + $0x2a0] sm:$0xff]
  %v1533 = vld [vmem:[%s3 + $0x2a8] sm:$0xff]
  %v1534 = vld [vmem:[%s3 + $0x2b0] sm:$0xff]
  %v1535 = vld [vmem:[%s3 + $0x2b8] sm:$0xff]
  %v1536 = vld [vmem:[%s3 + $0x2c0] sm:$0xff]
  %v1537 = vld [vmem:[%s3 + $0x2c8] sm:$0xff]
  %v1538 = vld [vmem:[%s3 + $0x2d0] sm:$0xff]
  %v1539 = vld [vmem:[%s3 + $0x2d8] sm:$0xff]
  %v1540 = vld [vmem:[%s3 + $0x2e0] sm:$0xff]
  %v1541 = vld [vmem:[%s3 + $0x2e8] sm:$0xff]
  %v1542 = vld [vmem:[%s3 + $0x2f0] sm:$0xff]
  %v1543 = vld [vmem:[%s3 + $0x2f8] sm:$0xff]
  %v1544 = vld [vmem:[%s3 + $0x300] sm:$0xff]
  %v1545 = vld [vmem:[%s3 + $0x308] sm:$0xff]
  %v1546 = vld [vmem:[%s3 + $0x310] sm:$0xff]
  %v1547 = vld [vmem:[%s3 + $0x318] sm:$0xff]
  %v1548 = vld [vmem:[%s3 + $0x320] sm:$0xff]
  %v1549 = vld [vmem:[%s3 + $0x328] sm:$0xff]
  %v1550 = vld [vmem:[%s3 + $0x330] sm:$0xff]
  %v1551 = vld [vmem:[%s3 + $0x338] sm:$0xff]
  %v1552 = vld [vmem:[%s3 + $0x340] sm:$0xff]
  %v1553 = vld [vmem:[%s3 + $0x348] sm:$0xff]
  %v1554 = vld [vmem:[%s3 + $0x350] sm:$0xff]
  %v1555 = vld [vmem:[%s3 + $0x358] sm:$0xff]
  %v1556 = vld [vmem:[%s3 + $0x360] sm:$0xff]
  %v1557 = vld [vmem:[%s3 + $0x368] sm:$0xff]
  %v1558 = vld [vmem:[%s3 + $0x370] sm:$0xff]
  %v1559 = vld [vmem:[%s3 + $0x378] sm:$0xff]
  %v1560 = vld [vmem:[%s3 + $0x380] sm:$0xff]
  %v1561 = vld [vmem:[%s3 + $0x388] sm:$0xff]
  %v1562 = vld [vmem:[%s3 + $0x390] sm:$0xff]
  %v1563 = vld [vmem:[%s3 + $0x398] sm:$0xff]
  %v1564 = vld [vmem:[%s3 + $0x3a0] sm:$0xff]
  %v1565 = vld [vmem:[%s3 + $0x3a8] sm:$0xff]
  %v1566 = vld [vmem:[%s3 + $0x3b0] sm:$0xff]
  %v1567 = vld [vmem:[%s3 + $0x3b8] sm:$0xff]
  %v1568 = vld [vmem:[%s3 + $0x3c0] sm:$0xff]
  %v1569 = vld [vmem:[%s3 + $0x3c8] sm:$0xff]
  %v1570 = vld [vmem:[%s3 + $0x3d0] sm:$0xff]
  %v1571 = vld [vmem:[%s3 + $0x3d8] sm:$0xff]
  %v1572 = vld [vmem:[%s3 + $0x3e0] sm:$0xff]
  %v1573 = vld [vmem:[%s3 + $0x3e8] sm:$0xff]
  %v1574 = vld [vmem:[%s3 + $0x3f0] sm:$0xff]
  %v1575 = vld [vmem:[%s3 + $0x3f8] sm:$0xff]
  %v1576 = vld [vmem:[%s4] sm:$0x1]
  %v1578 = vlaneseq
  %v1579 = vshrl.u32 %v1578, 7
  %v1580 = vsub.s32 0, %v1579
  %v1581 = vrot.slane %v1576, %v1580
  %1583 = vmatprep.subr.mxu0 0.0
  %1584 = vmatpush1.msra.mxu0 %v1448
  %1585 = vmatprep.subr.mxu0 0.0
  %1586 = vmatpush1.msra.mxu0 %v1449
  %1587 = vmatprep.subr.mxu0 0.0
  %1588 = vmatpush1.msra.mxu0 %v1450
  %1589 = vmatprep.subr.mxu0 0.0
  %1590 = vmatpush1.msra.mxu0 %v1451
  %1591 = vmatprep.subr.mxu0 0.0
  %1592 = vmatpush1.msra.mxu0 %v1452
  %1593 = vmatprep.subr.mxu0 0.0
  %1594 = vmatpush1.msra.mxu0 %v1453
  %1595 = vmatprep.subr.mxu0 0.0
  %1596 = vmatpush1.msra.mxu0 %v1454
  %1597 = vmatprep.subr.mxu0 0.0
  %1598 = vmatpush1.msra.mxu0 %v1455
  %1599 = vmatprep.subr.mxu0 0.0
  %1600 = vmatpush1.msra.mxu0 %v1456
  %1601 = vmatprep.subr.mxu0 0.0
  %1602 = vmatpush1.msra.mxu0 %v1457
  %1603 = vmatprep.subr.mxu0 0.0
  %1604 = vmatpush1.msra.mxu0 %v1458
  %1605 = vmatprep.subr.mxu0 0.0
  %1606 = vmatpush1.msra.mxu0 %v1459
  %1607 = vmatprep.subr.mxu0 0.0
  %1608 = vmatpush1.msra.mxu0 %v1460
  %1609 = vmatprep.subr.mxu0 0.0
  %1610 = vmatpush1.msra.mxu0 %v1461
  %1611 = vmatprep.subr.mxu0 0.0
  %1612 = vmatpush1.msra.mxu0 %v1462
  %1613 = vmatprep.subr.mxu0 0.0
  %1614 = vmatpush1.msra.mxu0 %v1463
  %1615 = vmatprep.subr.mxu0 0.0
  %1616 = vmatpush1.msra.mxu0 %v1464
  %1617 = vmatprep.subr.mxu0 0.0
  %1618 = vmatpush1.msra.mxu0 %v1465
  %1619 = vmatprep.subr.mxu0 0.0
  %1620 = vmatpush1.msra.mxu0 %v1466
  %1621 = vmatprep.subr.mxu0 0.0
  %1622 = vmatpush1.msra.mxu0 %v1467
  %1623 = vmatprep.subr.mxu0 0.0
  %1624 = vmatpush1.msra.mxu0 %v1468
  %1625 = vmatprep.subr.mxu0 0.0
  %1626 = vmatpush1.msra.mxu0 %v1469
  %1627 = vmatprep.subr.mxu0 0.0
  %1628 = vmatpush1.msra.mxu0 %v1470
  %1629 = vmatprep.subr.mxu0 0.0
  %1630 = vmatpush1.msra.mxu0 %v1471
  %1631 = vmatprep.subr.mxu0 0.0
  %1632 = vmatpush1.msra.mxu0 %v1472
  %1633 = vmatprep.subr.mxu0 0.0
  %1634 = vmatpush1.msra.mxu0 %v1473
  %1635 = vmatprep.subr.mxu0 0.0
  %1636 = vmatpush1.msra.mxu0 %v1474
  %1637 = vmatprep.subr.mxu0 0.0
  %1638 = vmatpush1.msra.mxu0 %v1475
  %1639 = vmatprep.subr.mxu0 0.0
  %1640 = vmatpush1.msra.mxu0 %v1476
  %1641 = vmatprep.subr.mxu0 0.0
  %1642 = vmatpush1.msra.mxu0 %v1477
  %1643 = vmatprep.subr.mxu0 0.0
  %1644 = vmatpush1.msra.mxu0 %v1478
  %1645 = vmatprep.subr.mxu0 0.0
  %1646 = vmatpush1.msra.mxu0 %v1479
  %1647 = vmatprep.mubr.f32.mxu0 %v1417
  %1648 = vmatmul.mubr.f32.gmra.mrb[0].mxu0 %v1416
  %v1649 = vpop.f32.mrb[0].mxu0
  %v1650 = vadd.f32 %v1581, %v1649
  %v1651 = vpop.f32.mrb[0].mxu0
  %1652 = vmatprep.mubr.f32.mxu0 %v1425
  %1653 = vmatmul.mubr.f32.gmra.mrb[0].mxu0 %v1424
  %v1654 = vpop.f32.mrb[0].mxu0
  %v1655 = vadd.f32 %v1581, %v1654
  %v1656 = vpop.f32.mrb[0].mxu0
  %1657 = vmatprep.mubr.f32.mxu0 %v1433
  %1658 = vmatmul.mubr.f32.gmra.mrb[0].mxu0 %v1432
  %v1659 = vpop.f32.mrb[0].mxu0
  %v1660 = vadd.f32 %v1581, %v1659
  %v1661 = vpop.f32.mrb[0].mxu0
  %1662 = vmatprep.mubr.f32.mxu0 %v1441
  %1663 = vmatmul.mubr.f32.gmra.mrb[0].mxu0 %v1440
  %v1664 = vpop.f32.mrb[0].mxu0
  %v1665 = vadd.f32 %v1581, %v1664
  %v1666 = vpop.f32.mrb[0].mxu0
  %1667 = vdwg.mxu0
  %1668 = vmatprep.subr.mxu0 0.0
  %1669 = vmatpush1.msra.mxu0 %v1480
  %1670 = vmatprep.subr.mxu0 0.0
  %1671 = vmatpush1.msra.mxu0 %v1481
  %1672 = vmatprep.subr.mxu0 0.0
  %1673 = vmatpush1.msra.mxu0 %v1482
  %1674 = vmatprep.subr.mxu0 0.0
  %1675 = vmatpush1.msra.mxu0 %v1483
  %1676 = vmatprep.subr.mxu0 0.0
  %1677 = vmatpush1.msra.mxu0 %v1484
  %1678 = vmatprep.subr.mxu0 0.0
  %1679 = vmatpush1.msra.mxu0 %v1485
  %1680 = vmatprep.subr.mxu0 0.0
  %1681 = vmatpush1.msra.mxu0 %v1486
  %1682 = vmatprep.subr.mxu0 0.0
  %1683 = vmatpush1.msra.mxu0 %v1487
  %1684 = vmatprep.subr.mxu0 0.0
  %1685 = vmatpush1.msra.mxu0 %v1488
  %1686 = vmatprep.subr.mxu0 0.0
  %1687 = vmatpush1.msra.mxu0 %v1489
  %1688 = vmatprep.subr.mxu0 0.0
  %1689 = vmatpush1.msra.mxu0 %v1490
  %1690 = vmatprep.subr.mxu0 0.0
  %1691 = vmatpush1.msra.mxu0 %v1491
  %1692 = vmatprep.subr.mxu0 0.0
  %1693 = vmatpush1.msra.mxu0 %v1492
  %1694 = vmatprep.subr.mxu0 0.0
  %1695 = vmatpush1.msra.mxu0 %v1493
  %1696 = vmatprep.subr.mxu0 0.0
  %1697 = vmatpush1.msra.mxu0 %v1494
  %1698 = vmatprep.subr.mxu0 0.0
  %1699 = vmatpush1.msra.mxu0 %v1495
  %1700 = vmatprep.subr.mxu0 0.0
  %1701 = vmatpush1.msra.mxu0 %v1496
  %1702 = vmatprep.subr.mxu0 0.0
  %1703 = vmatpush1.msra.mxu0 %v1497
  %1704 = vmatprep.subr.mxu0 0.0
  %1705 = vmatpush1.msra.mxu0 %v1498
  %1706 = vmatprep.subr.mxu0 0.0
  %1707 = vmatpush1.msra.mxu0 %v1499
  %1708 = vmatprep.subr.mxu0 0.0
  %1709 = vmatpush1.msra.mxu0 %v1500
  %1710 = vmatprep.subr.mxu0 0.0
  %1711 = vmatpush1.msra.mxu0 %v1501
  %1712 = vmatprep.subr.mxu0 0.0
  %1713 = vmatpush1.msra.mxu0 %v1502
  %1714 = vmatprep.subr.mxu0 0.0
  %1715 = vmatpush1.msra.mxu0 %v1503
  %1716 = vmatprep.subr.mxu0 0.0
  %1717 = vmatpush1.msra.mxu0 %v1504
  %1718 = vmatprep.subr.mxu0 0.0
  %1719 = vmatpush1.msra.mxu0 %v1505
  %1720 = vmatprep.subr.mxu0 0.0
  %1721 = vmatpush1.msra.mxu0 %v1506
  %1722 = vmatprep.subr.mxu0 0.0
  %1723 = vmatpush1.msra.mxu0 %v1507
  %1724 = vmatprep.subr.mxu0 0.0
  %1725 = vmatpush1.msra.mxu0 %v1508
  %1726 = vmatprep.subr.mxu0 0.0
  %1727 = vmatpush1.msra.mxu0 %v1509
  %1728 = vmatprep.subr.mxu0 0.0
  %1729 = vmatpush1.msra.mxu0 %v1510
  %1730 = vmatprep.subr.mxu0 0.0
  %1731 = vmatpush1.msra.mxu0 %v1511
  %1732 = vmatprep.mubr.f32.mxu0 %v1419
  %1733 = vmatmul.mubr.f32.gmra.mrb[0].mxu0 %v1418
  %v1734 = vpop.f32.mrb[0].mxu0
  %v1735 = vadd.f32 %v1650, %v1734
  %v1736 = vpop.f32.mrb[0].mxu0
  %1737 = vmatprep.mubr.f32.mxu0 %v1427
  %1738 = vmatmul.mubr.f32.gmra.mrb[0].mxu0 %v1426
  %v1739 = vpop.f32.mrb[0].mxu0
  %v1740 = vadd.f32 %v1655, %v1739
  %v1741 = vpop.f32.mrb[0].mxu0
  %1742 = vmatprep.mubr.f32.mxu0 %v1435
  %1743 = vmatmul.mubr.f32.gmra.mrb[0].mxu0 %v1434
  %v1744 = vpop.f32.mrb[0].mxu0
  %v1745 = vadd.f32 %v1660, %v1744
  %v1746 = vpop.f32.mrb[0].mxu0
  %1747 = vmatprep.mubr.f32.mxu0 %v1443
  %1748 = vmatmul.mubr.f32.gmra.mrb[0].mxu0 %v1442
  %v1749 = vpop.f32.mrb[0].mxu0
  %v1750 = vadd.f32 %v1665, %v1749
  %v1751 = vpop.f32.mrb[0].mxu0
  %1752 = vdwg.mxu0
  %1753 = vmatprep.subr.mxu0 0.0
  %1754 = vmatpush1.msra.mxu0 %v1512
  %1755 = vmatprep.subr.mxu0 0.0
  %1756 = vmatpush1.msra.mxu0 %v1513
  %1757 = vmatprep.subr.mxu0 0.0
  %1758 = vmatpush1.msra.mxu0 %v1514
  %1759 = vmatprep.subr.mxu0 0.0
  %1760 = vmatpush1.msra.mxu0 %v1515
  %1761 = vmatprep.subr.mxu0 0.0
  %1762 = vmatpush1.msra.mxu0 %v1516
  %1763 = vmatprep.subr.mxu0 0.0
  %1764 = vmatpush1.msra.mxu0 %v1517
  %1765 = vmatprep.subr.mxu0 0.0
  %1766 = vmatpush1.msra.mxu0 %v1518
  %1767 = vmatprep.subr.mxu0 0.0
  %1768 = vmatpush1.msra.mxu0 %v1519
  %1769 = vmatprep.subr.mxu0 0.0
  %1770 = vmatpush1.msra.mxu0 %v1520
  %1771 = vmatprep.subr.mxu0 0.0
  %1772 = vmatpush1.msra.mxu0 %v1521
  %1773 = vmatprep.subr.mxu0 0.0
  %1774 = vmatpush1.msra.mxu0 %v1522
  %1775 = vmatprep.subr.mxu0 0.0
  %1776 = vmatpush1.msra.mxu0 %v1523
  %1777 = vmatprep.subr.mxu0 0.0
  %1778 = vmatpush1.msra.mxu0 %v1524
  %1779 = vmatprep.subr.mxu0 0.0
  %1780 = vmatpush1.msra.mxu0 %v1525
  %1781 = vmatprep.subr.mxu0 0.0
  %1782 = vmatpush1.msra.mxu0 %v1526
  %1783 = vmatprep.subr.mxu0 0.0
  %1784 = vmatpush1.msra.mxu0 %v1527
  %1785 = vmatprep.subr.mxu0 0.0
  %1786 = vmatpush1.msra.mxu0 %v1528
  %1787 = vmatprep.subr.mxu0 0.0
  %1788 = vmatpush1.msra.mxu0 %v1529
  %1789 = vmatprep.subr.mxu0 0.0
  %1790 = vmatpush1.msra.mxu0 %v1530
  %1791 = vmatprep.subr.mxu0 0.0
  %1792 = vmatpush1.msra.mxu0 %v1531
  %1793 = vmatprep.subr.mxu0 0.0
  %1794 = vmatpush1.msra.mxu0 %v1532
  %1795 = vmatprep.subr.mxu0 0.0
  %1796 = vmatpush1.msra.mxu0 %v1533
  %1797 = vmatprep.subr.mxu0 0.0
  %1798 = vmatpush1.msra.mxu0 %v1534
  %1799 = vmatprep.subr.mxu0 0.0
  %1800 = vmatpush1.msra.mxu0 %v1535
  %1801 = vmatprep.subr.mxu0 0.0
  %1802 = vmatpush1.msra.mxu0 %v1536
  %1803 = vmatprep.subr.mxu0 0.0
  %1804 = vmatpush1.msra.mxu0 %v1537
  %1805 = vmatprep.subr.mxu0 0.0
  %1806 = vmatpush1.msra.mxu0 %v1538
  %1807 = vmatprep.subr.mxu0 0.0
  %1808 = vmatpush1.msra.mxu0 %v1539
  %1809 = vmatprep.subr.mxu0 0.0
  %1810 = vmatpush1.msra.mxu0 %v1540
  %1811 = vmatprep.subr.mxu0 0.0
  %1812 = vmatpush1.msra.mxu0 %v1541
  %1813 = vmatprep.subr.mxu0 0.0
  %1814 = vmatpush1.msra.mxu0 %v1542
  %1815 = vmatprep.subr.mxu0 0.0
  %1816 = vmatpush1.msra.mxu0 %v1543
  %1817 = vmatprep.mubr.f32.mxu0 %v1421
  %1818 = vmatmul.mubr.f32.gmra.mrb[0].mxu0 %v1420
  %v1819 = vpop.f32.mrb[0].mxu0
  %v1820 = vadd.f32 %v1735, %v1819
  %v1821 = vpop.f32.mrb[0].mxu0
  %1822 = vmatprep.mubr.f32.mxu0 %v1429
  %1823 = vmatmul.mubr.f32.gmra.mrb[0].mxu0 %v1428
  %v1824 = vpop.f32.mrb[0].mxu0
  %v1825 = vadd.f32 %v1740, %v1824
  %v1826 = vpop.f32.mrb[0].mxu0
  %1827 = vmatprep.mubr.f32.mxu0 %v1437
  %1828 = vmatmul.mubr.f32.gmra.mrb[0].mxu0 %v1436
  %v1829 = vpop.f32.mrb[0].mxu0
  %v1830 = vadd.f32 %v1745, %v1829
  %v1831 = vpop.f32.mrb[0].mxu0
  %1832 = vmatprep.mubr.f32.mxu0 %v1445
  %1833 = vmatmul.mubr.f32.gmra.mrb[0].mxu0 %v1444
  %v1834 = vpop.f32.mrb[0].mxu0
  %v1835 = vadd.f32 %v1750, %v1834
  %v1836 = vpop.f32.mrb[0].mxu0
  %1837 = vdwg.mxu0
  %1838 = vmatprep.subr.mxu0 0.0
  %1839 = vmatpush1.msra.mxu0 %v1544
  %1840 = vmatprep.subr.mxu0 0.0
  %1841 = vmatpush1.msra.mxu0 %v1545
  %1842 = vmatprep.subr.mxu0 0.0
  %1843 = vmatpush1.msra.mxu0 %v1546
  %1844 = vmatprep.subr.mxu0 0.0
  %1845 = vmatpush1.msra.mxu0 %v1547
  %1846 = vmatprep.subr.mxu0 0.0
  %1847 = vmatpush1.msra.mxu0 %v1548
  %1848 = vmatprep.subr.mxu0 0.0
  %1849 = vmatpush1.msra.mxu0 %v1549
  %1850 = vmatprep.subr.mxu0 0.0
  %1851 = vmatpush1.msra.mxu0 %v1550
  %1852 = vmatprep.subr.mxu0 0.0
  %1853 = vmatpush1.msra.mxu0 %v1551
  %1854 = vmatprep.subr.mxu0 0.0
  %1855 = vmatpush1.msra.mxu0 %v1552
  %1856 = vmatprep.subr.mxu0 0.0
  %1857 = vmatpush1.msra.mxu0 %v1553
  %1858 = vmatprep.subr.mxu0 0.0
  %1859 = vmatpush1.msra.mxu0 %v1554
  %1860 = vmatprep.subr.mxu0 0.0
  %1861 = vmatpush1.msra.mxu0 %v1555
  %1862 = vmatprep.subr.mxu0 0.0
  %1863 = vmatpush1.msra.mxu0 %v1556
  %1864 = vmatprep.subr.mxu0 0.0
  %1865 = vmatpush1.msra.mxu0 %v1557
  %1866 = vmatprep.subr.mxu0 0.0
  %1867 = vmatpush1.msra.mxu0 %v1558
  %1868 = vmatprep.subr.mxu0 0.0
  %1869 = vmatpush1.msra.mxu0 %v1559
  %1870 = vmatprep.subr.mxu0 0.0
  %1871 = vmatpush1.msra.mxu0 %v1560
  %1872 = vmatprep.subr.mxu0 0.0
  %1873 = vmatpush1.msra.mxu0 %v1561
  %1874 = vmatprep.subr.mxu0 0.0
  %1875 = vmatpush1.msra.mxu0 %v1562
  %1876 = vmatprep.subr.mxu0 0.0
  %1877 = vmatpush1.msra.mxu0 %v1563
  %1878 = vmatprep.subr.mxu0 0.0
  %1879 = vmatpush1.msra.mxu0 %v1564
  %1880 = vmatprep.subr.mxu0 0.0
  %1881 = vmatpush1.msra.mxu0 %v1565
  %1882 = vmatprep.subr.mxu0 0.0
  %1883 = vmatpush1.msra.mxu0 %v1566
  %1884 = vmatprep.subr.mxu0 0.0
  %1885 = vmatpush1.msra.mxu0 %v1567
  %1886 = vmatprep.subr.mxu0 0.0
  %1887 = vmatpush1.msra.mxu0 %v1568
  %1888 = vmatprep.subr.mxu0 0.0
  %1889 = vmatpush1.msra.mxu0 %v1569
  %1890 = vmatprep.subr.mxu0 0.0
  %1891 = vmatpush1.msra.mxu0 %v1570
  %1892 = vmatprep.subr.mxu0 0.0
  %1893 = vmatpush1.msra.mxu0 %v1571
  %1894 = vmatprep.subr.mxu0 0.0
  %1895 = vmatpush1.msra.mxu0 %v1572
  %1896 = vmatprep.subr.mxu0 0.0
  %1897 = vmatpush1.msra.mxu0 %v1573
  %1898 = vmatprep.subr.mxu0 0.0
  %1899 = vmatpush1.msra.mxu0 %v1574
  %1900 = vmatprep.subr.mxu0 0.0
  %1901 = vmatpush1.msra.mxu0 %v1575
  %1902 = vmatprep.mubr.f32.mxu0 %v1423
  %1903 = vmatmul.mubr.f32.gmra.mrb[0].mxu0 %v1422
  %v1904 = vpop.f32.mrb[0].mxu0
  %v1905 = vadd.f32 %v1820, %v1904
  %v1906 = vpop.f32.mrb[0].mxu0
  %1907 = vmatprep.mubr.f32.mxu0 %v1431
  %1908 = vmatmul.mubr.f32.gmra.mrb[0].mxu0 %v1430
  %v1909 = vpop.f32.mrb[0].mxu0
  %v1910 = vadd.f32 %v1825, %v1909
  %v1911 = vpop.f32.mrb[0].mxu0
  %1912 = vmatprep.mubr.f32.mxu0 %v1439
  %1913 = vmatmul.mubr.f32.gmra.mrb[0].mxu0 %v1438
  %v1914 = vpop.f32.mrb[0].mxu0
  %v1915 = vadd.f32 %v1830, %v1914
  %v1916 = vpop.f32.mrb[0].mxu0
  %1917 = vmatprep.mubr.f32.mxu0 %v1447
  %1918 = vmatmul.mubr.f32.gmra.mrb[0].mxu0 %v1446
  %v1919 = vpop.f32.mrb[0].mxu0
  %v1920 = vadd.f32 %v1835, %v1919
  %v1921 = vpop.f32.mrb[0].mxu0
  %1922 = vdwg.mxu0
  %1923 = vst [vmem:[%s15] sm:$0xff] %v1905
  %1924 = vst [vmem:[%s15 + $0x8] sm:$0xff] %v1910
  %1925 = vst [vmem:[%s15 + $0x10] sm:$0xff] %v1915
  %1926 = vst [vmem:[%s15 + $0x18] sm:$0xff] %v1920
  %v1927 = vld [vmem:[%s5] sm:$0xff]
  %v1928 = vld [vmem:[%s5 + $0x8] sm:$0xff]
  %v1929 = vld [vmem:[%s5 + $0x10] sm:$0xff]
  %v1930 = vld [vmem:[%s5 + $0x18] sm:$0xff]
  %v1931 = vld [vmem:[%s6] sm:$0xff]
  %v1932 = vld [vmem:[%s6 + $0x8] sm:$0xff]
  %v1933 = vld [vmem:[%s6 + $0x10] sm:$0xff]
  %v1934 = vld [vmem:[%s6 + $0x18] sm:$0xff]
  %v1935 = vld [vmem:[%s6 + $0x20] sm:$0xff]
  %v1936 = vld [vmem:[%s6 + $0x28] sm:$0xff]
  %v1937 = vld [vmem:[%s6 + $0x30] sm:$0xff]
  %v1938 = vld [vmem:[%s6 + $0x38] sm:$0xff]
  %v1939 = vld [vmem:[%s6 + $0x40] sm:$0xff]
  %v1940 = vld [vmem:[%s6 + $0x48] sm:$0xff]
  %v1941 = vld [vmem:[%s6 + $0x50] sm:$0xff]
  %v1942 = vld [vmem:[%s6 + $0x58] sm:$0xff]
  %v1943 = vld [vmem:[%s6 + $0x60] sm:$0xff]
  %v1944 = vld [vmem:[%s6 + $0x68] sm:$0xff]
  %v1945 = vld [vmem:[%s6 + $0x70] sm:$0xff]
  %v1946 = vld [vmem:[%s6 + $0x78] sm:$0xff]
  %v1947 = vld [vmem:[%s7] sm:$0xff]
  %v1949 = vlaneseq
  %v1950 = vshrl.u32 %v1949, 7
  %v1951 = vsub.s32 0, %v1950
  %v1952 = vrot.slane %v1947, %v1951
  %v1953 = vlaneseq
  %v1954 = vshrl.u32 %v1953, 7
  %v1955 = vsub.s32 1, %v1954
  %v1956 = vrot.slane %v1947, %v1955
  %v1957 = vlaneseq
  %v1958 = vshrl.u32 %v1957, 7
  %v1959 = vsub.s32 2, %v1958
  %v1960 = vrot.slane %v1947, %v1959
  %v1961 = vlaneseq
  %v1962 = vshrl.u32 %v1961, 7
  %v1963 = vsub.s32 3, %v1962
  %v1964 = vrot.slane %v1947, %v1963
  %v1965 = vlaneseq
  %v1966 = vshrl.u32 %v1965, 7
  %v1967 = vsub.s32 4, %v1966
  %v1968 = vrot.slane %v1947, %v1967
  %v1969 = vlaneseq
  %v1970 = vshrl.u32 %v1969, 7
  %v1971 = vsub.s32 5, %v1970
  %v1972 = vrot.slane %v1947, %v1971
  %v1973 = vlaneseq
  %v1974 = vshrl.u32 %v1973, 7
  %v1975 = vsub.s32 6, %v1974
  %v1976 = vrot.slane %v1947, %v1975
  %v1977 = vlaneseq
  %v1978 = vshrl.u32 %v1977, 7
  %v1979 = vsub.s32 7, %v1978
  %v1980 = vrot.slane %v1947, %v1979
  %vm1989 = vcmask 130048
  %v1991 = vsel %vm1989, %v1927, 0
  %v1994 = vsel %vm1989, %v1928, 0
  %v1997 = vsel %vm1989, %v1929, 0
  %v2000 = vsel %vm1989, %v1930, 0
  %2002 = vmatprep.subr.mxu0 %v1932
  %2003 = vmatpush1.msra.mxu0 %v1931
  %2004 = vmatprep.subr.mxu0 %v1940
  %2005 = vmatpush1.msra.mxu0 %v1939
  %2006 = vmatprep.subr.mxu0 0.0
  %2007 = vmatpush1.msra.mxu0 0.0
  %2008 = vmatprep.subr.mxu0 0.0
  %2009 = vmatpush1.msra.mxu0 0.0
  %2010 = vmatprep.subr.mxu0 0.0
  %2011 = vmatpush1.msra.mxu0 0.0
  %2012 = vmatprep.subr.mxu0 0.0
  %2013 = vmatpush1.msra.mxu0 0.0
  %2014 = vmatprep.subr.mxu0 0.0
  %2015 = vmatpush1.msra.mxu0 0.0
  %2016 = vmatprep.subr.mxu0 0.0
  %2017 = vmatpush1.msra.mxu0 0.0
  %2018 = vmatprep.subr.mxu0 0.0
  %2019 = vmatpush1.msra.mxu0 0.0
  %2020 = vmatprep.subr.mxu0 0.0
  %2021 = vmatpush1.msra.mxu0 0.0
  %2022 = vmatprep.subr.mxu0 0.0
  %2023 = vmatpush1.msra.mxu0 0.0
  %2024 = vmatprep.subr.mxu0 0.0
  %2025 = vmatpush1.msra.mxu0 0.0
  %2026 = vmatprep.subr.mxu0 0.0
  %2027 = vmatpush1.msra.mxu0 0.0
  %2028 = vmatprep.subr.mxu0 0.0
  %2029 = vmatpush1.msra.mxu0 0.0
  %2030 = vmatprep.subr.mxu0 0.0
  %2031 = vmatpush1.msra.mxu0 0.0
  %2032 = vmatprep.subr.mxu0 0.0
  %2033 = vmatpush1.msra.mxu0 0.0
  %2034 = vmatprep.subr.mxu0 0.0
  %2035 = vmatpush1.msra.mxu0 0.0
  %2036 = vmatprep.subr.mxu0 0.0
  %2037 = vmatpush1.msra.mxu0 0.0
  %2038 = vmatprep.subr.mxu0 0.0
  %2039 = vmatpush1.msra.mxu0 0.0
  %2040 = vmatprep.subr.mxu0 0.0
  %2041 = vmatpush1.msra.mxu0 0.0
  %2042 = vmatprep.subr.mxu0 0.0
  %2043 = vmatpush1.msra.mxu0 0.0
  %2044 = vmatprep.subr.mxu0 0.0
  %2045 = vmatpush1.msra.mxu0 0.0
  %2046 = vmatprep.subr.mxu0 0.0
  %2047 = vmatpush1.msra.mxu0 0.0
  %2048 = vmatprep.subr.mxu0 0.0
  %2049 = vmatpush1.msra.mxu0 0.0
  %2050 = vmatprep.subr.mxu0 0.0
  %2051 = vmatpush1.msra.mxu0 0.0
  %2052 = vmatprep.subr.mxu0 0.0
  %2053 = vmatpush1.msra.mxu0 0.0
  %2054 = vmatprep.subr.mxu0 0.0
  %2055 = vmatpush1.msra.mxu0 0.0
  %2056 = vmatprep.subr.mxu0 0.0
  %2057 = vmatpush1.msra.mxu0 0.0
  %2058 = vmatprep.subr.mxu0 0.0
  %2059 = vmatpush1.msra.mxu0 0.0
  %2060 = vmatprep.subr.mxu0 0.0
  %2061 = vmatpush1.msra.mxu0 0.0
  %2062 = vmatprep.subr.mxu0 0.0
  %2063 = vmatpush1.msra.mxu0 0.0
  %2064 = vmatprep.subr.mxu0 0.0
  %2065 = vmatpush1.msra.mxu0 0.0
  %2066 = vmatprep.mubr.f32.mxu0 0.0
  %2067 = vmatmul.mubr.f32.gmra.mrb[0].mxu0 %v1991
  %v2068 = vpop.f32.mrb[0].mxu0
  %v2069 = vadd.f32 %v1952, %v2068
  %v2070 = vpop.f32.mrb[0].mxu0
  %v2071 = vadd.f32 %v1956, %v2070
  %2072 = vmatprep.mubr.f32.mxu0 0.0
  %2073 = vmatmul.mubr.f32.gmra.mrb[0].mxu0 %v1994
  %v2074 = vpop.f32.mrb[0].mxu0
  %v2075 = vadd.f32 %v1952, %v2074
  %v2076 = vpop.f32.mrb[0].mxu0
  %v2077 = vadd.f32 %v1956, %v2076
  %2078 = vmatprep.mubr.f32.mxu0 0.0
  %2079 = vmatmul.mubr.f32.gmra.mrb[0].mxu0 %v1997
  %v2080 = vpop.f32.mrb[0].mxu0
  %v2081 = vadd.f32 %v1952, %v2080
  %v2082 = vpop.f32.mrb[0].mxu0
  %v2083 = vadd.f32 %v1956, %v2082
  %2084 = vmatprep.mubr.f32.mxu0 0.0
  %2085 = vmatmul.mubr.f32.gmra.mrb[0].mxu0 %v2000
  %v2086 = vpop.f32.mrb[0].mxu0
  %v2087 = vadd.f32 %v1952, %v2086
  %v2088 = vpop.f32.mrb[0].mxu0
  %v2089 = vadd.f32 %v1956, %v2088
  %2090 = vdwg.mxu0
  %2091 = vmatprep.subr.mxu0 %v1934
  %2092 = vmatpush1.msra.mxu0 %v1933
  %2093 = vmatprep.subr.mxu0 %v1942
  %2094 = vmatpush1.msra.mxu0 %v1941
  %2095 = vmatprep.subr.mxu0 0.0
  %2096 = vmatpush1.msra.mxu0 0.0
  %2097 = vmatprep.subr.mxu0 0.0
  %2098 = vmatpush1.msra.mxu0 0.0
  %2099 = vmatprep.subr.mxu0 0.0
  %2100 = vmatpush1.msra.mxu0 0.0
  %2101 = vmatprep.subr.mxu0 0.0
  %2102 = vmatpush1.msra.mxu0 0.0
  %2103 = vmatprep.subr.mxu0 0.0
  %2104 = vmatpush1.msra.mxu0 0.0
  %2105 = vmatprep.subr.mxu0 0.0
  %2106 = vmatpush1.msra.mxu0 0.0
  %2107 = vmatprep.subr.mxu0 0.0
  %2108 = vmatpush1.msra.mxu0 0.0
  %2109 = vmatprep.subr.mxu0 0.0
  %2110 = vmatpush1.msra.mxu0 0.0
  %2111 = vmatprep.subr.mxu0 0.0
  %2112 = vmatpush1.msra.mxu0 0.0
  %2113 = vmatprep.subr.mxu0 0.0
  %2114 = vmatpush1.msra.mxu0 0.0
  %2115 = vmatprep.subr.mxu0 0.0
  %2116 = vmatpush1.msra.mxu0 0.0
  %2117 = vmatprep.subr.mxu0 0.0
  %2118 = vmatpush1.msra.mxu0 0.0
  %2119 = vmatprep.subr.mxu0 0.0
  %2120 = vmatpush1.msra.mxu0 0.0
  %2121 = vmatprep.subr.mxu0 0.0
  %2122 = vmatpush1.msra.mxu0 0.0
  %2123 = vmatprep.subr.mxu0 0.0
  %2124 = vmatpush1.msra.mxu0 0.0
  %2125 = vmatprep.subr.mxu0 0.0
  %2126 = vmatpush1.msra.mxu0 0.0
  %2127 = vmatprep.subr.mxu0 0.0
  %2128 = vmatpush1.msra.mxu0 0.0
  %2129 = vmatprep.subr.mxu0 0.0
  %2130 = vmatpush1.msra.mxu0 0.0
  %2131 = vmatprep.subr.mxu0 0.0
  %2132 = vmatpush1.msra.mxu0 0.0
  %2133 = vmatprep.subr.mxu0 0.0
  %2134 = vmatpush1.msra.mxu0 0.0
  %2135 = vmatprep.subr.mxu0 0.0
  %2136 = vmatpush1.msra.mxu0 0.0
  %2137 = vmatprep.subr.mxu0 0.0
  %2138 = vmatpush1.msra.mxu0 0.0
  %2139 = vmatprep.subr.mxu0 0.0
  %2140 = vmatpush1.msra.mxu0 0.0
  %2141 = vmatprep.subr.mxu0 0.0
  %2142 = vmatpush1.msra.mxu0 0.0
  %2143 = vmatprep.subr.mxu0 0.0
  %2144 = vmatpush1.msra.mxu0 0.0
  %2145 = vmatprep.subr.mxu0 0.0
  %2146 = vmatpush1.msra.mxu0 0.0
  %2147 = vmatprep.subr.mxu0 0.0
  %2148 = vmatpush1.msra.mxu0 0.0
  %2149 = vmatprep.subr.mxu0 0.0
  %2150 = vmatpush1.msra.mxu0 0.0
  %2151 = vmatprep.subr.mxu0 0.0
  %2152 = vmatpush1.msra.mxu0 0.0
  %2153 = vmatprep.subr.mxu0 0.0
  %2154 = vmatpush1.msra.mxu0 0.0
  %2155 = vmatprep.mubr.f32.mxu0 0.0
  %2156 = vmatmul.mubr.f32.gmra.mrb[0].mxu0 %v1991
  %v2157 = vpop.f32.mrb[0].mxu0
  %v2158 = vadd.f32 %v1960, %v2157
  %v2159 = vpop.f32.mrb[0].mxu0
  %v2160 = vadd.f32 %v1964, %v2159
  %2161 = vmatprep.mubr.f32.mxu0 0.0
  %2162 = vmatmul.mubr.f32.gmra.mrb[0].mxu0 %v1994
  %v2163 = vpop.f32.mrb[0].mxu0
  %v2164 = vadd.f32 %v1960, %v2163
  %v2165 = vpop.f32.mrb[0].mxu0
  %v2166 = vadd.f32 %v1964, %v2165
  %2167 = vmatprep.mubr.f32.mxu0 0.0
  %2168 = vmatmul.mubr.f32.gmra.mrb[0].mxu0 %v1997
  %v2169 = vpop.f32.mrb[0].mxu0
  %v2170 = vadd.f32 %v1960, %v2169
  %v2171 = vpop.f32.mrb[0].mxu0
  %v2172 = vadd.f32 %v1964, %v2171
  %2173 = vmatprep.mubr.f32.mxu0 0.0
  %2174 = vmatmul.mubr.f32.gmra.mrb[0].mxu0 %v2000
  %v2175 = vpop.f32.mrb[0].mxu0
  %v2176 = vadd.f32 %v1960, %v2175
  %v2177 = vpop.f32.mrb[0].mxu0
  %v2178 = vadd.f32 %v1964, %v2177
  %2179 = vdwg.mxu0
  %2180 = vmatprep.subr.mxu0 %v1936
  %2181 = vmatpush1.msra.mxu0 %v1935
  %2182 = vmatprep.subr.mxu0 %v1944
  %2183 = vmatpush1.msra.mxu0 %v1943
  %2184 = vmatprep.subr.mxu0 0.0
  %2185 = vmatpush1.msra.mxu0 0.0
  %2186 = vmatprep.subr.mxu0 0.0
  %2187 = vmatpush1.msra.mxu0 0.0
  %2188 = vmatprep.subr.mxu0 0.0
  %2189 = vmatpush1.msra.mxu0 0.0
  %2190 = vmatprep.subr.mxu0 0.0
  %2191 = vmatpush1.msra.mxu0 0.0
  %2192 = vmatprep.subr.mxu0 0.0
  %2193 = vmatpush1.msra.mxu0 0.0
  %2194 = vmatprep.subr.mxu0 0.0
  %2195 = vmatpush1.msra.mxu0 0.0
  %2196 = vmatprep.subr.mxu0 0.0
  %2197 = vmatpush1.msra.mxu0 0.0
  %2198 = vmatprep.subr.mxu0 0.0
  %2199 = vmatpush1.msra.mxu0 0.0
  %2200 = vmatprep.subr.mxu0 0.0
  %2201 = vmatpush1.msra.mxu0 0.0
  %2202 = vmatprep.subr.mxu0 0.0
  %2203 = vmatpush1.msra.mxu0 0.0
  %2204 = vmatprep.subr.mxu0 0.0
  %2205 = vmatpush1.msra.mxu0 0.0
  %2206 = vmatprep.subr.mxu0 0.0
  %2207 = vmatpush1.msra.mxu0 0.0
  %2208 = vmatprep.subr.mxu0 0.0
  %2209 = vmatpush1.msra.mxu0 0.0
  %2210 = vmatprep.subr.mxu0 0.0
  %2211 = vmatpush1.msra.mxu0 0.0
  %2212 = vmatprep.subr.mxu0 0.0
  %2213 = vmatpush1.msra.mxu0 0.0
  %2214 = vmatprep.subr.mxu0 0.0
  %2215 = vmatpush1.msra.mxu0 0.0
  %2216 = vmatprep.subr.mxu0 0.0
  %2217 = vmatpush1.msra.mxu0 0.0
  %2218 = vmatprep.subr.mxu0 0.0
  %2219 = vmatpush1.msra.mxu0 0.0
  %2220 = vmatprep.subr.mxu0 0.0
  %2221 = vmatpush1.msra.mxu0 0.0
  %2222 = vmatprep.subr.mxu0 0.0
  %2223 = vmatpush1.msra.mxu0 0.0
  %2224 = vmatprep.subr.mxu0 0.0
  %2225 = vmatpush1.msra.mxu0 0.0
  %2226 = vmatprep.subr.mxu0 0.0
  %2227 = vmatpush1.msra.mxu0 0.0
  %2228 = vmatprep.subr.mxu0 0.0
  %2229 = vmatpush1.msra.mxu0 0.0
  %2230 = vmatprep.subr.mxu0 0.0
  %2231 = vmatpush1.msra.mxu0 0.0
  %2232 = vmatprep.subr.mxu0 0.0
  %2233 = vmatpush1.msra.mxu0 0.0
  %2234 = vmatprep.subr.mxu0 0.0
  %2235 = vmatpush1.msra.mxu0 0.0
  %2236 = vmatprep.subr.mxu0 0.0
  %2237 = vmatpush1.msra.mxu0 0.0
  %2238 = vmatprep.subr.mxu0 0.0
  %2239 = vmatpush1.msra.mxu0 0.0
  %2240 = vmatprep.subr.mxu0 0.0
  %2241 = vmatpush1.msra.mxu0 0.0
  %2242 = vmatprep.subr.mxu0 0.0
  %2243 = vmatpush1.msra.mxu0 0.0
  %2244 = vmatprep.mubr.f32.mxu0 0.0
  %2245 = vmatmul.mubr.f32.gmra.mrb[0].mxu0 %v1991
  %v2246 = vpop.f32.mrb[0].mxu0
  %v2247 = vadd.f32 %v1968, %v2246
  %v2248 = vpop.f32.mrb[0].mxu0
  %v2249 = vadd.f32 %v1972, %v2248
  %2250 = vmatprep.mubr.f32.mxu0 0.0
  %2251 = vmatmul.mubr.f32.gmra.mrb[0].mxu0 %v1994
  %v2252 = vpop.f32.mrb[0].mxu0
  %v2253 = vadd.f32 %v1968, %v2252
  %v2254 = vpop.f32.mrb[0].mxu0
  %v2255 = vadd.f32 %v1972, %v2254
  %2256 = vmatprep.mubr.f32.mxu0 0.0
  %2257 = vmatmul.mubr.f32.gmra.mrb[0].mxu0 %v1997
  %v2258 = vpop.f32.mrb[0].mxu0
  %v2259 = vadd.f32 %v1968, %v2258
  %v2260 = vpop.f32.mrb[0].mxu0
  %v2261 = vadd.f32 %v1972, %v2260
  %2262 = vmatprep.mubr.f32.mxu0 0.0
  %2263 = vmatmul.mubr.f32.gmra.mrb[0].mxu0 %v2000
  %v2264 = vpop.f32.mrb[0].mxu0
  %v2265 = vadd.f32 %v1968, %v2264
  %v2266 = vpop.f32.mrb[0].mxu0
  %v2267 = vadd.f32 %v1972, %v2266
  %2268 = vdwg.mxu0
  %2269 = vmatprep.subr.mxu0 %v1938
  %2270 = vmatpush1.msra.mxu0 %v1937
  %2271 = vmatprep.subr.mxu0 %v1946
  %2272 = vmatpush1.msra.mxu0 %v1945
  %2273 = vmatprep.subr.mxu0 0.0
  %2274 = vmatpush1.msra.mxu0 0.0
  %2275 = vmatprep.subr.mxu0 0.0
  %2276 = vmatpush1.msra.mxu0 0.0
  %2277 = vmatprep.subr.mxu0 0.0
  %2278 = vmatpush1.msra.mxu0 0.0
  %2279 = vmatprep.subr.mxu0 0.0
  %2280 = vmatpush1.msra.mxu0 0.0
  %2281 = vmatprep.subr.mxu0 0.0
  %2282 = vmatpush1.msra.mxu0 0.0
  %2283 = vmatprep.subr.mxu0 0.0
  %2284 = vmatpush1.msra.mxu0 0.0
  %2285 = vmatprep.subr.mxu0 0.0
  %2286 = vmatpush1.msra.mxu0 0.0
  %2287 = vmatprep.subr.mxu0 0.0
  %2288 = vmatpush1.msra.mxu0 0.0
  %2289 = vmatprep.subr.mxu0 0.0
  %2290 = vmatpush1.msra.mxu0 0.0
  %2291 = vmatprep.subr.mxu0 0.0
  %2292 = vmatpush1.msra.mxu0 0.0
  %2293 = vmatprep.subr.mxu0 0.0
  %2294 = vmatpush1.msra.mxu0 0.0
  %2295 = vmatprep.subr.mxu0 0.0
  %2296 = vmatpush1.msra.mxu0 0.0
  %2297 = vmatprep.subr.mxu0 0.0
  %2298 = vmatpush1.msra.mxu0 0.0
  %2299 = vmatprep.subr.mxu0 0.0
  %2300 = vmatpush1.msra.mxu0 0.0
  %2301 = vmatprep.subr.mxu0 0.0
  %2302 = vmatpush1.msra.mxu0 0.0
  %2303 = vmatprep.subr.mxu0 0.0
  %2304 = vmatpush1.msra.mxu0 0.0
  %2305 = vmatprep.subr.mxu0 0.0
  %2306 = vmatpush1.msra.mxu0 0.0
  %2307 = vmatprep.subr.mxu0 0.0
  %2308 = vmatpush1.msra.mxu0 0.0
  %2309 = vmatprep.subr.mxu0 0.0
  %2310 = vmatpush1.msra.mxu0 0.0
  %2311 = vmatprep.subr.mxu0 0.0
  %2312 = vmatpush1.msra.mxu0 0.0
  %2313 = vmatprep.subr.mxu0 0.0
  %2314 = vmatpush1.msra.mxu0 0.0
  %2315 = vmatprep.subr.mxu0 0.0
  %2316 = vmatpush1.msra.mxu0 0.0
  %2317 = vmatprep.subr.mxu0 0.0
  %2318 = vmatpush1.msra.mxu0 0.0
  %2319 = vmatprep.subr.mxu0 0.0
  %2320 = vmatpush1.msra.mxu0 0.0
  %2321 = vmatprep.subr.mxu0 0.0
  %2322 = vmatpush1.msra.mxu0 0.0
  %2323 = vmatprep.subr.mxu0 0.0
  %2324 = vmatpush1.msra.mxu0 0.0
  %2325 = vmatprep.subr.mxu0 0.0
  %2326 = vmatpush1.msra.mxu0 0.0
  %2327 = vmatprep.subr.mxu0 0.0
  %2328 = vmatpush1.msra.mxu0 0.0
  %2329 = vmatprep.subr.mxu0 0.0
  %2330 = vmatpush1.msra.mxu0 0.0
  %2331 = vmatprep.subr.mxu0 0.0
  %2332 = vmatpush1.msra.mxu0 0.0
  %2333 = vmatprep.mubr.f32.mxu0 0.0
  %2334 = vmatmul.mubr.f32.gmra.mrb[0].mxu0 %v1991
  %v2335 = vpop.f32.mrb[0].mxu0
  %v2336 = vadd.f32 %v1976, %v2335
  %v2337 = vpop.f32.mrb[0].mxu0
  %v2338 = vadd.f32 %v1980, %v2337
  %2339 = vmatprep.mubr.f32.mxu0 0.0
  %2340 = vmatmul.mubr.f32.gmra.mrb[0].mxu0 %v1994
  %v2341 = vpop.f32.mrb[0].mxu0
  %v2342 = vadd.f32 %v1976, %v2341
  %v2343 = vpop.f32.mrb[0].mxu0
  %v2344 = vadd.f32 %v1980, %v2343
  %2345 = vmatprep.mubr.f32.mxu0 0.0
  %2346 = vmatmul.mubr.f32.gmra.mrb[0].mxu0 %v1997
  %v2347 = vpop.f32.mrb[0].mxu0
  %v2348 = vadd.f32 %v1976, %v2347
  %v2349 = vpop.f32.mrb[0].mxu0
  %v2350 = vadd.f32 %v1980, %v2349
  %2351 = vmatprep.mubr.f32.mxu0 0.0
  %2352 = vmatmul.mubr.f32.gmra.mrb[0].mxu0 %v2000
  %v2353 = vpop.f32.mrb[0].mxu0
  %v2354 = vadd.f32 %v1976, %v2353
  %v2355 = vpop.f32.mrb[0].mxu0
  %v2356 = vadd.f32 %v1980, %v2355
  %2357 = vdwg.mxu0
  %2358 = vst [vmem:[%s19] sm:$0xff] %v2069
  %2359 = vst [vmem:[%s19 + $0x8] sm:$0xff] %v2071
  %2360 = vst [vmem:[%s19 + $0x10] sm:$0xff] %v2158
  %2361 = vst [vmem:[%s19 + $0x18] sm:$0xff] %v2160
  %2362 = vst [vmem:[%s19 + $0x20] sm:$0xff] %v2247
  %2363 = vst [vmem:[%s19 + $0x28] sm:$0xff] %v2249
  %2364 = vst [vmem:[%s19 + $0x30] sm:$0xff] %v2336
  %2365 = vst [vmem:[%s19 + $0x38] sm:$0xff] %v2338
  %2366 = vst [vmem:[%s19 + $0x40] sm:$0xff] %v2075
  %2367 = vst [vmem:[%s19 + $0x48] sm:$0xff] %v2077
  %2368 = vst [vmem:[%s19 + $0x50] sm:$0xff] %v2164
  %2369 = vst [vmem:[%s19 + $0x58] sm:$0xff] %v2166
  %2370 = vst [vmem:[%s19 + $0x60] sm:$0xff] %v2253
  %2371 = vst [vmem:[%s19 + $0x68] sm:$0xff] %v2255
  %2372 = vst [vmem:[%s19 + $0x70] sm:$0xff] %v2342
  %2373 = vst [vmem:[%s19 + $0x78] sm:$0xff] %v2344
  %2374 = vst [vmem:[%s19 + $0x80] sm:$0xff] %v2081
  %2375 = vst [vmem:[%s19 + $0x88] sm:$0xff] %v2083
  %2376 = vst [vmem:[%s19 + $0x90] sm:$0xff] %v2170
  %2377 = vst [vmem:[%s19 + $0x98] sm:$0xff] %v2172
  %2378 = vst [vmem:[%s19 + $0xa0] sm:$0xff] %v2259
  %2379 = vst [vmem:[%s19 + $0xa8] sm:$0xff] %v2261
  %2380 = vst [vmem:[%s19 + $0xb0] sm:$0xff] %v2348
  %2381 = vst [vmem:[%s19 + $0xb8] sm:$0xff] %v2350
  %2382 = vst [vmem:[%s19 + $0xc0] sm:$0xff] %v2087
  %2383 = vst [vmem:[%s19 + $0xc8] sm:$0xff] %v2089
  %2384 = vst [vmem:[%s19 + $0xd0] sm:$0xff] %v2176
  %2385 = vst [vmem:[%s19 + $0xd8] sm:$0xff] %v2178
  %2386 = vst [vmem:[%s19 + $0xe0] sm:$0xff] %v2265
  %2387 = vst [vmem:[%s19 + $0xe8] sm:$0xff] %v2267
  %2388 = vst [vmem:[%s19 + $0xf0] sm:$0xff] %v2354
  %2389 = vst [vmem:[%s19 + $0xf8] sm:$0xff] %v2356
  %v2390 = vmul.f32 %v2069, 0.5
  %v2391 = vmul.f32 %v2071, 0.5
  %v2392 = vmul.f32 %v2158, 0.5
  %v2393 = vmul.f32 %v2160, 0.5
  %v2394 = vmul.f32 %v2247, 0.5
  %v2395 = vmul.f32 %v2249, 0.5
  %v2396 = vmul.f32 %v2336, 0.5
  %v2397 = vmul.f32 %v2338, 0.5
  %v2398 = vmul.f32 %v2075, 0.5
  %v2399 = vmul.f32 %v2077, 0.5
  %v2400 = vmul.f32 %v2164, 0.5
  %v2401 = vmul.f32 %v2166, 0.5
  %v2402 = vmul.f32 %v2253, 0.5
  %v2403 = vmul.f32 %v2255, 0.5
  %v2404 = vmul.f32 %v2342, 0.5
  %v2405 = vmul.f32 %v2344, 0.5
  %v2406 = vmul.f32 %v2081, 0.5
  %v2407 = vmul.f32 %v2083, 0.5
  %v2408 = vmul.f32 %v2170, 0.5
  %v2409 = vmul.f32 %v2172, 0.5
  %v2410 = vmul.f32 %v2259, 0.5
  %v2411 = vmul.f32 %v2261, 0.5
  %v2412 = vmul.f32 %v2348, 0.5
  %v2413 = vmul.f32 %v2350, 0.5
  %v2414 = vmul.f32 %v2087, 0.5
  %v2415 = vmul.f32 %v2089, 0.5
  %v2416 = vmul.f32 %v2176, 0.5
  %v2417 = vmul.f32 %v2178, 0.5
  %v2418 = vmul.f32 %v2265, 0.5
  %v2419 = vmul.f32 %v2267, 0.5
  %v2420 = vmul.f32 %v2354, 0.5
  %v2421 = vmul.f32 %v2356, 0.5
  %v2422 = vmul.f32 %v2069, 0.70710677
  %v2423 = vmul.f32 %v2071, 0.70710677
  %v2424 = vmul.f32 %v2158, 0.70710677
  %v2425 = vmul.f32 %v2160, 0.70710677
  %v2426 = vmul.f32 %v2247, 0.70710677
  %v2427 = vmul.f32 %v2249, 0.70710677
  %v2428 = vmul.f32 %v2336, 0.70710677
  %v2429 = vmul.f32 %v2338, 0.70710677
  %v2430 = vmul.f32 %v2075, 0.70710677
  %v2431 = vmul.f32 %v2077, 0.70710677
  %v2432 = vmul.f32 %v2164, 0.70710677
  %v2433 = vmul.f32 %v2166, 0.70710677
  %v2434 = vmul.f32 %v2253, 0.70710677
  %v2435 = vmul.f32 %v2255, 0.70710677
  %v2436 = vmul.f32 %v2342, 0.70710677
  %v2437 = vmul.f32 %v2344, 0.70710677
  %v2438 = vmul.f32 %v2081, 0.70710677
  %v2439 = vmul.f32 %v2083, 0.70710677
  %v2440 = vmul.f32 %v2170, 0.70710677
  %v2441 = vmul.f32 %v2172, 0.70710677
  %v2442 = vmul.f32 %v2259, 0.70710677
  %v2443 = vmul.f32 %v2261, 0.70710677
  %v2444 = vmul.f32 %v2348, 0.70710677
  %v2445 = vmul.f32 %v2350, 0.70710677
  %v2446 = vmul.f32 %v2087, 0.70710677
  %v2447 = vmul.f32 %v2089, 0.70710677
  %v2448 = vmul.f32 %v2176, 0.70710677
  %v2449 = vmul.f32 %v2178, 0.70710677
  %v2450 = vmul.f32 %v2265, 0.70710677
  %v2451 = vmul.f32 %v2267, 0.70710677
  %v2452 = vmul.f32 %v2354, 0.70710677
  %v2453 = vmul.f32 %v2356, 0.70710677
  %v2454 = vand.u32 2147483647, %v2422
  %v2455 = vand.u32 2147483647, %v2423
  %v2456 = vand.u32 2147483647, %v2424
  %v2457 = vand.u32 2147483647, %v2425
  %v2458 = vand.u32 2147483647, %v2426
  %v2459 = vand.u32 2147483647, %v2427
  %v2460 = vand.u32 2147483647, %v2428
  %v2461 = vand.u32 2147483647, %v2429
  %v2462 = vand.u32 2147483647, %v2430
  %v2463 = vand.u32 2147483647, %v2431
  %v2464 = vand.u32 2147483647, %v2432
  %v2465 = vand.u32 2147483647, %v2433
  %v2466 = vand.u32 2147483647, %v2434
  %v2467 = vand.u32 2147483647, %v2435
  %v2468 = vand.u32 2147483647, %v2436
  %v2469 = vand.u32 2147483647, %v2437
  %v2470 = vand.u32 2147483647, %v2438
  %v2471 = vand.u32 2147483647, %v2439
  %v2472 = vand.u32 2147483647, %v2440
  %v2473 = vand.u32 2147483647, %v2441
  %v2474 = vand.u32 2147483647, %v2442
  %v2475 = vand.u32 2147483647, %v2443
  %v2476 = vand.u32 2147483647, %v2444
  %v2477 = vand.u32 2147483647, %v2445
  %v2478 = vand.u32 2147483647, %v2446
  %v2479 = vand.u32 2147483647, %v2447
  %v2480 = vand.u32 2147483647, %v2448
  %v2481 = vand.u32 2147483647, %v2449
  %v2482 = vand.u32 2147483647, %v2450
  %v2483 = vand.u32 2147483647, %v2451
  %v2484 = vand.u32 2147483647, %v2452
  %v2485 = vand.u32 2147483647, %v2453
  %v2486 = vmul.f32 %v2454, 0.3275911
  %v2487 = vmul.f32 %v2455, 0.3275911
  %v2488 = vmul.f32 %v2456, 0.3275911
  %v2489 = vmul.f32 %v2457, 0.3275911
  %v2490 = vmul.f32 %v2458, 0.3275911
  %v2491 = vmul.f32 %v2459, 0.3275911
  %v2492 = vmul.f32 %v2460, 0.3275911
  %v2493 = vmul.f32 %v2461, 0.3275911
  %v2494 = vmul.f32 %v2462, 0.3275911
  %v2495 = vmul.f32 %v2463, 0.3275911
  %v2496 = vmul.f32 %v2464, 0.3275911
  %v2497 = vmul.f32 %v2465, 0.3275911
  %v2498 = vmul.f32 %v2466, 0.3275911
  %v2499 = vmul.f32 %v2467, 0.3275911
  %v2500 = vmul.f32 %v2468, 0.3275911
  %v2501 = vmul.f32 %v2469, 0.3275911
  %v2502 = vmul.f32 %v2470, 0.3275911
  %v2503 = vmul.f32 %v2471, 0.3275911
  %v2504 = vmul.f32 %v2472, 0.3275911
  %v2505 = vmul.f32 %v2473, 0.3275911
  %v2506 = vmul.f32 %v2474, 0.3275911
  %v2507 = vmul.f32 %v2475, 0.3275911
  %v2508 = vmul.f32 %v2476, 0.3275911
  %v2509 = vmul.f32 %v2477, 0.3275911
  %v2510 = vmul.f32 %v2478, 0.3275911
  %v2511 = vmul.f32 %v2479, 0.3275911
  %v2512 = vmul.f32 %v2480, 0.3275911
  %v2513 = vmul.f32 %v2481, 0.3275911
  %v2514 = vmul.f32 %v2482, 0.3275911
  %v2515 = vmul.f32 %v2483, 0.3275911
  %v2516 = vmul.f32 %v2484, 0.3275911
  %v2517 = vmul.f32 %v2485, 0.3275911
  %v2518 = vadd.f32 %v2486, 1.0
  %v2519 = vadd.f32 %v2487, 1.0
  %v2520 = vadd.f32 %v2488, 1.0
  %v2521 = vadd.f32 %v2489, 1.0
  %v2522 = vadd.f32 %v2490, 1.0
  %v2523 = vadd.f32 %v2491, 1.0
  %v2524 = vadd.f32 %v2492, 1.0
  %v2525 = vadd.f32 %v2493, 1.0
  %v2526 = vadd.f32 %v2494, 1.0
  %v2527 = vadd.f32 %v2495, 1.0
  %v2528 = vadd.f32 %v2496, 1.0
  %v2529 = vadd.f32 %v2497, 1.0
  %v2530 = vadd.f32 %v2498, 1.0
  %v2531 = vadd.f32 %v2499, 1.0
  %v2532 = vadd.f32 %v2500, 1.0
  %v2533 = vadd.f32 %v2501, 1.0
  %v2534 = vadd.f32 %v2502, 1.0
  %v2535 = vadd.f32 %v2503, 1.0
  %v2536 = vadd.f32 %v2504, 1.0
  %v2537 = vadd.f32 %v2505, 1.0
  %v2538 = vadd.f32 %v2506, 1.0
  %v2539 = vadd.f32 %v2507, 1.0
  %v2540 = vadd.f32 %v2508, 1.0
  %v2541 = vadd.f32 %v2509, 1.0
  %v2542 = vadd.f32 %v2510, 1.0
  %v2543 = vadd.f32 %v2511, 1.0
  %v2544 = vadd.f32 %v2512, 1.0
  %v2545 = vadd.f32 %v2513, 1.0
  %v2546 = vadd.f32 %v2514, 1.0
  %v2547 = vadd.f32 %v2515, 1.0
  %v2548 = vadd.f32 %v2516, 1.0
  %v2549 = vadd.f32 %v2517, 1.0
  %v2550 = vrcp.pop %v2518
  %v2551 = vrcp.pop %v2519
  %v2552 = vrcp.pop %v2520
  %v2553 = vrcp.pop %v2521
  %v2554 = vrcp.pop %v2522
  %v2555 = vrcp.pop %v2523
  %v2556 = vrcp.pop %v2524
  %v2557 = vrcp.pop %v2525
  %v2558 = vrcp.pop %v2526
  %v2559 = vrcp.pop %v2527
  %v2560 = vrcp.pop %v2528
  %v2561 = vrcp.pop %v2529
  %v2562 = vrcp.pop %v2530
  %v2563 = vrcp.pop %v2531
  %v2564 = vrcp.pop %v2532
  %v2565 = vrcp.pop %v2533
  %v2566 = vrcp.pop %v2534
  %v2567 = vrcp.pop %v2535
  %v2568 = vrcp.pop %v2536
  %v2569 = vrcp.pop %v2537
  %v2570 = vrcp.pop %v2538
  %v2571 = vrcp.pop %v2539
  %v2572 = vrcp.pop %v2540
  %v2573 = vrcp.pop %v2541
  %v2574 = vrcp.pop %v2542
  %v2575 = vrcp.pop %v2543
  %v2576 = vrcp.pop %v2544
  %v2577 = vrcp.pop %v2545
  %v2578 = vrcp.pop %v2546
  %v2579 = vrcp.pop %v2547
  %v2580 = vrcp.pop %v2548
  %v2581 = vrcp.pop %v2549
  %v2582 = vmul.f32 %v2550, 1.0614054
  %v2583 = vmul.f32 %v2551, 1.0614054
  %v2584 = vmul.f32 %v2552, 1.0614054
  %v2585 = vmul.f32 %v2553, 1.0614054
  %v2586 = vmul.f32 %v2554, 1.0614054
  %v2587 = vmul.f32 %v2555, 1.0614054
  %v2588 = vmul.f32 %v2556, 1.0614054
  %v2589 = vmul.f32 %v2557, 1.0614054
  %v2590 = vmul.f32 %v2558, 1.0614054
  %v2591 = vmul.f32 %v2559, 1.0614054
  %v2592 = vmul.f32 %v2560, 1.0614054
  %v2593 = vmul.f32 %v2561, 1.0614054
  %v2594 = vmul.f32 %v2562, 1.0614054
  %v2595 = vmul.f32 %v2563, 1.0614054
  %v2596 = vmul.f32 %v2564, 1.0614054
  %v2597 = vmul.f32 %v2565, 1.0614054
  %v2598 = vmul.f32 %v2566, 1.0614054
  %v2599 = vmul.f32 %v2567, 1.0614054
  %v2600 = vmul.f32 %v2568, 1.0614054
  %v2601 = vmul.f32 %v2569, 1.0614054
  %v2602 = vmul.f32 %v2570, 1.0614054
  %v2603 = vmul.f32 %v2571, 1.0614054
  %v2604 = vmul.f32 %v2572, 1.0614054
  %v2605 = vmul.f32 %v2573, 1.0614054
  %v2606 = vmul.f32 %v2574, 1.0614054
  %v2607 = vmul.f32 %v2575, 1.0614054
  %v2608 = vmul.f32 %v2576, 1.0614054
  %v2609 = vmul.f32 %v2577, 1.0614054
  %v2610 = vmul.f32 %v2578, 1.0614054
  %v2611 = vmul.f32 %v2579, 1.0614054
  %v2612 = vmul.f32 %v2580, 1.0614054
  %v2613 = vmul.f32 %v2581, 1.0614054
  %v2614 = vadd.f32 %v2582, -1.4531521
  %v2615 = vadd.f32 %v2583, -1.4531521
  %v2616 = vadd.f32 %v2584, -1.4531521
  %v2617 = vadd.f32 %v2585, -1.4531521
  %v2618 = vadd.f32 %v2586, -1.4531521
  %v2619 = vadd.f32 %v2587, -1.4531521
  %v2620 = vadd.f32 %v2588, -1.4531521
  %v2621 = vadd.f32 %v2589, -1.4531521
  %v2622 = vadd.f32 %v2590, -1.4531521
  %v2623 = vadd.f32 %v2591, -1.4531521
  %v2624 = vadd.f32 %v2592, -1.4531521
  %v2625 = vadd.f32 %v2593, -1.4531521
  %v2626 = vadd.f32 %v2594, -1.4531521
  %v2627 = vadd.f32 %v2595, -1.4531521
  %v2628 = vadd.f32 %v2596, -1.4531521
  %v2629 = vadd.f32 %v2597, -1.4531521
  %v2630 = vadd.f32 %v2598, -1.4531521
  %v2631 = vadd.f32 %v2599, -1.4531521
  %v2632 = vadd.f32 %v2600, -1.4531521
  %v2633 = vadd.f32 %v2601, -1.4531521
  %v2634 = vadd.f32 %v2602, -1.4531521
  %v2635 = vadd.f32 %v2603, -1.4531521
  %v2636 = vadd.f32 %v2604, -1.4531521
  %v2637 = vadd.f32 %v2605, -1.4531521
  %v2638 = vadd.f32 %v2606, -1.4531521
  %v2639 = vadd.f32 %v2607, -1.4531521
  %v2640 = vadd.f32 %v2608, -1.4531521
  %v2641 = vadd.f32 %v2609, -1.4531521
  %v2642 = vadd.f32 %v2610, -1.4531521
  %v2643 = vadd.f32 %v2611, -1.4531521
  %v2644 = vadd.f32 %v2612, -1.4531521
  %v2645 = vadd.f32 %v2613, -1.4531521
  %v2646 = vmul.f32 %v2614, %v2550
  %v2647 = vmul.f32 %v2615, %v2551
  %v2648 = vmul.f32 %v2616, %v2552
  %v2649 = vmul.f32 %v2617, %v2553
  %v2650 = vmul.f32 %v2618, %v2554
  %v2651 = vmul.f32 %v2619, %v2555
  %v2652 = vmul.f32 %v2620, %v2556
  %v2653 = vmul.f32 %v2621, %v2557
  %v2654 = vmul.f32 %v2622, %v2558
  %v2655 = vmul.f32 %v2623, %v2559
  %v2656 = vmul.f32 %v2624, %v2560
  %v2657 = vmul.f32 %v2625, %v2561
  %v2658 = vmul.f32 %v2626, %v2562
  %v2659 = vmul.f32 %v2627, %v2563
  %v2660 = vmul.f32 %v2628, %v2564
  %v2661 = vmul.f32 %v2629, %v2565
  %v2662 = vmul.f32 %v2630, %v2566
  %v2663 = vmul.f32 %v2631, %v2567
  %v2664 = vmul.f32 %v2632, %v2568
  %v2665 = vmul.f32 %v2633, %v2569
  %v2666 = vmul.f32 %v2634, %v2570
  %v2667 = vmul.f32 %v2635, %v2571
  %v2668 = vmul.f32 %v2636, %v2572
  %v2669 = vmul.f32 %v2637, %v2573
  %v2670 = vmul.f32 %v2638, %v2574
  %v2671 = vmul.f32 %v2639, %v2575
  %v2672 = vmul.f32 %v2640, %v2576
  %v2673 = vmul.f32 %v2641, %v2577
  %v2674 = vmul.f32 %v2642, %v2578
  %v2675 = vmul.f32 %v2643, %v2579
  %v2676 = vmul.f32 %v2644, %v2580
  %v2677 = vmul.f32 %v2645, %v2581
  %v2678 = vadd.f32 %v2646, 1.4214138
  %v2679 = vadd.f32 %v2647, 1.4214138
  %v2680 = vadd.f32 %v2648, 1.4214138
  %v2681 = vadd.f32 %v2649, 1.4214138
  %v2682 = vadd.f32 %v2650, 1.4214138
  %v2683 = vadd.f32 %v2651, 1.4214138
  %v2684 = vadd.f32 %v2652, 1.4214138
  %v2685 = vadd.f32 %v2653, 1.4214138
  %v2686 = vadd.f32 %v2654, 1.4214138
  %v2687 = vadd.f32 %v2655, 1.4214138
  %v2688 = vadd.f32 %v2656, 1.4214138
  %v2689 = vadd.f32 %v2657, 1.4214138
  %v2690 = vadd.f32 %v2658, 1.4214138
  %v2691 = vadd.f32 %v2659, 1.4214138
  %v2692 = vadd.f32 %v2660, 1.4214138
  %v2693 = vadd.f32 %v2661, 1.4214138
  %v2694 = vadd.f32 %v2662, 1.4214138
  %v2695 = vadd.f32 %v2663, 1.4214138
  %v2696 = vadd.f32 %v2664, 1.4214138
  %v2697 = vadd.f32 %v2665, 1.4214138
  %v2698 = vadd.f32 %v2666, 1.4214138
  %v2699 = vadd.f32 %v2667, 1.4214138
  %v2700 = vadd.f32 %v2668, 1.4214138
  %v2701 = vadd.f32 %v2669, 1.4214138
  %v2702 = vadd.f32 %v2670, 1.4214138
  %v2703 = vadd.f32 %v2671, 1.4214138
  %v2704 = vadd.f32 %v2672, 1.4214138
  %v2705 = vadd.f32 %v2673, 1.4214138
  %v2706 = vadd.f32 %v2674, 1.4214138
  %v2707 = vadd.f32 %v2675, 1.4214138
  %v2708 = vadd.f32 %v2676, 1.4214138
  %v2709 = vadd.f32 %v2677, 1.4214138
  %v2710 = vmul.f32 %v2678, %v2550
  %v2711 = vmul.f32 %v2679, %v2551
  %v2712 = vmul.f32 %v2680, %v2552
  %v2713 = vmul.f32 %v2681, %v2553
  %v2714 = vmul.f32 %v2682, %v2554
  %v2715 = vmul.f32 %v2683, %v2555
  %v2716 = vmul.f32 %v2684, %v2556
  %v2717 = vmul.f32 %v2685, %v2557
  %v2718 = vmul.f32 %v2686, %v2558
  %v2719 = vmul.f32 %v2687, %v2559
  %v2720 = vmul.f32 %v2688, %v2560
  %v2721 = vmul.f32 %v2689, %v2561
  %v2722 = vmul.f32 %v2690, %v2562
  %v2723 = vmul.f32 %v2691, %v2563
  %v2724 = vmul.f32 %v2692, %v2564
  %v2725 = vmul.f32 %v2693, %v2565
  %v2726 = vmul.f32 %v2694, %v2566
  %v2727 = vmul.f32 %v2695, %v2567
  %v2728 = vmul.f32 %v2696, %v2568
  %v2729 = vmul.f32 %v2697, %v2569
  %v2730 = vmul.f32 %v2698, %v2570
  %v2731 = vmul.f32 %v2699, %v2571
  %v2732 = vmul.f32 %v2700, %v2572
  %v2733 = vmul.f32 %v2701, %v2573
  %v2734 = vmul.f32 %v2702, %v2574
  %v2735 = vmul.f32 %v2703, %v2575
  %v2736 = vmul.f32 %v2704, %v2576
  %v2737 = vmul.f32 %v2705, %v2577
  %v2738 = vmul.f32 %v2706, %v2578
  %v2739 = vmul.f32 %v2707, %v2579
  %v2740 = vmul.f32 %v2708, %v2580
  %v2741 = vmul.f32 %v2709, %v2581
  %v2742 = vadd.f32 %v2710, -0.28449672
  %v2743 = vadd.f32 %v2711, -0.28449672
  %v2744 = vadd.f32 %v2712, -0.28449672
  %v2745 = vadd.f32 %v2713, -0.28449672
  %v2746 = vadd.f32 %v2714, -0.28449672
  %v2747 = vadd.f32 %v2715, -0.28449672
  %v2748 = vadd.f32 %v2716, -0.28449672
  %v2749 = vadd.f32 %v2717, -0.28449672
  %v2750 = vadd.f32 %v2718, -0.28449672
  %v2751 = vadd.f32 %v2719, -0.28449672
  %v2752 = vadd.f32 %v2720, -0.28449672
  %v2753 = vadd.f32 %v2721, -0.28449672
  %v2754 = vadd.f32 %v2722, -0.28449672
  %v2755 = vadd.f32 %v2723, -0.28449672
  %v2756 = vadd.f32 %v2724, -0.28449672
  %v2757 = vadd.f32 %v2725, -0.28449672
  %v2758 = vadd.f32 %v2726, -0.28449672
  %v2759 = vadd.f32 %v2727, -0.28449672
  %v2760 = vadd.f32 %v2728, -0.28449672
  %v2761 = vadd.f32 %v2729, -0.28449672
  %v2762 = vadd.f32 %v2730, -0.28449672
  %v2763 = vadd.f32 %v2731, -0.28449672
  %v2764 = vadd.f32 %v2732, -0.28449672
  %v2765 = vadd.f32 %v2733, -0.28449672
  %v2766 = vadd.f32 %v2734, -0.28449672
  %v2767 = vadd.f32 %v2735, -0.28449672
  %v2768 = vadd.f32 %v2736, -0.28449672
  %v2769 = vadd.f32 %v2737, -0.28449672
  %v2770 = vadd.f32 %v2738, -0.28449672
  %v2771 = vadd.f32 %v2739, -0.28449672
  %v2772 = vadd.f32 %v2740, -0.28449672
  %v2773 = vadd.f32 %v2741, -0.28449672
  %v2774 = vmul.f32 %v2742, %v2550
  %v2775 = vmul.f32 %v2743, %v2551
  %v2776 = vmul.f32 %v2744, %v2552
  %v2777 = vmul.f32 %v2745, %v2553
  %v2778 = vmul.f32 %v2746, %v2554
  %v2779 = vmul.f32 %v2747, %v2555
  %v2780 = vmul.f32 %v2748, %v2556
  %v2781 = vmul.f32 %v2749, %v2557
  %v2782 = vmul.f32 %v2750, %v2558
  %v2783 = vmul.f32 %v2751, %v2559
  %v2784 = vmul.f32 %v2752, %v2560
  %v2785 = vmul.f32 %v2753, %v2561
  %v2786 = vmul.f32 %v2754, %v2562
  %v2787 = vmul.f32 %v2755, %v2563
  %v2788 = vmul.f32 %v2756, %v2564
  %v2789 = vmul.f32 %v2757, %v2565
  %v2790 = vmul.f32 %v2758, %v2566
  %v2791 = vmul.f32 %v2759, %v2567
  %v2792 = vmul.f32 %v2760, %v2568
  %v2793 = vmul.f32 %v2761, %v2569
  %v2794 = vmul.f32 %v2762, %v2570
  %v2795 = vmul.f32 %v2763, %v2571
  %v2796 = vmul.f32 %v2764, %v2572
  %v2797 = vmul.f32 %v2765, %v2573
  %v2798 = vmul.f32 %v2766, %v2574
  %v2799 = vmul.f32 %v2767, %v2575
  %v2800 = vmul.f32 %v2768, %v2576
  %v2801 = vmul.f32 %v2769, %v2577
  %v2802 = vmul.f32 %v2770, %v2578
  %v2803 = vmul.f32 %v2771, %v2579
  %v2804 = vmul.f32 %v2772, %v2580
  %v2805 = vmul.f32 %v2773, %v2581
  %v2806 = vadd.f32 %v2774, 0.2548296
  %v2807 = vadd.f32 %v2775, 0.2548296
  %v2808 = vadd.f32 %v2776, 0.2548296
  %v2809 = vadd.f32 %v2777, 0.2548296
  %v2810 = vadd.f32 %v2778, 0.2548296
  %v2811 = vadd.f32 %v2779, 0.2548296
  %v2812 = vadd.f32 %v2780, 0.2548296
  %v2813 = vadd.f32 %v2781, 0.2548296
  %v2814 = vadd.f32 %v2782, 0.2548296
  %v2815 = vadd.f32 %v2783, 0.2548296
  %v2816 = vadd.f32 %v2784, 0.2548296
  %v2817 = vadd.f32 %v2785, 0.2548296
  %v2818 = vadd.f32 %v2786, 0.2548296
  %v2819 = vadd.f32 %v2787, 0.2548296
  %v2820 = vadd.f32 %v2788, 0.2548296
  %v2821 = vadd.f32 %v2789, 0.2548296
  %v2822 = vadd.f32 %v2790, 0.2548296
  %v2823 = vadd.f32 %v2791, 0.2548296
  %v2824 = vadd.f32 %v2792, 0.2548296
  %v2825 = vadd.f32 %v2793, 0.2548296
  %v2826 = vadd.f32 %v2794, 0.2548296
  %v2827 = vadd.f32 %v2795, 0.2548296
  %v2828 = vadd.f32 %v2796, 0.2548296
  %v2829 = vadd.f32 %v2797, 0.2548296
  %v2830 = vadd.f32 %v2798, 0.2548296
  %v2831 = vadd.f32 %v2799, 0.2548296
  %v2832 = vadd.f32 %v2800, 0.2548296
  %v2833 = vadd.f32 %v2801, 0.2548296
  %v2834 = vadd.f32 %v2802, 0.2548296
  %v2835 = vadd.f32 %v2803, 0.2548296
  %v2836 = vadd.f32 %v2804, 0.2548296
  %v2837 = vadd.f32 %v2805, 0.2548296
  %v2838 = vmul.f32 %v2806, %v2550
  %v2839 = vmul.f32 %v2807, %v2551
  %v2840 = vmul.f32 %v2808, %v2552
  %v2841 = vmul.f32 %v2809, %v2553
  %v2842 = vmul.f32 %v2810, %v2554
  %v2843 = vmul.f32 %v2811, %v2555
  %v2844 = vmul.f32 %v2812, %v2556
  %v2845 = vmul.f32 %v2813, %v2557
  %v2846 = vmul.f32 %v2814, %v2558
  %v2847 = vmul.f32 %v2815, %v2559
  %v2848 = vmul.f32 %v2816, %v2560
  %v2849 = vmul.f32 %v2817, %v2561
  %v2850 = vmul.f32 %v2818, %v2562
  %v2851 = vmul.f32 %v2819, %v2563
  %v2852 = vmul.f32 %v2820, %v2564
  %v2853 = vmul.f32 %v2821, %v2565
  %v2854 = vmul.f32 %v2822, %v2566
  %v2855 = vmul.f32 %v2823, %v2567
  %v2856 = vmul.f32 %v2824, %v2568
  %v2857 = vmul.f32 %v2825, %v2569
  %v2858 = vmul.f32 %v2826, %v2570
  %v2859 = vmul.f32 %v2827, %v2571
  %v2860 = vmul.f32 %v2828, %v2572
  %v2861 = vmul.f32 %v2829, %v2573
  %v2862 = vmul.f32 %v2830, %v2574
  %v2863 = vmul.f32 %v2831, %v2575
  %v2864 = vmul.f32 %v2832, %v2576
  %v2865 = vmul.f32 %v2833, %v2577
  %v2866 = vmul.f32 %v2834, %v2578
  %v2867 = vmul.f32 %v2835, %v2579
  %v2868 = vmul.f32 %v2836, %v2580
  %v2869 = vmul.f32 %v2837, %v2581
  %v2870 = vsub.f32 0.0, %v2454
  %v2871 = vsub.f32 0.0, %v2455
  %v2872 = vsub.f32 0.0, %v2456
  %v2873 = vsub.f32 0.0, %v2457
  %v2874 = vsub.f32 0.0, %v2458
  %v2875 = vsub.f32 0.0, %v2459
  %v2876 = vsub.f32 0.0, %v2460
  %v2877 = vsub.f32 0.0, %v2461
  %v2878 = vsub.f32 0.0, %v2462
  %v2879 = vsub.f32 0.0, %v2463
  %v2880 = vsub.f32 0.0, %v2464
  %v2881 = vsub.f32 0.0, %v2465
  %v2882 = vsub.f32 0.0, %v2466
  %v2883 = vsub.f32 0.0, %v2467
  %v2884 = vsub.f32 0.0, %v2468
  %v2885 = vsub.f32 0.0, %v2469
  %v2886 = vsub.f32 0.0, %v2470
  %v2887 = vsub.f32 0.0, %v2471
  %v2888 = vsub.f32 0.0, %v2472
  %v2889 = vsub.f32 0.0, %v2473
  %v2890 = vsub.f32 0.0, %v2474
  %v2891 = vsub.f32 0.0, %v2475
  %v2892 = vsub.f32 0.0, %v2476
  %v2893 = vsub.f32 0.0, %v2477
  %v2894 = vsub.f32 0.0, %v2478
  %v2895 = vsub.f32 0.0, %v2479
  %v2896 = vsub.f32 0.0, %v2480
  %v2897 = vsub.f32 0.0, %v2481
  %v2898 = vsub.f32 0.0, %v2482
  %v2899 = vsub.f32 0.0, %v2483
  %v2900 = vsub.f32 0.0, %v2484
  %v2901 = vsub.f32 0.0, %v2485
  %v2902 = vmul.f32 %v2870, %v2454
  %v2903 = vmul.f32 %v2871, %v2455
  %v2904 = vmul.f32 %v2872, %v2456
  %v2905 = vmul.f32 %v2873, %v2457
  %v2906 = vmul.f32 %v2874, %v2458
  %v2907 = vmul.f32 %v2875, %v2459
  %v2908 = vmul.f32 %v2876, %v2460
  %v2909 = vmul.f32 %v2877, %v2461
  %v2910 = vmul.f32 %v2878, %v2462
  %v2911 = vmul.f32 %v2879, %v2463
  %v2912 = vmul.f32 %v2880, %v2464
  %v2913 = vmul.f32 %v2881, %v2465
  %v2914 = vmul.f32 %v2882, %v2466
  %v2915 = vmul.f32 %v2883, %v2467
  %v2916 = vmul.f32 %v2884, %v2468
  %v2917 = vmul.f32 %v2885, %v2469
  %v2918 = vmul.f32 %v2886, %v2470
  %v2919 = vmul.f32 %v2887, %v2471
  %v2920 = vmul.f32 %v2888, %v2472
  %v2921 = vmul.f32 %v2889, %v2473
  %v2922 = vmul.f32 %v2890, %v2474
  %v2923 = vmul.f32 %v2891, %v2475
  %v2924 = vmul.f32 %v2892, %v2476
  %v2925 = vmul.f32 %v2893, %v2477
  %v2926 = vmul.f32 %v2894, %v2478
  %v2927 = vmul.f32 %v2895, %v2479
  %v2928 = vmul.f32 %v2896, %v2480
  %v2929 = vmul.f32 %v2897, %v2481
  %v2930 = vmul.f32 %v2898, %v2482
  %v2931 = vmul.f32 %v2899, %v2483
  %v2932 = vmul.f32 %v2900, %v2484
  %v2933 = vmul.f32 %v2901, %v2485
  %v2934 = vmul.f32 %v2902, 1.442695
  %v2935 = vpow.pop %v2934
  %v2936 = vmul.f32 %v2903, 1.442695
  %v2937 = vpow.pop %v2936
  %v2938 = vmul.f32 %v2904, 1.442695
  %v2939 = vpow.pop %v2938
  %v2940 = vmul.f32 %v2905, 1.442695
  %v2941 = vpow.pop %v2940
  %v2942 = vmul.f32 %v2906, 1.442695
  %v2943 = vpow.pop %v2942
  %v2944 = vmul.f32 %v2907, 1.442695
  %v2945 = vpow.pop %v2944
  %v2946 = vmul.f32 %v2908, 1.442695
  %v2947 = vpow.pop %v2946
  %v2948 = vmul.f32 %v2909, 1.442695
  %v2949 = vpow.pop %v2948
  %v2950 = vmul.f32 %v2910, 1.442695
  %v2951 = vpow.pop %v2950
  %v2952 = vmul.f32 %v2911, 1.442695
  %v2953 = vpow.pop %v2952
  %v2954 = vmul.f32 %v2912, 1.442695
  %v2955 = vpow.pop %v2954
  %v2956 = vmul.f32 %v2913, 1.442695
  %v2957 = vpow.pop %v2956
  %v2958 = vmul.f32 %v2914, 1.442695
  %v2959 = vpow.pop %v2958
  %v2960 = vmul.f32 %v2915, 1.442695
  %v2961 = vpow.pop %v2960
  %v2962 = vmul.f32 %v2916, 1.442695
  %v2963 = vpow.pop %v2962
  %v2964 = vmul.f32 %v2917, 1.442695
  %v2965 = vpow.pop %v2964
  %v2966 = vmul.f32 %v2918, 1.442695
  %v2967 = vpow.pop %v2966
  %v2968 = vmul.f32 %v2919, 1.442695
  %v2969 = vpow.pop %v2968
  %v2970 = vmul.f32 %v2920, 1.442695
  %v2971 = vpow.pop %v2970
  %v2972 = vmul.f32 %v2921, 1.442695
  %v2973 = vpow.pop %v2972
  %v2974 = vmul.f32 %v2922, 1.442695
  %v2975 = vpow.pop %v2974
  %v2976 = vmul.f32 %v2923, 1.442695
  %v2977 = vpow.pop %v2976
  %v2978 = vmul.f32 %v2924, 1.442695
  %v2979 = vpow.pop %v2978
  %v2980 = vmul.f32 %v2925, 1.442695
  %v2981 = vpow.pop %v2980
  %v2982 = vmul.f32 %v2926, 1.442695
  %v2983 = vpow.pop %v2982
  %v2984 = vmul.f32 %v2927, 1.442695
  %v2985 = vpow.pop %v2984
  %v2986 = vmul.f32 %v2928, 1.442695
  %v2987 = vpow.pop %v2986
  %v2988 = vmul.f32 %v2929, 1.442695
  %v2989 = vpow.pop %v2988
  %v2990 = vmul.f32 %v2930, 1.442695
  %v2991 = vpow.pop %v2990
  %v2992 = vmul.f32 %v2931, 1.442695
  %v2993 = vpow.pop %v2992
  %v2994 = vmul.f32 %v2932, 1.442695
  %v2995 = vpow.pop %v2994
  %v2996 = vmul.f32 %v2933, 1.442695
  %v2997 = vpow.pop %v2996
  %v2998 = vmul.f32 %v2838, %v2935
  %v2999 = vmul.f32 %v2839, %v2937
  %v3000 = vmul.f32 %v2840, %v2939
  %v3001 = vmul.f32 %v2841, %v2941
  %v3002 = vmul.f32 %v2842, %v2943
  %v3003 = vmul.f32 %v2843, %v2945
  %v3004 = vmul.f32 %v2844, %v2947
  %v3005 = vmul.f32 %v2845, %v2949
  %v3006 = vmul.f32 %v2846, %v2951
  %v3007 = vmul.f32 %v2847, %v2953
  %v3008 = vmul.f32 %v2848, %v2955
  %v3009 = vmul.f32 %v2849, %v2957
  %v3010 = vmul.f32 %v2850, %v2959
  %v3011 = vmul.f32 %v2851, %v2961
  %v3012 = vmul.f32 %v2852, %v2963
  %v3013 = vmul.f32 %v2853, %v2965
  %v3014 = vmul.f32 %v2854, %v2967
  %v3015 = vmul.f32 %v2855, %v2969
  %v3016 = vmul.f32 %v2856, %v2971
  %v3017 = vmul.f32 %v2857, %v2973
  %v3018 = vmul.f32 %v2858, %v2975
  %v3019 = vmul.f32 %v2859, %v2977
  %v3020 = vmul.f32 %v2860, %v2979
  %v3021 = vmul.f32 %v2861, %v2981
  %v3022 = vmul.f32 %v2862, %v2983
  %v3023 = vmul.f32 %v2863, %v2985
  %v3024 = vmul.f32 %v2864, %v2987
  %v3025 = vmul.f32 %v2865, %v2989
  %v3026 = vmul.f32 %v2866, %v2991
  %v3027 = vmul.f32 %v2867, %v2993
  %v3028 = vmul.f32 %v2868, %v2995
  %v3029 = vmul.f32 %v2869, %v2997
  %v3030 = vsub.f32 1.0, %v2998
  %v3031 = vsub.f32 1.0, %v2999
  %v3032 = vsub.f32 1.0, %v3000
  %v3033 = vsub.f32 1.0, %v3001
  %v3034 = vsub.f32 1.0, %v3002
  %v3035 = vsub.f32 1.0, %v3003
  %v3036 = vsub.f32 1.0, %v3004
  %v3037 = vsub.f32 1.0, %v3005
  %v3038 = vsub.f32 1.0, %v3006
  %v3039 = vsub.f32 1.0, %v3007
  %v3040 = vsub.f32 1.0, %v3008
  %v3041 = vsub.f32 1.0, %v3009
  %v3042 = vsub.f32 1.0, %v3010
  %v3043 = vsub.f32 1.0, %v3011
  %v3044 = vsub.f32 1.0, %v3012
  %v3045 = vsub.f32 1.0, %v3013
  %v3046 = vsub.f32 1.0, %v3014
  %v3047 = vsub.f32 1.0, %v3015
  %v3048 = vsub.f32 1.0, %v3016
  %v3049 = vsub.f32 1.0, %v3017
  %v3050 = vsub.f32 1.0, %v3018
  %v3051 = vsub.f32 1.0, %v3019
  %v3052 = vsub.f32 1.0, %v3020
  %v3053 = vsub.f32 1.0, %v3021
  %v3054 = vsub.f32 1.0, %v3022
  %v3055 = vsub.f32 1.0, %v3023
  %v3056 = vsub.f32 1.0, %v3024
  %v3057 = vsub.f32 1.0, %v3025
  %v3058 = vsub.f32 1.0, %v3026
  %v3059 = vsub.f32 1.0, %v3027
  %v3060 = vsub.f32 1.0, %v3028
  %v3061 = vsub.f32 1.0, %v3029
  %vm3062 = vcmp.lt.f32.partialorder %v2422, 0.0
  %vm3063 = vcmp.lt.f32.partialorder %v2423, 0.0
  %vm3064 = vcmp.lt.f32.partialorder %v2424, 0.0
  %vm3065 = vcmp.lt.f32.partialorder %v2425, 0.0
  %vm3066 = vcmp.lt.f32.partialorder %v2426, 0.0
  %vm3067 = vcmp.lt.f32.partialorder %v2427, 0.0
  %vm3068 = vcmp.lt.f32.partialorder %v2428, 0.0
  %vm3069 = vcmp.lt.f32.partialorder %v2429, 0.0
  %vm3070 = vcmp.lt.f32.partialorder %v2430, 0.0
  %vm3071 = vcmp.lt.f32.partialorder %v2431, 0.0
  %vm3072 = vcmp.lt.f32.partialorder %v2432, 0.0
  %vm3073 = vcmp.lt.f32.partialorder %v2433, 0.0
  %vm3074 = vcmp.lt.f32.partialorder %v2434, 0.0
  %vm3075 = vcmp.lt.f32.partialorder %v2435, 0.0
  %vm3076 = vcmp.lt.f32.partialorder %v2436, 0.0
  %vm3077 = vcmp.lt.f32.partialorder %v2437, 0.0
  %vm3078 = vcmp.lt.f32.partialorder %v2438, 0.0
  %vm3079 = vcmp.lt.f32.partialorder %v2439, 0.0
  %vm3080 = vcmp.lt.f32.partialorder %v2440, 0.0
  %vm3081 = vcmp.lt.f32.partialorder %v2441, 0.0
  %vm3082 = vcmp.lt.f32.partialorder %v2442, 0.0
  %vm3083 = vcmp.lt.f32.partialorder %v2443, 0.0
  %vm3084 = vcmp.lt.f32.partialorder %v2444, 0.0
  %vm3085 = vcmp.lt.f32.partialorder %v2445, 0.0
  %vm3086 = vcmp.lt.f32.partialorder %v2446, 0.0
  %vm3087 = vcmp.lt.f32.partialorder %v2447, 0.0
  %vm3088 = vcmp.lt.f32.partialorder %v2448, 0.0
  %vm3089 = vcmp.lt.f32.partialorder %v2449, 0.0
  %vm3090 = vcmp.lt.f32.partialorder %v2450, 0.0
  %vm3091 = vcmp.lt.f32.partialorder %v2451, 0.0
  %vm3092 = vcmp.lt.f32.partialorder %v2452, 0.0
  %vm3093 = vcmp.lt.f32.partialorder %v2453, 0.0
  %v3094 = vsub.f32 0.0, %v3030
  %v3095 = vsub.f32 0.0, %v3031
  %v3096 = vsub.f32 0.0, %v3032
  %v3097 = vsub.f32 0.0, %v3033
  %v3098 = vsub.f32 0.0, %v3034
  %v3099 = vsub.f32 0.0, %v3035
  %v3100 = vsub.f32 0.0, %v3036
  %v3101 = vsub.f32 0.0, %v3037
  %v3102 = vsub.f32 0.0, %v3038
  %v3103 = vsub.f32 0.0, %v3039
  %v3104 = vsub.f32 0.0, %v3040
  %v3105 = vsub.f32 0.0, %v3041
  %v3106 = vsub.f32 0.0, %v3042
  %v3107 = vsub.f32 0.0, %v3043
  %v3108 = vsub.f32 0.0, %v3044
  %v3109 = vsub.f32 0.0, %v3045
  %v3110 = vsub.f32 0.0, %v3046
  %v3111 = vsub.f32 0.0, %v3047
  %v3112 = vsub.f32 0.0, %v3048
  %v3113 = vsub.f32 0.0, %v3049
  %v3114 = vsub.f32 0.0, %v3050
  %v3115 = vsub.f32 0.0, %v3051
  %v3116 = vsub.f32 0.0, %v3052
  %v3117 = vsub.f32 0.0, %v3053
  %v3118 = vsub.f32 0.0, %v3054
  %v3119 = vsub.f32 0.0, %v3055
  %v3120 = vsub.f32 0.0, %v3056
  %v3121 = vsub.f32 0.0, %v3057
  %v3122 = vsub.f32 0.0, %v3058
  %v3123 = vsub.f32 0.0, %v3059
  %v3124 = vsub.f32 0.0, %v3060
  %v3125 = vsub.f32 0.0, %v3061
  %v3126 = vsel %vm3062, %v3094, %v3030
  %v3127 = vsel %vm3063, %v3095, %v3031
  %v3128 = vsel %vm3064, %v3096, %v3032
  %v3129 = vsel %vm3065, %v3097, %v3033
  %v3130 = vsel %vm3066, %v3098, %v3034
  %v3131 = vsel %vm3067, %v3099, %v3035
  %v3132 = vsel %vm3068, %v3100, %v3036
  %v3133 = vsel %vm3069, %v3101, %v3037
  %v3134 = vsel %vm3070, %v3102, %v3038
  %v3135 = vsel %vm3071, %v3103, %v3039
  %v3136 = vsel %vm3072, %v3104, %v3040
  %v3137 = vsel %vm3073, %v3105, %v3041
  %v3138 = vsel %vm3074, %v3106, %v3042
  %v3139 = vsel %vm3075, %v3107, %v3043
  %v3140 = vsel %vm3076, %v3108, %v3044
  %v3141 = vsel %vm3077, %v3109, %v3045
  %v3142 = vsel %vm3078, %v3110, %v3046
  %v3143 = vsel %vm3079, %v3111, %v3047
  %v3144 = vsel %vm3080, %v3112, %v3048
  %v3145 = vsel %vm3081, %v3113, %v3049
  %v3146 = vsel %vm3082, %v3114, %v3050
  %v3147 = vsel %vm3083, %v3115, %v3051
  %v3148 = vsel %vm3084, %v3116, %v3052
  %v3149 = vsel %vm3085, %v3117, %v3053
  %v3150 = vsel %vm3086, %v3118, %v3054
  %v3151 = vsel %vm3087, %v3119, %v3055
  %v3152 = vsel %vm3088, %v3120, %v3056
  %v3153 = vsel %vm3089, %v3121, %v3057
  %v3154 = vsel %vm3090, %v3122, %v3058
  %v3155 = vsel %vm3091, %v3123, %v3059
  %v3156 = vsel %vm3092, %v3124, %v3060
  %v3157 = vsel %vm3093, %v3125, %v3061
  %v3158 = vadd.f32 %v3126, 1.0
  %v3159 = vadd.f32 %v3127, 1.0
  %v3160 = vadd.f32 %v3128, 1.0
  %v3161 = vadd.f32 %v3129, 1.0
  %v3162 = vadd.f32 %v3130, 1.0
  %v3163 = vadd.f32 %v3131, 1.0
  %v3164 = vadd.f32 %v3132, 1.0
  %v3165 = vadd.f32 %v3133, 1.0
  %v3166 = vadd.f32 %v3134, 1.0
  %v3167 = vadd.f32 %v3135, 1.0
  %v3168 = vadd.f32 %v3136, 1.0
  %v3169 = vadd.f32 %v3137, 1.0
  %v3170 = vadd.f32 %v3138, 1.0
  %v3171 = vadd.f32 %v3139, 1.0
  %v3172 = vadd.f32 %v3140, 1.0
  %v3173 = vadd.f32 %v3141, 1.0
  %v3174 = vadd.f32 %v3142, 1.0
  %v3175 = vadd.f32 %v3143, 1.0
  %v3176 = vadd.f32 %v3144, 1.0
  %v3177 = vadd.f32 %v3145, 1.0
  %v3178 = vadd.f32 %v3146, 1.0
  %v3179 = vadd.f32 %v3147, 1.0
  %v3180 = vadd.f32 %v3148, 1.0
  %v3181 = vadd.f32 %v3149, 1.0
  %v3182 = vadd.f32 %v3150, 1.0
  %v3183 = vadd.f32 %v3151, 1.0
  %v3184 = vadd.f32 %v3152, 1.0
  %v3185 = vadd.f32 %v3153, 1.0
  %v3186 = vadd.f32 %v3154, 1.0
  %v3187 = vadd.f32 %v3155, 1.0
  %v3188 = vadd.f32 %v3156, 1.0
  %v3189 = vadd.f32 %v3157, 1.0
  %v3190 = vmul.f32 %v2390, %v3158
  %v3191 = vmul.f32 %v2391, %v3159
  %v3192 = vmul.f32 %v2392, %v3160
  %v3193 = vmul.f32 %v2393, %v3161
  %v3194 = vmul.f32 %v2394, %v3162
  %v3195 = vmul.f32 %v2395, %v3163
  %v3196 = vmul.f32 %v2396, %v3164
  %v3197 = vmul.f32 %v2397, %v3165
  %v3198 = vmul.f32 %v2398, %v3166
  %v3199 = vmul.f32 %v2399, %v3167
  %v3200 = vmul.f32 %v2400, %v3168
  %v3201 = vmul.f32 %v2401, %v3169
  %v3202 = vmul.f32 %v2402, %v3170
  %v3203 = vmul.f32 %v2403, %v3171
  %v3204 = vmul.f32 %v2404, %v3172
  %v3205 = vmul.f32 %v2405, %v3173
  %v3206 = vmul.f32 %v2406, %v3174
  %v3207 = vmul.f32 %v2407, %v3175
  %v3208 = vmul.f32 %v2408, %v3176
  %v3209 = vmul.f32 %v2409, %v3177
  %v3210 = vmul.f32 %v2410, %v3178
  %v3211 = vmul.f32 %v2411, %v3179
  %v3212 = vmul.f32 %v2412, %v3180
  %v3213 = vmul.f32 %v2413, %v3181
  %v3214 = vmul.f32 %v2414, %v3182
  %v3215 = vmul.f32 %v2415, %v3183
  %v3216 = vmul.f32 %v2416, %v3184
  %v3217 = vmul.f32 %v2417, %v3185
  %v3218 = vmul.f32 %v2418, %v3186
  %v3219 = vmul.f32 %v2419, %v3187
  %v3220 = vmul.f32 %v2420, %v3188
  %v3221 = vmul.f32 %v2421, %v3189
  %v3222 = vld [vmem:[%s8] sm:$0xff]
  %v3223 = vld [vmem:[%s8 + $0x8] sm:$0xff]
  %v3224 = vld [vmem:[%s8 + $0x10] sm:$0xff]
  %v3225 = vld [vmem:[%s8 + $0x18] sm:$0xff]
  %v3226 = vld [vmem:[%s8 + $0x20] sm:$0xff]
  %v3227 = vld [vmem:[%s8 + $0x28] sm:$0xff]
  %v3228 = vld [vmem:[%s8 + $0x30] sm:$0xff]
  %v3229 = vld [vmem:[%s8 + $0x38] sm:$0xff]
  %v3230 = vld [vmem:[%s8 + $0x40] sm:$0xff]
  %v3231 = vld [vmem:[%s8 + $0x48] sm:$0xff]
  %v3232 = vld [vmem:[%s8 + $0x50] sm:$0xff]
  %v3233 = vld [vmem:[%s8 + $0x58] sm:$0xff]
  %v3234 = vld [vmem:[%s8 + $0x60] sm:$0xff]
  %v3235 = vld [vmem:[%s8 + $0x68] sm:$0xff]
  %v3236 = vld [vmem:[%s8 + $0x70] sm:$0xff]
  %v3237 = vld [vmem:[%s8 + $0x78] sm:$0xff]
  %v3238 = vld [vmem:[%s8 + $0x80] sm:$0xff]
  %v3239 = vld [vmem:[%s8 + $0x88] sm:$0xff]
  %v3240 = vld [vmem:[%s8 + $0x90] sm:$0xff]
  %v3241 = vld [vmem:[%s8 + $0x98] sm:$0xff]
  %v3242 = vld [vmem:[%s8 + $0xa0] sm:$0xff]
  %v3243 = vld [vmem:[%s8 + $0xa8] sm:$0xff]
  %v3244 = vld [vmem:[%s8 + $0xb0] sm:$0xff]
  %v3245 = vld [vmem:[%s8 + $0xb8] sm:$0xff]
  %v3246 = vld [vmem:[%s8 + $0xc0] sm:$0xff]
  %v3247 = vld [vmem:[%s8 + $0xc8] sm:$0xff]
  %v3248 = vld [vmem:[%s8 + $0xd0] sm:$0xff]
  %v3249 = vld [vmem:[%s8 + $0xd8] sm:$0xff]
  %v3250 = vld [vmem:[%s8 + $0xe0] sm:$0xff]
  %v3251 = vld [vmem:[%s8 + $0xe8] sm:$0xff]
  %v3252 = vld [vmem:[%s8 + $0xf0] sm:$0xff]
  %v3253 = vld [vmem:[%s8 + $0xf8] sm:$0xff]
  %v3254 = vld [vmem:[%s8 + $0x100] sm:$0xff]
  %v3255 = vld [vmem:[%s8 + $0x108] sm:$0xff]
  %v3256 = vld [vmem:[%s8 + $0x110] sm:$0xff]
  %v3257 = vld [vmem:[%s8 + $0x118] sm:$0xff]
  %v3258 = vld [vmem:[%s8 + $0x120] sm:$0xff]
  %v3259 = vld [vmem:[%s8 + $0x128] sm:$0xff]
  %v3260 = vld [vmem:[%s8 + $0x130] sm:$0xff]
  %v3261 = vld [vmem:[%s8 + $0x138] sm:$0xff]
  %v3262 = vld [vmem:[%s8 + $0x140] sm:$0xff]
  %v3263 = vld [vmem:[%s8 + $0x148] sm:$0xff]
  %v3264 = vld [vmem:[%s8 + $0x150] sm:$0xff]
  %v3265 = vld [vmem:[%s8 + $0x158] sm:$0xff]
  %v3266 = vld [vmem:[%s8 + $0x160] sm:$0xff]
  %v3267 = vld [vmem:[%s8 + $0x168] sm:$0xff]
  %v3268 = vld [vmem:[%s8 + $0x170] sm:$0xff]
  %v3269 = vld [vmem:[%s8 + $0x178] sm:$0xff]
  %v3270 = vld [vmem:[%s8 + $0x180] sm:$0xff]
  %v3271 = vld [vmem:[%s8 + $0x188] sm:$0xff]
  %v3272 = vld [vmem:[%s8 + $0x190] sm:$0xff]
  %v3273 = vld [vmem:[%s8 + $0x198] sm:$0xff]
  %v3274 = vld [vmem:[%s8 + $0x1a0] sm:$0xff]
  %v3275 = vld [vmem:[%s8 + $0x1a8] sm:$0xff]
  %v3276 = vld [vmem:[%s8 + $0x1b0] sm:$0xff]
  %v3277 = vld [vmem:[%s8 + $0x1b8] sm:$0xff]
  %v3278 = vld [vmem:[%s8 + $0x1c0] sm:$0xff]
  %v3279 = vld [vmem:[%s8 + $0x1c8] sm:$0xff]
  %v3280 = vld [vmem:[%s8 + $0x1d0] sm:$0xff]
  %v3281 = vld [vmem:[%s8 + $0x1d8] sm:$0xff]
  %v3282 = vld [vmem:[%s8 + $0x1e0] sm:$0xff]
  %v3283 = vld [vmem:[%s8 + $0x1e8] sm:$0xff]
  %v3284 = vld [vmem:[%s8 + $0x1f0] sm:$0xff]
  %v3285 = vld [vmem:[%s8 + $0x1f8] sm:$0xff]
  %v3286 = vld [vmem:[%s8 + $0x200] sm:$0xff]
  %v3287 = vld [vmem:[%s8 + $0x208] sm:$0xff]
  %v3288 = vld [vmem:[%s8 + $0x210] sm:$0xff]
  %v3289 = vld [vmem:[%s8 + $0x218] sm:$0xff]
  %v3290 = vld [vmem:[%s8 + $0x220] sm:$0xff]
  %v3291 = vld [vmem:[%s8 + $0x228] sm:$0xff]
  %v3292 = vld [vmem:[%s8 + $0x230] sm:$0xff]
  %v3293 = vld [vmem:[%s8 + $0x238] sm:$0xff]
  %v3294 = vld [vmem:[%s8 + $0x240] sm:$0xff]
  %v3295 = vld [vmem:[%s8 + $0x248] sm:$0xff]
  %v3296 = vld [vmem:[%s8 + $0x250] sm:$0xff]
  %v3297 = vld [vmem:[%s8 + $0x258] sm:$0xff]
  %v3298 = vld [vmem:[%s8 + $0x260] sm:$0xff]
  %v3299 = vld [vmem:[%s8 + $0x268] sm:$0xff]
  %v3300 = vld [vmem:[%s8 + $0x270] sm:$0xff]
  %v3301 = vld [vmem:[%s8 + $0x278] sm:$0xff]
  %v3302 = vld [vmem:[%s8 + $0x280] sm:$0xff]
  %v3303 = vld [vmem:[%s8 + $0x288] sm:$0xff]
  %v3304 = vld [vmem:[%s8 + $0x290] sm:$0xff]
  %v3305 = vld [vmem:[%s8 + $0x298] sm:$0xff]
  %v3306 = vld [vmem:[%s8 + $0x2a0] sm:$0xff]
  %v3307 = vld [vmem:[%s8 + $0x2a8] sm:$0xff]
  %v3308 = vld [vmem:[%s8 + $0x2b0] sm:$0xff]
  %v3309 = vld [vmem:[%s8 + $0x2b8] sm:$0xff]
  %v3310 = vld [vmem:[%s8 + $0x2c0] sm:$0xff]
  %v3311 = vld [vmem:[%s8 + $0x2c8] sm:$0xff]
  %v3312 = vld [vmem:[%s8 + $0x2d0] sm:$0xff]
  %v3313 = vld [vmem:[%s8 + $0x2d8] sm:$0xff]
  %v3314 = vld [vmem:[%s8 + $0x2e0] sm:$0xff]
  %v3315 = vld [vmem:[%s8 + $0x2e8] sm:$0xff]
  %v3316 = vld [vmem:[%s8 + $0x2f0] sm:$0xff]
  %v3317 = vld [vmem:[%s8 + $0x2f8] sm:$0xff]
  %v3318 = vld [vmem:[%s8 + $0x300] sm:$0xff]
  %v3319 = vld [vmem:[%s8 + $0x308] sm:$0xff]
  %v3320 = vld [vmem:[%s8 + $0x310] sm:$0xff]
  %v3321 = vld [vmem:[%s8 + $0x318] sm:$0xff]
  %v3322 = vld [vmem:[%s8 + $0x320] sm:$0xff]
  %v3323 = vld [vmem:[%s8 + $0x328] sm:$0xff]
  %v3324 = vld [vmem:[%s8 + $0x330] sm:$0xff]
  %v3325 = vld [vmem:[%s8 + $0x338] sm:$0xff]
  %v3326 = vld [vmem:[%s8 + $0x340] sm:$0xff]
  %v3327 = vld [vmem:[%s8 + $0x348] sm:$0xff]
  %v3328 = vld [vmem:[%s8 + $0x350] sm:$0xff]
  %v3329 = vld [vmem:[%s8 + $0x358] sm:$0xff]
  %v3330 = vld [vmem:[%s8 + $0x360] sm:$0xff]
  %v3331 = vld [vmem:[%s8 + $0x368] sm:$0xff]
  %v3332 = vld [vmem:[%s8 + $0x370] sm:$0xff]
  %v3333 = vld [vmem:[%s8 + $0x378] sm:$0xff]
  %v3334 = vld [vmem:[%s8 + $0x380] sm:$0xff]
  %v3335 = vld [vmem:[%s8 + $0x388] sm:$0xff]
  %v3336 = vld [vmem:[%s8 + $0x390] sm:$0xff]
  %v3337 = vld [vmem:[%s8 + $0x398] sm:$0xff]
  %v3338 = vld [vmem:[%s8 + $0x3a0] sm:$0xff]
  %v3339 = vld [vmem:[%s8 + $0x3a8] sm:$0xff]
  %v3340 = vld [vmem:[%s8 + $0x3b0] sm:$0xff]
  %v3341 = vld [vmem:[%s8 + $0x3b8] sm:$0xff]
  %v3342 = vld [vmem:[%s8 + $0x3c0] sm:$0xff]
  %v3343 = vld [vmem:[%s8 + $0x3c8] sm:$0xff]
  %v3344 = vld [vmem:[%s8 + $0x3d0] sm:$0xff]
  %v3345 = vld [vmem:[%s8 + $0x3d8] sm:$0xff]
  %v3346 = vld [vmem:[%s8 + $0x3e0] sm:$0xff]
  %v3347 = vld [vmem:[%s8 + $0x3e8] sm:$0xff]
  %v3348 = vld [vmem:[%s8 + $0x3f0] sm:$0xff]
  %v3349 = vld [vmem:[%s8 + $0x3f8] sm:$0xff]
  %v3350 = vld [vmem:[%s9] sm:$0x1]
  %v3352 = vlaneseq
  %v3353 = vshrl.u32 %v3352, 7
  %v3354 = vsub.s32 0, %v3353
  %v3355 = vrot.slane %v3350, %v3354
  %3357 = vmatprep.subr.mxu0 0.0
  %3358 = vmatpush1.msra.mxu0 %v3222
  %3359 = vmatprep.subr.mxu0 0.0
  %3360 = vmatpush1.msra.mxu0 %v3223
  %3361 = vmatprep.subr.mxu0 0.0
  %3362 = vmatpush1.msra.mxu0 %v3224
  %3363 = vmatprep.subr.mxu0 0.0
  %3364 = vmatpush1.msra.mxu0 %v3225
  %3365 = vmatprep.subr.mxu0 0.0
  %3366 = vmatpush1.msra.mxu0 %v3226
  %3367 = vmatprep.subr.mxu0 0.0
  %3368 = vmatpush1.msra.mxu0 %v3227
  %3369 = vmatprep.subr.mxu0 0.0
  %3370 = vmatpush1.msra.mxu0 %v3228
  %3371 = vmatprep.subr.mxu0 0.0
  %3372 = vmatpush1.msra.mxu0 %v3229
  %3373 = vmatprep.subr.mxu0 0.0
  %3374 = vmatpush1.msra.mxu0 %v3230
  %3375 = vmatprep.subr.mxu0 0.0
  %3376 = vmatpush1.msra.mxu0 %v3231
  %3377 = vmatprep.subr.mxu0 0.0
  %3378 = vmatpush1.msra.mxu0 %v3232
  %3379 = vmatprep.subr.mxu0 0.0
  %3380 = vmatpush1.msra.mxu0 %v3233
  %3381 = vmatprep.subr.mxu0 0.0
  %3382 = vmatpush1.msra.mxu0 %v3234
  %3383 = vmatprep.subr.mxu0 0.0
  %3384 = vmatpush1.msra.mxu0 %v3235
  %3385 = vmatprep.subr.mxu0 0.0
  %3386 = vmatpush1.msra.mxu0 %v3236
  %3387 = vmatprep.subr.mxu0 0.0
  %3388 = vmatpush1.msra.mxu0 %v3237
  %3389 = vmatprep.subr.mxu0 0.0
  %3390 = vmatpush1.msra.mxu0 %v3238
  %3391 = vmatprep.subr.mxu0 0.0
  %3392 = vmatpush1.msra.mxu0 %v3239
  %3393 = vmatprep.subr.mxu0 0.0
  %3394 = vmatpush1.msra.mxu0 %v3240
  %3395 = vmatprep.subr.mxu0 0.0
  %3396 = vmatpush1.msra.mxu0 %v3241
  %3397 = vmatprep.subr.mxu0 0.0
  %3398 = vmatpush1.msra.mxu0 %v3242
  %3399 = vmatprep.subr.mxu0 0.0
  %3400 = vmatpush1.msra.mxu0 %v3243
  %3401 = vmatprep.subr.mxu0 0.0
  %3402 = vmatpush1.msra.mxu0 %v3244
  %3403 = vmatprep.subr.mxu0 0.0
  %3404 = vmatpush1.msra.mxu0 %v3245
  %3405 = vmatprep.subr.mxu0 0.0
  %3406 = vmatpush1.msra.mxu0 %v3246
  %3407 = vmatprep.subr.mxu0 0.0
  %3408 = vmatpush1.msra.mxu0 %v3247
  %3409 = vmatprep.subr.mxu0 0.0
  %3410 = vmatpush1.msra.mxu0 %v3248
  %3411 = vmatprep.subr.mxu0 0.0
  %3412 = vmatpush1.msra.mxu0 %v3249
  %3413 = vmatprep.subr.mxu0 0.0
  %3414 = vmatpush1.msra.mxu0 %v3250
  %3415 = vmatprep.subr.mxu0 0.0
  %3416 = vmatpush1.msra.mxu0 %v3251
  %3417 = vmatprep.subr.mxu0 0.0
  %3418 = vmatpush1.msra.mxu0 %v3252
  %3419 = vmatprep.subr.mxu0 0.0
  %3420 = vmatpush1.msra.mxu0 %v3253
  %3421 = vmatprep.mubr.f32.mxu0 %v3191
  %3422 = vmatmul.mubr.f32.gmra.mrb[0].mxu0 %v3190
  %v3423 = vpop.f32.mrb[0].mxu0
  %v3424 = vadd.f32 %v3355, %v3423
  %v3425 = vpop.f32.mrb[0].mxu0
  %3426 = vmatprep.mubr.f32.mxu0 %v3199
  %3427 = vmatmul.mubr.f32.gmra.mrb[0].mxu0 %v3198
  %v3428 = vpop.f32.mrb[0].mxu0
  %v3429 = vadd.f32 %v3355, %v3428
  %v3430 = vpop.f32.mrb[0].mxu0
  %3431 = vmatprep.mubr.f32.mxu0 %v3207
  %3432 = vmatmul.mubr.f32.gmra.mrb[0].mxu0 %v3206
  %v3433 = vpop.f32.mrb[0].mxu0
  %v3434 = vadd.f32 %v3355, %v3433
  %v3435 = vpop.f32.mrb[0].mxu0
  %3436 = vmatprep.mubr.f32.mxu0 %v3215
  %3437 = vmatmul.mubr.f32.gmra.mrb[0].mxu0 %v3214
  %v3438 = vpop.f32.mrb[0].mxu0
  %v3439 = vadd.f32 %v3355, %v3438
  %v3440 = vpop.f32.mrb[0].mxu0
  %3441 = vdwg.mxu0
  %3442 = vmatprep.subr.mxu0 0.0
  %3443 = vmatpush1.msra.mxu0 %v3254
  %3444 = vmatprep.subr.mxu0 0.0
  %3445 = vmatpush1.msra.mxu0 %v3255
  %3446 = vmatprep.subr.mxu0 0.0
  %3447 = vmatpush1.msra.mxu0 %v3256
  %3448 = vmatprep.subr.mxu0 0.0
  %3449 = vmatpush1.msra.mxu0 %v3257
  %3450 = vmatprep.subr.mxu0 0.0
  %3451 = vmatpush1.msra.mxu0 %v3258
  %3452 = vmatprep.subr.mxu0 0.0
  %3453 = vmatpush1.msra.mxu0 %v3259
  %3454 = vmatprep.subr.mxu0 0.0
  %3455 = vmatpush1.msra.mxu0 %v3260
  %3456 = vmatprep.subr.mxu0 0.0
  %3457 = vmatpush1.msra.mxu0 %v3261
  %3458 = vmatprep.subr.mxu0 0.0
  %3459 = vmatpush1.msra.mxu0 %v3262
  %3460 = vmatprep.subr.mxu0 0.0
  %3461 = vmatpush1.msra.mxu0 %v3263
  %3462 = vmatprep.subr.mxu0 0.0
  %3463 = vmatpush1.msra.mxu0 %v3264
  %3464 = vmatprep.subr.mxu0 0.0
  %3465 = vmatpush1.msra.mxu0 %v3265
  %3466 = vmatprep.subr.mxu0 0.0
  %3467 = vmatpush1.msra.mxu0 %v3266
  %3468 = vmatprep.subr.mxu0 0.0
  %3469 = vmatpush1.msra.mxu0 %v3267
  %3470 = vmatprep.subr.mxu0 0.0
  %3471 = vmatpush1.msra.mxu0 %v3268
  %3472 = vmatprep.subr.mxu0 0.0
  %3473 = vmatpush1.msra.mxu0 %v3269
  %3474 = vmatprep.subr.mxu0 0.0
  %3475 = vmatpush1.msra.mxu0 %v3270
  %3476 = vmatprep.subr.mxu0 0.0
  %3477 = vmatpush1.msra.mxu0 %v3271
  %3478 = vmatprep.subr.mxu0 0.0
  %3479 = vmatpush1.msra.mxu0 %v3272
  %3480 = vmatprep.subr.mxu0 0.0
  %3481 = vmatpush1.msra.mxu0 %v3273
  %3482 = vmatprep.subr.mxu0 0.0
  %3483 = vmatpush1.msra.mxu0 %v3274
  %3484 = vmatprep.subr.mxu0 0.0
  %3485 = vmatpush1.msra.mxu0 %v3275
  %3486 = vmatprep.subr.mxu0 0.0
  %3487 = vmatpush1.msra.mxu0 %v3276
  %3488 = vmatprep.subr.mxu0 0.0
  %3489 = vmatpush1.msra.mxu0 %v3277
  %3490 = vmatprep.subr.mxu0 0.0
  %3491 = vmatpush1.msra.mxu0 %v3278
  %3492 = vmatprep.subr.mxu0 0.0
  %3493 = vmatpush1.msra.mxu0 %v3279
  %3494 = vmatprep.subr.mxu0 0.0
  %3495 = vmatpush1.msra.mxu0 %v3280
  %3496 = vmatprep.subr.mxu0 0.0
  %3497 = vmatpush1.msra.mxu0 %v3281
  %3498 = vmatprep.subr.mxu0 0.0
  %3499 = vmatpush1.msra.mxu0 %v3282
  %3500 = vmatprep.subr.mxu0 0.0
  %3501 = vmatpush1.msra.mxu0 %v3283
  %3502 = vmatprep.subr.mxu0 0.0
  %3503 = vmatpush1.msra.mxu0 %v3284
  %3504 = vmatprep.subr.mxu0 0.0
  %3505 = vmatpush1.msra.mxu0 %v3285
  %3506 = vmatprep.mubr.f32.mxu0 %v3193
  %3507 = vmatmul.mubr.f32.gmra.mrb[0].mxu0 %v3192
  %v3508 = vpop.f32.mrb[0].mxu0
  %v3509 = vadd.f32 %v3424, %v3508
  %v3510 = vpop.f32.mrb[0].mxu0
  %3511 = vmatprep.mubr.f32.mxu0 %v3201
  %3512 = vmatmul.mubr.f32.gmra.mrb[0].mxu0 %v3200
  %v3513 = vpop.f32.mrb[0].mxu0
  %v3514 = vadd.f32 %v3429, %v3513
  %v3515 = vpop.f32.mrb[0].mxu0
  %3516 = vmatprep.mubr.f32.mxu0 %v3209
  %3517 = vmatmul.mubr.f32.gmra.mrb[0].mxu0 %v3208
  %v3518 = vpop.f32.mrb[0].mxu0
  %v3519 = vadd.f32 %v3434, %v3518
  %v3520 = vpop.f32.mrb[0].mxu0
  %3521 = vmatprep.mubr.f32.mxu0 %v3217
  %3522 = vmatmul.mubr.f32.gmra.mrb[0].mxu0 %v3216
  %v3523 = vpop.f32.mrb[0].mxu0
  %v3524 = vadd.f32 %v3439, %v3523
  %v3525 = vpop.f32.mrb[0].mxu0
  %3526 = vdwg.mxu0
  %3527 = vmatprep.subr.mxu0 0.0
  %3528 = vmatpush1.msra.mxu0 %v3286
  %3529 = vmatprep.subr.mxu0 0.0
  %3530 = vmatpush1.msra.mxu0 %v3287
  %3531 = vmatprep.subr.mxu0 0.0
  %3532 = vmatpush1.msra.mxu0 %v3288
  %3533 = vmatprep.subr.mxu0 0.0
  %3534 = vmatpush1.msra.mxu0 %v3289
  %3535 = vmatprep.subr.mxu0 0.0
  %3536 = vmatpush1.msra.mxu0 %v3290
  %3537 = vmatprep.subr.mxu0 0.0
  %3538 = vmatpush1.msra.mxu0 %v3291
  %3539 = vmatprep.subr.mxu0 0.0
  %3540 = vmatpush1.msra.mxu0 %v3292
  %3541 = vmatprep.subr.mxu0 0.0
  %3542 = vmatpush1.msra.mxu0 %v3293
  %3543 = vmatprep.subr.mxu0 0.0
  %3544 = vmatpush1.msra.mxu0 %v3294
  %3545 = vmatprep.subr.mxu0 0.0
  %3546 = vmatpush1.msra.mxu0 %v3295
  %3547 = vmatprep.subr.mxu0 0.0
  %3548 = vmatpush1.msra.mxu0 %v3296
  %3549 = vmatprep.subr.mxu0 0.0
  %3550 = vmatpush1.msra.mxu0 %v3297
  %3551 = vmatprep.subr.mxu0 0.0
  %3552 = vmatpush1.msra.mxu0 %v3298
  %3553 = vmatprep.subr.mxu0 0.0
  %3554 = vmatpush1.msra.mxu0 %v3299
  %3555 = vmatprep.subr.mxu0 0.0
  %3556 = vmatpush1.msra.mxu0 %v3300
  %3557 = vmatprep.subr.mxu0 0.0
  %3558 = vmatpush1.msra.mxu0 %v3301
  %3559 = vmatprep.subr.mxu0 0.0
  %3560 = vmatpush1.msra.mxu0 %v3302
  %3561 = vmatprep.subr.mxu0 0.0
  %3562 = vmatpush1.msra.mxu0 %v3303
  %3563 = vmatprep.subr.mxu0 0.0
  %3564 = vmatpush1.msra.mxu0 %v3304
  %3565 = vmatprep.subr.mxu0 0.0
  %3566 = vmatpush1.msra.mxu0 %v3305
  %3567 = vmatprep.subr.mxu0 0.0
  %3568 = vmatpush1.msra.mxu0 %v3306
  %3569 = vmatprep.subr.mxu0 0.0
  %3570 = vmatpush1.msra.mxu0 %v3307
  %3571 = vmatprep.subr.mxu0 0.0
  %3572 = vmatpush1.msra.mxu0 %v3308
  %3573 = vmatprep.subr.mxu0 0.0
  %3574 = vmatpush1.msra.mxu0 %v3309
  %3575 = vmatprep.subr.mxu0 0.0
  %3576 = vmatpush1.msra.mxu0 %v3310
  %3577 = vmatprep.subr.mxu0 0.0
  %3578 = vmatpush1.msra.mxu0 %v3311
  %3579 = vmatprep.subr.mxu0 0.0
  %3580 = vmatpush1.msra.mxu0 %v3312
  %3581 = vmatprep.subr.mxu0 0.0
  %3582 = vmatpush1.msra.mxu0 %v3313
  %3583 = vmatprep.subr.mxu0 0.0
  %3584 = vmatpush1.msra.mxu0 %v3314
  %3585 = vmatprep.subr.mxu0 0.0
  %3586 = vmatpush1.msra.mxu0 %v3315
  %3587 = vmatprep.subr.mxu0 0.0
  %3588 = vmatpush1.msra.mxu0 %v3316
  %3589 = vmatprep.subr.mxu0 0.0
  %3590 = vmatpush1.msra.mxu0 %v3317
  %3591 = vmatprep.mubr.f32.mxu0 %v3195
  %3592 = vmatmul.mubr.f32.gmra.mrb[0].mxu0 %v3194
  %v3593 = vpop.f32.mrb[0].mxu0
  %v3594 = vadd.f32 %v3509, %v3593
  %v3595 = vpop.f32.mrb[0].mxu0
  %3596 = vmatprep.mubr.f32.mxu0 %v3203
  %3597 = vmatmul.mubr.f32.gmra.mrb[0].mxu0 %v3202
  %v3598 = vpop.f32.mrb[0].mxu0
  %v3599 = vadd.f32 %v3514, %v3598
  %v3600 = vpop.f32.mrb[0].mxu0
  %3601 = vmatprep.mubr.f32.mxu0 %v3211
  %3602 = vmatmul.mubr.f32.gmra.mrb[0].mxu0 %v3210
  %v3603 = vpop.f32.mrb[0].mxu0
  %v3604 = vadd.f32 %v3519, %v3603
  %v3605 = vpop.f32.mrb[0].mxu0
  %3606 = vmatprep.mubr.f32.mxu0 %v3219
  %3607 = vmatmul.mubr.f32.gmra.mrb[0].mxu0 %v3218
  %v3608 = vpop.f32.mrb[0].mxu0
  %v3609 = vadd.f32 %v3524, %v3608
  %v3610 = vpop.f32.mrb[0].mxu0
  %3611 = vdwg.mxu0
  %3612 = vmatprep.subr.mxu0 0.0
  %3613 = vmatpush1.msra.mxu0 %v3318
  %3614 = vmatprep.subr.mxu0 0.0
  %3615 = vmatpush1.msra.mxu0 %v3319
  %3616 = vmatprep.subr.mxu0 0.0
  %3617 = vmatpush1.msra.mxu0 %v3320
  %3618 = vmatprep.subr.mxu0 0.0
  %3619 = vmatpush1.msra.mxu0 %v3321
  %3620 = vmatprep.subr.mxu0 0.0
  %3621 = vmatpush1.msra.mxu0 %v3322
  %3622 = vmatprep.subr.mxu0 0.0
  %3623 = vmatpush1.msra.mxu0 %v3323
  %3624 = vmatprep.subr.mxu0 0.0
  %3625 = vmatpush1.msra.mxu0 %v3324
  %3626 = vmatprep.subr.mxu0 0.0
  %3627 = vmatpush1.msra.mxu0 %v3325
  %3628 = vmatprep.subr.mxu0 0.0
  %3629 = vmatpush1.msra.mxu0 %v3326
  %3630 = vmatprep.subr.mxu0 0.0
  %3631 = vmatpush1.msra.mxu0 %v3327
  %3632 = vmatprep.subr.mxu0 0.0
  %3633 = vmatpush1.msra.mxu0 %v3328
  %3634 = vmatprep.subr.mxu0 0.0
  %3635 = vmatpush1.msra.mxu0 %v3329
  %3636 = vmatprep.subr.mxu0 0.0
  %3637 = vmatpush1.msra.mxu0 %v3330
  %3638 = vmatprep.subr.mxu0 0.0
  %3639 = vmatpush1.msra.mxu0 %v3331
  %3640 = vmatprep.subr.mxu0 0.0
  %3641 = vmatpush1.msra.mxu0 %v3332
  %3642 = vmatprep.subr.mxu0 0.0
  %3643 = vmatpush1.msra.mxu0 %v3333
  %3644 = vmatprep.subr.mxu0 0.0
  %3645 = vmatpush1.msra.mxu0 %v3334
  %3646 = vmatprep.subr.mxu0 0.0
  %3647 = vmatpush1.msra.mxu0 %v3335
  %3648 = vmatprep.subr.mxu0 0.0
  %3649 = vmatpush1.msra.mxu0 %v3336
  %3650 = vmatprep.subr.mxu0 0.0
  %3651 = vmatpush1.msra.mxu0 %v3337
  %3652 = vmatprep.subr.mxu0 0.0
  %3653 = vmatpush1.msra.mxu0 %v3338
  %3654 = vmatprep.subr.mxu0 0.0
  %3655 = vmatpush1.msra.mxu0 %v3339
  %3656 = vmatprep.subr.mxu0 0.0
  %3657 = vmatpush1.msra.mxu0 %v3340
  %3658 = vmatprep.subr.mxu0 0.0
  %3659 = vmatpush1.msra.mxu0 %v3341
  %3660 = vmatprep.subr.mxu0 0.0
  %3661 = vmatpush1.msra.mxu0 %v3342
  %3662 = vmatprep.subr.mxu0 0.0
  %3663 = vmatpush1.msra.mxu0 %v3343
  %3664 = vmatprep.subr.mxu0 0.0
  %3665 = vmatpush1.msra.mxu0 %v3344
  %3666 = vmatprep.subr.mxu0 0.0
  %3667 = vmatpush1.msra.mxu0 %v3345
  %3668 = vmatprep.subr.mxu0 0.0
  %3669 = vmatpush1.msra.mxu0 %v3346
  %3670 = vmatprep.subr.mxu0 0.0
  %3671 = vmatpush1.msra.mxu0 %v3347
  %3672 = vmatprep.subr.mxu0 0.0
  %3673 = vmatpush1.msra.mxu0 %v3348
  %3674 = vmatprep.subr.mxu0 0.0
  %3675 = vmatpush1.msra.mxu0 %v3349
  %3676 = vmatprep.mubr.f32.mxu0 %v3197
  %3677 = vmatmul.mubr.f32.gmra.mrb[0].mxu0 %v3196
  %v3678 = vpop.f32.mrb[0].mxu0
  %v3679 = vadd.f32 %v3594, %v3678
  %v3680 = vpop.f32.mrb[0].mxu0
  %3681 = vmatprep.mubr.f32.mxu0 %v3205
  %3682 = vmatmul.mubr.f32.gmra.mrb[0].mxu0 %v3204
  %v3683 = vpop.f32.mrb[0].mxu0
  %v3684 = vadd.f32 %v3599, %v3683
  %v3685 = vpop.f32.mrb[0].mxu0
  %3686 = vmatprep.mubr.f32.mxu0 %v3213
  %3687 = vmatmul.mubr.f32.gmra.mrb[0].mxu0 %v3212
  %v3688 = vpop.f32.mrb[0].mxu0
  %v3689 = vadd.f32 %v3604, %v3688
  %v3690 = vpop.f32.mrb[0].mxu0
  %3691 = vmatprep.mubr.f32.mxu0 %v3221
  %3692 = vmatmul.mubr.f32.gmra.mrb[0].mxu0 %v3220
  %v3693 = vpop.f32.mrb[0].mxu0
  %v3694 = vadd.f32 %v3609, %v3693
  %v3695 = vpop.f32.mrb[0].mxu0
  %3696 = vdwg.mxu0
  %3697 = vst [vmem:[%s16] sm:$0xff] %v3679
  %3698 = vst [vmem:[%s16 + $0x8] sm:$0xff] %v3684
  %3699 = vst [vmem:[%s16 + $0x10] sm:$0xff] %v3689
  %3700 = vst [vmem:[%s16 + $0x18] sm:$0xff] %v3694
  %v3701 = vld [vmem:[%s10] sm:$0xff]
  %v3702 = vld [vmem:[%s10 + $0x8] sm:$0xff]
  %v3703 = vld [vmem:[%s10 + $0x10] sm:$0xff]
  %v3704 = vld [vmem:[%s10 + $0x18] sm:$0xff]
  %v3705 = vld [vmem:[%s11] sm:$0xff]
  %v3706 = vld [vmem:[%s11 + $0x8] sm:$0xff]
  %v3707 = vld [vmem:[%s11 + $0x10] sm:$0xff]
  %v3708 = vld [vmem:[%s11 + $0x18] sm:$0xff]
  %v3709 = vld [vmem:[%s12] sm:$0xff]
  %v3711 = vlaneseq
  %v3712 = vshrl.u32 %v3711, 7
  %v3713 = vsub.s32 0, %v3712
  %v3714 = vrot.slane %v3709, %v3713
  %v3715 = vlaneseq
  %v3716 = vshrl.u32 %v3715, 7
  %v3717 = vsub.s32 1, %v3716
  %v3718 = vrot.slane %v3709, %v3717
  %v3719 = vlaneseq
  %v3720 = vshrl.u32 %v3719, 7
  %v3721 = vsub.s32 2, %v3720
  %v3722 = vrot.slane %v3709, %v3721
  %v3723 = vlaneseq
  %v3724 = vshrl.u32 %v3723, 7
  %v3725 = vsub.s32 3, %v3724
  %v3726 = vrot.slane %v3709, %v3725
  %v3727 = vlaneseq
  %v3728 = vshrl.u32 %v3727, 7
  %v3729 = vsub.s32 4, %v3728
  %v3730 = vrot.slane %v3709, %v3729
  %v3731 = vlaneseq
  %v3732 = vshrl.u32 %v3731, 7
  %v3733 = vsub.s32 5, %v3732
  %v3734 = vrot.slane %v3709, %v3733
  %v3735 = vlaneseq
  %v3736 = vshrl.u32 %v3735, 7
  %v3737 = vsub.s32 6, %v3736
  %v3738 = vrot.slane %v3709, %v3737
  %v3739 = vlaneseq
  %v3740 = vshrl.u32 %v3739, 7
  %v3741 = vsub.s32 7, %v3740
  %v3742 = vrot.slane %v3709, %v3741
  %v3755 = vcombine.high %v3705, %v3705
  %v3756 = vcombine.high %v3706, %v3706
  %v3757 = vcombine.high %v3707, %v3707
  %v3758 = vcombine.high %v3708, %v3708
  %vm3759 = vcmask 31744
  %v3761 = vsel %vm3759, %v3701, 0
  %v3764 = vsel %vm3759, %v3702, 0
  %v3767 = vsel %vm3759, %v3703, 0
  %v3770 = vsel %vm3759, %v3704, 0
  %vm3772 = vcmask 1043456
  %v3773 = vsel %vm3772, %v3705, 0
  %v3775 = vsel %vm3772, %v3755, 0
  %v3777 = vsel %vm3772, %v3706, 0
  %v3779 = vsel %vm3772, %v3756, 0
  %v3781 = vsel %vm3772, %v3707, 0
  %v3783 = vsel %vm3772, %v3757, 0
  %v3785 = vsel %vm3772, %v3708, 0
  %v3787 = vsel %vm3772, %v3758, 0
  %3789 = vmatprep.subr.mxu0 %v3775
  %3790 = vmatpush1.msra.mxu0 %v3773
  %3791 = vmatprep.subr.mxu0 0.0
  %3792 = vmatpush1.msra.mxu0 0.0
  %3793 = vmatprep.subr.mxu0 0.0
  %3794 = vmatpush1.msra.mxu0 0.0
  %3795 = vmatprep.subr.mxu0 0.0
  %3796 = vmatpush1.msra.mxu0 0.0
  %3797 = vmatprep.subr.mxu0 0.0
  %3798 = vmatpush1.msra.mxu0 0.0
  %3799 = vmatprep.subr.mxu0 0.0
  %3800 = vmatpush1.msra.mxu0 0.0
  %3801 = vmatprep.subr.mxu0 0.0
  %3802 = vmatpush1.msra.mxu0 0.0
  %3803 = vmatprep.subr.mxu0 0.0
  %3804 = vmatpush1.msra.mxu0 0.0
  %3805 = vmatprep.subr.mxu0 0.0
  %3806 = vmatpush1.msra.mxu0 0.0
  %3807 = vmatprep.subr.mxu0 0.0
  %3808 = vmatpush1.msra.mxu0 0.0
  %3809 = vmatprep.subr.mxu0 0.0
  %3810 = vmatpush1.msra.mxu0 0.0
  %3811 = vmatprep.subr.mxu0 0.0
  %3812 = vmatpush1.msra.mxu0 0.0
  %3813 = vmatprep.subr.mxu0 0.0
  %3814 = vmatpush1.msra.mxu0 0.0
  %3815 = vmatprep.subr.mxu0 0.0
  %3816 = vmatpush1.msra.mxu0 0.0
  %3817 = vmatprep.subr.mxu0 0.0
  %3818 = vmatpush1.msra.mxu0 0.0
  %3819 = vmatprep.subr.mxu0 0.0
  %3820 = vmatpush1.msra.mxu0 0.0
  %3821 = vmatprep.subr.mxu0 0.0
  %3822 = vmatpush1.msra.mxu0 0.0
  %3823 = vmatprep.subr.mxu0 0.0
  %3824 = vmatpush1.msra.mxu0 0.0
  %3825 = vmatprep.subr.mxu0 0.0
  %3826 = vmatpush1.msra.mxu0 0.0
  %3827 = vmatprep.subr.mxu0 0.0
  %3828 = vmatpush1.msra.mxu0 0.0
  %3829 = vmatprep.subr.mxu0 0.0
  %3830 = vmatpush1.msra.mxu0 0.0
  %3831 = vmatprep.subr.mxu0 0.0
  %3832 = vmatpush1.msra.mxu0 0.0
  %3833 = vmatprep.subr.mxu0 0.0
  %3834 = vmatpush1.msra.mxu0 0.0
  %3835 = vmatprep.subr.mxu0 0.0
  %3836 = vmatpush1.msra.mxu0 0.0
  %3837 = vmatprep.subr.mxu0 0.0
  %3838 = vmatpush1.msra.mxu0 0.0
  %3839 = vmatprep.subr.mxu0 0.0
  %3840 = vmatpush1.msra.mxu0 0.0
  %3841 = vmatprep.subr.mxu0 0.0
  %3842 = vmatpush1.msra.mxu0 0.0
  %3843 = vmatprep.subr.mxu0 0.0
  %3844 = vmatpush1.msra.mxu0 0.0
  %3845 = vmatprep.subr.mxu0 0.0
  %3846 = vmatpush1.msra.mxu0 0.0
  %3847 = vmatprep.subr.mxu0 0.0
  %3848 = vmatpush1.msra.mxu0 0.0
  %3849 = vmatprep.subr.mxu0 0.0
  %3850 = vmatpush1.msra.mxu0 0.0
  %3851 = vmatprep.subr.mxu0 0.0
  %3852 = vmatpush1.msra.mxu0 0.0
  %3853 = vmatprep.mubr.f32.mxu0 0.0
  %3854 = vmatmul.mubr.f32.gmra.mrb[0].mxu0 %v3761
  %v3855 = vpop.f32.mrb[0].mxu0
  %v3856 = vadd.f32 %v3714, %v3855
  %v3857 = vpop.f32.mrb[0].mxu0
  %v3858 = vadd.f32 %v3718, %v3857
  %3859 = vmatprep.mubr.f32.mxu0 0.0
  %3860 = vmatmul.mubr.f32.gmra.mrb[0].mxu0 %v3764
  %v3861 = vpop.f32.mrb[0].mxu0
  %v3862 = vadd.f32 %v3714, %v3861
  %v3863 = vpop.f32.mrb[0].mxu0
  %v3864 = vadd.f32 %v3718, %v3863
  %3865 = vmatprep.mubr.f32.mxu0 0.0
  %3866 = vmatmul.mubr.f32.gmra.mrb[0].mxu0 %v3767
  %v3867 = vpop.f32.mrb[0].mxu0
  %v3868 = vadd.f32 %v3714, %v3867
  %v3869 = vpop.f32.mrb[0].mxu0
  %v3870 = vadd.f32 %v3718, %v3869
  %3871 = vmatprep.mubr.f32.mxu0 0.0
  %3872 = vmatmul.mubr.f32.gmra.mrb[0].mxu0 %v3770
  %v3873 = vpop.f32.mrb[0].mxu0
  %v3874 = vadd.f32 %v3714, %v3873
  %v3875 = vpop.f32.mrb[0].mxu0
  %v3876 = vadd.f32 %v3718, %v3875
  %3877 = vdwg.mxu0
  %3878 = vmatprep.subr.mxu0 %v3779
  %3879 = vmatpush1.msra.mxu0 %v3777
  %3880 = vmatprep.subr.mxu0 0.0
  %3881 = vmatpush1.msra.mxu0 0.0
  %3882 = vmatprep.subr.mxu0 0.0
  %3883 = vmatpush1.msra.mxu0 0.0
  %3884 = vmatprep.subr.mxu0 0.0
  %3885 = vmatpush1.msra.mxu0 0.0
  %3886 = vmatprep.subr.mxu0 0.0
  %3887 = vmatpush1.msra.mxu0 0.0
  %3888 = vmatprep.subr.mxu0 0.0
  %3889 = vmatpush1.msra.mxu0 0.0
  %3890 = vmatprep.subr.mxu0 0.0
  %3891 = vmatpush1.msra.mxu0 0.0
  %3892 = vmatprep.subr.mxu0 0.0
  %3893 = vmatpush1.msra.mxu0 0.0
  %3894 = vmatprep.subr.mxu0 0.0
  %3895 = vmatpush1.msra.mxu0 0.0
  %3896 = vmatprep.subr.mxu0 0.0
  %3897 = vmatpush1.msra.mxu0 0.0
  %3898 = vmatprep.subr.mxu0 0.0
  %3899 = vmatpush1.msra.mxu0 0.0
  %3900 = vmatprep.subr.mxu0 0.0
  %3901 = vmatpush1.msra.mxu0 0.0
  %3902 = vmatprep.subr.mxu0 0.0
  %3903 = vmatpush1.msra.mxu0 0.0
  %3904 = vmatprep.subr.mxu0 0.0
  %3905 = vmatpush1.msra.mxu0 0.0
  %3906 = vmatprep.subr.mxu0 0.0
  %3907 = vmatpush1.msra.mxu0 0.0
  %3908 = vmatprep.subr.mxu0 0.0
  %3909 = vmatpush1.msra.mxu0 0.0
  %3910 = vmatprep.subr.mxu0 0.0
  %3911 = vmatpush1.msra.mxu0 0.0
  %3912 = vmatprep.subr.mxu0 0.0
  %3913 = vmatpush1.msra.mxu0 0.0
  %3914 = vmatprep.subr.mxu0 0.0
  %3915 = vmatpush1.msra.mxu0 0.0
  %3916 = vmatprep.subr.mxu0 0.0
  %3917 = vmatpush1.msra.mxu0 0.0
  %3918 = vmatprep.subr.mxu0 0.0
  %3919 = vmatpush1.msra.mxu0 0.0
  %3920 = vmatprep.subr.mxu0 0.0
  %3921 = vmatpush1.msra.mxu0 0.0
  %3922 = vmatprep.subr.mxu0 0.0
  %3923 = vmatpush1.msra.mxu0 0.0
  %3924 = vmatprep.subr.mxu0 0.0
  %3925 = vmatpush1.msra.mxu0 0.0
  %3926 = vmatprep.subr.mxu0 0.0
  %3927 = vmatpush1.msra.mxu0 0.0
  %3928 = vmatprep.subr.mxu0 0.0
  %3929 = vmatpush1.msra.mxu0 0.0
  %3930 = vmatprep.subr.mxu0 0.0
  %3931 = vmatpush1.msra.mxu0 0.0
  %3932 = vmatprep.subr.mxu0 0.0
  %3933 = vmatpush1.msra.mxu0 0.0
  %3934 = vmatprep.subr.mxu0 0.0
  %3935 = vmatpush1.msra.mxu0 0.0
  %3936 = vmatprep.subr.mxu0 0.0
  %3937 = vmatpush1.msra.mxu0 0.0
  %3938 = vmatprep.subr.mxu0 0.0
  %3939 = vmatpush1.msra.mxu0 0.0
  %3940 = vmatprep.subr.mxu0 0.0
  %3941 = vmatpush1.msra.mxu0 0.0
  %3942 = vmatprep.mubr.f32.mxu0 0.0
  %3943 = vmatmul.mubr.f32.gmra.mrb[0].mxu0 %v3761
  %v3944 = vpop.f32.mrb[0].mxu0
  %v3945 = vadd.f32 %v3722, %v3944
  %v3946 = vpop.f32.mrb[0].mxu0
  %v3947 = vadd.f32 %v3726, %v3946
  %3948 = vmatprep.mubr.f32.mxu0 0.0
  %3949 = vmatmul.mubr.f32.gmra.mrb[0].mxu0 %v3764
  %v3950 = vpop.f32.mrb[0].mxu0
  %v3951 = vadd.f32 %v3722, %v3950
  %v3952 = vpop.f32.mrb[0].mxu0
  %v3953 = vadd.f32 %v3726, %v3952
  %3954 = vmatprep.mubr.f32.mxu0 0.0
  %3955 = vmatmul.mubr.f32.gmra.mrb[0].mxu0 %v3767
  %v3956 = vpop.f32.mrb[0].mxu0
  %v3957 = vadd.f32 %v3722, %v3956
  %v3958 = vpop.f32.mrb[0].mxu0
  %v3959 = vadd.f32 %v3726, %v3958
  %3960 = vmatprep.mubr.f32.mxu0 0.0
  %3961 = vmatmul.mubr.f32.gmra.mrb[0].mxu0 %v3770
  %v3962 = vpop.f32.mrb[0].mxu0
  %v3963 = vadd.f32 %v3722, %v3962
  %v3964 = vpop.f32.mrb[0].mxu0
  %v3965 = vadd.f32 %v3726, %v3964
  %3966 = vdwg.mxu0
  %3967 = vmatprep.subr.mxu0 %v3783
  %3968 = vmatpush1.msra.mxu0 %v3781
  %3969 = vmatprep.subr.mxu0 0.0
  %3970 = vmatpush1.msra.mxu0 0.0
  %3971 = vmatprep.subr.mxu0 0.0
  %3972 = vmatpush1.msra.mxu0 0.0
  %3973 = vmatprep.subr.mxu0 0.0
  %3974 = vmatpush1.msra.mxu0 0.0
  %3975 = vmatprep.subr.mxu0 0.0
  %3976 = vmatpush1.msra.mxu0 0.0
  %3977 = vmatprep.subr.mxu0 0.0
  %3978 = vmatpush1.msra.mxu0 0.0
  %3979 = vmatprep.subr.mxu0 0.0
  %3980 = vmatpush1.msra.mxu0 0.0
  %3981 = vmatprep.subr.mxu0 0.0
  %3982 = vmatpush1.msra.mxu0 0.0
  %3983 = vmatprep.subr.mxu0 0.0
  %3984 = vmatpush1.msra.mxu0 0.0
  %3985 = vmatprep.subr.mxu0 0.0
  %3986 = vmatpush1.msra.mxu0 0.0
  %3987 = vmatprep.subr.mxu0 0.0
  %3988 = vmatpush1.msra.mxu0 0.0
  %3989 = vmatprep.subr.mxu0 0.0
  %3990 = vmatpush1.msra.mxu0 0.0
  %3991 = vmatprep.subr.mxu0 0.0
  %3992 = vmatpush1.msra.mxu0 0.0
  %3993 = vmatprep.subr.mxu0 0.0
  %3994 = vmatpush1.msra.mxu0 0.0
  %3995 = vmatprep.subr.mxu0 0.0
  %3996 = vmatpush1.msra.mxu0 0.0
  %3997 = vmatprep.subr.mxu0 0.0
  %3998 = vmatpush1.msra.mxu0 0.0
  %3999 = vmatprep.subr.mxu0 0.0
  %4000 = vmatpush1.msra.mxu0 0.0
  %4001 = vmatprep.subr.mxu0 0.0
  %4002 = vmatpush1.msra.mxu0 0.0
  %4003 = vmatprep.subr.mxu0 0.0
  %4004 = vmatpush1.msra.mxu0 0.0
  %4005 = vmatprep.subr.mxu0 0.0
  %4006 = vmatpush1.msra.mxu0 0.0
  %4007 = vmatprep.subr.mxu0 0.0
  %4008 = vmatpush1.msra.mxu0 0.0
  %4009 = vmatprep.subr.mxu0 0.0
  %4010 = vmatpush1.msra.mxu0 0.0
  %4011 = vmatprep.subr.mxu0 0.0
  %4012 = vmatpush1.msra.mxu0 0.0
  %4013 = vmatprep.subr.mxu0 0.0
  %4014 = vmatpush1.msra.mxu0 0.0
  %4015 = vmatprep.subr.mxu0 0.0
  %4016 = vmatpush1.msra.mxu0 0.0
  %4017 = vmatprep.subr.mxu0 0.0
  %4018 = vmatpush1.msra.mxu0 0.0
  %4019 = vmatprep.subr.mxu0 0.0
  %4020 = vmatpush1.msra.mxu0 0.0
  %4021 = vmatprep.subr.mxu0 0.0
  %4022 = vmatpush1.msra.mxu0 0.0
  %4023 = vmatprep.subr.mxu0 0.0
  %4024 = vmatpush1.msra.mxu0 0.0
  %4025 = vmatprep.subr.mxu0 0.0
  %4026 = vmatpush1.msra.mxu0 0.0
  %4027 = vmatprep.subr.mxu0 0.0
  %4028 = vmatpush1.msra.mxu0 0.0
  %4029 = vmatprep.subr.mxu0 0.0
  %4030 = vmatpush1.msra.mxu0 0.0
  %4031 = vmatprep.mubr.f32.mxu0 0.0
  %4032 = vmatmul.mubr.f32.gmra.mrb[0].mxu0 %v3761
  %v4033 = vpop.f32.mrb[0].mxu0
  %v4034 = vadd.f32 %v3730, %v4033
  %v4035 = vpop.f32.mrb[0].mxu0
  %v4036 = vadd.f32 %v3734, %v4035
  %4037 = vmatprep.mubr.f32.mxu0 0.0
  %4038 = vmatmul.mubr.f32.gmra.mrb[0].mxu0 %v3764
  %v4039 = vpop.f32.mrb[0].mxu0
  %v4040 = vadd.f32 %v3730, %v4039
  %v4041 = vpop.f32.mrb[0].mxu0
  %v4042 = vadd.f32 %v3734, %v4041
  %4043 = vmatprep.mubr.f32.mxu0 0.0
  %4044 = vmatmul.mubr.f32.gmra.mrb[0].mxu0 %v3767
  %v4045 = vpop.f32.mrb[0].mxu0
  %v4046 = vadd.f32 %v3730, %v4045
  %v4047 = vpop.f32.mrb[0].mxu0
  %v4048 = vadd.f32 %v3734, %v4047
  %4049 = vmatprep.mubr.f32.mxu0 0.0
  %4050 = vmatmul.mubr.f32.gmra.mrb[0].mxu0 %v3770
  %v4051 = vpop.f32.mrb[0].mxu0
  %v4052 = vadd.f32 %v3730, %v4051
  %v4053 = vpop.f32.mrb[0].mxu0
  %v4054 = vadd.f32 %v3734, %v4053
  %4055 = vdwg.mxu0
  %4056 = vmatprep.subr.mxu0 %v3787
  %4057 = vmatpush1.msra.mxu0 %v3785
  %4058 = vmatprep.subr.mxu0 0.0
  %4059 = vmatpush1.msra.mxu0 0.0
  %4060 = vmatprep.subr.mxu0 0.0
  %4061 = vmatpush1.msra.mxu0 0.0
  %4062 = vmatprep.subr.mxu0 0.0
  %4063 = vmatpush1.msra.mxu0 0.0
  %4064 = vmatprep.subr.mxu0 0.0
  %4065 = vmatpush1.msra.mxu0 0.0
  %4066 = vmatprep.subr.mxu0 0.0
  %4067 = vmatpush1.msra.mxu0 0.0
  %4068 = vmatprep.subr.mxu0 0.0
  %4069 = vmatpush1.msra.mxu0 0.0
  %4070 = vmatprep.subr.mxu0 0.0
  %4071 = vmatpush1.msra.mxu0 0.0
  %4072 = vmatprep.subr.mxu0 0.0
  %4073 = vmatpush1.msra.mxu0 0.0
  %4074 = vmatprep.subr.mxu0 0.0
  %4075 = vmatpush1.msra.mxu0 0.0
  %4076 = vmatprep.subr.mxu0 0.0
  %4077 = vmatpush1.msra.mxu0 0.0
  %4078 = vmatprep.subr.mxu0 0.0
  %4079 = vmatpush1.msra.mxu0 0.0
  %4080 = vmatprep.subr.mxu0 0.0
  %4081 = vmatpush1.msra.mxu0 0.0
  %4082 = vmatprep.subr.mxu0 0.0
  %4083 = vmatpush1.msra.mxu0 0.0
  %4084 = vmatprep.subr.mxu0 0.0
  %4085 = vmatpush1.msra.mxu0 0.0
  %4086 = vmatprep.subr.mxu0 0.0
  %4087 = vmatpush1.msra.mxu0 0.0
  %4088 = vmatprep.subr.mxu0 0.0
  %4089 = vmatpush1.msra.mxu0 0.0
  %4090 = vmatprep.subr.mxu0 0.0
  %4091 = vmatpush1.msra.mxu0 0.0
  %4092 = vmatprep.subr.mxu0 0.0
  %4093 = vmatpush1.msra.mxu0 0.0
  %4094 = vmatprep.subr.mxu0 0.0
  %4095 = vmatpush1.msra.mxu0 0.0
  %4096 = vmatprep.subr.mxu0 0.0
  %4097 = vmatpush1.msra.mxu0 0.0
  %4098 = vmatprep.subr.mxu0 0.0
  %4099 = vmatpush1.msra.mxu0 0.0
  %4100 = vmatprep.subr.mxu0 0.0
  %4101 = vmatpush1.msra.mxu0 0.0
  %4102 = vmatprep.subr.mxu0 0.0
  %4103 = vmatpush1.msra.mxu0 0.0
  %4104 = vmatprep.subr.mxu0 0.0
  %4105 = vmatpush1.msra.mxu0 0.0
  %4106 = vmatprep.subr.mxu0 0.0
  %4107 = vmatpush1.msra.mxu0 0.0
  %4108 = vmatprep.subr.mxu0 0.0
  %4109 = vmatpush1.msra.mxu0 0.0
  %4110 = vmatprep.subr.mxu0 0.0
  %4111 = vmatpush1.msra.mxu0 0.0
  %4112 = vmatprep.subr.mxu0 0.0
  %4113 = vmatpush1.msra.mxu0 0.0
  %4114 = vmatprep.subr.mxu0 0.0
  %4115 = vmatpush1.msra.mxu0 0.0
  %4116 = vmatprep.subr.mxu0 0.0
  %4117 = vmatpush1.msra.mxu0 0.0
  %4118 = vmatprep.subr.mxu0 0.0
  %4119 = vmatpush1.msra.mxu0 0.0
  %4120 = vmatprep.mubr.f32.mxu0 0.0
  %4121 = vmatmul.mubr.f32.gmra.mrb[0].mxu0 %v3761
  %v4122 = vpop.f32.mrb[0].mxu0
  %v4123 = vadd.f32 %v3738, %v4122
  %v4124 = vpop.f32.mrb[0].mxu0
  %v4125 = vadd.f32 %v3742, %v4124
  %4126 = vmatprep.mubr.f32.mxu0 0.0
  %4127 = vmatmul.mubr.f32.gmra.mrb[0].mxu0 %v3764
  %v4128 = vpop.f32.mrb[0].mxu0
  %v4129 = vadd.f32 %v3738, %v4128
  %v4130 = vpop.f32.mrb[0].mxu0
  %v4131 = vadd.f32 %v3742, %v4130
  %4132 = vmatprep.mubr.f32.mxu0 0.0
  %4133 = vmatmul.mubr.f32.gmra.mrb[0].mxu0 %v3767
  %v4134 = vpop.f32.mrb[0].mxu0
  %v4135 = vadd.f32 %v3738, %v4134
  %v4136 = vpop.f32.mrb[0].mxu0
  %v4137 = vadd.f32 %v3742, %v4136
  %4138 = vmatprep.mubr.f32.mxu0 0.0
  %4139 = vmatmul.mubr.f32.gmra.mrb[0].mxu0 %v3770
  %v4140 = vpop.f32.mrb[0].mxu0
  %v4141 = vadd.f32 %v3738, %v4140
  %v4142 = vpop.f32.mrb[0].mxu0
  %v4143 = vadd.f32 %v3742, %v4142
  %4144 = vdwg.mxu0
  %4145 = vst [vmem:[%s20] sm:$0xff] %v3856
  %4146 = vst [vmem:[%s20 + $0x8] sm:$0xff] %v3858
  %4147 = vst [vmem:[%s20 + $0x10] sm:$0xff] %v3945
  %4148 = vst [vmem:[%s20 + $0x18] sm:$0xff] %v3947
  %4149 = vst [vmem:[%s20 + $0x20] sm:$0xff] %v4034
  %4150 = vst [vmem:[%s20 + $0x28] sm:$0xff] %v4036
  %4151 = vst [vmem:[%s20 + $0x30] sm:$0xff] %v4123
  %4152 = vst [vmem:[%s20 + $0x38] sm:$0xff] %v4125
  %4153 = vst [vmem:[%s20 + $0x40] sm:$0xff] %v3862
  %4154 = vst [vmem:[%s20 + $0x48] sm:$0xff] %v3864
  %4155 = vst [vmem:[%s20 + $0x50] sm:$0xff] %v3951
  %4156 = vst [vmem:[%s20 + $0x58] sm:$0xff] %v3953
  %4157 = vst [vmem:[%s20 + $0x60] sm:$0xff] %v4040
  %4158 = vst [vmem:[%s20 + $0x68] sm:$0xff] %v4042
  %4159 = vst [vmem:[%s20 + $0x70] sm:$0xff] %v4129
  %4160 = vst [vmem:[%s20 + $0x78] sm:$0xff] %v4131
  %4161 = vst [vmem:[%s20 + $0x80] sm:$0xff] %v3868
  %4162 = vst [vmem:[%s20 + $0x88] sm:$0xff] %v3870
  %4163 = vst [vmem:[%s20 + $0x90] sm:$0xff] %v3957
  %4164 = vst [vmem:[%s20 + $0x98] sm:$0xff] %v3959
  %4165 = vst [vmem:[%s20 + $0xa0] sm:$0xff] %v4046
  %4166 = vst [vmem:[%s20 + $0xa8] sm:$0xff] %v4048
  %4167 = vst [vmem:[%s20 + $0xb0] sm:$0xff] %v4135
  %4168 = vst [vmem:[%s20 + $0xb8] sm:$0xff] %v4137
  %4169 = vst [vmem:[%s20 + $0xc0] sm:$0xff] %v3874
  %4170 = vst [vmem:[%s20 + $0xc8] sm:$0xff] %v3876
  %4171 = vst [vmem:[%s20 + $0xd0] sm:$0xff] %v3963
  %4172 = vst [vmem:[%s20 + $0xd8] sm:$0xff] %v3965
  %4173 = vst [vmem:[%s20 + $0xe0] sm:$0xff] %v4052
  %4174 = vst [vmem:[%s20 + $0xe8] sm:$0xff] %v4054
  %4175 = vst [vmem:[%s20 + $0xf0] sm:$0xff] %v4141
  %4176 = vst [vmem:[%s20 + $0xf8] sm:$0xff] %v4143
  %v4177 = vmul.f32 %v3856, 0.5
  %v4178 = vmul.f32 %v3858, 0.5
  %v4179 = vmul.f32 %v3945, 0.5
  %v4180 = vmul.f32 %v3947, 0.5
  %v4181 = vmul.f32 %v4034, 0.5
  %v4182 = vmul.f32 %v4036, 0.5
  %v4183 = vmul.f32 %v4123, 0.5
  %v4184 = vmul.f32 %v4125, 0.5
  %v4185 = vmul.f32 %v3862, 0.5
  %v4186 = vmul.f32 %v3864, 0.5
  %v4187 = vmul.f32 %v3951, 0.5
  %v4188 = vmul.f32 %v3953, 0.5
  %v4189 = vmul.f32 %v4040, 0.5
  %v4190 = vmul.f32 %v4042, 0.5
  %v4191 = vmul.f32 %v4129, 0.5
  %v4192 = vmul.f32 %v4131, 0.5
  %v4193 = vmul.f32 %v3868, 0.5
  %v4194 = vmul.f32 %v3870, 0.5
  %v4195 = vmul.f32 %v3957, 0.5
  %v4196 = vmul.f32 %v3959, 0.5
  %v4197 = vmul.f32 %v4046, 0.5
  %v4198 = vmul.f32 %v4048, 0.5
  %v4199 = vmul.f32 %v4135, 0.5
  %v4200 = vmul.f32 %v4137, 0.5
  %v4201 = vmul.f32 %v3874, 0.5
  %v4202 = vmul.f32 %v3876, 0.5
  %v4203 = vmul.f32 %v3963, 0.5
  %v4204 = vmul.f32 %v3965, 0.5
  %v4205 = vmul.f32 %v4052, 0.5
  %v4206 = vmul.f32 %v4054, 0.5
  %v4207 = vmul.f32 %v4141, 0.5
  %v4208 = vmul.f32 %v4143, 0.5
  %v4209 = vmul.f32 %v3856, 0.70710677
  %v4210 = vmul.f32 %v3858, 0.70710677
  %v4211 = vmul.f32 %v3945, 0.70710677
  %v4212 = vmul.f32 %v3947, 0.70710677
  %v4213 = vmul.f32 %v4034, 0.70710677
  %v4214 = vmul.f32 %v4036, 0.70710677
  %v4215 = vmul.f32 %v4123, 0.70710677
  %v4216 = vmul.f32 %v4125, 0.70710677
  %v4217 = vmul.f32 %v3862, 0.70710677
  %v4218 = vmul.f32 %v3864, 0.70710677
  %v4219 = vmul.f32 %v3951, 0.70710677
  %v4220 = vmul.f32 %v3953, 0.70710677
  %v4221 = vmul.f32 %v4040, 0.70710677
  %v4222 = vmul.f32 %v4042, 0.70710677
  %v4223 = vmul.f32 %v4129, 0.70710677
  %v4224 = vmul.f32 %v4131, 0.70710677
  %v4225 = vmul.f32 %v3868, 0.70710677
  %v4226 = vmul.f32 %v3870, 0.70710677
  %v4227 = vmul.f32 %v3957, 0.70710677
  %v4228 = vmul.f32 %v3959, 0.70710677
  %v4229 = vmul.f32 %v4046, 0.70710677
  %v4230 = vmul.f32 %v4048, 0.70710677
  %v4231 = vmul.f32 %v4135, 0.70710677
  %v4232 = vmul.f32 %v4137, 0.70710677
  %v4233 = vmul.f32 %v3874, 0.70710677
  %v4234 = vmul.f32 %v3876, 0.70710677
  %v4235 = vmul.f32 %v3963, 0.70710677
  %v4236 = vmul.f32 %v3965, 0.70710677
  %v4237 = vmul.f32 %v4052, 0.70710677
  %v4238 = vmul.f32 %v4054, 0.70710677
  %v4239 = vmul.f32 %v4141, 0.70710677
  %v4240 = vmul.f32 %v4143, 0.70710677
  %v4241 = vand.u32 2147483647, %v4209
  %v4242 = vand.u32 2147483647, %v4210
  %v4243 = vand.u32 2147483647, %v4211
  %v4244 = vand.u32 2147483647, %v4212
  %v4245 = vand.u32 2147483647, %v4213
  %v4246 = vand.u32 2147483647, %v4214
  %v4247 = vand.u32 2147483647, %v4215
  %v4248 = vand.u32 2147483647, %v4216
  %v4249 = vand.u32 2147483647, %v4217
  %v4250 = vand.u32 2147483647, %v4218
  %v4251 = vand.u32 2147483647, %v4219
  %v4252 = vand.u32 2147483647, %v4220
  %v4253 = vand.u32 2147483647, %v4221
  %v4254 = vand.u32 2147483647, %v4222
  %v4255 = vand.u32 2147483647, %v4223
  %v4256 = vand.u32 2147483647, %v4224
  %v4257 = vand.u32 2147483647, %v4225
  %v4258 = vand.u32 2147483647, %v4226
  %v4259 = vand.u32 2147483647, %v4227
  %v4260 = vand.u32 2147483647, %v4228
  %v4261 = vand.u32 2147483647, %v4229
  %v4262 = vand.u32 2147483647, %v4230
  %v4263 = vand.u32 2147483647, %v4231
  %v4264 = vand.u32 2147483647, %v4232
  %v4265 = vand.u32 2147483647, %v4233
  %v4266 = vand.u32 2147483647, %v4234
  %v4267 = vand.u32 2147483647, %v4235
  %v4268 = vand.u32 2147483647, %v4236
  %v4269 = vand.u32 2147483647, %v4237
  %v4270 = vand.u32 2147483647, %v4238
  %v4271 = vand.u32 2147483647, %v4239
  %v4272 = vand.u32 2147483647, %v4240
  %v4273 = vmul.f32 %v4241, 0.3275911
  %v4274 = vmul.f32 %v4242, 0.3275911
  %v4275 = vmul.f32 %v4243, 0.3275911
  %v4276 = vmul.f32 %v4244, 0.3275911
  %v4277 = vmul.f32 %v4245, 0.3275911
  %v4278 = vmul.f32 %v4246, 0.3275911
  %v4279 = vmul.f32 %v4247, 0.3275911
  %v4280 = vmul.f32 %v4248, 0.3275911
  %v4281 = vmul.f32 %v4249, 0.3275911
  %v4282 = vmul.f32 %v4250, 0.3275911
  %v4283 = vmul.f32 %v4251, 0.3275911
  %v4284 = vmul.f32 %v4252, 0.3275911
  %v4285 = vmul.f32 %v4253, 0.3275911
  %v4286 = vmul.f32 %v4254, 0.3275911
  %v4287 = vmul.f32 %v4255, 0.3275911
  %v4288 = vmul.f32 %v4256, 0.3275911
  %v4289 = vmul.f32 %v4257, 0.3275911
  %v4290 = vmul.f32 %v4258, 0.3275911
  %v4291 = vmul.f32 %v4259, 0.3275911
  %v4292 = vmul.f32 %v4260, 0.3275911
  %v4293 = vmul.f32 %v4261, 0.3275911
  %v4294 = vmul.f32 %v4262, 0.3275911
  %v4295 = vmul.f32 %v4263, 0.3275911
  %v4296 = vmul.f32 %v4264, 0.3275911
  %v4297 = vmul.f32 %v4265, 0.3275911
  %v4298 = vmul.f32 %v4266, 0.3275911
  %v4299 = vmul.f32 %v4267, 0.3275911
  %v4300 = vmul.f32 %v4268, 0.3275911
  %v4301 = vmul.f32 %v4269, 0.3275911
  %v4302 = vmul.f32 %v4270, 0.3275911
  %v4303 = vmul.f32 %v4271, 0.3275911
  %v4304 = vmul.f32 %v4272, 0.3275911
  %v4305 = vadd.f32 %v4273, 1.0
  %v4306 = vadd.f32 %v4274, 1.0
  %v4307 = vadd.f32 %v4275, 1.0
  %v4308 = vadd.f32 %v4276, 1.0
  %v4309 = vadd.f32 %v4277, 1.0
  %v4310 = vadd.f32 %v4278, 1.0
  %v4311 = vadd.f32 %v4279, 1.0
  %v4312 = vadd.f32 %v4280, 1.0
  %v4313 = vadd.f32 %v4281, 1.0
  %v4314 = vadd.f32 %v4282, 1.0
  %v4315 = vadd.f32 %v4283, 1.0
  %v4316 = vadd.f32 %v4284, 1.0
  %v4317 = vadd.f32 %v4285, 1.0
  %v4318 = vadd.f32 %v4286, 1.0
  %v4319 = vadd.f32 %v4287, 1.0
  %v4320 = vadd.f32 %v4288, 1.0
  %v4321 = vadd.f32 %v4289, 1.0
  %v4322 = vadd.f32 %v4290, 1.0
  %v4323 = vadd.f32 %v4291, 1.0
  %v4324 = vadd.f32 %v4292, 1.0
  %v4325 = vadd.f32 %v4293, 1.0
  %v4326 = vadd.f32 %v4294, 1.0
  %v4327 = vadd.f32 %v4295, 1.0
  %v4328 = vadd.f32 %v4296, 1.0
  %v4329 = vadd.f32 %v4297, 1.0
  %v4330 = vadd.f32 %v4298, 1.0
  %v4331 = vadd.f32 %v4299, 1.0
  %v4332 = vadd.f32 %v4300, 1.0
  %v4333 = vadd.f32 %v4301, 1.0
  %v4334 = vadd.f32 %v4302, 1.0
  %v4335 = vadd.f32 %v4303, 1.0
  %v4336 = vadd.f32 %v4304, 1.0
  %v4337 = vrcp.pop %v4305
  %v4338 = vrcp.pop %v4306
  %v4339 = vrcp.pop %v4307
  %v4340 = vrcp.pop %v4308
  %v4341 = vrcp.pop %v4309
  %v4342 = vrcp.pop %v4310
  %v4343 = vrcp.pop %v4311
  %v4344 = vrcp.pop %v4312
  %v4345 = vrcp.pop %v4313
  %v4346 = vrcp.pop %v4314
  %v4347 = vrcp.pop %v4315
  %v4348 = vrcp.pop %v4316
  %v4349 = vrcp.pop %v4317
  %v4350 = vrcp.pop %v4318
  %v4351 = vrcp.pop %v4319
  %v4352 = vrcp.pop %v4320
  %v4353 = vrcp.pop %v4321
  %v4354 = vrcp.pop %v4322
  %v4355 = vrcp.pop %v4323
  %v4356 = vrcp.pop %v4324
  %v4357 = vrcp.pop %v4325
  %v4358 = vrcp.pop %v4326
  %v4359 = vrcp.pop %v4327
  %v4360 = vrcp.pop %v4328
  %v4361 = vrcp.pop %v4329
  %v4362 = vrcp.pop %v4330
  %v4363 = vrcp.pop %v4331
  %v4364 = vrcp.pop %v4332
  %v4365 = vrcp.pop %v4333
  %v4366 = vrcp.pop %v4334
  %v4367 = vrcp.pop %v4335
  %v4368 = vrcp.pop %v4336
  %v4369 = vmul.f32 %v4337, 1.0614054
  %v4370 = vmul.f32 %v4338, 1.0614054
  %v4371 = vmul.f32 %v4339, 1.0614054
  %v4372 = vmul.f32 %v4340, 1.0614054
  %v4373 = vmul.f32 %v4341, 1.0614054
  %v4374 = vmul.f32 %v4342, 1.0614054
  %v4375 = vmul.f32 %v4343, 1.0614054
  %v4376 = vmul.f32 %v4344, 1.0614054
  %v4377 = vmul.f32 %v4345, 1.0614054
  %v4378 = vmul.f32 %v4346, 1.0614054
  %v4379 = vmul.f32 %v4347, 1.0614054
  %v4380 = vmul.f32 %v4348, 1.0614054
  %v4381 = vmul.f32 %v4349, 1.0614054
  %v4382 = vmul.f32 %v4350, 1.0614054
  %v4383 = vmul.f32 %v4351, 1.0614054
  %v4384 = vmul.f32 %v4352, 1.0614054
  %v4385 = vmul.f32 %v4353, 1.0614054
  %v4386 = vmul.f32 %v4354, 1.0614054
  %v4387 = vmul.f32 %v4355, 1.0614054
  %v4388 = vmul.f32 %v4356, 1.0614054
  %v4389 = vmul.f32 %v4357, 1.0614054
  %v4390 = vmul.f32 %v4358, 1.0614054
  %v4391 = vmul.f32 %v4359, 1.0614054
  %v4392 = vmul.f32 %v4360, 1.0614054
  %v4393 = vmul.f32 %v4361, 1.0614054
  %v4394 = vmul.f32 %v4362, 1.0614054
  %v4395 = vmul.f32 %v4363, 1.0614054
  %v4396 = vmul.f32 %v4364, 1.0614054
  %v4397 = vmul.f32 %v4365, 1.0614054
  %v4398 = vmul.f32 %v4366, 1.0614054
  %v4399 = vmul.f32 %v4367, 1.0614054
  %v4400 = vmul.f32 %v4368, 1.0614054
  %v4401 = vadd.f32 %v4369, -1.4531521
  %v4402 = vadd.f32 %v4370, -1.4531521
  %v4403 = vadd.f32 %v4371, -1.4531521
  %v4404 = vadd.f32 %v4372, -1.4531521
  %v4405 = vadd.f32 %v4373, -1.4531521
  %v4406 = vadd.f32 %v4374, -1.4531521
  %v4407 = vadd.f32 %v4375, -1.4531521
  %v4408 = vadd.f32 %v4376, -1.4531521
  %v4409 = vadd.f32 %v4377, -1.4531521
  %v4410 = vadd.f32 %v4378, -1.4531521
  %v4411 = vadd.f32 %v4379, -1.4531521
  %v4412 = vadd.f32 %v4380, -1.4531521
  %v4413 = vadd.f32 %v4381, -1.4531521
  %v4414 = vadd.f32 %v4382, -1.4531521
  %v4415 = vadd.f32 %v4383, -1.4531521
  %v4416 = vadd.f32 %v4384, -1.4531521
  %v4417 = vadd.f32 %v4385, -1.4531521
  %v4418 = vadd.f32 %v4386, -1.4531521
  %v4419 = vadd.f32 %v4387, -1.4531521
  %v4420 = vadd.f32 %v4388, -1.4531521
  %v4421 = vadd.f32 %v4389, -1.4531521
  %v4422 = vadd.f32 %v4390, -1.4531521
  %v4423 = vadd.f32 %v4391, -1.4531521
  %v4424 = vadd.f32 %v4392, -1.4531521
  %v4425 = vadd.f32 %v4393, -1.4531521
  %v4426 = vadd.f32 %v4394, -1.4531521
  %v4427 = vadd.f32 %v4395, -1.4531521
  %v4428 = vadd.f32 %v4396, -1.4531521
  %v4429 = vadd.f32 %v4397, -1.4531521
  %v4430 = vadd.f32 %v4398, -1.4531521
  %v4431 = vadd.f32 %v4399, -1.4531521
  %v4432 = vadd.f32 %v4400, -1.4531521
  %v4433 = vmul.f32 %v4401, %v4337
  %v4434 = vmul.f32 %v4402, %v4338
  %v4435 = vmul.f32 %v4403, %v4339
  %v4436 = vmul.f32 %v4404, %v4340
  %v4437 = vmul.f32 %v4405, %v4341
  %v4438 = vmul.f32 %v4406, %v4342
  %v4439 = vmul.f32 %v4407, %v4343
  %v4440 = vmul.f32 %v4408, %v4344
  %v4441 = vmul.f32 %v4409, %v4345
  %v4442 = vmul.f32 %v4410, %v4346
  %v4443 = vmul.f32 %v4411, %v4347
  %v4444 = vmul.f32 %v4412, %v4348
  %v4445 = vmul.f32 %v4413, %v4349
  %v4446 = vmul.f32 %v4414, %v4350
  %v4447 = vmul.f32 %v4415, %v4351
  %v4448 = vmul.f32 %v4416, %v4352
  %v4449 = vmul.f32 %v4417, %v4353
  %v4450 = vmul.f32 %v4418, %v4354
  %v4451 = vmul.f32 %v4419, %v4355
  %v4452 = vmul.f32 %v4420, %v4356
  %v4453 = vmul.f32 %v4421, %v4357
  %v4454 = vmul.f32 %v4422, %v4358
  %v4455 = vmul.f32 %v4423, %v4359
  %v4456 = vmul.f32 %v4424, %v4360
  %v4457 = vmul.f32 %v4425, %v4361
  %v4458 = vmul.f32 %v4426, %v4362
  %v4459 = vmul.f32 %v4427, %v4363
  %v4460 = vmul.f32 %v4428, %v4364
  %v4461 = vmul.f32 %v4429, %v4365
  %v4462 = vmul.f32 %v4430, %v4366
  %v4463 = vmul.f32 %v4431, %v4367
  %v4464 = vmul.f32 %v4432, %v4368
  %v4465 = vadd.f32 %v4433, 1.4214138
  %v4466 = vadd.f32 %v4434, 1.4214138
  %v4467 = vadd.f32 %v4435, 1.4214138
  %v4468 = vadd.f32 %v4436, 1.4214138
  %v4469 = vadd.f32 %v4437, 1.4214138
  %v4470 = vadd.f32 %v4438, 1.4214138
  %v4471 = vadd.f32 %v4439, 1.4214138
  %v4472 = vadd.f32 %v4440, 1.4214138
  %v4473 = vadd.f32 %v4441, 1.4214138
  %v4474 = vadd.f32 %v4442, 1.4214138
  %v4475 = vadd.f32 %v4443, 1.4214138
  %v4476 = vadd.f32 %v4444, 1.4214138
  %v4477 = vadd.f32 %v4445, 1.4214138
  %v4478 = vadd.f32 %v4446, 1.4214138
  %v4479 = vadd.f32 %v4447, 1.4214138
  %v4480 = vadd.f32 %v4448, 1.4214138
  %v4481 = vadd.f32 %v4449, 1.4214138
  %v4482 = vadd.f32 %v4450, 1.4214138
  %v4483 = vadd.f32 %v4451, 1.4214138
  %v4484 = vadd.f32 %v4452, 1.4214138
  %v4485 = vadd.f32 %v4453, 1.4214138
  %v4486 = vadd.f32 %v4454, 1.4214138
  %v4487 = vadd.f32 %v4455, 1.4214138
  %v4488 = vadd.f32 %v4456, 1.4214138
  %v4489 = vadd.f32 %v4457, 1.4214138
  %v4490 = vadd.f32 %v4458, 1.4214138
  %v4491 = vadd.f32 %v4459, 1.4214138
  %v4492 = vadd.f32 %v4460, 1.4214138
  %v4493 = vadd.f32 %v4461, 1.4214138
  %v4494 = vadd.f32 %v4462, 1.4214138
  %v4495 = vadd.f32 %v4463, 1.4214138
  %v4496 = vadd.f32 %v4464, 1.4214138
  %v4497 = vmul.f32 %v4465, %v4337
  %v4498 = vmul.f32 %v4466, %v4338
  %v4499 = vmul.f32 %v4467, %v4339
  %v4500 = vmul.f32 %v4468, %v4340
  %v4501 = vmul.f32 %v4469, %v4341
  %v4502 = vmul.f32 %v4470, %v4342
  %v4503 = vmul.f32 %v4471, %v4343
  %v4504 = vmul.f32 %v4472, %v4344
  %v4505 = vmul.f32 %v4473, %v4345
  %v4506 = vmul.f32 %v4474, %v4346
  %v4507 = vmul.f32 %v4475, %v4347
  %v4508 = vmul.f32 %v4476, %v4348
  %v4509 = vmul.f32 %v4477, %v4349
  %v4510 = vmul.f32 %v4478, %v4350
  %v4511 = vmul.f32 %v4479, %v4351
  %v4512 = vmul.f32 %v4480, %v4352
  %v4513 = vmul.f32 %v4481, %v4353
  %v4514 = vmul.f32 %v4482, %v4354
  %v4515 = vmul.f32 %v4483, %v4355
  %v4516 = vmul.f32 %v4484, %v4356
  %v4517 = vmul.f32 %v4485, %v4357
  %v4518 = vmul.f32 %v4486, %v4358
  %v4519 = vmul.f32 %v4487, %v4359
  %v4520 = vmul.f32 %v4488, %v4360
  %v4521 = vmul.f32 %v4489, %v4361
  %v4522 = vmul.f32 %v4490, %v4362
  %v4523 = vmul.f32 %v4491, %v4363
  %v4524 = vmul.f32 %v4492, %v4364
  %v4525 = vmul.f32 %v4493, %v4365
  %v4526 = vmul.f32 %v4494, %v4366
  %v4527 = vmul.f32 %v4495, %v4367
  %v4528 = vmul.f32 %v4496, %v4368
  %v4529 = vadd.f32 %v4497, -0.28449672
  %v4530 = vadd.f32 %v4498, -0.28449672
  %v4531 = vadd.f32 %v4499, -0.28449672
  %v4532 = vadd.f32 %v4500, -0.28449672
  %v4533 = vadd.f32 %v4501, -0.28449672
  %v4534 = vadd.f32 %v4502, -0.28449672
  %v4535 = vadd.f32 %v4503, -0.28449672
  %v4536 = vadd.f32 %v4504, -0.28449672
  %v4537 = vadd.f32 %v4505, -0.28449672
  %v4538 = vadd.f32 %v4506, -0.28449672
  %v4539 = vadd.f32 %v4507, -0.28449672
  %v4540 = vadd.f32 %v4508, -0.28449672
  %v4541 = vadd.f32 %v4509, -0.28449672
  %v4542 = vadd.f32 %v4510, -0.28449672
  %v4543 = vadd.f32 %v4511, -0.28449672
  %v4544 = vadd.f32 %v4512, -0.28449672
  %v4545 = vadd.f32 %v4513, -0.28449672
  %v4546 = vadd.f32 %v4514, -0.28449672
  %v4547 = vadd.f32 %v4515, -0.28449672
  %v4548 = vadd.f32 %v4516, -0.28449672
  %v4549 = vadd.f32 %v4517, -0.28449672
  %v4550 = vadd.f32 %v4518, -0.28449672
  %v4551 = vadd.f32 %v4519, -0.28449672
  %v4552 = vadd.f32 %v4520, -0.28449672
  %v4553 = vadd.f32 %v4521, -0.28449672
  %v4554 = vadd.f32 %v4522, -0.28449672
  %v4555 = vadd.f32 %v4523, -0.28449672
  %v4556 = vadd.f32 %v4524, -0.28449672
  %v4557 = vadd.f32 %v4525, -0.28449672
  %v4558 = vadd.f32 %v4526, -0.28449672
  %v4559 = vadd.f32 %v4527, -0.28449672
  %v4560 = vadd.f32 %v4528, -0.28449672
  %v4561 = vmul.f32 %v4529, %v4337
  %v4562 = vmul.f32 %v4530, %v4338
  %v4563 = vmul.f32 %v4531, %v4339
  %v4564 = vmul.f32 %v4532, %v4340
  %v4565 = vmul.f32 %v4533, %v4341
  %v4566 = vmul.f32 %v4534, %v4342
  %v4567 = vmul.f32 %v4535, %v4343
  %v4568 = vmul.f32 %v4536, %v4344
  %v4569 = vmul.f32 %v4537, %v4345
  %v4570 = vmul.f32 %v4538, %v4346
  %v4571 = vmul.f32 %v4539, %v4347
  %v4572 = vmul.f32 %v4540, %v4348
  %v4573 = vmul.f32 %v4541, %v4349
  %v4574 = vmul.f32 %v4542, %v4350
  %v4575 = vmul.f32 %v4543, %v4351
  %v4576 = vmul.f32 %v4544, %v4352
  %v4577 = vmul.f32 %v4545, %v4353
  %v4578 = vmul.f32 %v4546, %v4354
  %v4579 = vmul.f32 %v4547, %v4355
  %v4580 = vmul.f32 %v4548, %v4356
  %v4581 = vmul.f32 %v4549, %v4357
  %v4582 = vmul.f32 %v4550, %v4358
  %v4583 = vmul.f32 %v4551, %v4359
  %v4584 = vmul.f32 %v4552, %v4360
  %v4585 = vmul.f32 %v4553, %v4361
  %v4586 = vmul.f32 %v4554, %v4362
  %v4587 = vmul.f32 %v4555, %v4363
  %v4588 = vmul.f32 %v4556, %v4364
  %v4589 = vmul.f32 %v4557, %v4365
  %v4590 = vmul.f32 %v4558, %v4366
  %v4591 = vmul.f32 %v4559, %v4367
  %v4592 = vmul.f32 %v4560, %v4368
  %v4593 = vadd.f32 %v4561, 0.2548296
  %v4594 = vadd.f32 %v4562, 0.2548296
  %v4595 = vadd.f32 %v4563, 0.2548296
  %v4596 = vadd.f32 %v4564, 0.2548296
  %v4597 = vadd.f32 %v4565, 0.2548296
  %v4598 = vadd.f32 %v4566, 0.2548296
  %v4599 = vadd.f32 %v4567, 0.2548296
  %v4600 = vadd.f32 %v4568, 0.2548296
  %v4601 = vadd.f32 %v4569, 0.2548296
  %v4602 = vadd.f32 %v4570, 0.2548296
  %v4603 = vadd.f32 %v4571, 0.2548296
  %v4604 = vadd.f32 %v4572, 0.2548296
  %v4605 = vadd.f32 %v4573, 0.2548296
  %v4606 = vadd.f32 %v4574, 0.2548296
  %v4607 = vadd.f32 %v4575, 0.2548296
  %v4608 = vadd.f32 %v4576, 0.2548296
  %v4609 = vadd.f32 %v4577, 0.2548296
  %v4610 = vadd.f32 %v4578, 0.2548296
  %v4611 = vadd.f32 %v4579, 0.2548296
  %v4612 = vadd.f32 %v4580, 0.2548296
  %v4613 = vadd.f32 %v4581, 0.2548296
  %v4614 = vadd.f32 %v4582, 0.2548296
  %v4615 = vadd.f32 %v4583, 0.2548296
  %v4616 = vadd.f32 %v4584, 0.2548296
  %v4617 = vadd.f32 %v4585, 0.2548296
  %v4618 = vadd.f32 %v4586, 0.2548296
  %v4619 = vadd.f32 %v4587, 0.2548296
  %v4620 = vadd.f32 %v4588, 0.2548296
  %v4621 = vadd.f32 %v4589, 0.2548296
  %v4622 = vadd.f32 %v4590, 0.2548296
  %v4623 = vadd.f32 %v4591, 0.2548296
  %v4624 = vadd.f32 %v4592, 0.2548296
  %v4625 = vmul.f32 %v4593, %v4337
  %v4626 = vmul.f32 %v4594, %v4338
  %v4627 = vmul.f32 %v4595, %v4339
  %v4628 = vmul.f32 %v4596, %v4340
  %v4629 = vmul.f32 %v4597, %v4341
  %v4630 = vmul.f32 %v4598, %v4342
  %v4631 = vmul.f32 %v4599, %v4343
  %v4632 = vmul.f32 %v4600, %v4344
  %v4633 = vmul.f32 %v4601, %v4345
  %v4634 = vmul.f32 %v4602, %v4346
  %v4635 = vmul.f32 %v4603, %v4347
  %v4636 = vmul.f32 %v4604, %v4348
  %v4637 = vmul.f32 %v4605, %v4349
  %v4638 = vmul.f32 %v4606, %v4350
  %v4639 = vmul.f32 %v4607, %v4351
  %v4640 = vmul.f32 %v4608, %v4352
  %v4641 = vmul.f32 %v4609, %v4353
  %v4642 = vmul.f32 %v4610, %v4354
  %v4643 = vmul.f32 %v4611, %v4355
  %v4644 = vmul.f32 %v4612, %v4356
  %v4645 = vmul.f32 %v4613, %v4357
  %v4646 = vmul.f32 %v4614, %v4358
  %v4647 = vmul.f32 %v4615, %v4359
  %v4648 = vmul.f32 %v4616, %v4360
  %v4649 = vmul.f32 %v4617, %v4361
  %v4650 = vmul.f32 %v4618, %v4362
  %v4651 = vmul.f32 %v4619, %v4363
  %v4652 = vmul.f32 %v4620, %v4364
  %v4653 = vmul.f32 %v4621, %v4365
  %v4654 = vmul.f32 %v4622, %v4366
  %v4655 = vmul.f32 %v4623, %v4367
  %v4656 = vmul.f32 %v4624, %v4368
  %v4657 = vsub.f32 0.0, %v4241
  %v4658 = vsub.f32 0.0, %v4242
  %v4659 = vsub.f32 0.0, %v4243
  %v4660 = vsub.f32 0.0, %v4244
  %v4661 = vsub.f32 0.0, %v4245
  %v4662 = vsub.f32 0.0, %v4246
  %v4663 = vsub.f32 0.0, %v4247
  %v4664 = vsub.f32 0.0, %v4248
  %v4665 = vsub.f32 0.0, %v4249
  %v4666 = vsub.f32 0.0, %v4250
  %v4667 = vsub.f32 0.0, %v4251
  %v4668 = vsub.f32 0.0, %v4252
  %v4669 = vsub.f32 0.0, %v4253
  %v4670 = vsub.f32 0.0, %v4254
  %v4671 = vsub.f32 0.0, %v4255
  %v4672 = vsub.f32 0.0, %v4256
  %v4673 = vsub.f32 0.0, %v4257
  %v4674 = vsub.f32 0.0, %v4258
  %v4675 = vsub.f32 0.0, %v4259
  %v4676 = vsub.f32 0.0, %v4260
  %v4677 = vsub.f32 0.0, %v4261
  %v4678 = vsub.f32 0.0, %v4262
  %v4679 = vsub.f32 0.0, %v4263
  %v4680 = vsub.f32 0.0, %v4264
  %v4681 = vsub.f32 0.0, %v4265
  %v4682 = vsub.f32 0.0, %v4266
  %v4683 = vsub.f32 0.0, %v4267
  %v4684 = vsub.f32 0.0, %v4268
  %v4685 = vsub.f32 0.0, %v4269
  %v4686 = vsub.f32 0.0, %v4270
  %v4687 = vsub.f32 0.0, %v4271
  %v4688 = vsub.f32 0.0, %v4272
  %v4689 = vmul.f32 %v4657, %v4241
  %v4690 = vmul.f32 %v4658, %v4242
  %v4691 = vmul.f32 %v4659, %v4243
  %v4692 = vmul.f32 %v4660, %v4244
  %v4693 = vmul.f32 %v4661, %v4245
  %v4694 = vmul.f32 %v4662, %v4246
  %v4695 = vmul.f32 %v4663, %v4247
  %v4696 = vmul.f32 %v4664, %v4248
  %v4697 = vmul.f32 %v4665, %v4249
  %v4698 = vmul.f32 %v4666, %v4250
  %v4699 = vmul.f32 %v4667, %v4251
  %v4700 = vmul.f32 %v4668, %v4252
  %v4701 = vmul.f32 %v4669, %v4253
  %v4702 = vmul.f32 %v4670, %v4254
  %v4703 = vmul.f32 %v4671, %v4255
  %v4704 = vmul.f32 %v4672, %v4256
  %v4705 = vmul.f32 %v4673, %v4257
  %v4706 = vmul.f32 %v4674, %v4258
  %v4707 = vmul.f32 %v4675, %v4259
  %v4708 = vmul.f32 %v4676, %v4260
  %v4709 = vmul.f32 %v4677, %v4261
  %v4710 = vmul.f32 %v4678, %v4262
  %v4711 = vmul.f32 %v4679, %v4263
  %v4712 = vmul.f32 %v4680, %v4264
  %v4713 = vmul.f32 %v4681, %v4265
  %v4714 = vmul.f32 %v4682, %v4266
  %v4715 = vmul.f32 %v4683, %v4267
  %v4716 = vmul.f32 %v4684, %v4268
  %v4717 = vmul.f32 %v4685, %v4269
  %v4718 = vmul.f32 %v4686, %v4270
  %v4719 = vmul.f32 %v4687, %v4271
  %v4720 = vmul.f32 %v4688, %v4272
  %v4721 = vmul.f32 %v4689, 1.442695
  %v4722 = vpow.pop %v4721
  %v4723 = vmul.f32 %v4690, 1.442695
  %v4724 = vpow.pop %v4723
  %v4725 = vmul.f32 %v4691, 1.442695
  %v4726 = vpow.pop %v4725
  %v4727 = vmul.f32 %v4692, 1.442695
  %v4728 = vpow.pop %v4727
  %v4729 = vmul.f32 %v4693, 1.442695
  %v4730 = vpow.pop %v4729
  %v4731 = vmul.f32 %v4694, 1.442695
  %v4732 = vpow.pop %v4731
  %v4733 = vmul.f32 %v4695, 1.442695
  %v4734 = vpow.pop %v4733
  %v4735 = vmul.f32 %v4696, 1.442695
  %v4736 = vpow.pop %v4735
  %v4737 = vmul.f32 %v4697, 1.442695
  %v4738 = vpow.pop %v4737
  %v4739 = vmul.f32 %v4698, 1.442695
  %v4740 = vpow.pop %v4739
  %v4741 = vmul.f32 %v4699, 1.442695
  %v4742 = vpow.pop %v4741
  %v4743 = vmul.f32 %v4700, 1.442695
  %v4744 = vpow.pop %v4743
  %v4745 = vmul.f32 %v4701, 1.442695
  %v4746 = vpow.pop %v4745
  %v4747 = vmul.f32 %v4702, 1.442695
  %v4748 = vpow.pop %v4747
  %v4749 = vmul.f32 %v4703, 1.442695
  %v4750 = vpow.pop %v4749
  %v4751 = vmul.f32 %v4704, 1.442695
  %v4752 = vpow.pop %v4751
  %v4753 = vmul.f32 %v4705, 1.442695
  %v4754 = vpow.pop %v4753
  %v4755 = vmul.f32 %v4706, 1.442695
  %v4756 = vpow.pop %v4755
  %v4757 = vmul.f32 %v4707, 1.442695
  %v4758 = vpow.pop %v4757
  %v4759 = vmul.f32 %v4708, 1.442695
  %v4760 = vpow.pop %v4759
  %v4761 = vmul.f32 %v4709, 1.442695
  %v4762 = vpow.pop %v4761
  %v4763 = vmul.f32 %v4710, 1.442695
  %v4764 = vpow.pop %v4763
  %v4765 = vmul.f32 %v4711, 1.442695
  %v4766 = vpow.pop %v4765
  %v4767 = vmul.f32 %v4712, 1.442695
  %v4768 = vpow.pop %v4767
  %v4769 = vmul.f32 %v4713, 1.442695
  %v4770 = vpow.pop %v4769
  %v4771 = vmul.f32 %v4714, 1.442695
  %v4772 = vpow.pop %v4771
  %v4773 = vmul.f32 %v4715, 1.442695
  %v4774 = vpow.pop %v4773
  %v4775 = vmul.f32 %v4716, 1.442695
  %v4776 = vpow.pop %v4775
  %v4777 = vmul.f32 %v4717, 1.442695
  %v4778 = vpow.pop %v4777
  %v4779 = vmul.f32 %v4718, 1.442695
  %v4780 = vpow.pop %v4779
  %v4781 = vmul.f32 %v4719, 1.442695
  %v4782 = vpow.pop %v4781
  %v4783 = vmul.f32 %v4720, 1.442695
  %v4784 = vpow.pop %v4783
  %v4785 = vmul.f32 %v4625, %v4722
  %v4786 = vmul.f32 %v4626, %v4724
  %v4787 = vmul.f32 %v4627, %v4726
  %v4788 = vmul.f32 %v4628, %v4728
  %v4789 = vmul.f32 %v4629, %v4730
  %v4790 = vmul.f32 %v4630, %v4732
  %v4791 = vmul.f32 %v4631, %v4734
  %v4792 = vmul.f32 %v4632, %v4736
  %v4793 = vmul.f32 %v4633, %v4738
  %v4794 = vmul.f32 %v4634, %v4740
  %v4795 = vmul.f32 %v4635, %v4742
  %v4796 = vmul.f32 %v4636, %v4744
  %v4797 = vmul.f32 %v4637, %v4746
  %v4798 = vmul.f32 %v4638, %v4748
  %v4799 = vmul.f32 %v4639, %v4750
  %v4800 = vmul.f32 %v4640, %v4752
  %v4801 = vmul.f32 %v4641, %v4754
  %v4802 = vmul.f32 %v4642, %v4756
  %v4803 = vmul.f32 %v4643, %v4758
  %v4804 = vmul.f32 %v4644, %v4760
  %v4805 = vmul.f32 %v4645, %v4762
  %v4806 = vmul.f32 %v4646, %v4764
  %v4807 = vmul.f32 %v4647, %v4766
  %v4808 = vmul.f32 %v4648, %v4768
  %v4809 = vmul.f32 %v4649, %v4770
  %v4810 = vmul.f32 %v4650, %v4772
  %v4811 = vmul.f32 %v4651, %v4774
  %v4812 = vmul.f32 %v4652, %v4776
  %v4813 = vmul.f32 %v4653, %v4778
  %v4814 = vmul.f32 %v4654, %v4780
  %v4815 = vmul.f32 %v4655, %v4782
  %v4816 = vmul.f32 %v4656, %v4784
  %v4817 = vsub.f32 1.0, %v4785
  %v4818 = vsub.f32 1.0, %v4786
  %v4819 = vsub.f32 1.0, %v4787
  %v4820 = vsub.f32 1.0, %v4788
  %v4821 = vsub.f32 1.0, %v4789
  %v4822 = vsub.f32 1.0, %v4790
  %v4823 = vsub.f32 1.0, %v4791
  %v4824 = vsub.f32 1.0, %v4792
  %v4825 = vsub.f32 1.0, %v4793
  %v4826 = vsub.f32 1.0, %v4794
  %v4827 = vsub.f32 1.0, %v4795
  %v4828 = vsub.f32 1.0, %v4796
  %v4829 = vsub.f32 1.0, %v4797
  %v4830 = vsub.f32 1.0, %v4798
  %v4831 = vsub.f32 1.0, %v4799
  %v4832 = vsub.f32 1.0, %v4800
  %v4833 = vsub.f32 1.0, %v4801
  %v4834 = vsub.f32 1.0, %v4802
  %v4835 = vsub.f32 1.0, %v4803
  %v4836 = vsub.f32 1.0, %v4804
  %v4837 = vsub.f32 1.0, %v4805
  %v4838 = vsub.f32 1.0, %v4806
  %v4839 = vsub.f32 1.0, %v4807
  %v4840 = vsub.f32 1.0, %v4808
  %v4841 = vsub.f32 1.0, %v4809
  %v4842 = vsub.f32 1.0, %v4810
  %v4843 = vsub.f32 1.0, %v4811
  %v4844 = vsub.f32 1.0, %v4812
  %v4845 = vsub.f32 1.0, %v4813
  %v4846 = vsub.f32 1.0, %v4814
  %v4847 = vsub.f32 1.0, %v4815
  %v4848 = vsub.f32 1.0, %v4816
  %vm4849 = vcmp.lt.f32.partialorder %v4209, 0.0
  %vm4850 = vcmp.lt.f32.partialorder %v4210, 0.0
  %vm4851 = vcmp.lt.f32.partialorder %v4211, 0.0
  %vm4852 = vcmp.lt.f32.partialorder %v4212, 0.0
  %vm4853 = vcmp.lt.f32.partialorder %v4213, 0.0
  %vm4854 = vcmp.lt.f32.partialorder %v4214, 0.0
  %vm4855 = vcmp.lt.f32.partialorder %v4215, 0.0
  %vm4856 = vcmp.lt.f32.partialorder %v4216, 0.0
  %vm4857 = vcmp.lt.f32.partialorder %v4217, 0.0
  %vm4858 = vcmp.lt.f32.partialorder %v4218, 0.0
  %vm4859 = vcmp.lt.f32.partialorder %v4219, 0.0
  %vm4860 = vcmp.lt.f32.partialorder %v4220, 0.0
  %vm4861 = vcmp.lt.f32.partialorder %v4221, 0.0
  %vm4862 = vcmp.lt.f32.partialorder %v4222, 0.0
  %vm4863 = vcmp.lt.f32.partialorder %v4223, 0.0
  %vm4864 = vcmp.lt.f32.partialorder %v4224, 0.0
  %vm4865 = vcmp.lt.f32.partialorder %v4225, 0.0
  %vm4866 = vcmp.lt.f32.partialorder %v4226, 0.0
  %vm4867 = vcmp.lt.f32.partialorder %v4227, 0.0
  %vm4868 = vcmp.lt.f32.partialorder %v4228, 0.0
  %vm4869 = vcmp.lt.f32.partialorder %v4229, 0.0
  %vm4870 = vcmp.lt.f32.partialorder %v4230, 0.0
  %vm4871 = vcmp.lt.f32.partialorder %v4231, 0.0
  %vm4872 = vcmp.lt.f32.partialorder %v4232, 0.0
  %vm4873 = vcmp.lt.f32.partialorder %v4233, 0.0
  %vm4874 = vcmp.lt.f32.partialorder %v4234, 0.0
  %vm4875 = vcmp.lt.f32.partialorder %v4235, 0.0
  %vm4876 = vcmp.lt.f32.partialorder %v4236, 0.0
  %vm4877 = vcmp.lt.f32.partialorder %v4237, 0.0
  %vm4878 = vcmp.lt.f32.partialorder %v4238, 0.0
  %vm4879 = vcmp.lt.f32.partialorder %v4239, 0.0
  %vm4880 = vcmp.lt.f32.partialorder %v4240, 0.0
  %v4881 = vsub.f32 0.0, %v4817
  %v4882 = vsub.f32 0.0, %v4818
  %v4883 = vsub.f32 0.0, %v4819
  %v4884 = vsub.f32 0.0, %v4820
  %v4885 = vsub.f32 0.0, %v4821
  %v4886 = vsub.f32 0.0, %v4822
  %v4887 = vsub.f32 0.0, %v4823
  %v4888 = vsub.f32 0.0, %v4824
  %v4889 = vsub.f32 0.0, %v4825
  %v4890 = vsub.f32 0.0, %v4826
  %v4891 = vsub.f32 0.0, %v4827
  %v4892 = vsub.f32 0.0, %v4828
  %v4893 = vsub.f32 0.0, %v4829
  %v4894 = vsub.f32 0.0, %v4830
  %v4895 = vsub.f32 0.0, %v4831
  %v4896 = vsub.f32 0.0, %v4832
  %v4897 = vsub.f32 0.0, %v4833
  %v4898 = vsub.f32 0.0, %v4834
  %v4899 = vsub.f32 0.0, %v4835
  %v4900 = vsub.f32 0.0, %v4836
  %v4901 = vsub.f32 0.0, %v4837
  %v4902 = vsub.f32 0.0, %v4838
  %v4903 = vsub.f32 0.0, %v4839
  %v4904 = vsub.f32 0.0, %v4840
  %v4905 = vsub.f32 0.0, %v4841
  %v4906 = vsub.f32 0.0, %v4842
  %v4907 = vsub.f32 0.0, %v4843
  %v4908 = vsub.f32 0.0, %v4844
  %v4909 = vsub.f32 0.0, %v4845
  %v4910 = vsub.f32 0.0, %v4846
  %v4911 = vsub.f32 0.0, %v4847
  %v4912 = vsub.f32 0.0, %v4848
  %v4913 = vsel %vm4849, %v4881, %v4817
  %v4914 = vsel %vm4850, %v4882, %v4818
  %v4915 = vsel %vm4851, %v4883, %v4819
  %v4916 = vsel %vm4852, %v4884, %v4820
  %v4917 = vsel %vm4853, %v4885, %v4821
  %v4918 = vsel %vm4854, %v4886, %v4822
  %v4919 = vsel %vm4855, %v4887, %v4823
  %v4920 = vsel %vm4856, %v4888, %v4824
  %v4921 = vsel %vm4857, %v4889, %v4825
  %v4922 = vsel %vm4858, %v4890, %v4826
  %v4923 = vsel %vm4859, %v4891, %v4827
  %v4924 = vsel %vm4860, %v4892, %v4828
  %v4925 = vsel %vm4861, %v4893, %v4829
  %v4926 = vsel %vm4862, %v4894, %v4830
  %v4927 = vsel %vm4863, %v4895, %v4831
  %v4928 = vsel %vm4864, %v4896, %v4832
  %v4929 = vsel %vm4865, %v4897, %v4833
  %v4930 = vsel %vm4866, %v4898, %v4834
  %v4931 = vsel %vm4867, %v4899, %v4835
  %v4932 = vsel %vm4868, %v4900, %v4836
  %v4933 = vsel %vm4869, %v4901, %v4837
  %v4934 = vsel %vm4870, %v4902, %v4838
  %v4935 = vsel %vm4871, %v4903, %v4839
  %v4936 = vsel %vm4872, %v4904, %v4840
  %v4937 = vsel %vm4873, %v4905, %v4841
  %v4938 = vsel %vm4874, %v4906, %v4842
  %v4939 = vsel %vm4875, %v4907, %v4843
  %v4940 = vsel %vm4876, %v4908, %v4844
  %v4941 = vsel %vm4877, %v4909, %v4845
  %v4942 = vsel %vm4878, %v4910, %v4846
  %v4943 = vsel %vm4879, %v4911, %v4847
  %v4944 = vsel %vm4880, %v4912, %v4848
  %v4945 = vadd.f32 %v4913, 1.0
  %v4946 = vadd.f32 %v4914, 1.0
  %v4947 = vadd.f32 %v4915, 1.0
  %v4948 = vadd.f32 %v4916, 1.0
  %v4949 = vadd.f32 %v4917, 1.0
  %v4950 = vadd.f32 %v4918, 1.0
  %v4951 = vadd.f32 %v4919, 1.0
  %v4952 = vadd.f32 %v4920, 1.0
  %v4953 = vadd.f32 %v4921, 1.0
  %v4954 = vadd.f32 %v4922, 1.0
  %v4955 = vadd.f32 %v4923, 1.0
  %v4956 = vadd.f32 %v4924, 1.0
  %v4957 = vadd.f32 %v4925, 1.0
  %v4958 = vadd.f32 %v4926, 1.0
  %v4959 = vadd.f32 %v4927, 1.0
  %v4960 = vadd.f32 %v4928, 1.0
  %v4961 = vadd.f32 %v4929, 1.0
  %v4962 = vadd.f32 %v4930, 1.0
  %v4963 = vadd.f32 %v4931, 1.0
  %v4964 = vadd.f32 %v4932, 1.0
  %v4965 = vadd.f32 %v4933, 1.0
  %v4966 = vadd.f32 %v4934, 1.0
  %v4967 = vadd.f32 %v4935, 1.0
  %v4968 = vadd.f32 %v4936, 1.0
  %v4969 = vadd.f32 %v4937, 1.0
  %v4970 = vadd.f32 %v4938, 1.0
  %v4971 = vadd.f32 %v4939, 1.0
  %v4972 = vadd.f32 %v4940, 1.0
  %v4973 = vadd.f32 %v4941, 1.0
  %v4974 = vadd.f32 %v4942, 1.0
  %v4975 = vadd.f32 %v4943, 1.0
  %v4976 = vadd.f32 %v4944, 1.0
  %v4977 = vmul.f32 %v4177, %v4945
  %v4978 = vmul.f32 %v4178, %v4946
  %v4979 = vmul.f32 %v4179, %v4947
  %v4980 = vmul.f32 %v4180, %v4948
  %v4981 = vmul.f32 %v4181, %v4949
  %v4982 = vmul.f32 %v4182, %v4950
  %v4983 = vmul.f32 %v4183, %v4951
  %v4984 = vmul.f32 %v4184, %v4952
  %v4985 = vmul.f32 %v4185, %v4953
  %v4986 = vmul.f32 %v4186, %v4954
  %v4987 = vmul.f32 %v4187, %v4955
  %v4988 = vmul.f32 %v4188, %v4956
  %v4989 = vmul.f32 %v4189, %v4957
  %v4990 = vmul.f32 %v4190, %v4958
  %v4991 = vmul.f32 %v4191, %v4959
  %v4992 = vmul.f32 %v4192, %v4960
  %v4993 = vmul.f32 %v4193, %v4961
  %v4994 = vmul.f32 %v4194, %v4962
  %v4995 = vmul.f32 %v4195, %v4963
  %v4996 = vmul.f32 %v4196, %v4964
  %v4997 = vmul.f32 %v4197, %v4965
  %v4998 = vmul.f32 %v4198, %v4966
  %v4999 = vmul.f32 %v4199, %v4967
  %v5000 = vmul.f32 %v4200, %v4968
  %v5001 = vmul.f32 %v4201, %v4969
  %v5002 = vmul.f32 %v4202, %v4970
  %v5003 = vmul.f32 %v4203, %v4971
  %v5004 = vmul.f32 %v4204, %v4972
  %v5005 = vmul.f32 %v4205, %v4973
  %v5006 = vmul.f32 %v4206, %v4974
  %v5007 = vmul.f32 %v4207, %v4975
  %v5008 = vmul.f32 %v4208, %v4976
  %v5009 = vld [vmem:[%s13] sm:$0xff]
  %v5010 = vld [vmem:[%s13 + $0x8] sm:$0xff]
  %v5011 = vld [vmem:[%s13 + $0x10] sm:$0xff]
  %v5012 = vld [vmem:[%s13 + $0x18] sm:$0xff]
  %v5013 = vld [vmem:[%s13 + $0x20] sm:$0xff]
  %v5014 = vld [vmem:[%s13 + $0x28] sm:$0xff]
  %v5015 = vld [vmem:[%s13 + $0x30] sm:$0xff]
  %v5016 = vld [vmem:[%s13 + $0x38] sm:$0xff]
  %v5017 = vld [vmem:[%s13 + $0x40] sm:$0xff]
  %v5018 = vld [vmem:[%s13 + $0x48] sm:$0xff]
  %v5019 = vld [vmem:[%s13 + $0x50] sm:$0xff]
  %v5020 = vld [vmem:[%s13 + $0x58] sm:$0xff]
  %v5021 = vld [vmem:[%s13 + $0x60] sm:$0xff]
  %v5022 = vld [vmem:[%s13 + $0x68] sm:$0xff]
  %v5023 = vld [vmem:[%s13 + $0x70] sm:$0xff]
  %v5024 = vld [vmem:[%s13 + $0x78] sm:$0xff]
  %v5025 = vld [vmem:[%s13 + $0x80] sm:$0xff]
  %v5026 = vld [vmem:[%s13 + $0x88] sm:$0xff]
  %v5027 = vld [vmem:[%s13 + $0x90] sm:$0xff]
  %v5028 = vld [vmem:[%s13 + $0x98] sm:$0xff]
  %v5029 = vld [vmem:[%s13 + $0xa0] sm:$0xff]
  %v5030 = vld [vmem:[%s13 + $0xa8] sm:$0xff]
  %v5031 = vld [vmem:[%s13 + $0xb0] sm:$0xff]
  %v5032 = vld [vmem:[%s13 + $0xb8] sm:$0xff]
  %v5033 = vld [vmem:[%s13 + $0xc0] sm:$0xff]
  %v5034 = vld [vmem:[%s13 + $0xc8] sm:$0xff]
  %v5035 = vld [vmem:[%s13 + $0xd0] sm:$0xff]
  %v5036 = vld [vmem:[%s13 + $0xd8] sm:$0xff]
  %v5037 = vld [vmem:[%s13 + $0xe0] sm:$0xff]
  %v5038 = vld [vmem:[%s13 + $0xe8] sm:$0xff]
  %v5039 = vld [vmem:[%s13 + $0xf0] sm:$0xff]
  %v5040 = vld [vmem:[%s13 + $0xf8] sm:$0xff]
  %v5041 = vld [vmem:[%s13 + $0x100] sm:$0xff]
  %v5042 = vld [vmem:[%s13 + $0x108] sm:$0xff]
  %v5043 = vld [vmem:[%s13 + $0x110] sm:$0xff]
  %v5044 = vld [vmem:[%s13 + $0x118] sm:$0xff]
  %v5045 = vld [vmem:[%s13 + $0x120] sm:$0xff]
  %v5046 = vld [vmem:[%s13 + $0x128] sm:$0xff]
  %v5047 = vld [vmem:[%s13 + $0x130] sm:$0xff]
  %v5048 = vld [vmem:[%s13 + $0x138] sm:$0xff]
  %v5049 = vld [vmem:[%s13 + $0x140] sm:$0xff]
  %v5050 = vld [vmem:[%s13 + $0x148] sm:$0xff]
  %v5051 = vld [vmem:[%s13 + $0x150] sm:$0xff]
  %v5052 = vld [vmem:[%s13 + $0x158] sm:$0xff]
  %v5053 = vld [vmem:[%s13 + $0x160] sm:$0xff]
  %v5054 = vld [vmem:[%s13 + $0x168] sm:$0xff]
  %v5055 = vld [vmem:[%s13 + $0x170] sm:$0xff]
  %v5056 = vld [vmem:[%s13 + $0x178] sm:$0xff]
  %v5057 = vld [vmem:[%s13 + $0x180] sm:$0xff]
  %v5058 = vld [vmem:[%s13 + $0x188] sm:$0xff]
  %v5059 = vld [vmem:[%s13 + $0x190] sm:$0xff]
  %v5060 = vld [vmem:[%s13 + $0x198] sm:$0xff]
  %v5061 = vld [vmem:[%s13 + $0x1a0] sm:$0xff]
  %v5062 = vld [vmem:[%s13 + $0x1a8] sm:$0xff]
  %v5063 = vld [vmem:[%s13 + $0x1b0] sm:$0xff]
  %v5064 = vld [vmem:[%s13 + $0x1b8] sm:$0xff]
  %v5065 = vld [vmem:[%s13 + $0x1c0] sm:$0xff]
  %v5066 = vld [vmem:[%s13 + $0x1c8] sm:$0xff]
  %v5067 = vld [vmem:[%s13 + $0x1d0] sm:$0xff]
  %v5068 = vld [vmem:[%s13 + $0x1d8] sm:$0xff]
  %v5069 = vld [vmem:[%s13 + $0x1e0] sm:$0xff]
  %v5070 = vld [vmem:[%s13 + $0x1e8] sm:$0xff]
  %v5071 = vld [vmem:[%s13 + $0x1f0] sm:$0xff]
  %v5072 = vld [vmem:[%s13 + $0x1f8] sm:$0xff]
  %v5073 = vld [vmem:[%s13 + $0x200] sm:$0xff]
  %v5074 = vld [vmem:[%s13 + $0x208] sm:$0xff]
  %v5075 = vld [vmem:[%s13 + $0x210] sm:$0xff]
  %v5076 = vld [vmem:[%s13 + $0x218] sm:$0xff]
  %v5077 = vld [vmem:[%s13 + $0x220] sm:$0xff]
  %v5078 = vld [vmem:[%s13 + $0x228] sm:$0xff]
  %v5079 = vld [vmem:[%s13 + $0x230] sm:$0xff]
  %v5080 = vld [vmem:[%s13 + $0x238] sm:$0xff]
  %v5081 = vld [vmem:[%s13 + $0x240] sm:$0xff]
  %v5082 = vld [vmem:[%s13 + $0x248] sm:$0xff]
  %v5083 = vld [vmem:[%s13 + $0x250] sm:$0xff]
  %v5084 = vld [vmem:[%s13 + $0x258] sm:$0xff]
  %v5085 = vld [vmem:[%s13 + $0x260] sm:$0xff]
  %v5086 = vld [vmem:[%s13 + $0x268] sm:$0xff]
  %v5087 = vld [vmem:[%s13 + $0x270] sm:$0xff]
  %v5088 = vld [vmem:[%s13 + $0x278] sm:$0xff]
  %v5089 = vld [vmem:[%s13 + $0x280] sm:$0xff]
  %v5090 = vld [vmem:[%s13 + $0x288] sm:$0xff]
  %v5091 = vld [vmem:[%s13 + $0x290] sm:$0xff]
  %v5092 = vld [vmem:[%s13 + $0x298] sm:$0xff]
  %v5093 = vld [vmem:[%s13 + $0x2a0] sm:$0xff]
  %v5094 = vld [vmem:[%s13 + $0x2a8] sm:$0xff]
  %v5095 = vld [vmem:[%s13 + $0x2b0] sm:$0xff]
  %v5096 = vld [vmem:[%s13 + $0x2b8] sm:$0xff]
  %v5097 = vld [vmem:[%s13 + $0x2c0] sm:$0xff]
  %v5098 = vld [vmem:[%s13 + $0x2c8] sm:$0xff]
  %v5099 = vld [vmem:[%s13 + $0x2d0] sm:$0xff]
  %v5100 = vld [vmem:[%s13 + $0x2d8] sm:$0xff]
  %v5101 = vld [vmem:[%s13 + $0x2e0] sm:$0xff]
  %v5102 = vld [vmem:[%s13 + $0x2e8] sm:$0xff]
  %v5103 = vld [vmem:[%s13 + $0x2f0] sm:$0xff]
  %v5104 = vld [vmem:[%s13 + $0x2f8] sm:$0xff]
  %v5105 = vld [vmem:[%s13 + $0x300] sm:$0xff]
  %v5106 = vld [vmem:[%s13 + $0x308] sm:$0xff]
  %v5107 = vld [vmem:[%s13 + $0x310] sm:$0xff]
  %v5108 = vld [vmem:[%s13 + $0x318] sm:$0xff]
  %v5109 = vld [vmem:[%s13 + $0x320] sm:$0xff]
  %v5110 = vld [vmem:[%s13 + $0x328] sm:$0xff]
  %v5111 = vld [vmem:[%s13 + $0x330] sm:$0xff]
  %v5112 = vld [vmem:[%s13 + $0x338] sm:$0xff]
  %v5113 = vld [vmem:[%s13 + $0x340] sm:$0xff]
  %v5114 = vld [vmem:[%s13 + $0x348] sm:$0xff]
  %v5115 = vld [vmem:[%s13 + $0x350] sm:$0xff]
  %v5116 = vld [vmem:[%s13 + $0x358] sm:$0xff]
  %v5117 = vld [vmem:[%s13 + $0x360] sm:$0xff]
  %v5118 = vld [vmem:[%s13 + $0x368] sm:$0xff]
  %v5119 = vld [vmem:[%s13 + $0x370] sm:$0xff]
  %v5120 = vld [vmem:[%s13 + $0x378] sm:$0xff]
  %v5121 = vld [vmem:[%s13 + $0x380] sm:$0xff]
  %v5122 = vld [vmem:[%s13 + $0x388] sm:$0xff]
  %v5123 = vld [vmem:[%s13 + $0x390] sm:$0xff]
  %v5124 = vld [vmem:[%s13 + $0x398] sm:$0xff]
  %v5125 = vld [vmem:[%s13 + $0x3a0] sm:$0xff]
  %v5126 = vld [vmem:[%s13 + $0x3a8] sm:$0xff]
  %v5127 = vld [vmem:[%s13 + $0x3b0] sm:$0xff]
  %v5128 = vld [vmem:[%s13 + $0x3b8] sm:$0xff]
  %v5129 = vld [vmem:[%s13 + $0x3c0] sm:$0xff]
  %v5130 = vld [vmem:[%s13 + $0x3c8] sm:$0xff]
  %v5131 = vld [vmem:[%s13 + $0x3d0] sm:$0xff]
  %v5132 = vld [vmem:[%s13 + $0x3d8] sm:$0xff]
  %v5133 = vld [vmem:[%s13 + $0x3e0] sm:$0xff]
  %v5134 = vld [vmem:[%s13 + $0x3e8] sm:$0xff]
  %v5135 = vld [vmem:[%s13 + $0x3f0] sm:$0xff]
  %v5136 = vld [vmem:[%s13 + $0x3f8] sm:$0xff]
  %v5137 = vld [vmem:[%s14] sm:$0x1]
  %v5139 = vlaneseq
  %v5140 = vshrl.u32 %v5139, 7
  %v5141 = vsub.s32 0, %v5140
  %v5142 = vrot.slane %v5137, %v5141
  %5144 = vmatprep.subr.mxu0 0.0
  %5145 = vmatpush1.msra.mxu0 %v5009
  %5146 = vmatprep.subr.mxu0 0.0
  %5147 = vmatpush1.msra.mxu0 %v5010
  %5148 = vmatprep.subr.mxu0 0.0
  %5149 = vmatpush1.msra.mxu0 %v5011
  %5150 = vmatprep.subr.mxu0 0.0
  %5151 = vmatpush1.msra.mxu0 %v5012
  %5152 = vmatprep.subr.mxu0 0.0
  %5153 = vmatpush1.msra.mxu0 %v5013
  %5154 = vmatprep.subr.mxu0 0.0
  %5155 = vmatpush1.msra.mxu0 %v5014
  %5156 = vmatprep.subr.mxu0 0.0
  %5157 = vmatpush1.msra.mxu0 %v5015
  %5158 = vmatprep.subr.mxu0 0.0
  %5159 = vmatpush1.msra.mxu0 %v5016
  %5160 = vmatprep.subr.mxu0 0.0
  %5161 = vmatpush1.msra.mxu0 %v5017
  %5162 = vmatprep.subr.mxu0 0.0
  %5163 = vmatpush1.msra.mxu0 %v5018
  %5164 = vmatprep.subr.mxu0 0.0
  %5165 = vmatpush1.msra.mxu0 %v5019
  %5166 = vmatprep.subr.mxu0 0.0
  %5167 = vmatpush1.msra.mxu0 %v5020
  %5168 = vmatprep.subr.mxu0 0.0
  %5169 = vmatpush1.msra.mxu0 %v5021
  %5170 = vmatprep.subr.mxu0 0.0
  %5171 = vmatpush1.msra.mxu0 %v5022
  %5172 = vmatprep.subr.mxu0 0.0
  %5173 = vmatpush1.msra.mxu0 %v5023
  %5174 = vmatprep.subr.mxu0 0.0
  %5175 = vmatpush1.msra.mxu0 %v5024
  %5176 = vmatprep.subr.mxu0 0.0
  %5177 = vmatpush1.msra.mxu0 %v5025
  %5178 = vmatprep.subr.mxu0 0.0
  %5179 = vmatpush1.msra.mxu0 %v5026
  %5180 = vmatprep.subr.mxu0 0.0
  %5181 = vmatpush1.msra.mxu0 %v5027
  %5182 = vmatprep.subr.mxu0 0.0
  %5183 = vmatpush1.msra.mxu0 %v5028
  %5184 = vmatprep.subr.mxu0 0.0
  %5185 = vmatpush1.msra.mxu0 %v5029
  %5186 = vmatprep.subr.mxu0 0.0
  %5187 = vmatpush1.msra.mxu0 %v5030
  %5188 = vmatprep.subr.mxu0 0.0
  %5189 = vmatpush1.msra.mxu0 %v5031
  %5190 = vmatprep.subr.mxu0 0.0
  %5191 = vmatpush1.msra.mxu0 %v5032
  %5192 = vmatprep.subr.mxu0 0.0
  %5193 = vmatpush1.msra.mxu0 %v5033
  %5194 = vmatprep.subr.mxu0 0.0
  %5195 = vmatpush1.msra.mxu0 %v5034
  %5196 = vmatprep.subr.mxu0 0.0
  %5197 = vmatpush1.msra.mxu0 %v5035
  %5198 = vmatprep.subr.mxu0 0.0
  %5199 = vmatpush1.msra.mxu0 %v5036
  %5200 = vmatprep.subr.mxu0 0.0
  %5201 = vmatpush1.msra.mxu0 %v5037
  %5202 = vmatprep.subr.mxu0 0.0
  %5203 = vmatpush1.msra.mxu0 %v5038
  %5204 = vmatprep.subr.mxu0 0.0
  %5205 = vmatpush1.msra.mxu0 %v5039
  %5206 = vmatprep.subr.mxu0 0.0
  %5207 = vmatpush1.msra.mxu0 %v5040
  %5208 = vmatprep.mubr.f32.mxu0 %v4978
  %5209 = vmatmul.mubr.f32.gmra.mrb[0].mxu0 %v4977
  %v5210 = vpop.f32.mrb[0].mxu0
  %v5211 = vadd.f32 %v5142, %v5210
  %v5212 = vpop.f32.mrb[0].mxu0
  %5213 = vmatprep.mubr.f32.mxu0 %v4986
  %5214 = vmatmul.mubr.f32.gmra.mrb[0].mxu0 %v4985
  %v5215 = vpop.f32.mrb[0].mxu0
  %v5216 = vadd.f32 %v5142, %v5215
  %v5217 = vpop.f32.mrb[0].mxu0
  %5218 = vmatprep.mubr.f32.mxu0 %v4994
  %5219 = vmatmul.mubr.f32.gmra.mrb[0].mxu0 %v4993
  %v5220 = vpop.f32.mrb[0].mxu0
  %v5221 = vadd.f32 %v5142, %v5220
  %v5222 = vpop.f32.mrb[0].mxu0
  %5223 = vmatprep.mubr.f32.mxu0 %v5002
  %5224 = vmatmul.mubr.f32.gmra.mrb[0].mxu0 %v5001
  %v5225 = vpop.f32.mrb[0].mxu0
  %v5226 = vadd.f32 %v5142, %v5225
  %v5227 = vpop.f32.mrb[0].mxu0
  %5228 = vdwg.mxu0
  %5229 = vmatprep.subr.mxu0 0.0
  %5230 = vmatpush1.msra.mxu0 %v5041
  %5231 = vmatprep.subr.mxu0 0.0
  %5232 = vmatpush1.msra.mxu0 %v5042
  %5233 = vmatprep.subr.mxu0 0.0
  %5234 = vmatpush1.msra.mxu0 %v5043
  %5235 = vmatprep.subr.mxu0 0.0
  %5236 = vmatpush1.msra.mxu0 %v5044
  %5237 = vmatprep.subr.mxu0 0.0
  %5238 = vmatpush1.msra.mxu0 %v5045
  %5239 = vmatprep.subr.mxu0 0.0
  %5240 = vmatpush1.msra.mxu0 %v5046
  %5241 = vmatprep.subr.mxu0 0.0
  %5242 = vmatpush1.msra.mxu0 %v5047
  %5243 = vmatprep.subr.mxu0 0.0
  %5244 = vmatpush1.msra.mxu0 %v5048
  %5245 = vmatprep.subr.mxu0 0.0
  %5246 = vmatpush1.msra.mxu0 %v5049
  %5247 = vmatprep.subr.mxu0 0.0
  %5248 = vmatpush1.msra.mxu0 %v5050
  %5249 = vmatprep.subr.mxu0 0.0
  %5250 = vmatpush1.msra.mxu0 %v5051
  %5251 = vmatprep.subr.mxu0 0.0
  %5252 = vmatpush1.msra.mxu0 %v5052
  %5253 = vmatprep.subr.mxu0 0.0
  %5254 = vmatpush1.msra.mxu0 %v5053
  %5255 = vmatprep.subr.mxu0 0.0
  %5256 = vmatpush1.msra.mxu0 %v5054
  %5257 = vmatprep.subr.mxu0 0.0
  %5258 = vmatpush1.msra.mxu0 %v5055
  %5259 = vmatprep.subr.mxu0 0.0
  %5260 = vmatpush1.msra.mxu0 %v5056
  %5261 = vmatprep.subr.mxu0 0.0
  %5262 = vmatpush1.msra.mxu0 %v5057
  %5263 = vmatprep.subr.mxu0 0.0
  %5264 = vmatpush1.msra.mxu0 %v5058
  %5265 = vmatprep.subr.mxu0 0.0
  %5266 = vmatpush1.msra.mxu0 %v5059
  %5267 = vmatprep.subr.mxu0 0.0
  %5268 = vmatpush1.msra.mxu0 %v5060
  %5269 = vmatprep.subr.mxu0 0.0
  %5270 = vmatpush1.msra.mxu0 %v5061
  %5271 = vmatprep.subr.mxu0 0.0
  %5272 = vmatpush1.msra.mxu0 %v5062
  %5273 = vmatprep.subr.mxu0 0.0
  %5274 = vmatpush1.msra.mxu0 %v5063
  %5275 = vmatprep.subr.mxu0 0.0
  %5276 = vmatpush1.msra.mxu0 %v5064
  %5277 = vmatprep.subr.mxu0 0.0
  %5278 = vmatpush1.msra.mxu0 %v5065
  %5279 = vmatprep.subr.mxu0 0.0
  %5280 = vmatpush1.msra.mxu0 %v5066
  %5281 = vmatprep.subr.mxu0 0.0
  %5282 = vmatpush1.msra.mxu0 %v5067
  %5283 = vmatprep.subr.mxu0 0.0
  %5284 = vmatpush1.msra.mxu0 %v5068
  %5285 = vmatprep.subr.mxu0 0.0
  %5286 = vmatpush1.msra.mxu0 %v5069
  %5287 = vmatprep.subr.mxu0 0.0
  %5288 = vmatpush1.msra.mxu0 %v5070
  %5289 = vmatprep.subr.mxu0 0.0
  %5290 = vmatpush1.msra.mxu0 %v5071
  %5291 = vmatprep.subr.mxu0 0.0
  %5292 = vmatpush1.msra.mxu0 %v5072
  %5293 = vmatprep.mubr.f32.mxu0 %v4980
  %5294 = vmatmul.mubr.f32.gmra.mrb[0].mxu0 %v4979
  %v5295 = vpop.f32.mrb[0].mxu0
  %v5296 = vadd.f32 %v5211, %v5295
  %v5297 = vpop.f32.mrb[0].mxu0
  %5298 = vmatprep.mubr.f32.mxu0 %v4988
  %5299 = vmatmul.mubr.f32.gmra.mrb[0].mxu0 %v4987
  %v5300 = vpop.f32.mrb[0].mxu0
  %v5301 = vadd.f32 %v5216, %v5300
  %v5302 = vpop.f32.mrb[0].mxu0
  %5303 = vmatprep.mubr.f32.mxu0 %v4996
  %5304 = vmatmul.mubr.f32.gmra.mrb[0].mxu0 %v4995
  %v5305 = vpop.f32.mrb[0].mxu0
  %v5306 = vadd.f32 %v5221, %v5305
  %v5307 = vpop.f32.mrb[0].mxu0
  %5308 = vmatprep.mubr.f32.mxu0 %v5004
  %5309 = vmatmul.mubr.f32.gmra.mrb[0].mxu0 %v5003
  %v5310 = vpop.f32.mrb[0].mxu0
  %v5311 = vadd.f32 %v5226, %v5310
  %v5312 = vpop.f32.mrb[0].mxu0
  %5313 = vdwg.mxu0
  %5314 = vmatprep.subr.mxu0 0.0
  %5315 = vmatpush1.msra.mxu0 %v5073
  %5316 = vmatprep.subr.mxu0 0.0
  %5317 = vmatpush1.msra.mxu0 %v5074
  %5318 = vmatprep.subr.mxu0 0.0
  %5319 = vmatpush1.msra.mxu0 %v5075
  %5320 = vmatprep.subr.mxu0 0.0
  %5321 = vmatpush1.msra.mxu0 %v5076
  %5322 = vmatprep.subr.mxu0 0.0
  %5323 = vmatpush1.msra.mxu0 %v5077
  %5324 = vmatprep.subr.mxu0 0.0
  %5325 = vmatpush1.msra.mxu0 %v5078
  %5326 = vmatprep.subr.mxu0 0.0
  %5327 = vmatpush1.msra.mxu0 %v5079
  %5328 = vmatprep.subr.mxu0 0.0
  %5329 = vmatpush1.msra.mxu0 %v5080
  %5330 = vmatprep.subr.mxu0 0.0
  %5331 = vmatpush1.msra.mxu0 %v5081
  %5332 = vmatprep.subr.mxu0 0.0
  %5333 = vmatpush1.msra.mxu0 %v5082
  %5334 = vmatprep.subr.mxu0 0.0
  %5335 = vmatpush1.msra.mxu0 %v5083
  %5336 = vmatprep.subr.mxu0 0.0
  %5337 = vmatpush1.msra.mxu0 %v5084
  %5338 = vmatprep.subr.mxu0 0.0
  %5339 = vmatpush1.msra.mxu0 %v5085
  %5340 = vmatprep.subr.mxu0 0.0
  %5341 = vmatpush1.msra.mxu0 %v5086
  %5342 = vmatprep.subr.mxu0 0.0
  %5343 = vmatpush1.msra.mxu0 %v5087
  %5344 = vmatprep.subr.mxu0 0.0
  %5345 = vmatpush1.msra.mxu0 %v5088
  %5346 = vmatprep.subr.mxu0 0.0
  %5347 = vmatpush1.msra.mxu0 %v5089
  %5348 = vmatprep.subr.mxu0 0.0
  %5349 = vmatpush1.msra.mxu0 %v5090
  %5350 = vmatprep.subr.mxu0 0.0
  %5351 = vmatpush1.msra.mxu0 %v5091
  %5352 = vmatprep.subr.mxu0 0.0
  %5353 = vmatpush1.msra.mxu0 %v5092
  %5354 = vmatprep.subr.mxu0 0.0
  %5355 = vmatpush1.msra.mxu0 %v5093
  %5356 = vmatprep.subr.mxu0 0.0
  %5357 = vmatpush1.msra.mxu0 %v5094
  %5358 = vmatprep.subr.mxu0 0.0
  %5359 = vmatpush1.msra.mxu0 %v5095
  %5360 = vmatprep.subr.mxu0 0.0
  %5361 = vmatpush1.msra.mxu0 %v5096
  %5362 = vmatprep.subr.mxu0 0.0
  %5363 = vmatpush1.msra.mxu0 %v5097
  %5364 = vmatprep.subr.mxu0 0.0
  %5365 = vmatpush1.msra.mxu0 %v5098
  %5366 = vmatprep.subr.mxu0 0.0
  %5367 = vmatpush1.msra.mxu0 %v5099
  %5368 = vmatprep.subr.mxu0 0.0
  %5369 = vmatpush1.msra.mxu0 %v5100
  %5370 = vmatprep.subr.mxu0 0.0
  %5371 = vmatpush1.msra.mxu0 %v5101
  %5372 = vmatprep.subr.mxu0 0.0
  %5373 = vmatpush1.msra.mxu0 %v5102
  %5374 = vmatprep.subr.mxu0 0.0
  %5375 = vmatpush1.msra.mxu0 %v5103
  %5376 = vmatprep.subr.mxu0 0.0
  %5377 = vmatpush1.msra.mxu0 %v5104
  %5378 = vmatprep.mubr.f32.mxu0 %v4982
  %5379 = vmatmul.mubr.f32.gmra.mrb[0].mxu0 %v4981
  %v5380 = vpop.f32.mrb[0].mxu0
  %v5381 = vadd.f32 %v5296, %v5380
  %v5382 = vpop.f32.mrb[0].mxu0
  %5383 = vmatprep.mubr.f32.mxu0 %v4990
  %5384 = vmatmul.mubr.f32.gmra.mrb[0].mxu0 %v4989
  %v5385 = vpop.f32.mrb[0].mxu0
  %v5386 = vadd.f32 %v5301, %v5385
  %v5387 = vpop.f32.mrb[0].mxu0
  %5388 = vmatprep.mubr.f32.mxu0 %v4998
  %5389 = vmatmul.mubr.f32.gmra.mrb[0].mxu0 %v4997
  %v5390 = vpop.f32.mrb[0].mxu0
  %v5391 = vadd.f32 %v5306, %v5390
  %v5392 = vpop.f32.mrb[0].mxu0
  %5393 = vmatprep.mubr.f32.mxu0 %v5006
  %5394 = vmatmul.mubr.f32.gmra.mrb[0].mxu0 %v5005
  %v5395 = vpop.f32.mrb[0].mxu0
  %v5396 = vadd.f32 %v5311, %v5395
  %v5397 = vpop.f32.mrb[0].mxu0
  %5398 = vdwg.mxu0
  %5399 = vmatprep.subr.mxu0 0.0
  %5400 = vmatpush1.msra.mxu0 %v5105
  %5401 = vmatprep.subr.mxu0 0.0
  %5402 = vmatpush1.msra.mxu0 %v5106
  %5403 = vmatprep.subr.mxu0 0.0
  %5404 = vmatpush1.msra.mxu0 %v5107
  %5405 = vmatprep.subr.mxu0 0.0
  %5406 = vmatpush1.msra.mxu0 %v5108
  %5407 = vmatprep.subr.mxu0 0.0
  %5408 = vmatpush1.msra.mxu0 %v5109
  %5409 = vmatprep.subr.mxu0 0.0
  %5410 = vmatpush1.msra.mxu0 %v5110
  %5411 = vmatprep.subr.mxu0 0.0
  %5412 = vmatpush1.msra.mxu0 %v5111
  %5413 = vmatprep.subr.mxu0 0.0
  %5414 = vmatpush1.msra.mxu0 %v5112
  %5415 = vmatprep.subr.mxu0 0.0
  %5416 = vmatpush1.msra.mxu0 %v5113
  %5417 = vmatprep.subr.mxu0 0.0
  %5418 = vmatpush1.msra.mxu0 %v5114
  %5419 = vmatprep.subr.mxu0 0.0
  %5420 = vmatpush1.msra.mxu0 %v5115
  %5421 = vmatprep.subr.mxu0 0.0
  %5422 = vmatpush1.msra.mxu0 %v5116
  %5423 = vmatprep.subr.mxu0 0.0
  %5424 = vmatpush1.msra.mxu0 %v5117
  %5425 = vmatprep.subr.mxu0 0.0
  %5426 = vmatpush1.msra.mxu0 %v5118
  %5427 = vmatprep.subr.mxu0 0.0
  %5428 = vmatpush1.msra.mxu0 %v5119
  %5429 = vmatprep.subr.mxu0 0.0
  %5430 = vmatpush1.msra.mxu0 %v5120
  %5431 = vmatprep.subr.mxu0 0.0
  %5432 = vmatpush1.msra.mxu0 %v5121
  %5433 = vmatprep.subr.mxu0 0.0
  %5434 = vmatpush1.msra.mxu0 %v5122
  %5435 = vmatprep.subr.mxu0 0.0
  %5436 = vmatpush1.msra.mxu0 %v5123
  %5437 = vmatprep.subr.mxu0 0.0
  %5438 = vmatpush1.msra.mxu0 %v5124
  %5439 = vmatprep.subr.mxu0 0.0
  %5440 = vmatpush1.msra.mxu0 %v5125
  %5441 = vmatprep.subr.mxu0 0.0
  %5442 = vmatpush1.msra.mxu0 %v5126
  %5443 = vmatprep.subr.mxu0 0.0
  %5444 = vmatpush1.msra.mxu0 %v5127
  %5445 = vmatprep.subr.mxu0 0.0
  %5446 = vmatpush1.msra.mxu0 %v5128
  %5447 = vmatprep.subr.mxu0 0.0
  %5448 = vmatpush1.msra.mxu0 %v5129
  %5449 = vmatprep.subr.mxu0 0.0
  %5450 = vmatpush1.msra.mxu0 %v5130
  %5451 = vmatprep.subr.mxu0 0.0
  %5452 = vmatpush1.msra.mxu0 %v5131
  %5453 = vmatprep.subr.mxu0 0.0
  %5454 = vmatpush1.msra.mxu0 %v5132
  %5455 = vmatprep.subr.mxu0 0.0
  %5456 = vmatpush1.msra.mxu0 %v5133
  %5457 = vmatprep.subr.mxu0 0.0
  %5458 = vmatpush1.msra.mxu0 %v5134
  %5459 = vmatprep.subr.mxu0 0.0
  %5460 = vmatpush1.msra.mxu0 %v5135
  %5461 = vmatprep.subr.mxu0 0.0
  %5462 = vmatpush1.msra.mxu0 %v5136
  %5463 = vmatprep.mubr.f32.mxu0 %v4984
  %5464 = vmatmul.mubr.f32.gmra.mrb[0].mxu0 %v4983
  %v5465 = vpop.f32.mrb[0].mxu0
  %v5466 = vadd.f32 %v5381, %v5465
  %v5467 = vpop.f32.mrb[0].mxu0
  %5468 = vmatprep.mubr.f32.mxu0 %v4992
  %5469 = vmatmul.mubr.f32.gmra.mrb[0].mxu0 %v4991
  %v5470 = vpop.f32.mrb[0].mxu0
  %v5471 = vadd.f32 %v5386, %v5470
  %v5472 = vpop.f32.mrb[0].mxu0
  %5473 = vmatprep.mubr.f32.mxu0 %v5000
  %5474 = vmatmul.mubr.f32.gmra.mrb[0].mxu0 %v4999
  %v5475 = vpop.f32.mrb[0].mxu0
  %v5476 = vadd.f32 %v5391, %v5475
  %v5477 = vpop.f32.mrb[0].mxu0
  %5478 = vmatprep.mubr.f32.mxu0 %v5008
  %5479 = vmatmul.mubr.f32.gmra.mrb[0].mxu0 %v5007
  %v5480 = vpop.f32.mrb[0].mxu0
  %v5481 = vadd.f32 %v5396, %v5480
  %v5482 = vpop.f32.mrb[0].mxu0
  %5483 = vdwg.mxu0
  %5484 = vst [vmem:[%s17] sm:$0xff] %v5466
  %5485 = vst [vmem:[%s17 + $0x8] sm:$0xff] %v5471
  %5486 = vst [vmem:[%s17 + $0x10] sm:$0xff] %v5476
  %5487 = vst [vmem:[%s17 + $0x18] sm:$0xff] %v5481
  // Predicated region
  $region62: #{test_model_forward.3} parent=0 // pred_check
    _
  $region63: #{test_model_forward.3} parent=0 // pred_check_branch
    %5489 = sbr.rel (0) target = $region65
  $region64: #{test_model_forward.3} parent=0 // pred_region
    _
  $region65: #{test_model_forward.3} parent=0 // pred_fallthru
    _
  // Predicated region
  $region66: #{test_model_forward.3} parent=0 // pred_check
    _
  $region67: #{test_model_forward.3} parent=0 // pred_check_branch
    %5491 = sbr.rel (0) target = $region69
  $region68: #{test_model_forward.3} parent=0 // pred_region
    _
  $region69: #{test_model_forward.3} parent=0 // pred_fallthru
    _
  // Predicated region
  $region70: #{test_model_forward.3} parent=0 // pred_check
    _
  $region71: #{test_model_forward.3} parent=0 // pred_check_branch
    %5493 = sbr.rel (0) target = $region73
  $region72: #{test_model_forward.3} parent=0 // pred_region
    _
  $region73: #{test_model_forward.3} parent=0 // pred_fallthru
    _
  // Predicated region
  $region74: #{test_model_forward.3} parent=0 // pred_check
    _
  $region75: #{test_model_forward.3} parent=0 // pred_check_branch
    %5495 = sbr.rel (0) target = $region77
  $region76: #{test_model_forward.3} parent=0 // pred_region
    _
  $region77: #{test_model_forward.3} parent=0 // pred_fallthru
    _
  // Predicated region
  $region78: #{test_model_forward.3} parent=0 // pred_check
    _
  $region79: #{test_model_forward.3} parent=0 // pred_check_branch
    %5497 = sbr.rel (0) target = $region81
  $region80: #{test_model_forward.3} parent=0 // pred_region
    _
  $region81: #{test_model_forward.3} parent=0 // pred_fallthru
    _
  // Predicated region
  $region82: #{test_model_forward.3} parent=0 // pred_check
    _
  $region83: #{test_model_forward.3} parent=0 // pred_check_branch
    %5499 = sbr.rel (0) target = $region85
  $region84: #{test_model_forward.3} parent=0 // pred_region
    _
  $region85: #{test_model_forward.3} parent=0 // pred_fallthru
    _
  // Predicated region
  $region86: #{test_model_forward.3} parent=0 // pred_check
    _
  $region87: #{test_model_forward.3} parent=0 // pred_check_branch
    %5501 = sbr.rel (0) target = $region89
  $region88: #{test_model_forward.3} parent=0 // pred_region
    _
  $region89: #{test_model_forward.3} parent=0 // pred_fallthru
    _
  // Predicated region
  $region90: #{test_model_forward.3} parent=0 // pred_check
    _
  $region91: #{test_model_forward.3} parent=0 // pred_check_branch
    %5503 = sbr.rel (0) target = $region93
  $region92: #{test_model_forward.3} parent=0 // pred_region
    _
  $region93: #{test_model_forward.3} parent=0 // pred_fallthru
    _
  // Predicated region
  $region94: #{test_model_forward.3} parent=0 // pred_check
    _
  $region95: #{test_model_forward.3} parent=0 // pred_check_branch
    %5505 = sbr.rel (0) target = $region97
  $region96: #{test_model_forward.3} parent=0 // pred_region
    _
  $region97: #{test_model_forward.3} parent=0 // pred_fallthru
    _
  // Predicated region
  $region98: #{test_model_forward.3} parent=0 // pred_check
    _
  $region99: #{test_model_forward.3} parent=0 // pred_check_branch
    %5507 = sbr.rel (0) target = $region101
  $region100: #{test_model_forward.3} parent=0 // pred_region
    _
  $region101: #{test_model_forward.3} parent=0 // pred_fallthru
    _
  // Predicated region
  $region102: #{test_model_forward.3} parent=0 // pred_check
    _
  $region103: #{test_model_forward.3} parent=0 // pred_check_branch
    %5509 = sbr.rel (0) target = $region105
  $region104: #{test_model_forward.3} parent=0 // pred_region
    _
  $region105: #{test_model_forward.3} parent=0 // pred_fallthru
    _
  // Predicated region
  $region106: #{test_model_forward.3} parent=0 // pred_check
    _
  $region107: #{test_model_forward.3} parent=0 // pred_check_branch
    %5511 = sbr.rel (0) target = $region109
  $region108: #{test_model_forward.3} parent=0 // pred_region
    _
  $region109: #{test_model_forward.3} parent=0 // pred_fallthru
    _

</llo_original>
